<compile_context>
chip_gen: v5e
topology: v5e:2x2
jax: 0.10.0
libtpu: 0.0.40
codegen_flags: <defaults>
</compile_context>

<pallas_src>
import functools

import jax
import jax.numpy as jnp
import numpy as np
from jax import lax
from jax.experimental import pallas as pl
from jax.experimental.pallas import tpu as pltpu

K = 3  # conv kernel size (fixed by the module)


# ---------------------------------------------------------------------------
# Fused kernel: conv(3x3, s=2) + bias + ReLU  ->  conv(3x3, s=1) + bias + ReLU
# One grid step = one batch element (whole image fits comfortably in VMEM at
# these shapes).  Stride-2 is handled via 4 pre-split input phase planes so all
# in-kernel slices are unit-stride; each conv is 9 tap-matmuls accumulated in
# f32 on the MXU.
# ---------------------------------------------------------------------------
def _make_fused_kernel(ho, wo, cin, cout, compute_dtype):
    prec = (lax.Precision.HIGHEST
            if np.dtype(compute_dtype) == np.float32
            else lax.Precision.DEFAULT)

    def kernel(p00, p01, p10, p11, w1_ref, b1_ref, w2_ref, b2_ref,
               o_ref, y1_pad):
        phases = ((p00, p01), (p10, p11))

        # ---------------- conv1: 3x3, stride 2, pad 1 (via phase planes) ----
        acc1 = jnp.zeros((ho * wo, cout), jnp.float32)
        for kh in range(K):
            for kw in range(K):
                ph = phases[kh % 2][kw % 2]
                a, b = kh // 2, kw // 2
                tap = ph[0, a:a + ho, b:b + wo, :]            # (ho, wo, cin)
                tap2d = tap.reshape(ho * wo, cin).astype(compute_dtype)
                acc1 += jnp.dot(tap2d, w1_ref[kh * K + kw],
                                preferred_element_type=jnp.float32,
                                precision=prec)
        # f32 epilogue: bias + ReLU (bias is NOT folded into the matmul)
        y1 = jnp.maximum(acc1 + b1_ref[...].astype(jnp.float32), 0.0)

        # Intermediate stays in VMEM: write into a zero-padded scratch so
        # conv2's taps are plain unit-stride slices (halo = zero padding).
        y1_pad[...] = jnp.zeros(y1_pad.shape, y1_pad.dtype)
        y1_pad[1:1 + ho, 1:1 + wo, :] = y1.reshape(ho, wo, cout)

        # ---------------- conv2: 3x3, stride 1, pad 1 -----------------------
        acc2 = jnp.zeros((ho * wo, cout), jnp.float32)
        for kh in range(K):
            for kw in range(K):
                tap = y1_pad[kh:kh + ho, kw:kw + wo, :]       # (ho, wo, cout)
                tap2d = tap.reshape(ho * wo, cout).astype(compute_dtype)
                acc2 += jnp.dot(tap2d, w2_ref[kh * K + kw],
                                preferred_element_type=jnp.float32,
                                precision=prec)
        y2 = jnp.maximum(acc2 + b2_ref[...].astype(jnp.float32), 0.0)
        o_ref[0] = y2.reshape(ho, wo, cout).astype(o_ref.dtype)

    return kernel


@functools.partial(jax.jit, static_argnames=("compute_dtype",))
def transition_block_down(x_nchw, w1, b1, w2, b2, *, compute_dtype=jnp.float32):
    """_TransitionBlock(in_c, out_c, resample='down', norm=False).forward"""
    n, cin, h, w = x_nchw.shape
    cout = w1.shape[0]
    assert w1.shape[1] == cin and w2.shape == (cout, cout, K, K)
    assert h % 2 == 0 and w % 2 == 0
    ho, wo = h // 2, w // 2
    # wo must be sublane-aligned for the cheap (ho, wo, c) -> (ho*wo, c)
    # in-kernel reshape (no cross-vreg data movement).
    assert wo % 8 == 0, "width//2 must be a multiple of 8 for this kernel"

    # --- cheap host-side prep (bytes ~= input size, no 9x im2col blow-up) ---
    x = jnp.transpose(x_nchw, (0, 2, 3, 1))                     # NCHW -> NHWC
    xp = jnp.pad(x, ((0, 0), (1, 1), (1, 1), (0, 0)))           # spatial pad=1
    # stride-2 phase split: tap (kh,kw) reads phase (kh%2, kw%2) at a
    # unit-stride offset (kh//2, kw//2) inside the kernel.
    p00 = xp[:, 0::2, 0::2, :]
    p01 = xp[:, 0::2, 1::2, :]
    p10 = xp[:, 1::2, 0::2, :]
    p11 = xp[:, 1::2, 1::2, :]
    hp, wp = p00.shape[1], p00.shape[2]

    # Weights: (Cout, Cin, kh, kw) -> (9, Cin, Cout); tap index = kh*3 + kw.
    w1m = jnp.transpose(w1, (2, 3, 1, 0)).reshape(K * K, cin, cout)
    w2m = jnp.transpose(w2, (2, 3, 1, 0)).reshape(K * K, cout, cout)
    w1m = w1m.astype(compute_dtype)
    w2m = w2m.astype(compute_dtype)
    b1m = b1.reshape(1, cout).astype(jnp.float32)   # bias stays f32 (epilogue)
    b2m = b2.reshape(1, cout).astype(jnp.float32)

    # Advisory cost estimate so XLA schedules the surrounding glue well.
    flops = (2 * n * ho * wo * (K * K * cin) * cout
             + 2 * n * ho * wo * (K * K * cout) * cout)
    bytes_accessed = (sum(int(a.size) * a.dtype.itemsize
                          for a in (p00, p01, p10, p11, w1m, w2m, b1m, b2m))
                      + n * ho * wo * cout * 4)

    kernel = _make_fused_kernel(ho, wo, cin, cout, compute_dtype)

    out = pl.pallas_call(
        kernel,
        out_shape=jax.ShapeDtypeStruct((n, ho, wo, cout), jnp.float32),
        grid_spec=pltpu.PrefetchScalarGridSpec(
            num_scalar_prefetch=0,
            grid=(n,),
            in_specs=[
                pl.BlockSpec((1, hp, wp, cin), lambda i: (i, 0, 0, 0)),
                pl.BlockSpec((1, hp, wp, cin), lambda i: (i, 0, 0, 0)),
                pl.BlockSpec((1, hp, wp, cin), lambda i: (i, 0, 0, 0)),
                pl.BlockSpec((1, hp, wp, cin), lambda i: (i, 0, 0, 0)),
                pl.BlockSpec((K * K, cin, cout), lambda i: (0, 0, 0)),
                pl.BlockSpec((1, cout), lambda i: (0, 0)),
                pl.BlockSpec((K * K, cout, cout), lambda i: (0, 0, 0)),
                pl.BlockSpec((1, cout), lambda i: (0, 0)),
            ],
            out_specs=pl.BlockSpec((1, ho, wo, cout), lambda i: (i, 0, 0, 0)),
            scratch_shapes=[
                # conv1 output, zero-padded halo, resident in VMEM (f32 so the
                # 3D<->2D tap reshapes stay on clean (8,128) f32 tiles).
                pltpu.VMEM((ho + 2, wo + 2, cout), jnp.float32),
            ],
        ),
        compiler_params=pltpu.CompilerParams(
            # Batch images are independent -> shard across TensorCores (v7x).
            dimension_semantics=("parallel",),
        ),
        cost_estimate=pl.CostEstimate(
            flops=flops, transcendentals=0, bytes_accessed=bytes_accessed),
    )(p00, p01, p10, p11, w1m, b1m, w2m, b2m)

    return jnp.transpose(out, (0, 3, 1, 2))                     # NHWC -> NCHW


def _reference(x, w1, b1, w2, b2):
    dn = ('NCHW', 'OIHW', 'NCHW')
    y = lax.conv_general_dilated(x, w1, (2, 2), ((1, 1), (1, 1)),
                                 dimension_numbers=dn,
                                 precision=lax.Precision.HIGHEST)
    y = jnp.maximum(y + b1[None, :, None, None], 0.0)
    y = lax.conv_general_dilated(y, w2, (1, 1), ((1, 1), (1, 1)),
                                 dimension_numbers=dn,
                                 precision=lax.Precision.HIGHEST)
    y = jnp.maximum(y + b2[None, :, None, None], 0.0)
    return y


if __name__ == "__main__":
    key = jax.random.PRNGKey(0)
    kx, k1, k2, k3, k4 = jax.random.split(key, 5)

    N, CIN, H, W = 2, 4, 16, 16
    COUT = 8

    x = jax.random.normal(kx, (N, CIN, H, W), jnp.float32)
    # deterministic synthetic parameters (shapes from the module's __init__)
    w1 = 0.1 * jax.random.normal(k1, (COUT, CIN, 3, 3), jnp.float32)
    b1 = 0.1 * jax.random.normal(k2, (COUT,), jnp.float32)
    w2 = 0.1 * jax.random.normal(k3, (COUT, COUT, 3, 3), jnp.float32)
    b2 = 0.1 * jax.random.normal(k4, (COUT,), jnp.float32)

    y_ref = _reference(x, w1, b1, w2, b2)

    # f32 path (precision=HIGHEST) -> tight tolerance vs. reference.
    y = jax.block_until_ready(transition_block_down(x, w1, b1, w2, b2))
    np.testing.assert_allclose(np.asarray(y), np.asarray(y_ref),
                               rtol=1e-5, atol=1e-5)
    assert y.shape == (N, COUT, H // 2, W // 2)

    # bf16 MXU path (v6e/v7x default in production): f32 accumulation and an
    # f32 bias+ReLU epilogue keep it close; loose tolerance for bf16 rounding.
    y_bf16 = jax.block_until_ready(
        transition_block_down(x, w1, b1, w2, b2, compute_dtype=jnp.bfloat16))
    np.testing.assert_allclose(np.asarray(y_bf16), np.asarray(y_ref),
                               rtol=5e-2, atol=5e-2)

    print("KERNEL_OK")
</pallas_src>

<mosaic_0001>
module attributes {stable_mosaic.version = 11 : i64} {
  func.func @kernel(%arg0: i32, %arg1: memref<1x9x9x4xf32, #tpu.memory_space<vmem>>, %arg2: memref<1x9x9x4xf32, #tpu.memory_space<vmem>>, %arg3: memref<1x9x9x4xf32, #tpu.memory_space<vmem>>, %arg4: memref<1x9x9x4xf32, #tpu.memory_space<vmem>>, %arg5: memref<9x4x8xf32, #tpu.memory_space<vmem>>, %arg6: memref<1x8xf32, #tpu.memory_space<vmem>>, %arg7: memref<9x8x8xf32, #tpu.memory_space<vmem>>, %arg8: memref<1x8xf32, #tpu.memory_space<vmem>>, %arg9: memref<1x8x8x8xf32, #tpu.memory_space<vmem>>, %arg10: memref<10x10x8xf32, #tpu.memory_space<vmem>>) attributes {dimension_semantics = [#tpu.dimension_semantics<parallel>], iteration_bounds = array<i64: 2>, scalar_prefetch = 0 : i64, scratch_operands = 1 : i64, tpu.core_type = #tpu.core_type<tc>, window_params = [{transform_indices = @transform_0, window_bounds = array<i64: 1, 9, 9, 4>}, {transform_indices = @transform_1, window_bounds = array<i64: 1, 9, 9, 4>}, {transform_indices = @transform_2, window_bounds = array<i64: 1, 9, 9, 4>}, {transform_indices = @transform_3, window_bounds = array<i64: 1, 9, 9, 4>}, {pipeline_mode = #tpu.pipeline_mode<synchronous>, transform_indices = @transform_4, window_bounds = array<i64: 9, 4, 8>}, {pipeline_mode = #tpu.pipeline_mode<synchronous>, transform_indices = @transform_5, window_bounds = array<i64: 1, 8>}, {pipeline_mode = #tpu.pipeline_mode<synchronous>, transform_indices = @transform_6, window_bounds = array<i64: 9, 8, 8>}, {pipeline_mode = #tpu.pipeline_mode<synchronous>, transform_indices = @transform_7, window_bounds = array<i64: 1, 8>}, {transform_indices = @transform_8, window_bounds = array<i64: 1, 8, 8, 8>}]} {
    %cst = arith.constant 0.000000e+00 : f32
    %0 = vector.broadcast %cst : f32 to vector<64x8xf32>
    %c0 = arith.constant 0 : index
    %c0_0 = arith.constant 0 : index
    %c0_1 = arith.constant 0 : index
    %c0_2 = arith.constant 0 : index
    %1 = vector.load %arg1[%c0, %c0_0, %c0_1, %c0_2] : memref<1x9x9x4xf32, #tpu.memory_space<vmem>>, vector<1x8x8x4xf32>
    %2 = vector.shape_cast %1 : vector<1x8x8x4xf32> to vector<8x8x4xf32>
    %3 = vector.shape_cast %2 : vector<8x8x4xf32> to vector<64x4xf32>
    %c0_3 = arith.constant 0 : index
    %c0_4 = arith.constant 0 : index
    %c0_5 = arith.constant 0 : index
    %4 = vector.load %arg5[%c0_3, %c0_4, %c0_5] : memref<9x4x8xf32, #tpu.memory_space<vmem>>, vector<1x4x8xf32>
    %5 = vector.shape_cast %4 : vector<1x4x8xf32> to vector<4x8xf32>
    %cst_6 = arith.constant dense<0.000000e+00> : vector<64x8xf32>
    %6 = tpu.matmul %3, %5, %cst_6 {dimension_numbers = #tpu.dot_dimension_numbers<[1], [0], [0], [1], [0, 0, 1, 1], [], []>, precision = #tpu.contract_precision<fp32>} : vector<64x4xf32>, vector<4x8xf32>, vector<64x8xf32> -> vector<64x8xf32>
    %7 = arith.addf %0, %6 : vector<64x8xf32>
    %c0_7 = arith.constant 0 : index
    %c0_8 = arith.constant 0 : index
    %c0_9 = arith.constant 0 : index
    %c0_10 = arith.constant 0 : index
    %8 = vector.load %arg2[%c0_7, %c0_8, %c0_9, %c0_10] : memref<1x9x9x4xf32, #tpu.memory_space<vmem>>, vector<1x8x8x4xf32>
    %9 = vector.shape_cast %8 : vector<1x8x8x4xf32> to vector<8x8x4xf32>
    %10 = vector.shape_cast %9 : vector<8x8x4xf32> to vector<64x4xf32>
    %c1 = arith.constant 1 : index
    %c0_11 = arith.constant 0 : index
    %c0_12 = arith.constant 0 : index
    %11 = vector.load %arg5[%c1, %c0_11, %c0_12] : memref<9x4x8xf32, #tpu.memory_space<vmem>>, vector<1x4x8xf32>
    %12 = vector.shape_cast %11 : vector<1x4x8xf32> to vector<4x8xf32>
    %cst_13 = arith.constant dense<0.000000e+00> : vector<64x8xf32>
    %13 = tpu.matmul %10, %12, %cst_13 {dimension_numbers = #tpu.dot_dimension_numbers<[1], [0], [0], [1], [0, 0, 1, 1], [], []>, precision = #tpu.contract_precision<fp32>} : vector<64x4xf32>, vector<4x8xf32>, vector<64x8xf32> -> vector<64x8xf32>
    %14 = arith.addf %7, %13 : vector<64x8xf32>
    %c0_14 = arith.constant 0 : index
    %c0_15 = arith.constant 0 : index
    %c1_16 = arith.constant 1 : index
    %c0_17 = arith.constant 0 : index
    %15 = vector.load %arg1[%c0_14, %c0_15, %c1_16, %c0_17] : memref<1x9x9x4xf32, #tpu.memory_space<vmem>>, vector<1x8x8x4xf32>
    %16 = vector.shape_cast %15 : vector<1x8x8x4xf32> to vector<8x8x4xf32>
    %17 = vector.shape_cast %16 : vector<8x8x4xf32> to vector<64x4xf32>
    %c2 = arith.constant 2 : index
    %c0_18 = arith.constant 0 : index
    %c0_19 = arith.constant 0 : index
    %18 = vector.load %arg5[%c2, %c0_18, %c0_19] : memref<9x4x8xf32, #tpu.memory_space<vmem>>, vector<1x4x8xf32>
    %19 = vector.shape_cast %18 : vector<1x4x8xf32> to vector<4x8xf32>
    %cst_20 = arith.constant dense<0.000000e+00> : vector<64x8xf32>
    %20 = tpu.matmul %17, %19, %cst_20 {dimension_numbers = #tpu.dot_dimension_numbers<[1], [0], [0], [1], [0, 0, 1, 1], [], []>, precision = #tpu.contract_precision<fp32>} : vector<64x4xf32>, vector<4x8xf32>, vector<64x8xf32> -> vector<64x8xf32>
    %21 = arith.addf %14, %20 : vector<64x8xf32>
    %c0_21 = arith.constant 0 : index
    %c0_22 = arith.constant 0 : index
    %c0_23 = arith.constant 0 : index
    %c0_24 = arith.constant 0 : index
    %22 = vector.load %arg3[%c0_21, %c0_22, %c0_23, %c0_24] : memref<1x9x9x4xf32, #tpu.memory_space<vmem>>, vector<1x8x8x4xf32>
    %23 = vector.shape_cast %22 : vector<1x8x8x4xf32> to vector<8x8x4xf32>
    %24 = vector.shape_cast %23 : vector<8x8x4xf32> to vector<64x4xf32>
    %c3 = arith.constant 3 : index
    %c0_25 = arith.constant 0 : index
    %c0_26 = arith.constant 0 : index
    %25 = vector.load %arg5[%c3, %c0_25, %c0_26] : memref<9x4x8xf32, #tpu.memory_space<vmem>>, vector<1x4x8xf32>
    %26 = vector.shape_cast %25 : vector<1x4x8xf32> to vector<4x8xf32>
    %cst_27 = arith.constant dense<0.000000e+00> : vector<64x8xf32>
    %27 = tpu.matmul %24, %26, %cst_27 {dimension_numbers = #tpu.dot_dimension_numbers<[1], [0], [0], [1], [0, 0, 1, 1], [], []>, precision = #tpu.contract_precision<fp32>} : vector<64x4xf32>, vector<4x8xf32>, vector<64x8xf32> -> vector<64x8xf32>
    %28 = arith.addf %21, %27 : vector<64x8xf32>
    %c0_28 = arith.constant 0 : index
    %c0_29 = arith.constant 0 : index
    %c0_30 = arith.constant 0 : index
    %c0_31 = arith.constant 0 : index
    %29 = vector.load %arg4[%c0_28, %c0_29, %c0_30, %c0_31] : memref<1x9x9x4xf32, #tpu.memory_space<vmem>>, vector<1x8x8x4xf32>
    %30 = vector.shape_cast %29 : vector<1x8x8x4xf32> to vector<8x8x4xf32>
    %31 = vector.shape_cast %30 : vector<8x8x4xf32> to vector<64x4xf32>
    %c4 = arith.constant 4 : index
    %c0_32 = arith.constant 0 : index
    %c0_33 = arith.constant 0 : index
    %32 = vector.load %arg5[%c4, %c0_32, %c0_33] : memref<9x4x8xf32, #tpu.memory_space<vmem>>, vector<1x4x8xf32>
    %33 = vector.shape_cast %32 : vector<1x4x8xf32> to vector<4x8xf32>
    %cst_34 = arith.constant dense<0.000000e+00> : vector<64x8xf32>
    %34 = tpu.matmul %31, %33, %cst_34 {dimension_numbers = #tpu.dot_dimension_numbers<[1], [0], [0], [1], [0, 0, 1, 1], [], []>, precision = #tpu.contract_precision<fp32>} : vector<64x4xf32>, vector<4x8xf32>, vector<64x8xf32> -> vector<64x8xf32>
    %35 = arith.addf %28, %34 : vector<64x8xf32>
    %c0_35 = arith.constant 0 : index
    %c0_36 = arith.constant 0 : index
    %c1_37 = arith.constant 1 : index
    %c0_38 = arith.constant 0 : index
    %36 = vector.load %arg3[%c0_35, %c0_36, %c1_37, %c0_38] : memref<1x9x9x4xf32, #tpu.memory_space<vmem>>, vector<1x8x8x4xf32>
    %37 = vector.shape_cast %36 : vector<1x8x8x4xf32> to vector<8x8x4xf32>
    %38 = vector.shape_cast %37 : vector<8x8x4xf32> to vector<64x4xf32>
    %c5 = arith.constant 5 : index
    %c0_39 = arith.constant 0 : index
    %c0_40 = arith.constant 0 : index
    %39 = vector.load %arg5[%c5, %c0_39, %c0_40] : memref<9x4x8xf32, #tpu.memory_space<vmem>>, vector<1x4x8xf32>
    %40 = vector.shape_cast %39 : vector<1x4x8xf32> to vector<4x8xf32>
    %cst_41 = arith.constant dense<0.000000e+00> : vector<64x8xf32>
    %41 = tpu.matmul %38, %40, %cst_41 {dimension_numbers = #tpu.dot_dimension_numbers<[1], [0], [0], [1], [0, 0, 1, 1], [], []>, precision = #tpu.contract_precision<fp32>} : vector<64x4xf32>, vector<4x8xf32>, vector<64x8xf32> -> vector<64x8xf32>
    %42 = arith.addf %35, %41 : vector<64x8xf32>
    %c0_42 = arith.constant 0 : index
    %c1_43 = arith.constant 1 : index
    %c0_44 = arith.constant 0 : index
    %c0_45 = arith.constant 0 : index
    %43 = vector.load %arg1[%c0_42, %c1_43, %c0_44, %c0_45] : memref<1x9x9x4xf32, #tpu.memory_space<vmem>>, vector<1x8x8x4xf32>
    %44 = vector.shape_cast %43 : vector<1x8x8x4xf32> to vector<8x8x4xf32>
    %45 = vector.shape_cast %44 : vector<8x8x4xf32> to vector<64x4xf32>
    %c6 = arith.constant 6 : index
    %c0_46 = arith.constant 0 : index
    %c0_47 = arith.constant 0 : index
    %46 = vector.load %arg5[%c6, %c0_46, %c0_47] : memref<9x4x8xf32, #tpu.memory_space<vmem>>, vector<1x4x8xf32>
    %47 = vector.shape_cast %46 : vector<1x4x8xf32> to vector<4x8xf32>
    %cst_48 = arith.constant dense<0.000000e+00> : vector<64x8xf32>
    %48 = tpu.matmul %45, %47, %cst_48 {dimension_numbers = #tpu.dot_dimension_numbers<[1], [0], [0], [1], [0, 0, 1, 1], [], []>, precision = #tpu.contract_precision<fp32>} : vector<64x4xf32>, vector<4x8xf32>, vector<64x8xf32> -> vector<64x8xf32>
    %49 = arith.addf %42, %48 : vector<64x8xf32>
    %c0_49 = arith.constant 0 : index
    %c1_50 = arith.constant 1 : index
    %c0_51 = arith.constant 0 : index
    %c0_52 = arith.constant 0 : index
    %50 = vector.load %arg2[%c0_49, %c1_50, %c0_51, %c0_52] : memref<1x9x9x4xf32, #tpu.memory_space<vmem>>, vector<1x8x8x4xf32>
    %51 = vector.shape_cast %50 : vector<1x8x8x4xf32> to vector<8x8x4xf32>
    %52 = vector.shape_cast %51 : vector<8x8x4xf32> to vector<64x4xf32>
    %c7 = arith.constant 7 : index
    %c0_53 = arith.constant 0 : index
    %c0_54 = arith.constant 0 : index
    %53 = vector.load %arg5[%c7, %c0_53, %c0_54] : memref<9x4x8xf32, #tpu.memory_space<vmem>>, vector<1x4x8xf32>
    %54 = vector.shape_cast %53 : vector<1x4x8xf32> to vector<4x8xf32>
    %cst_55 = arith.constant dense<0.000000e+00> : vector<64x8xf32>
    %55 = tpu.matmul %52, %54, %cst_55 {dimension_numbers = #tpu.dot_dimension_numbers<[1], [0], [0], [1], [0, 0, 1, 1], [], []>, precision = #tpu.contract_precision<fp32>} : vector<64x4xf32>, vector<4x8xf32>, vector<64x8xf32> -> vector<64x8xf32>
    %56 = arith.addf %49, %55 : vector<64x8xf32>
    %c0_56 = arith.constant 0 : index
    %c1_57 = arith.constant 1 : index
    %c1_58 = arith.constant 1 : index
    %c0_59 = arith.constant 0 : index
    %57 = vector.load %arg1[%c0_56, %c1_57, %c1_58, %c0_59] : memref<1x9x9x4xf32, #tpu.memory_space<vmem>>, vector<1x8x8x4xf32>
    %58 = vector.shape_cast %57 : vector<1x8x8x4xf32> to vector<8x8x4xf32>
    %59 = vector.shape_cast %58 : vector<8x8x4xf32> to vector<64x4xf32>
    %c8 = arith.constant 8 : index
    %c0_60 = arith.constant 0 : index
    %c0_61 = arith.constant 0 : index
    %60 = vector.load %arg5[%c8, %c0_60, %c0_61] : memref<9x4x8xf32, #tpu.memory_space<vmem>>, vector<1x4x8xf32>
    %61 = vector.shape_cast %60 : vector<1x4x8xf32> to vector<4x8xf32>
    %cst_62 = arith.constant dense<0.000000e+00> : vector<64x8xf32>
    %62 = tpu.matmul %59, %61, %cst_62 {dimension_numbers = #tpu.dot_dimension_numbers<[1], [0], [0], [1], [0, 0, 1, 1], [], []>, precision = #tpu.contract_precision<fp32>} : vector<64x4xf32>, vector<4x8xf32>, vector<64x8xf32> -> vector<64x8xf32>
    %63 = arith.addf %56, %62 : vector<64x8xf32>
    %c0_63 = arith.constant 0 : index
    %c0_64 = arith.constant 0 : index
    %64 = vector.load %arg6[%c0_63, %c0_64] : memref<1x8xf32, #tpu.memory_space<vmem>>, vector<1x8xf32>
    %65 = vector.broadcast %64 : vector<1x8xf32> to vector<64x8xf32>
    %66 = arith.addf %63, %65 : vector<64x8xf32>
    %cst_65 = arith.constant 0.000000e+00 : f32
    %67 = vector.broadcast %cst_65 : f32 to vector<64x8xf32>
    %68 = arith.maximumf %66, %67 : vector<64x8xf32>
    %cst_66 = arith.constant 0.000000e+00 : f32
    %69 = vector.broadcast %cst_66 : f32 to vector<10x10x8xf32>
    %c0_67 = arith.constant 0 : index
    %c0_68 = arith.constant 0 : index
    %c0_69 = arith.constant 0 : index
    %70 = vector.load %arg10[%c0_67, %c0_68, %c0_69] : memref<10x10x8xf32, #tpu.memory_space<vmem>>, vector<10x10x8xf32>
    tpu.vector_store %arg10[%c0_67, %c0_68, %c0_69], %69 {strides = array<i32>} : memref<10x10x8xf32, #tpu.memory_space<vmem>>, vector<10x10x8xf32>,
    %71 = vector.shape_cast %68 : vector<64x8xf32> to vector<8x8x8xf32>
    %c1_70 = arith.constant 1 : index
    %c1_71 = arith.constant 1 : index
    %c0_72 = arith.constant 0 : index
    %72 = vector.load %arg10[%c1_70, %c1_71, %c0_72] : memref<10x10x8xf32, #tpu.memory_space<vmem>>, vector<8x8x8xf32>
    tpu.vector_store %arg10[%c1_70, %c1_71, %c0_72], %71 {strides = array<i32>} : memref<10x10x8xf32, #tpu.memory_space<vmem>>, vector<8x8x8xf32>,
    %cst_73 = arith.constant 0.000000e+00 : f32
    %73 = vector.broadcast %cst_73 : f32 to vector<64x8xf32>
    %c0_74 = arith.constant 0 : index
    %c0_75 = arith.constant 0 : index
    %c0_76 = arith.constant 0 : index
    %74 = vector.load %arg10[%c0_74, %c0_75, %c0_76] : memref<10x10x8xf32, #tpu.memory_space<vmem>>, vector<8x8x8xf32>
    %75 = vector.shape_cast %74 : vector<8x8x8xf32> to vector<64x8xf32>
    %c0_77 = arith.constant 0 : index
    %c0_78 = arith.constant 0 : index
    %c0_79 = arith.constant 0 : index
    %76 = vector.load %arg7[%c0_77, %c0_78, %c0_79] : memref<9x8x8xf32, #tpu.memory_space<vmem>>, vector<1x8x8xf32>
    %77 = vector.shape_cast %76 : vector<1x8x8xf32> to vector<8x8xf32>
    %cst_80 = arith.constant dense<0.000000e+00> : vector<64x8xf32>
    %78 = tpu.matmul %75, %77, %cst_80 {dimension_numbers = #tpu.dot_dimension_numbers<[1], [0], [0], [1], [0, 0, 1, 1], [], []>, precision = #tpu.contract_precision<fp32>} : vector<64x8xf32>, vector<8x8xf32>, vector<64x8xf32> -> vector<64x8xf32>
    %79 = arith.addf %73, %78 : vector<64x8xf32>
    %c0_81 = arith.constant 0 : index
    %c1_82 = arith.constant 1 : index
    %c0_83 = arith.constant 0 : index
    %80 = vector.load %arg10[%c0_81, %c1_82, %c0_83] : memref<10x10x8xf32, #tpu.memory_space<vmem>>, vector<8x8x8xf32>
    %81 = vector.shape_cast %80 : vector<8x8x8xf32> to vector<64x8xf32>
    %c1_84 = arith.constant 1 : index
    %c0_85 = arith.constant 0 : index
    %c0_86 = arith.constant 0 : index
    %82 = vector.load %arg7[%c1_84, %c0_85, %c0_86] : memref<9x8x8xf32, #tpu.memory_space<vmem>>, vector<1x8x8xf32>
    %83 = vector.shape_cast %82 : vector<1x8x8xf32> to vector<8x8xf32>
    %cst_87 = arith.constant dense<0.000000e+00> : vector<64x8xf32>
    %84 = tpu.matmul %81, %83, %cst_87 {dimension_numbers = #tpu.dot_dimension_numbers<[1], [0], [0], [1], [0, 0, 1, 1], [], []>, precision = #tpu.contract_precision<fp32>} : vector<64x8xf32>, vector<8x8xf32>, vector<64x8xf32> -> vector<64x8xf32>
    %85 = arith.addf %79, %84 : vector<64x8xf32>
    %c0_88 = arith.constant 0 : index
    %c2_89 = arith.constant 2 : index
    %c0_90 = arith.constant 0 : index
    %86 = vector.load %arg10[%c0_88, %c2_89, %c0_90] : memref<10x10x8xf32, #tpu.memory_space<vmem>>, vector<8x8x8xf32>
    %87 = vector.shape_cast %86 : vector<8x8x8xf32> to vector<64x8xf32>
    %c2_91 = arith.constant 2 : index
    %c0_92 = arith.constant 0 : index
    %c0_93 = arith.constant 0 : index
    %88 = vector.load %arg7[%c2_91, %c0_92, %c0_93] : memref<9x8x8xf32, #tpu.memory_space<vmem>>, vector<1x8x8xf32>
    %89 = vector.shape_cast %88 : vector<1x8x8xf32> to vector<8x8xf32>
    %cst_94 = arith.constant dense<0.000000e+00> : vector<64x8xf32>
    %90 = tpu.matmul %87, %89, %cst_94 {dimension_numbers = #tpu.dot_dimension_numbers<[1], [0], [0], [1], [0, 0, 1, 1], [], []>, precision = #tpu.contract_precision<fp32>} : vector<64x8xf32>, vector<8x8xf32>, vector<64x8xf32> -> vector<64x8xf32>
    %91 = arith.addf %85, %90 : vector<64x8xf32>
    %c1_95 = arith.constant 1 : index
    %c0_96 = arith.constant 0 : index
    %c0_97 = arith.constant 0 : index
    %92 = vector.load %arg10[%c1_95, %c0_96, %c0_97] : memref<10x10x8xf32, #tpu.memory_space<vmem>>, vector<8x8x8xf32>
    %93 = vector.shape_cast %92 : vector<8x8x8xf32> to vector<64x8xf32>
    %c3_98 = arith.constant 3 : index
    %c0_99 = arith.constant 0 : index
    %c0_100 = arith.constant 0 : index
    %94 = vector.load %arg7[%c3_98, %c0_99, %c0_100] : memref<9x8x8xf32, #tpu.memory_space<vmem>>, vector<1x8x8xf32>
    %95 = vector.shape_cast %94 : vector<1x8x8xf32> to vector<8x8xf32>
    %cst_101 = arith.constant dense<0.000000e+00> : vector<64x8xf32>
    %96 = tpu.matmul %93, %95, %cst_101 {dimension_numbers = #tpu.dot_dimension_numbers<[1], [0], [0], [1], [0, 0, 1, 1], [], []>, precision = #tpu.contract_precision<fp32>} : vector<64x8xf32>, vector<8x8xf32>, vector<64x8xf32> -> vector<64x8xf32>
    %97 = arith.addf %91, %96 : vector<64x8xf32>
    %c1_102 = arith.constant 1 : index
    %c1_103 = arith.constant 1 : index
    %c0_104 = arith.constant 0 : index
    %98 = vector.load %arg10[%c1_102, %c1_103, %c0_104] : memref<10x10x8xf32, #tpu.memory_space<vmem>>, vector<8x8x8xf32>
    %99 = vector.shape_cast %98 : vector<8x8x8xf32> to vector<64x8xf32>
    %c4_105 = arith.constant 4 : index
    %c0_106 = arith.constant 0 : index
    %c0_107 = arith.constant 0 : index
    %100 = vector.load %arg7[%c4_105, %c0_106, %c0_107] : memref<9x8x8xf32, #tpu.memory_space<vmem>>, vector<1x8x8xf32>
    %101 = vector.shape_cast %100 : vector<1x8x8xf32> to vector<8x8xf32>
    %cst_108 = arith.constant dense<0.000000e+00> : vector<64x8xf32>
    %102 = tpu.matmul %99, %101, %cst_108 {dimension_numbers = #tpu.dot_dimension_numbers<[1], [0], [0], [1], [0, 0, 1, 1], [], []>, precision = #tpu.contract_precision<fp32>} : vector<64x8xf32>, vector<8x8xf32>, vector<64x8xf32> -> vector<64x8xf32>
    %103 = arith.addf %97, %102 : vector<64x8xf32>
    %c1_109 = arith.constant 1 : index
    %c2_110 = arith.constant 2 : index
    %c0_111 = arith.constant 0 : index
    %104 = vector.load %arg10[%c1_109, %c2_110, %c0_111] : memref<10x10x8xf32, #tpu.memory_space<vmem>>, vector<8x8x8xf32>
    %105 = vector.shape_cast %104 : vector<8x8x8xf32> to vector<64x8xf32>
    %c5_112 = arith.constant 5 : index
    %c0_113 = arith.constant 0 : index
    %c0_114 = arith.constant 0 : index
    %106 = vector.load %arg7[%c5_112, %c0_113, %c0_114] : memref<9x8x8xf32, #tpu.memory_space<vmem>>, vector<1x8x8xf32>
    %107 = vector.shape_cast %106 : vector<1x8x8xf32> to vector<8x8xf32>
    %cst_115 = arith.constant dense<0.000000e+00> : vector<64x8xf32>
    %108 = tpu.matmul %105, %107, %cst_115 {dimension_numbers = #tpu.dot_dimension_numbers<[1], [0], [0], [1], [0, 0, 1, 1], [], []>, precision = #tpu.contract_precision<fp32>} : vector<64x8xf32>, vector<8x8xf32>, vector<64x8xf32> -> vector<64x8xf32>
    %109 = arith.addf %103, %108 : vector<64x8xf32>
    %c2_116 = arith.constant 2 : index
    %c0_117 = arith.constant 0 : index
    %c0_118 = arith.constant 0 : index
    %110 = vector.load %arg10[%c2_116, %c0_117, %c0_118] : memref<10x10x8xf32, #tpu.memory_space<vmem>>, vector<8x8x8xf32>
    %111 = vector.shape_cast %110 : vector<8x8x8xf32> to vector<64x8xf32>
    %c6_119 = arith.constant 6 : index
    %c0_120 = arith.constant 0 : index
    %c0_121 = arith.constant 0 : index
    %112 = vector.load %arg7[%c6_119, %c0_120, %c0_121] : memref<9x8x8xf32, #tpu.memory_space<vmem>>, vector<1x8x8xf32>
    %113 = vector.shape_cast %112 : vector<1x8x8xf32> to vector<8x8xf32>
    %cst_122 = arith.constant dense<0.000000e+00> : vector<64x8xf32>
    %114 = tpu.matmul %111, %113, %cst_122 {dimension_numbers = #tpu.dot_dimension_numbers<[1], [0], [0], [1], [0, 0, 1, 1], [], []>, precision = #tpu.contract_precision<fp32>} : vector<64x8xf32>, vector<8x8xf32>, vector<64x8xf32> -> vector<64x8xf32>
    %115 = arith.addf %109, %114 : vector<64x8xf32>
    %c2_123 = arith.constant 2 : index
    %c1_124 = arith.constant 1 : index
    %c0_125 = arith.constant 0 : index
    %116 = vector.load %arg10[%c2_123, %c1_124, %c0_125] : memref<10x10x8xf32, #tpu.memory_space<vmem>>, vector<8x8x8xf32>
    %117 = vector.shape_cast %116 : vector<8x8x8xf32> to vector<64x8xf32>
    %c7_126 = arith.constant 7 : index
    %c0_127 = arith.constant 0 : index
    %c0_128 = arith.constant 0 : index
    %118 = vector.load %arg7[%c7_126, %c0_127, %c0_128] : memref<9x8x8xf32, #tpu.memory_space<vmem>>, vector<1x8x8xf32>
    %119 = vector.shape_cast %118 : vector<1x8x8xf32> to vector<8x8xf32>
    %cst_129 = arith.constant dense<0.000000e+00> : vector<64x8xf32>
    %120 = tpu.matmul %117, %119, %cst_129 {dimension_numbers = #tpu.dot_dimension_numbers<[1], [0], [0], [1], [0, 0, 1, 1], [], []>, precision = #tpu.contract_precision<fp32>} : vector<64x8xf32>, vector<8x8xf32>, vector<64x8xf32> -> vector<64x8xf32>
    %121 = arith.addf %115, %120 : vector<64x8xf32>
    %c2_130 = arith.constant 2 : index
    %c2_131 = arith.constant 2 : index
    %c0_132 = arith.constant 0 : index
    %122 = vector.load %arg10[%c2_130, %c2_131, %c0_132] : memref<10x10x8xf32, #tpu.memory_space<vmem>>, vector<8x8x8xf32>
    %123 = vector.shape_cast %122 : vector<8x8x8xf32> to vector<64x8xf32>
    %c8_133 = arith.constant 8 : index
    %c0_134 = arith.constant 0 : index
    %c0_135 = arith.constant 0 : index
    %124 = vector.load %arg7[%c8_133, %c0_134, %c0_135] : memref<9x8x8xf32, #tpu.memory_space<vmem>>, vector<1x8x8xf32>
    %125 = vector.shape_cast %124 : vector<1x8x8xf32> to vector<8x8xf32>
    %cst_136 = arith.constant dense<0.000000e+00> : vector<64x8xf32>
    %126 = tpu.matmul %123, %125, %cst_136 {dimension_numbers = #tpu.dot_dimension_numbers<[1], [0], [0], [1], [0, 0, 1, 1], [], []>, precision = #tpu.contract_precision<fp32>} : vector<64x8xf32>, vector<8x8xf32>, vector<64x8xf32> -> vector<64x8xf32>
    %127 = arith.addf %121, %126 : vector<64x8xf32>
    %c0_137 = arith.constant 0 : index
    %c0_138 = arith.constant 0 : index
    %128 = vector.load %arg8[%c0_137, %c0_138] : memref<1x8xf32, #tpu.memory_space<vmem>>, vector<1x8xf32>
    %129 = vector.broadcast %128 : vector<1x8xf32> to vector<64x8xf32>
    %130 = arith.addf %127, %129 : vector<64x8xf32>
    %cst_139 = arith.constant 0.000000e+00 : f32
    %131 = vector.broadcast %cst_139 : f32 to vector<64x8xf32>
    %132 = arith.maximumf %130, %131 : vector<64x8xf32>
    %133 = vector.shape_cast %132 : vector<64x8xf32> to vector<8x8x8xf32>
    %c0_140 = arith.constant 0 : index
    %c0_141 = arith.constant 0 : index
    %c0_142 = arith.constant 0 : index
    %c0_143 = arith.constant 0 : index
    %134 = vector.load %arg9[%c0_140, %c0_141, %c0_142, %c0_143] : memref<1x8x8x8xf32, #tpu.memory_space<vmem>>, vector<1x8x8x8xf32>
    %135 = vector.shape_cast %134 : vector<1x8x8x8xf32> to vector<8x8x8xf32>
    %136 = vector.shape_cast %133 : vector<8x8x8xf32> to vector<1x8x8x8xf32>
    tpu.vector_store %arg9[%c0_140, %c0_141, %c0_142, %c0_143], %136 {strides = array<i32>} : memref<1x8x8x8xf32, #tpu.memory_space<vmem>>, vector<1x8x8x8xf32>,
    return
  }
  func.func @transform_0(%arg0: i32) -> (i32, i32, i32, i32) {
    %c0_i32 = arith.constant 0 : i32
    %c0_i32_0 = arith.constant 0 : i32
    %c0_i32_1 = arith.constant 0 : i32
    %c0_i32_2 = arith.constant 0 : i32
    return %arg0, %c0_i32, %c0_i32_0, %c0_i32_1 : i32, i32, i32, i32
  }
  func.func @transform_1(%arg0: i32) -> (i32, i32, i32, i32) {
    %c0_i32 = arith.constant 0 : i32
    %c0_i32_0 = arith.constant 0 : i32
    %c0_i32_1 = arith.constant 0 : i32
    %c0_i32_2 = arith.constant 0 : i32
    return %arg0, %c0_i32, %c0_i32_0, %c0_i32_1 : i32, i32, i32, i32
  }
  func.func @transform_2(%arg0: i32) -> (i32, i32, i32, i32) {
    %c0_i32 = arith.constant 0 : i32
    %c0_i32_0 = arith.constant 0 : i32
    %c0_i32_1 = arith.constant 0 : i32
    %c0_i32_2 = arith.constant 0 : i32
    return %arg0, %c0_i32, %c0_i32_0, %c0_i32_1 : i32, i32, i32, i32
  }
  func.func @transform_3(%arg0: i32) -> (i32, i32, i32, i32) {
    %c0_i32 = arith.constant 0 : i32
    %c0_i32_0 = arith.constant 0 : i32
    %c0_i32_1 = arith.constant 0 : i32
    %c0_i32_2 = arith.constant 0 : i32
    return %arg0, %c0_i32, %c0_i32_0, %c0_i32_1 : i32, i32, i32, i32
  }
  func.func @transform_4(%arg0: i32) -> (i32, i32, i32) {
    %c0_i32 = arith.constant 0 : i32
    %c0_i32_0 = arith.constant 0 : i32
    %c0_i32_1 = arith.constant 0 : i32
    %c0_i32_2 = arith.constant 0 : i32
    return %c0_i32, %c0_i32_0, %c0_i32_1 : i32, i32, i32
  }
  func.func @transform_5(%arg0: i32) -> (i32, i32) {
    %c0_i32 = arith.constant 0 : i32
    %c0_i32_0 = arith.constant 0 : i32
    %c0_i32_1 = arith.constant 0 : i32
    return %c0_i32, %c0_i32_0 : i32, i32
  }
  func.func @transform_6(%arg0: i32) -> (i32, i32, i32) {
    %c0_i32 = arith.constant 0 : i32
    %c0_i32_0 = arith.constant 0 : i32
    %c0_i32_1 = arith.constant 0 : i32
    %c0_i32_2 = arith.constant 0 : i32
    return %c0_i32, %c0_i32_0, %c0_i32_1 : i32, i32, i32
  }
  func.func @transform_7(%arg0: i32) -> (i32, i32) {
    %c0_i32 = arith.constant 0 : i32
    %c0_i32_0 = arith.constant 0 : i32
    %c0_i32_1 = arith.constant 0 : i32
    return %c0_i32, %c0_i32_0 : i32, i32
  }
  func.func @transform_8(%arg0: i32) -> (i32, i32, i32, i32) {
    %c0_i32 = arith.constant 0 : i32
    %c0_i32_0 = arith.constant 0 : i32
    %c0_i32_1 = arith.constant 0 : i32
    %c0_i32_2 = arith.constant 0 : i32
    return %arg0, %c0_i32, %c0_i32_0, %c0_i32_1 : i32, i32, i32, i32
  }
}

</mosaic_0001>

<llo_original>
// kernel: transition_block_down.1
$region0: #{transition_block_down.1}
  #allocation0 [shape = 'u32[]', space=smem, size = 0x4, offset = 0x4, fixed_abs, tag = 'smem constant byte address 0x4 - core index']
  #allocation1 [shape = 'u32[72,128]{1,0:T(1,128)}', space=vmem, size = 0x9000, scoped, tag = 'internal scratch']
  #allocation2 [shape = 'f32[10,10,8]{2,1,0:T(8,128)}', space=vmem, size = 0x14000, scoped, tag = 'scratch operand']
  %s0 = inlined_call_operand.vmem [shape: f32[2,9,9,4], index: 0, kind: input, shape index: {}]
  %s1 = inlined_call_operand.vmem [shape: f32[2,9,9,4], index: 1, kind: input, shape index: {}]
  %s2 = inlined_call_operand.vmem [shape: f32[2,9,9,4], index: 2, kind: input, shape index: {}]
  %s3 = inlined_call_operand.vmem [shape: f32[2,9,9,4], index: 3, kind: input, shape index: {}]
  %s4 = inlined_call_operand.vmem [shape: f32[9,4,8], index: 4, kind: input, shape index: {}]
  %s5 = inlined_call_operand.vmem [shape: f32[1,8], index: 5, kind: input, shape index: {}]
  %s6 = inlined_call_operand.vmem [shape: f32[9,8,8], index: 6, kind: input, shape index: {}]
  %s7 = inlined_call_operand.vmem [shape: f32[1,8], index: 7, kind: input, shape index: {}]
  %s8 = inlined_call_operand.vmem [shape: f32[2,8,8,8], index: 8, kind: output, shape index: {}]
  %s9 = sld [smem:[#allocation0]]
  $region65: #{transition_block_down.1} parent=0
    _
  %s11 = ssub.s32 1, %s9
  %s12 = scalar_select 0, %s11, %s9
  loop: start=0, step=1, limit=4
  $region2: #{transition_block_down.1} parent=0 // loop_pre_header
    _
  $region3: #{transition_block_down.1} parent=0 // loop_header
    %s14 = sphi 0, %s18
    %p15 = scmp.ge.s32.totalorder %s14, 4
    %s24 = sphi 0, %s26
    %s27 = sphi 0, %s24
    %s28 = sphi 0, %s27
    %s44 = sphi 0, %s28
    %s50 = sphi 0, %s52
    %s53 = sphi 0, %s50
    %s54 = sphi 0, %s53
    %s70 = sphi 0, %s54
    %s76 = sphi 0, %s78
    %s79 = sphi 0, %s76
    %s80 = sphi 0, %s79
    %s96 = sphi 0, %s80
    %s102 = sphi 0, %s104
    %s105 = sphi 0, %s102
    %s106 = sphi 0, %s105
    %s122 = sphi 0, %s106
    %s126 = sphi 0, %s126
    %s128 = sphi 0, %s126
    %s129 = sphi 0, %s128
    %s143 = sphi 0, %s129
    %s147 = sphi 0, %s147
    %s149 = sphi 0, %s147
    %s150 = sphi 0, %s149
    %s164 = sphi 0, %s150
    %s168 = sphi 0, %s168
    %s170 = sphi 0, %s168
    %s171 = sphi 0, %s170
    %s185 = sphi 0, %s171
    %s189 = sphi 0, %s189
    %s191 = sphi 0, %s189
    %s192 = sphi 0, %s191
    %s206 = sphi 0, %s192
    %s212 = sphi 0, %s214
    %s215 = sphi 0, %s212
    %s216 = sphi 0, %s215
    %s232 = sphi 0, %s216
  $region4: #{transition_block_down.1} parent=0 // loop_header_branch
    %17 = sbr.rel (%p15) target = $region8
  $region5: #{transition_block_down.1} parent=0 // loop_body
    %s19 = ssub.s32 %s14, 1
    %s20 = ssub.s32 %s14, 2
    %s21 = sadd.s32 %s14, 1
    %s22 = ssub.s32 %s14, %s21
    %p23 = scmp.eq.s32.totalorder %s22, 0
    %s25 = sadd.s32 %s24, 1
    %s26 = scalar_select %p23, %s24, %s25
    %p29 = pneg %p23
    %p30 = scmp.eq.s32.totalorder %s14, 1
    %p31 = por %p29, %p30
    %p32 = scmp.ne.s32.totalorder %s24, %s27
    %p33 = scmp.eq.s32.totalorder %s14, 0
    %p34 = por %p32, %p33
    %p35 = scmp.ne.s32.totalorder %s24, %s27
    %p36 = scmp.eq.s32.totalorder %s19, 1
    %p37 = por %p35, %p36
    %p38 = scmp.ne.s32.totalorder %s27, %s28
    %p39 = scmp.eq.s32.totalorder %s19, 0
    %p40 = por %p38, %p39
    %p41 = scmp.ne.s32.totalorder %s27, %s28
    %p42 = scmp.eq.s32.totalorder %s20, 1
    %p43 = por %p41, %p42
    %p45 = scmp.ne.s32.totalorder %s28, %s44
    %p46 = scmp.eq.s32.totalorder %s20, 0
    %p47 = por %p45, %p46
    %s48 = ssub.s32 %s14, %s21
    %p49 = scmp.eq.s32.totalorder %s48, 0
    %s51 = sadd.s32 %s50, 1
    %s52 = scalar_select %p49, %s50, %s51
    %p55 = pneg %p49
    %p56 = scmp.eq.s32.totalorder %s14, 1
    %p57 = por %p55, %p56
    %p58 = scmp.ne.s32.totalorder %s50, %s53
    %p59 = scmp.eq.s32.totalorder %s14, 0
    %p60 = por %p58, %p59
    %p61 = scmp.ne.s32.totalorder %s50, %s53
    %p62 = scmp.eq.s32.totalorder %s19, 1
    %p63 = por %p61, %p62
    %p64 = scmp.ne.s32.totalorder %s53, %s54
    %p65 = scmp.eq.s32.totalorder %s19, 0
    %p66 = por %p64, %p65
    %p67 = scmp.ne.s32.totalorder %s53, %s54
    %p68 = scmp.eq.s32.totalorder %s20, 1
    %p69 = por %p67, %p68
    %p71 = scmp.ne.s32.totalorder %s54, %s70
    %p72 = scmp.eq.s32.totalorder %s20, 0
    %p73 = por %p71, %p72
    %s74 = ssub.s32 %s14, %s21
    %p75 = scmp.eq.s32.totalorder %s74, 0
    %s77 = sadd.s32 %s76, 1
    %s78 = scalar_select %p75, %s76, %s77
    %p81 = pneg %p75
    %p82 = scmp.eq.s32.totalorder %s14, 1
    %p83 = por %p81, %p82
    %p84 = scmp.ne.s32.totalorder %s76, %s79
    %p85 = scmp.eq.s32.totalorder %s14, 0
    %p86 = por %p84, %p85
    %p87 = scmp.ne.s32.totalorder %s76, %s79
    %p88 = scmp.eq.s32.totalorder %s19, 1
    %p89 = por %p87, %p88
    %p90 = scmp.ne.s32.totalorder %s79, %s80
    %p91 = scmp.eq.s32.totalorder %s19, 0
    %p92 = por %p90, %p91
    %p93 = scmp.ne.s32.totalorder %s79, %s80
    %p94 = scmp.eq.s32.totalorder %s20, 1
    %p95 = por %p93, %p94
    %p97 = scmp.ne.s32.totalorder %s80, %s96
    %p98 = scmp.eq.s32.totalorder %s20, 0
    %p99 = por %p97, %p98
    %s100 = ssub.s32 %s14, %s21
    %p101 = scmp.eq.s32.totalorder %s100, 0
    %s103 = sadd.s32 %s102, 1
    %s104 = scalar_select %p101, %s102, %s103
    %p107 = pneg %p101
    %p108 = scmp.eq.s32.totalorder %s14, 1
    %p109 = por %p107, %p108
    %p110 = scmp.ne.s32.totalorder %s102, %s105
    %p111 = scmp.eq.s32.totalorder %s14, 0
    %p112 = por %p110, %p111
    %p113 = scmp.ne.s32.totalorder %s102, %s105
    %p114 = scmp.eq.s32.totalorder %s19, 1
    %p115 = por %p113, %p114
    %p116 = scmp.ne.s32.totalorder %s105, %s106
    %p117 = scmp.eq.s32.totalorder %s19, 0
    %p118 = por %p116, %p117
    %p119 = scmp.ne.s32.totalorder %s105, %s106
    %p120 = scmp.eq.s32.totalorder %s20, 1
    %p121 = por %p119, %p120
    %p123 = scmp.ne.s32.totalorder %s106, %s122
    %p124 = scmp.eq.s32.totalorder %s20, 0
    %p125 = por %p123, %p124
    %s127 = sadd.s32 %s126, 1
    %p130 = scmp.eq.s32.totalorder %s14, 1
    %p131 = scmp.ne.s32.totalorder %s126, %s128
    %p132 = scmp.eq.s32.totalorder %s14, 0
    %p133 = por %p131, %p132
    %p134 = scmp.ne.s32.totalorder %s126, %s128
    %p135 = scmp.eq.s32.totalorder %s19, 1
    %p136 = por %p134, %p135
    %p137 = scmp.ne.s32.totalorder %s128, %s129
    %p138 = scmp.eq.s32.totalorder %s19, 0
    %p139 = por %p137, %p138
    %p140 = scmp.ne.s32.totalorder %s128, %s129
    %p141 = scmp.eq.s32.totalorder %s20, 1
    %p142 = por %p140, %p141
    %p144 = scmp.ne.s32.totalorder %s129, %s143
    %p145 = scmp.eq.s32.totalorder %s20, 0
    %p146 = por %p144, %p145
    %s148 = sadd.s32 %s147, 1
    %p151 = scmp.eq.s32.totalorder %s14, 1
    %p152 = scmp.ne.s32.totalorder %s147, %s149
    %p153 = scmp.eq.s32.totalorder %s14, 0
    %p154 = por %p152, %p153
    %p155 = scmp.ne.s32.totalorder %s147, %s149
    %p156 = scmp.eq.s32.totalorder %s19, 1
    %p157 = por %p155, %p156
    %p158 = scmp.ne.s32.totalorder %s149, %s150
    %p159 = scmp.eq.s32.totalorder %s19, 0
    %p160 = por %p158, %p159
    %p161 = scmp.ne.s32.totalorder %s149, %s150
    %p162 = scmp.eq.s32.totalorder %s20, 1
    %p163 = por %p161, %p162
    %p165 = scmp.ne.s32.totalorder %s150, %s164
    %p166 = scmp.eq.s32.totalorder %s20, 0
    %p167 = por %p165, %p166
    %s169 = sadd.s32 %s168, 1
    %p172 = scmp.eq.s32.totalorder %s14, 1
    %p173 = scmp.ne.s32.totalorder %s168, %s170
    %p174 = scmp.eq.s32.totalorder %s14, 0
    %p175 = por %p173, %p174
    %p176 = scmp.ne.s32.totalorder %s168, %s170
    %p177 = scmp.eq.s32.totalorder %s19, 1
    %p178 = por %p176, %p177
    %p179 = scmp.ne.s32.totalorder %s170, %s171
    %p180 = scmp.eq.s32.totalorder %s19, 0
    %p181 = por %p179, %p180
    %p182 = scmp.ne.s32.totalorder %s170, %s171
    %p183 = scmp.eq.s32.totalorder %s20, 1
    %p184 = por %p182, %p183
    %p186 = scmp.ne.s32.totalorder %s171, %s185
    %p187 = scmp.eq.s32.totalorder %s20, 0
    %p188 = por %p186, %p187
    %s190 = sadd.s32 %s189, 1
    %p193 = scmp.eq.s32.totalorder %s14, 1
    %p194 = scmp.ne.s32.totalorder %s189, %s191
    %p195 = scmp.eq.s32.totalorder %s14, 0
    %p196 = por %p194, %p195
    %p197 = scmp.ne.s32.totalorder %s189, %s191
    %p198 = scmp.eq.s32.totalorder %s19, 1
    %p199 = por %p197, %p198
    %p200 = scmp.ne.s32.totalorder %s191, %s192
    %p201 = scmp.eq.s32.totalorder %s19, 0
    %p202 = por %p200, %p201
    %p203 = scmp.ne.s32.totalorder %s191, %s192
    %p204 = scmp.eq.s32.totalorder %s20, 1
    %p205 = por %p203, %p204
    %p207 = scmp.ne.s32.totalorder %s192, %s206
    %p208 = scmp.eq.s32.totalorder %s20, 0
    %p209 = por %p207, %p208
    %s210 = ssub.s32 %s14, %s21
    %p211 = scmp.eq.s32.totalorder %s210, 0
    %s213 = sadd.s32 %s212, 1
    %s214 = scalar_select %p211, %s212, %s213
    %p217 = pneg %p211
    %p218 = scmp.eq.s32.totalorder %s14, 1
    %p219 = por %p217, %p218
    %p220 = scmp.ne.s32.totalorder %s212, %s215
    %p221 = scmp.eq.s32.totalorder %s14, 0
    %p222 = por %p220, %p221
    %p223 = scmp.ne.s32.totalorder %s212, %s215
    %p224 = scmp.eq.s32.totalorder %s19, 1
    %p225 = por %p223, %p224
    %p226 = scmp.ne.s32.totalorder %s215, %s216
    %p227 = scmp.eq.s32.totalorder %s19, 0
    %p228 = por %p226, %p227
    %p229 = scmp.ne.s32.totalorder %s215, %s216
    %p230 = scmp.eq.s32.totalorder %s20, 1
    %p231 = por %p229, %p230
    %p233 = scmp.ne.s32.totalorder %s216, %s232
    %p234 = scmp.eq.s32.totalorder %s20, 0
    %p235 = por %p233, %p234
    %p236 = scmp.le.s32.totalorder 1, %s14
    %p237 = scmp.lt.s32.totalorder %s14, 3
    %p238 = pnand %p236, %p237
    %p239 = pneg %p238
    // Predicated region
    $region9: #{transition_block_down.1} parent=5 // pred_check
      _
    $region10: #{transition_block_down.1} parent=5 // pred_check_branch
      %241 = sbr.rel (%p238) target = $region12
    $region11: #{transition_block_down.1} parent=5 // pred_region
      %s242 = ssub.s32 %s14, 1
      // Predicated region
      $region13: #{transition_block_down.1} parent=11 // pred_check
        %p243 = pneg %p139
      $region14: #{transition_block_down.1} parent=11 // pred_check_branch
        %245 = sbr.rel (%p243) target = $region16
      $region15: #{transition_block_down.1} parent=11 // pred_region
        _
      $region16: #{transition_block_down.1} parent=11 // pred_fallthru
        _
      // Predicated region
      $region17: #{transition_block_down.1} parent=11 // pred_check
        %p246 = pneg %p160
      $region18: #{transition_block_down.1} parent=11 // pred_check_branch
        %248 = sbr.rel (%p246) target = $region20
      $region19: #{transition_block_down.1} parent=11 // pred_region
        _
      $region20: #{transition_block_down.1} parent=11 // pred_fallthru
        _
      // Predicated region
      $region21: #{transition_block_down.1} parent=11 // pred_check
        %p249 = pneg %p181
      $region22: #{transition_block_down.1} parent=11 // pred_check_branch
        %251 = sbr.rel (%p249) target = $region24
      $region23: #{transition_block_down.1} parent=11 // pred_region
        _
      $region24: #{transition_block_down.1} parent=11 // pred_fallthru
        _
      // Predicated region
      $region25: #{transition_block_down.1} parent=11 // pred_check
        %p252 = pneg %p202
      $region26: #{transition_block_down.1} parent=11 // pred_check_branch
        %254 = sbr.rel (%p252) target = $region28
      $region27: #{transition_block_down.1} parent=11 // pred_region
        _
      $region28: #{transition_block_down.1} parent=11 // pred_fallthru
        _
    $region12: #{transition_block_down.1} parent=5 // pred_fallthru
      _
    %p255 = scmp.lt.s32.totalorder %s14, 2
    // Predicated region
    $region29: #{transition_block_down.1} parent=5 // pred_check
      %p256 = pneg %p255
    $region30: #{transition_block_down.1} parent=5 // pred_check_branch
      %258 = sbr.rel (%p256) target = $region32
    $region31: #{transition_block_down.1} parent=5 // pred_region
      // Predicated region
      $region33: #{transition_block_down.1} parent=31 // pred_check
        %p259 = pneg %p34
      $region34: #{transition_block_down.1} parent=31 // pred_check_branch
        %261 = sbr.rel (%p259) target = $region36
      $region35: #{transition_block_down.1} parent=31 // pred_region
        %p262 = scmp.lt.s32.totalorder %s14, 1
        %s263 = scalar_select %p262, %s14, 1
        %s264 = smul.addr %s263, 18
        %s265 = smul.addr %s264, 8
        %s266 = scalar_lea.vmem %s0, %s265
      $region36: #{transition_block_down.1} parent=31 // pred_fallthru
        _
      // Predicated region
      $region37: #{transition_block_down.1} parent=31 // pred_check
        %p267 = pneg %p60
      $region38: #{transition_block_down.1} parent=31 // pred_check_branch
        %269 = sbr.rel (%p267) target = $region40
      $region39: #{transition_block_down.1} parent=31 // pred_region
        %p270 = scmp.lt.s32.totalorder %s14, 1
        %s271 = scalar_select %p270, %s14, 1
        %s272 = smul.addr %s271, 18
        %s273 = smul.addr %s272, 8
        %s274 = scalar_lea.vmem %s1, %s273
      $region40: #{transition_block_down.1} parent=31 // pred_fallthru
        _
      // Predicated region
      $region41: #{transition_block_down.1} parent=31 // pred_check
        %p275 = pneg %p86
      $region42: #{transition_block_down.1} parent=31 // pred_check_branch
        %277 = sbr.rel (%p275) target = $region44
      $region43: #{transition_block_down.1} parent=31 // pred_region
        %p278 = scmp.lt.s32.totalorder %s14, 1
        %s279 = scalar_select %p278, %s14, 1
        %s280 = smul.addr %s279, 18
        %s281 = smul.addr %s280, 8
        %s282 = scalar_lea.vmem %s2, %s281
      $region44: #{transition_block_down.1} parent=31 // pred_fallthru
        _
      // Predicated region
      $region45: #{transition_block_down.1} parent=31 // pred_check
        %p283 = pneg %p112
      $region46: #{transition_block_down.1} parent=31 // pred_check_branch
        %285 = sbr.rel (%p283) target = $region48
      $region47: #{transition_block_down.1} parent=31 // pred_region
        %p286 = scmp.lt.s32.totalorder %s14, 1
        %s287 = scalar_select %p286, %s14, 1
        %s288 = smul.addr %s287, 18
        %s289 = smul.addr %s288, 8
        %s290 = scalar_lea.vmem %s3, %s289
      $region48: #{transition_block_down.1} parent=31 // pred_fallthru
        _
    $region32: #{transition_block_down.1} parent=5 // pred_fallthru
      _
    %p291 = scmp.le.s32.totalorder 1, %s14
    %p292 = scmp.lt.s32.totalorder %s14, 3
    %p293 = pnand %p291, %p292
    %p294 = pneg %p293
    // Predicated region
    $region49: #{transition_block_down.1} parent=5 // pred_check
      _
    $region50: #{transition_block_down.1} parent=5 // pred_check_branch
      %296 = sbr.rel (%p293) target = $region52
    $region51: #{transition_block_down.1} parent=5 // pred_region
      %s297 = ssub.s32 %s14, 1
      %p298 = scmp.lt.s32.totalorder %s19, 1
      %s299 = scalar_select %p298, %s19, 1
      %s300 = smul.addr %s299, 18
      %s301 = smul.addr %s300, 8
      %s302 = scalar_lea.vmem %s0, %s301
      %p303 = pneg %p40
      %p304 = pneg %p37
      %p305 = scmp.lt.s32.totalorder %s19, 1
      %s306 = scalar_select %p305, %s19, 1
      %s307 = smul.addr %s306, 18
      %s308 = smul.addr %s307, 8
      %s309 = scalar_lea.vmem %s1, %s308
      %p310 = pneg %p66
      %p311 = pneg %p63
      %p312 = scmp.lt.s32.totalorder %s19, 1
      %s313 = scalar_select %p312, %s19, 1
      %s314 = smul.addr %s313, 18
      %s315 = smul.addr %s314, 8
      %s316 = scalar_lea.vmem %s2, %s315
      %p317 = pneg %p92
      %p318 = pneg %p89
      %p319 = scmp.lt.s32.totalorder %s19, 1
      %s320 = scalar_select %p319, %s19, 1
      %s321 = smul.addr %s320, 18
      %s322 = smul.addr %s321, 8
      %s323 = scalar_lea.vmem %s3, %s322
      %p324 = pneg %p118
      %p325 = pneg %p115
      %p326 = pneg %p139
      %p327 = pneg %p136
      %p328 = pneg %p160
      %p329 = pneg %p157
      %p330 = pneg %p181
      %p331 = pneg %p178
      %p332 = pneg %p202
      %p333 = pneg %p199
      %p334 = pneg %p228
      %p335 = pneg %p225
      %p336 = scmp.lt.s32.totalorder %s19, 1
      %s337 = scalar_select %p336, %s19, 1
      %s338 = smul.addr %s337, 8
      %s339 = smul.addr %s338, 8
      %s340 = scalar_lea.vmem %s8, %s339
      %p341 = scmp.lt.s32.totalorder %s19, 1
      %s342 = scalar_select %p341, %s19, 1
      %s343 = smul.addr %s342, 18
      %s344 = smul.addr %s343, 8
      %s345 = scalar_lea.vmem %s0, %s344
      %p346 = scmp.lt.s32.totalorder %s19, 1
      %s347 = scalar_select %p346, %s19, 1
      %s348 = smul.addr %s347, 18
      %s349 = smul.addr %s348, 8
      %s350 = scalar_lea.vmem %s1, %s349
      %p351 = scmp.lt.s32.totalorder %s19, 1
      %s352 = scalar_select %p351, %s19, 1
      %s353 = smul.addr %s352, 18
      %s354 = smul.addr %s353, 8
      %s355 = scalar_lea.vmem %s2, %s354
      %p356 = scmp.lt.s32.totalorder %s19, 1
      %s357 = scalar_select %p356, %s19, 1
      %s358 = smul.addr %s357, 18
      %s359 = smul.addr %s358, 8
      %s360 = scalar_lea.vmem %s3, %s359
      %p361 = scmp.lt.s32.totalorder %s19, 1
      %s362 = scalar_select %p361, %s19, 1
      %s363 = smul.addr %s362, 8
      %s364 = smul.addr %s363, 8
      %s365 = scalar_lea.vmem %s8, %s364
      %v366 = vld [vmem:[%s345] sm:$0xff]
      %v367 = vld [vmem:[%s345 + $0x10] sm:$0xff]
      %v368 = vld [vmem:[%s345 + $0x20] sm:$0xff]
      %v369 = vld [vmem:[%s345 + $0x30] sm:$0xff]
      %v370 = vld [vmem:[%s345 + $0x40] sm:$0xff]
      %v371 = vld [vmem:[%s345 + $0x50] sm:$0xff]
      %v372 = vld [vmem:[%s345 + $0x60] sm:$0xff]
      %v373 = vld [vmem:[%s345 + $0x70] sm:$0xff]
      %v374 = vld [vmem:[%s4] sm:$0xf]
      %v375 = vld [vmem:[%s350] sm:$0xff]
      %v376 = vld [vmem:[%s350 + $0x10] sm:$0xff]
      %v377 = vld [vmem:[%s350 + $0x20] sm:$0xff]
      %v378 = vld [vmem:[%s350 + $0x30] sm:$0xff]
      %v379 = vld [vmem:[%s350 + $0x40] sm:$0xff]
      %v380 = vld [vmem:[%s350 + $0x50] sm:$0xff]
      %v381 = vld [vmem:[%s350 + $0x60] sm:$0xff]
      %v382 = vld [vmem:[%s350 + $0x70] sm:$0xff]
      %s383 = scalar_lea.vmem %s4, 4
      %v384 = vld [vmem:[%s383] sm:$0xf]
      %vm385 = vcmask 31744
      %v387 = vsel %vm385, %v375, 0
      %v390 = vsel %vm385, %v376, 0
      %v393 = vsel %vm385, %v377, 0
      %v396 = vsel %vm385, %v378, 0
      %v399 = vsel %vm385, %v379, 0
      %v402 = vsel %vm385, %v380, 0
      %v405 = vsel %vm385, %v381, 0
      %v408 = vsel %vm385, %v382, 0
      %vm410 = vcmask 1043456
      %v412 = vsel %vm410, %v384, 0
      %414 = vmatpush.msra.mxu0 0.0
      %415 = vmatpush.msra.mxu0 0.0
      %416 = vmatpush.msra.mxu0 0.0
      %417 = vmatpush.msra.mxu0 0.0
      %418 = vmatpush.msra.mxu0 0.0
      %419 = vmatpush.msra.mxu0 0.0
      %420 = vmatpush.msra.mxu0 0.0
      %421 = vmatpush.msra.mxu0 0.0
      %422 = vmatpush.msra.mxu0 0.0
      %423 = vmatpush.msra.mxu0 0.0
      %424 = vmatpush.msra.mxu0 0.0
      %425 = vmatpush.msra.mxu0 0.0
      %426 = vmatpush.msra.mxu0 0.0
      %427 = vmatpush.msra.mxu0 0.0
      %428 = vmatpush.msra.mxu0 0.0
      %v429 = vand.u32 %v412, 4294901760
      %430 = vmatpush.msra.mxu0 %v429
      %v431 = vand.u32 %v387, 4294901760
      %v432 = vsub.f32 %v387, %v431
      %v433 = vand.u32 %v432, 4294901760
      %v434 = vsub.f32 %v432, %v433
      %v435 = vand.u32 %v434, 4294901760
      %436 = vmatmul.f32.gmra.mxu0 %v435
      %v437 = vpop.f32.mrf.mxu0
      %v438 = vadd.f32 0.0, %v437
      %v439 = vand.u32 %v390, 4294901760
      %v440 = vsub.f32 %v390, %v439
      %v441 = vand.u32 %v440, 4294901760
      %v442 = vsub.f32 %v440, %v441
      %v443 = vand.u32 %v442, 4294901760
      %444 = vmatmul.f32.gmra.mxu0 %v443
      %v445 = vpop.f32.mrf.mxu0
      %v446 = vadd.f32 0.0, %v445
      %v447 = vand.u32 %v393, 4294901760
      %v448 = vsub.f32 %v393, %v447
      %v449 = vand.u32 %v448, 4294901760
      %v450 = vsub.f32 %v448, %v449
      %v451 = vand.u32 %v450, 4294901760
      %452 = vmatmul.f32.gmra.mxu0 %v451
      %v453 = vpop.f32.mrf.mxu0
      %v454 = vadd.f32 0.0, %v453
      %v455 = vand.u32 %v396, 4294901760
      %v456 = vsub.f32 %v396, %v455
      %v457 = vand.u32 %v456, 4294901760
      %v458 = vsub.f32 %v456, %v457
      %v459 = vand.u32 %v458, 4294901760
      %460 = vmatmul.f32.gmra.mxu0 %v459
      %v461 = vpop.f32.mrf.mxu0
      %v462 = vadd.f32 0.0, %v461
      %v463 = vand.u32 %v399, 4294901760
      %v464 = vsub.f32 %v399, %v463
      %v465 = vand.u32 %v464, 4294901760
      %v466 = vsub.f32 %v464, %v465
      %v467 = vand.u32 %v466, 4294901760
      %468 = vmatmul.f32.gmra.mxu0 %v467
      %v469 = vpop.f32.mrf.mxu0
      %v470 = vadd.f32 0.0, %v469
      %v471 = vand.u32 %v402, 4294901760
      %v472 = vsub.f32 %v402, %v471
      %v473 = vand.u32 %v472, 4294901760
      %v474 = vsub.f32 %v472, %v473
      %v475 = vand.u32 %v474, 4294901760
      %476 = vmatmul.f32.gmra.mxu0 %v475
      %v477 = vpop.f32.mrf.mxu0
      %v478 = vadd.f32 0.0, %v477
      %v479 = vand.u32 %v405, 4294901760
      %v480 = vsub.f32 %v405, %v479
      %v481 = vand.u32 %v480, 4294901760
      %v482 = vsub.f32 %v480, %v481
      %v483 = vand.u32 %v482, 4294901760
      %484 = vmatmul.f32.gmra.mxu0 %v483
      %v485 = vpop.f32.mrf.mxu0
      %v486 = vadd.f32 0.0, %v485
      %v487 = vand.u32 %v408, 4294901760
      %v488 = vsub.f32 %v408, %v487
      %v489 = vand.u32 %v488, 4294901760
      %v490 = vsub.f32 %v488, %v489
      %v491 = vand.u32 %v490, 4294901760
      %492 = vmatmul.f32.gmra.mxu0 %v491
      %v493 = vpop.f32.mrf.mxu0
      %v494 = vadd.f32 0.0, %v493
      %495 = vdwg.mxu0
      %496 = vmatpush.msra.mxu0 0.0
      %497 = vmatpush.msra.mxu0 0.0
      %498 = vmatpush.msra.mxu0 0.0
      %499 = vmatpush.msra.mxu0 0.0
      %500 = vmatpush.msra.mxu0 0.0
      %501 = vmatpush.msra.mxu0 0.0
      %502 = vmatpush.msra.mxu0 0.0
      %503 = vmatpush.msra.mxu0 0.0
      %504 = vmatpush.msra.mxu0 0.0
      %505 = vmatpush.msra.mxu0 0.0
      %506 = vmatpush.msra.mxu0 0.0
      %507 = vmatpush.msra.mxu0 0.0
      %508 = vmatpush.msra.mxu0 0.0
      %509 = vmatpush.msra.mxu0 0.0
      %510 = vmatpush.msra.mxu0 0.0
      %v511 = vand.u32 %v412, 4294901760
      %v512 = vsub.f32 %v412, %v511
      %v513 = vand.u32 %v512, 4294901760
      %v514 = vsub.f32 %v512, %v513
      %v515 = vand.u32 %v514, 4294901760
      %516 = vmatpush.msra.mxu0 %v515
      %v517 = vand.u32 %v387, 4294901760
      %518 = vmatmul.f32.gmra.mxu0 %v517
      %v519 = vpop.f32.mrf.mxu0
      %v520 = vadd.f32 %v438, %v519
      %v521 = vand.u32 %v390, 4294901760
      %522 = vmatmul.f32.gmra.mxu0 %v521
      %v523 = vpop.f32.mrf.mxu0
      %v524 = vadd.f32 %v446, %v523
      %v525 = vand.u32 %v393, 4294901760
      %526 = vmatmul.f32.gmra.mxu0 %v525
      %v527 = vpop.f32.mrf.mxu0
      %v528 = vadd.f32 %v454, %v527
      %v529 = vand.u32 %v396, 4294901760
      %530 = vmatmul.f32.gmra.mxu0 %v529
      %v531 = vpop.f32.mrf.mxu0
      %v532 = vadd.f32 %v462, %v531
      %v533 = vand.u32 %v399, 4294901760
      %534 = vmatmul.f32.gmra.mxu0 %v533
      %v535 = vpop.f32.mrf.mxu0
      %v536 = vadd.f32 %v470, %v535
      %v537 = vand.u32 %v402, 4294901760
      %538 = vmatmul.f32.gmra.mxu0 %v537
      %v539 = vpop.f32.mrf.mxu0
      %v540 = vadd.f32 %v478, %v539
      %v541 = vand.u32 %v405, 4294901760
      %542 = vmatmul.f32.gmra.mxu0 %v541
      %v543 = vpop.f32.mrf.mxu0
      %v544 = vadd.f32 %v486, %v543
      %v545 = vand.u32 %v408, 4294901760
      %546 = vmatmul.f32.gmra.mxu0 %v545
      %v547 = vpop.f32.mrf.mxu0
      %v548 = vadd.f32 %v494, %v547
      %549 = vdwg.mxu0
      %550 = vmatpush.msra.mxu0 0.0
      %551 = vmatpush.msra.mxu0 0.0
      %552 = vmatpush.msra.mxu0 0.0
      %553 = vmatpush.msra.mxu0 0.0
      %554 = vmatpush.msra.mxu0 0.0
      %555 = vmatpush.msra.mxu0 0.0
      %556 = vmatpush.msra.mxu0 0.0
      %557 = vmatpush.msra.mxu0 0.0
      %558 = vmatpush.msra.mxu0 0.0
      %559 = vmatpush.msra.mxu0 0.0
      %560 = vmatpush.msra.mxu0 0.0
      %561 = vmatpush.msra.mxu0 0.0
      %562 = vmatpush.msra.mxu0 0.0
      %563 = vmatpush.msra.mxu0 0.0
      %564 = vmatpush.msra.mxu0 0.0
      %v565 = vand.u32 %v412, 4294901760
      %v566 = vsub.f32 %v412, %v565
      %567 = vmatpush.msra.mxu0 %v566
      %v568 = vand.u32 %v387, 4294901760
      %v569 = vsub.f32 %v387, %v568
      %570 = vmatmul.f32.gmra.mxu0 %v569
      %v571 = vpop.f32.mrf.mxu0
      %v572 = vadd.f32 %v520, %v571
      %v573 = vand.u32 %v390, 4294901760
      %v574 = vsub.f32 %v390, %v573
      %575 = vmatmul.f32.gmra.mxu0 %v574
      %v576 = vpop.f32.mrf.mxu0
      %v577 = vadd.f32 %v524, %v576
      %v578 = vand.u32 %v393, 4294901760
      %v579 = vsub.f32 %v393, %v578
      %580 = vmatmul.f32.gmra.mxu0 %v579
      %v581 = vpop.f32.mrf.mxu0
      %v582 = vadd.f32 %v528, %v581
      %v583 = vand.u32 %v396, 4294901760
      %v584 = vsub.f32 %v396, %v583
      %585 = vmatmul.f32.gmra.mxu0 %v584
      %v586 = vpop.f32.mrf.mxu0
      %v587 = vadd.f32 %v532, %v586
      %v588 = vand.u32 %v399, 4294901760
      %v589 = vsub.f32 %v399, %v588
      %590 = vmatmul.f32.gmra.mxu0 %v589
      %v591 = vpop.f32.mrf.mxu0
      %v592 = vadd.f32 %v536, %v591
      %v593 = vand.u32 %v402, 4294901760
      %v594 = vsub.f32 %v402, %v593
      %595 = vmatmul.f32.gmra.mxu0 %v594
      %v596 = vpop.f32.mrf.mxu0
      %v597 = vadd.f32 %v540, %v596
      %v598 = vand.u32 %v405, 4294901760
      %v599 = vsub.f32 %v405, %v598
      %600 = vmatmul.f32.gmra.mxu0 %v599
      %v601 = vpop.f32.mrf.mxu0
      %v602 = vadd.f32 %v544, %v601
      %v603 = vand.u32 %v408, 4294901760
      %v604 = vsub.f32 %v408, %v603
      %605 = vmatmul.f32.gmra.mxu0 %v604
      %v606 = vpop.f32.mrf.mxu0
      %v607 = vadd.f32 %v548, %v606
      %608 = vdwg.mxu0
      %609 = vmatpush.msra.mxu0 0.0
      %610 = vmatpush.msra.mxu0 0.0
      %611 = vmatpush.msra.mxu0 0.0
      %612 = vmatpush.msra.mxu0 0.0
      %613 = vmatpush.msra.mxu0 0.0
      %614 = vmatpush.msra.mxu0 0.0
      %615 = vmatpush.msra.mxu0 0.0
      %616 = vmatpush.msra.mxu0 0.0
      %617 = vmatpush.msra.mxu0 0.0
      %618 = vmatpush.msra.mxu0 0.0
      %619 = vmatpush.msra.mxu0 0.0
      %620 = vmatpush.msra.mxu0 0.0
      %621 = vmatpush.msra.mxu0 0.0
      %622 = vmatpush.msra.mxu0 0.0
      %623 = vmatpush.msra.mxu0 0.0
      %v624 = vand.u32 %v412, 4294901760
      %625 = vmatpush.msra.mxu0 %v624
      %v626 = vand.u32 %v387, 4294901760
      %v627 = vsub.f32 %v387, %v626
      %v628 = vand.u32 %v627, 4294901760
      %629 = vmatmul.f32.gmra.mxu0 %v628
      %v630 = vpop.f32.mrf.mxu0
      %v631 = vadd.f32 %v572, %v630
      %v632 = vand.u32 %v390, 4294901760
      %v633 = vsub.f32 %v390, %v632
      %v634 = vand.u32 %v633, 4294901760
      %635 = vmatmul.f32.gmra.mxu0 %v634
      %v636 = vpop.f32.mrf.mxu0
      %v637 = vadd.f32 %v577, %v636
      %v638 = vand.u32 %v393, 4294901760
      %v639 = vsub.f32 %v393, %v638
      %v640 = vand.u32 %v639, 4294901760
      %641 = vmatmul.f32.gmra.mxu0 %v640
      %v642 = vpop.f32.mrf.mxu0
      %v643 = vadd.f32 %v582, %v642
      %v644 = vand.u32 %v396, 4294901760
      %v645 = vsub.f32 %v396, %v644
      %v646 = vand.u32 %v645, 4294901760
      %647 = vmatmul.f32.gmra.mxu0 %v646
      %v648 = vpop.f32.mrf.mxu0
      %v649 = vadd.f32 %v587, %v648
      %v650 = vand.u32 %v399, 4294901760
      %v651 = vsub.f32 %v399, %v650
      %v652 = vand.u32 %v651, 4294901760
      %653 = vmatmul.f32.gmra.mxu0 %v652
      %v654 = vpop.f32.mrf.mxu0
      %v655 = vadd.f32 %v592, %v654
      %v656 = vand.u32 %v402, 4294901760
      %v657 = vsub.f32 %v402, %v656
      %v658 = vand.u32 %v657, 4294901760
      %659 = vmatmul.f32.gmra.mxu0 %v658
      %v660 = vpop.f32.mrf.mxu0
      %v661 = vadd.f32 %v597, %v660
      %v662 = vand.u32 %v405, 4294901760
      %v663 = vsub.f32 %v405, %v662
      %v664 = vand.u32 %v663, 4294901760
      %665 = vmatmul.f32.gmra.mxu0 %v664
      %v666 = vpop.f32.mrf.mxu0
      %v667 = vadd.f32 %v602, %v666
      %v668 = vand.u32 %v408, 4294901760
      %v669 = vsub.f32 %v408, %v668
      %v670 = vand.u32 %v669, 4294901760
      %671 = vmatmul.f32.gmra.mxu0 %v670
      %v672 = vpop.f32.mrf.mxu0
      %v673 = vadd.f32 %v607, %v672
      %674 = vdwg.mxu0
      %675 = vmatpush.msra.mxu0 0.0
      %676 = vmatpush.msra.mxu0 0.0
      %677 = vmatpush.msra.mxu0 0.0
      %678 = vmatpush.msra.mxu0 0.0
      %679 = vmatpush.msra.mxu0 0.0
      %680 = vmatpush.msra.mxu0 0.0
      %681 = vmatpush.msra.mxu0 0.0
      %682 = vmatpush.msra.mxu0 0.0
      %683 = vmatpush.msra.mxu0 0.0
      %684 = vmatpush.msra.mxu0 0.0
      %685 = vmatpush.msra.mxu0 0.0
      %686 = vmatpush.msra.mxu0 0.0
      %687 = vmatpush.msra.mxu0 0.0
      %688 = vmatpush.msra.mxu0 0.0
      %689 = vmatpush.msra.mxu0 0.0
      %v690 = vand.u32 %v412, 4294901760
      %v691 = vsub.f32 %v412, %v690
      %v692 = vand.u32 %v691, 4294901760
      %693 = vmatpush.msra.mxu0 %v692
      %v694 = vand.u32 %v387, 4294901760
      %695 = vmatmul.f32.gmra.mxu0 %v694
      %v696 = vpop.f32.mrf.mxu0
      %v697 = vadd.f32 %v631, %v696
      %v698 = vand.u32 %v390, 4294901760
      %699 = vmatmul.f32.gmra.mxu0 %v698
      %v700 = vpop.f32.mrf.mxu0
      %v701 = vadd.f32 %v637, %v700
      %v702 = vand.u32 %v393, 4294901760
      %703 = vmatmul.f32.gmra.mxu0 %v702
      %v704 = vpop.f32.mrf.mxu0
      %v705 = vadd.f32 %v643, %v704
      %v706 = vand.u32 %v396, 4294901760
      %707 = vmatmul.f32.gmra.mxu0 %v706
      %v708 = vpop.f32.mrf.mxu0
      %v709 = vadd.f32 %v649, %v708
      %v710 = vand.u32 %v399, 4294901760
      %711 = vmatmul.f32.gmra.mxu0 %v710
      %v712 = vpop.f32.mrf.mxu0
      %v713 = vadd.f32 %v655, %v712
      %v714 = vand.u32 %v402, 4294901760
      %715 = vmatmul.f32.gmra.mxu0 %v714
      %v716 = vpop.f32.mrf.mxu0
      %v717 = vadd.f32 %v661, %v716
      %v718 = vand.u32 %v405, 4294901760
      %719 = vmatmul.f32.gmra.mxu0 %v718
      %v720 = vpop.f32.mrf.mxu0
      %v721 = vadd.f32 %v667, %v720
      %v722 = vand.u32 %v408, 4294901760
      %723 = vmatmul.f32.gmra.mxu0 %v722
      %v724 = vpop.f32.mrf.mxu0
      %v725 = vadd.f32 %v673, %v724
      %726 = vdwg.mxu0
      %727 = vmatpush.msra.mxu0 0.0
      %728 = vmatpush.msra.mxu0 0.0
      %729 = vmatpush.msra.mxu0 0.0
      %730 = vmatpush.msra.mxu0 0.0
      %731 = vmatpush.msra.mxu0 0.0
      %732 = vmatpush.msra.mxu0 0.0
      %733 = vmatpush.msra.mxu0 0.0
      %734 = vmatpush.msra.mxu0 0.0
      %735 = vmatpush.msra.mxu0 0.0
      %736 = vmatpush.msra.mxu0 0.0
      %737 = vmatpush.msra.mxu0 0.0
      %738 = vmatpush.msra.mxu0 0.0
      %739 = vmatpush.msra.mxu0 0.0
      %740 = vmatpush.msra.mxu0 0.0
      %741 = vmatpush.msra.mxu0 0.0
      %v742 = vand.u32 %v412, 4294901760
      %743 = vmatpush.msra.mxu0 %v742
      %v744 = vand.u32 %v387, 4294901760
      %745 = vmatmul.f32.gmra.mxu0 %v744
      %v746 = vpop.f32.mrf.mxu0
      %v747 = vadd.f32 %v697, %v746
      %v748 = vand.u32 %v390, 4294901760
      %749 = vmatmul.f32.gmra.mxu0 %v748
      %v750 = vpop.f32.mrf.mxu0
      %v751 = vadd.f32 %v701, %v750
      %v752 = vand.u32 %v393, 4294901760
      %753 = vmatmul.f32.gmra.mxu0 %v752
      %v754 = vpop.f32.mrf.mxu0
      %v755 = vadd.f32 %v705, %v754
      %v756 = vand.u32 %v396, 4294901760
      %757 = vmatmul.f32.gmra.mxu0 %v756
      %v758 = vpop.f32.mrf.mxu0
      %v759 = vadd.f32 %v709, %v758
      %v760 = vand.u32 %v399, 4294901760
      %761 = vmatmul.f32.gmra.mxu0 %v760
      %v762 = vpop.f32.mrf.mxu0
      %v763 = vadd.f32 %v713, %v762
      %v764 = vand.u32 %v402, 4294901760
      %765 = vmatmul.f32.gmra.mxu0 %v764
      %v766 = vpop.f32.mrf.mxu0
      %v767 = vadd.f32 %v717, %v766
      %v768 = vand.u32 %v405, 4294901760
      %769 = vmatmul.f32.gmra.mxu0 %v768
      %v770 = vpop.f32.mrf.mxu0
      %v771 = vadd.f32 %v721, %v770
      %v772 = vand.u32 %v408, 4294901760
      %773 = vmatmul.f32.gmra.mxu0 %v772
      %v774 = vpop.f32.mrf.mxu0
      %v775 = vadd.f32 %v725, %v774
      %776 = vdwg.mxu0
      %v778 = vsel %vm385, %v366, 0
      %v781 = vsel %vm385, %v367, 0
      %v784 = vsel %vm385, %v368, 0
      %v787 = vsel %vm385, %v369, 0
      %v790 = vsel %vm385, %v370, 0
      %v793 = vsel %vm385, %v371, 0
      %v796 = vsel %vm385, %v372, 0
      %v799 = vsel %vm385, %v373, 0
      %v802 = vsel %vm410, %v374, 0
      %804 = vmatpush.msra.mxu0 0.0
      %805 = vmatpush.msra.mxu0 0.0
      %806 = vmatpush.msra.mxu0 0.0
      %807 = vmatpush.msra.mxu0 0.0
      %808 = vmatpush.msra.mxu0 0.0
      %809 = vmatpush.msra.mxu0 0.0
      %810 = vmatpush.msra.mxu0 0.0
      %811 = vmatpush.msra.mxu0 0.0
      %812 = vmatpush.msra.mxu0 0.0
      %813 = vmatpush.msra.mxu0 0.0
      %814 = vmatpush.msra.mxu0 0.0
      %815 = vmatpush.msra.mxu0 0.0
      %816 = vmatpush.msra.mxu0 0.0
      %817 = vmatpush.msra.mxu0 0.0
      %818 = vmatpush.msra.mxu0 0.0
      %v819 = vand.u32 %v802, 4294901760
      %820 = vmatpush.msra.mxu0 %v819
      %v821 = vand.u32 %v778, 4294901760
      %v822 = vsub.f32 %v778, %v821
      %v823 = vand.u32 %v822, 4294901760
      %v824 = vsub.f32 %v822, %v823
      %v825 = vand.u32 %v824, 4294901760
      %826 = vmatmul.f32.gmra.mxu0 %v825
      %v827 = vpop.f32.mrf.mxu0
      %v828 = vadd.f32 %v747, %v827
      %v829 = vand.u32 %v781, 4294901760
      %v830 = vsub.f32 %v781, %v829
      %v831 = vand.u32 %v830, 4294901760
      %v832 = vsub.f32 %v830, %v831
      %v833 = vand.u32 %v832, 4294901760
      %834 = vmatmul.f32.gmra.mxu0 %v833
      %v835 = vpop.f32.mrf.mxu0
      %v836 = vadd.f32 %v751, %v835
      %v837 = vand.u32 %v784, 4294901760
      %v838 = vsub.f32 %v784, %v837
      %v839 = vand.u32 %v838, 4294901760
      %v840 = vsub.f32 %v838, %v839
      %v841 = vand.u32 %v840, 4294901760
      %842 = vmatmul.f32.gmra.mxu0 %v841
      %v843 = vpop.f32.mrf.mxu0
      %v844 = vadd.f32 %v755, %v843
      %v845 = vand.u32 %v787, 4294901760
      %v846 = vsub.f32 %v787, %v845
      %v847 = vand.u32 %v846, 4294901760
      %v848 = vsub.f32 %v846, %v847
      %v849 = vand.u32 %v848, 4294901760
      %850 = vmatmul.f32.gmra.mxu0 %v849
      %v851 = vpop.f32.mrf.mxu0
      %v852 = vadd.f32 %v759, %v851
      %v853 = vand.u32 %v790, 4294901760
      %v854 = vsub.f32 %v790, %v853
      %v855 = vand.u32 %v854, 4294901760
      %v856 = vsub.f32 %v854, %v855
      %v857 = vand.u32 %v856, 4294901760
      %858 = vmatmul.f32.gmra.mxu0 %v857
      %v859 = vpop.f32.mrf.mxu0
      %v860 = vadd.f32 %v763, %v859
      %v861 = vand.u32 %v793, 4294901760
      %v862 = vsub.f32 %v793, %v861
      %v863 = vand.u32 %v862, 4294901760
      %v864 = vsub.f32 %v862, %v863
      %v865 = vand.u32 %v864, 4294901760
      %866 = vmatmul.f32.gmra.mxu0 %v865
      %v867 = vpop.f32.mrf.mxu0
      %v868 = vadd.f32 %v767, %v867
      %v869 = vand.u32 %v796, 4294901760
      %v870 = vsub.f32 %v796, %v869
      %v871 = vand.u32 %v870, 4294901760
      %v872 = vsub.f32 %v870, %v871
      %v873 = vand.u32 %v872, 4294901760
      %874 = vmatmul.f32.gmra.mxu0 %v873
      %v875 = vpop.f32.mrf.mxu0
      %v876 = vadd.f32 %v771, %v875
      %v877 = vand.u32 %v799, 4294901760
      %v878 = vsub.f32 %v799, %v877
      %v879 = vand.u32 %v878, 4294901760
      %v880 = vsub.f32 %v878, %v879
      %v881 = vand.u32 %v880, 4294901760
      %882 = vmatmul.f32.gmra.mxu0 %v881
      %v883 = vpop.f32.mrf.mxu0
      %v884 = vadd.f32 %v775, %v883
      %885 = vdwg.mxu0
      %886 = vmatpush.msra.mxu0 0.0
      %887 = vmatpush.msra.mxu0 0.0
      %888 = vmatpush.msra.mxu0 0.0
      %889 = vmatpush.msra.mxu0 0.0
      %890 = vmatpush.msra.mxu0 0.0
      %891 = vmatpush.msra.mxu0 0.0
      %892 = vmatpush.msra.mxu0 0.0
      %893 = vmatpush.msra.mxu0 0.0
      %894 = vmatpush.msra.mxu0 0.0
      %895 = vmatpush.msra.mxu0 0.0
      %896 = vmatpush.msra.mxu0 0.0
      %897 = vmatpush.msra.mxu0 0.0
      %898 = vmatpush.msra.mxu0 0.0
      %899 = vmatpush.msra.mxu0 0.0
      %900 = vmatpush.msra.mxu0 0.0
      %v901 = vand.u32 %v802, 4294901760
      %v902 = vsub.f32 %v802, %v901
      %v903 = vand.u32 %v902, 4294901760
      %v904 = vsub.f32 %v902, %v903
      %v905 = vand.u32 %v904, 4294901760
      %906 = vmatpush.msra.mxu0 %v905
      %v907 = vand.u32 %v778, 4294901760
      %908 = vmatmul.f32.gmra.mxu0 %v907
      %v909 = vpop.f32.mrf.mxu0
      %v910 = vadd.f32 %v828, %v909
      %v911 = vand.u32 %v781, 4294901760
      %912 = vmatmul.f32.gmra.mxu0 %v911
      %v913 = vpop.f32.mrf.mxu0
      %v914 = vadd.f32 %v836, %v913
      %v915 = vand.u32 %v784, 4294901760
      %916 = vmatmul.f32.gmra.mxu0 %v915
      %v917 = vpop.f32.mrf.mxu0
      %v918 = vadd.f32 %v844, %v917
      %v919 = vand.u32 %v787, 4294901760
      %920 = vmatmul.f32.gmra.mxu0 %v919
      %v921 = vpop.f32.mrf.mxu0
      %v922 = vadd.f32 %v852, %v921
      %v923 = vand.u32 %v790, 4294901760
      %924 = vmatmul.f32.gmra.mxu0 %v923
      %v925 = vpop.f32.mrf.mxu0
      %v926 = vadd.f32 %v860, %v925
      %v927 = vand.u32 %v793, 4294901760
      %928 = vmatmul.f32.gmra.mxu0 %v927
      %v929 = vpop.f32.mrf.mxu0
      %v930 = vadd.f32 %v868, %v929
      %v931 = vand.u32 %v796, 4294901760
      %932 = vmatmul.f32.gmra.mxu0 %v931
      %v933 = vpop.f32.mrf.mxu0
      %v934 = vadd.f32 %v876, %v933
      %v935 = vand.u32 %v799, 4294901760
      %936 = vmatmul.f32.gmra.mxu0 %v935
      %v937 = vpop.f32.mrf.mxu0
      %v938 = vadd.f32 %v884, %v937
      %939 = vdwg.mxu0
      %940 = vmatpush.msra.mxu0 0.0
      %941 = vmatpush.msra.mxu0 0.0
      %942 = vmatpush.msra.mxu0 0.0
      %943 = vmatpush.msra.mxu0 0.0
      %944 = vmatpush.msra.mxu0 0.0
      %945 = vmatpush.msra.mxu0 0.0
      %946 = vmatpush.msra.mxu0 0.0
      %947 = vmatpush.msra.mxu0 0.0
      %948 = vmatpush.msra.mxu0 0.0
      %949 = vmatpush.msra.mxu0 0.0
      %950 = vmatpush.msra.mxu0 0.0
      %951 = vmatpush.msra.mxu0 0.0
      %952 = vmatpush.msra.mxu0 0.0
      %953 = vmatpush.msra.mxu0 0.0
      %954 = vmatpush.msra.mxu0 0.0
      %v955 = vand.u32 %v802, 4294901760
      %v956 = vsub.f32 %v802, %v955
      %957 = vmatpush.msra.mxu0 %v956
      %v958 = vand.u32 %v778, 4294901760
      %v959 = vsub.f32 %v778, %v958
      %960 = vmatmul.f32.gmra.mxu0 %v959
      %v961 = vpop.f32.mrf.mxu0
      %v962 = vadd.f32 %v910, %v961
      %v963 = vand.u32 %v781, 4294901760
      %v964 = vsub.f32 %v781, %v963
      %965 = vmatmul.f32.gmra.mxu0 %v964
      %v966 = vpop.f32.mrf.mxu0
      %v967 = vadd.f32 %v914, %v966
      %v968 = vand.u32 %v784, 4294901760
      %v969 = vsub.f32 %v784, %v968
      %970 = vmatmul.f32.gmra.mxu0 %v969
      %v971 = vpop.f32.mrf.mxu0
      %v972 = vadd.f32 %v918, %v971
      %v973 = vand.u32 %v787, 4294901760
      %v974 = vsub.f32 %v787, %v973
      %975 = vmatmul.f32.gmra.mxu0 %v974
      %v976 = vpop.f32.mrf.mxu0
      %v977 = vadd.f32 %v922, %v976
      %v978 = vand.u32 %v790, 4294901760
      %v979 = vsub.f32 %v790, %v978
      %980 = vmatmul.f32.gmra.mxu0 %v979
      %v981 = vpop.f32.mrf.mxu0
      %v982 = vadd.f32 %v926, %v981
      %v983 = vand.u32 %v793, 4294901760
      %v984 = vsub.f32 %v793, %v983
      %985 = vmatmul.f32.gmra.mxu0 %v984
      %v986 = vpop.f32.mrf.mxu0
      %v987 = vadd.f32 %v930, %v986
      %v988 = vand.u32 %v796, 4294901760
      %v989 = vsub.f32 %v796, %v988
      %990 = vmatmul.f32.gmra.mxu0 %v989
      %v991 = vpop.f32.mrf.mxu0
      %v992 = vadd.f32 %v934, %v991
      %v993 = vand.u32 %v799, 4294901760
      %v994 = vsub.f32 %v799, %v993
      %995 = vmatmul.f32.gmra.mxu0 %v994
      %v996 = vpop.f32.mrf.mxu0
      %v997 = vadd.f32 %v938, %v996
      %998 = vdwg.mxu0
      %999 = vmatpush.msra.mxu0 0.0
      %1000 = vmatpush.msra.mxu0 0.0
      %1001 = vmatpush.msra.mxu0 0.0
      %1002 = vmatpush.msra.mxu0 0.0
      %1003 = vmatpush.msra.mxu0 0.0
      %1004 = vmatpush.msra.mxu0 0.0
      %1005 = vmatpush.msra.mxu0 0.0
      %1006 = vmatpush.msra.mxu0 0.0
      %1007 = vmatpush.msra.mxu0 0.0
      %1008 = vmatpush.msra.mxu0 0.0
      %1009 = vmatpush.msra.mxu0 0.0
      %1010 = vmatpush.msra.mxu0 0.0
      %1011 = vmatpush.msra.mxu0 0.0
      %1012 = vmatpush.msra.mxu0 0.0
      %1013 = vmatpush.msra.mxu0 0.0
      %v1014 = vand.u32 %v802, 4294901760
      %1015 = vmatpush.msra.mxu0 %v1014
      %v1016 = vand.u32 %v778, 4294901760
      %v1017 = vsub.f32 %v778, %v1016
      %v1018 = vand.u32 %v1017, 4294901760
      %1019 = vmatmul.f32.gmra.mxu0 %v1018
      %v1020 = vpop.f32.mrf.mxu0
      %v1021 = vadd.f32 %v962, %v1020
      %v1022 = vand.u32 %v781, 4294901760
      %v1023 = vsub.f32 %v781, %v1022
      %v1024 = vand.u32 %v1023, 4294901760
      %1025 = vmatmul.f32.gmra.mxu0 %v1024
      %v1026 = vpop.f32.mrf.mxu0
      %v1027 = vadd.f32 %v967, %v1026
      %v1028 = vand.u32 %v784, 4294901760
      %v1029 = vsub.f32 %v784, %v1028
      %v1030 = vand.u32 %v1029, 4294901760
      %1031 = vmatmul.f32.gmra.mxu0 %v1030
      %v1032 = vpop.f32.mrf.mxu0
      %v1033 = vadd.f32 %v972, %v1032
      %v1034 = vand.u32 %v787, 4294901760
      %v1035 = vsub.f32 %v787, %v1034
      %v1036 = vand.u32 %v1035, 4294901760
      %1037 = vmatmul.f32.gmra.mxu0 %v1036
      %v1038 = vpop.f32.mrf.mxu0
      %v1039 = vadd.f32 %v977, %v1038
      %v1040 = vand.u32 %v790, 4294901760
      %v1041 = vsub.f32 %v790, %v1040
      %v1042 = vand.u32 %v1041, 4294901760
      %1043 = vmatmul.f32.gmra.mxu0 %v1042
      %v1044 = vpop.f32.mrf.mxu0
      %v1045 = vadd.f32 %v982, %v1044
      %v1046 = vand.u32 %v793, 4294901760
      %v1047 = vsub.f32 %v793, %v1046
      %v1048 = vand.u32 %v1047, 4294901760
      %1049 = vmatmul.f32.gmra.mxu0 %v1048
      %v1050 = vpop.f32.mrf.mxu0
      %v1051 = vadd.f32 %v987, %v1050
      %v1052 = vand.u32 %v796, 4294901760
      %v1053 = vsub.f32 %v796, %v1052
      %v1054 = vand.u32 %v1053, 4294901760
      %1055 = vmatmul.f32.gmra.mxu0 %v1054
      %v1056 = vpop.f32.mrf.mxu0
      %v1057 = vadd.f32 %v992, %v1056
      %v1058 = vand.u32 %v799, 4294901760
      %v1059 = vsub.f32 %v799, %v1058
      %v1060 = vand.u32 %v1059, 4294901760
      %1061 = vmatmul.f32.gmra.mxu0 %v1060
      %v1062 = vpop.f32.mrf.mxu0
      %v1063 = vadd.f32 %v997, %v1062
      %1064 = vdwg.mxu0
      %1065 = vmatpush.msra.mxu0 0.0
      %1066 = vmatpush.msra.mxu0 0.0
      %1067 = vmatpush.msra.mxu0 0.0
      %1068 = vmatpush.msra.mxu0 0.0
      %1069 = vmatpush.msra.mxu0 0.0
      %1070 = vmatpush.msra.mxu0 0.0
      %1071 = vmatpush.msra.mxu0 0.0
      %1072 = vmatpush.msra.mxu0 0.0
      %1073 = vmatpush.msra.mxu0 0.0
      %1074 = vmatpush.msra.mxu0 0.0
      %1075 = vmatpush.msra.mxu0 0.0
      %1076 = vmatpush.msra.mxu0 0.0
      %1077 = vmatpush.msra.mxu0 0.0
      %1078 = vmatpush.msra.mxu0 0.0
      %1079 = vmatpush.msra.mxu0 0.0
      %v1080 = vand.u32 %v802, 4294901760
      %v1081 = vsub.f32 %v802, %v1080
      %v1082 = vand.u32 %v1081, 4294901760
      %1083 = vmatpush.msra.mxu0 %v1082
      %v1084 = vand.u32 %v778, 4294901760
      %1085 = vmatmul.f32.gmra.mxu0 %v1084
      %v1086 = vpop.f32.mrf.mxu0
      %v1087 = vadd.f32 %v1021, %v1086
      %v1088 = vand.u32 %v781, 4294901760
      %1089 = vmatmul.f32.gmra.mxu0 %v1088
      %v1090 = vpop.f32.mrf.mxu0
      %v1091 = vadd.f32 %v1027, %v1090
      %v1092 = vand.u32 %v784, 4294901760
      %1093 = vmatmul.f32.gmra.mxu0 %v1092
      %v1094 = vpop.f32.mrf.mxu0
      %v1095 = vadd.f32 %v1033, %v1094
      %v1096 = vand.u32 %v787, 4294901760
      %1097 = vmatmul.f32.gmra.mxu0 %v1096
      %v1098 = vpop.f32.mrf.mxu0
      %v1099 = vadd.f32 %v1039, %v1098
      %v1100 = vand.u32 %v790, 4294901760
      %1101 = vmatmul.f32.gmra.mxu0 %v1100
      %v1102 = vpop.f32.mrf.mxu0
      %v1103 = vadd.f32 %v1045, %v1102
      %v1104 = vand.u32 %v793, 4294901760
      %1105 = vmatmul.f32.gmra.mxu0 %v1104
      %v1106 = vpop.f32.mrf.mxu0
      %v1107 = vadd.f32 %v1051, %v1106
      %v1108 = vand.u32 %v796, 4294901760
      %1109 = vmatmul.f32.gmra.mxu0 %v1108
      %v1110 = vpop.f32.mrf.mxu0
      %v1111 = vadd.f32 %v1057, %v1110
      %v1112 = vand.u32 %v799, 4294901760
      %1113 = vmatmul.f32.gmra.mxu0 %v1112
      %v1114 = vpop.f32.mrf.mxu0
      %v1115 = vadd.f32 %v1063, %v1114
      %1116 = vdwg.mxu0
      %1117 = vmatpush.msra.mxu0 0.0
      %1118 = vmatpush.msra.mxu0 0.0
      %1119 = vmatpush.msra.mxu0 0.0
      %1120 = vmatpush.msra.mxu0 0.0
      %1121 = vmatpush.msra.mxu0 0.0
      %1122 = vmatpush.msra.mxu0 0.0
      %1123 = vmatpush.msra.mxu0 0.0
      %1124 = vmatpush.msra.mxu0 0.0
      %1125 = vmatpush.msra.mxu0 0.0
      %1126 = vmatpush.msra.mxu0 0.0
      %1127 = vmatpush.msra.mxu0 0.0
      %1128 = vmatpush.msra.mxu0 0.0
      %1129 = vmatpush.msra.mxu0 0.0
      %1130 = vmatpush.msra.mxu0 0.0
      %1131 = vmatpush.msra.mxu0 0.0
      %v1132 = vand.u32 %v802, 4294901760
      %1133 = vmatpush.msra.mxu0 %v1132
      %v1134 = vand.u32 %v778, 4294901760
      %1135 = vmatmul.f32.gmra.mxu0 %v1134
      %v1136 = vpop.f32.mrf.mxu0
      %v1137 = vadd.f32 %v1087, %v1136
      %v1138 = vand.u32 %v781, 4294901760
      %1139 = vmatmul.f32.gmra.mxu0 %v1138
      %v1140 = vpop.f32.mrf.mxu0
      %v1141 = vadd.f32 %v1091, %v1140
      %v1142 = vand.u32 %v784, 4294901760
      %1143 = vmatmul.f32.gmra.mxu0 %v1142
      %v1144 = vpop.f32.mrf.mxu0
      %v1145 = vadd.f32 %v1095, %v1144
      %v1146 = vand.u32 %v787, 4294901760
      %1147 = vmatmul.f32.gmra.mxu0 %v1146
      %v1148 = vpop.f32.mrf.mxu0
      %v1149 = vadd.f32 %v1099, %v1148
      %v1150 = vand.u32 %v790, 4294901760
      %1151 = vmatmul.f32.gmra.mxu0 %v1150
      %v1152 = vpop.f32.mrf.mxu0
      %v1153 = vadd.f32 %v1103, %v1152
      %v1154 = vand.u32 %v793, 4294901760
      %1155 = vmatmul.f32.gmra.mxu0 %v1154
      %v1156 = vpop.f32.mrf.mxu0
      %v1157 = vadd.f32 %v1107, %v1156
      %v1158 = vand.u32 %v796, 4294901760
      %1159 = vmatmul.f32.gmra.mxu0 %v1158
      %v1160 = vpop.f32.mrf.mxu0
      %v1161 = vadd.f32 %v1111, %v1160
      %v1162 = vand.u32 %v799, 4294901760
      %1163 = vmatmul.f32.gmra.mxu0 %v1162
      %v1164 = vpop.f32.mrf.mxu0
      %v1165 = vadd.f32 %v1115, %v1164
      %1166 = vdwg.mxu0
      %v1167 = vld [vmem:[%s345 + $0x1] sm:$0xff]
      %v1168 = vld [vmem:[%s345 + $0x11] sm:$0xff]
      %v1169 = vld [vmem:[%s345 + $0x21] sm:$0xff]
      %v1170 = vld [vmem:[%s345 + $0x31] sm:$0xff]
      %v1171 = vld [vmem:[%s345 + $0x41] sm:$0xff]
      %v1172 = vld [vmem:[%s345 + $0x51] sm:$0xff]
      %v1173 = vld [vmem:[%s345 + $0x61] sm:$0xff]
      %v1174 = vld [vmem:[%s345 + $0x71] sm:$0xff]
      %s1175 = scalar_lea.vmem %s4, 8
      %v1176 = vld [vmem:[%s1175] sm:$0xf]
      %v1178 = vsel %vm385, %v1167, 0
      %v1181 = vsel %vm385, %v1168, 0
      %v1184 = vsel %vm385, %v1169, 0
      %v1187 = vsel %vm385, %v1170, 0
      %v1190 = vsel %vm385, %v1171, 0
      %v1193 = vsel %vm385, %v1172, 0
      %v1196 = vsel %vm385, %v1173, 0
      %v1199 = vsel %vm385, %v1174, 0
      %v1202 = vsel %vm410, %v1176, 0
      %1204 = vmatpush.msra.mxu0 0.0
      %1205 = vmatpush.msra.mxu0 0.0
      %1206 = vmatpush.msra.mxu0 0.0
      %1207 = vmatpush.msra.mxu0 0.0
      %1208 = vmatpush.msra.mxu0 0.0
      %1209 = vmatpush.msra.mxu0 0.0
      %1210 = vmatpush.msra.mxu0 0.0
      %1211 = vmatpush.msra.mxu0 0.0
      %1212 = vmatpush.msra.mxu0 0.0
      %1213 = vmatpush.msra.mxu0 0.0
      %1214 = vmatpush.msra.mxu0 0.0
      %1215 = vmatpush.msra.mxu0 0.0
      %1216 = vmatpush.msra.mxu0 0.0
      %1217 = vmatpush.msra.mxu0 0.0
      %1218 = vmatpush.msra.mxu0 0.0
      %v1219 = vand.u32 %v1202, 4294901760
      %1220 = vmatpush.msra.mxu0 %v1219
      %v1221 = vand.u32 %v1178, 4294901760
      %v1222 = vsub.f32 %v1178, %v1221
      %v1223 = vand.u32 %v1222, 4294901760
      %v1224 = vsub.f32 %v1222, %v1223
      %v1225 = vand.u32 %v1224, 4294901760
      %1226 = vmatmul.f32.gmra.mxu0 %v1225
      %v1227 = vpop.f32.mrf.mxu0
      %v1228 = vadd.f32 0.0, %v1227
      %v1229 = vand.u32 %v1181, 4294901760
      %v1230 = vsub.f32 %v1181, %v1229
      %v1231 = vand.u32 %v1230, 4294901760
      %v1232 = vsub.f32 %v1230, %v1231
      %v1233 = vand.u32 %v1232, 4294901760
      %1234 = vmatmul.f32.gmra.mxu0 %v1233
      %v1235 = vpop.f32.mrf.mxu0
      %v1236 = vadd.f32 0.0, %v1235
      %v1237 = vand.u32 %v1184, 4294901760
      %v1238 = vsub.f32 %v1184, %v1237
      %v1239 = vand.u32 %v1238, 4294901760
      %v1240 = vsub.f32 %v1238, %v1239
      %v1241 = vand.u32 %v1240, 4294901760
      %1242 = vmatmul.f32.gmra.mxu0 %v1241
      %v1243 = vpop.f32.mrf.mxu0
      %v1244 = vadd.f32 0.0, %v1243
      %v1245 = vand.u32 %v1187, 4294901760
      %v1246 = vsub.f32 %v1187, %v1245
      %v1247 = vand.u32 %v1246, 4294901760
      %v1248 = vsub.f32 %v1246, %v1247
      %v1249 = vand.u32 %v1248, 4294901760
      %1250 = vmatmul.f32.gmra.mxu0 %v1249
      %v1251 = vpop.f32.mrf.mxu0
      %v1252 = vadd.f32 0.0, %v1251
      %v1253 = vand.u32 %v1190, 4294901760
      %v1254 = vsub.f32 %v1190, %v1253
      %v1255 = vand.u32 %v1254, 4294901760
      %v1256 = vsub.f32 %v1254, %v1255
      %v1257 = vand.u32 %v1256, 4294901760
      %1258 = vmatmul.f32.gmra.mxu0 %v1257
      %v1259 = vpop.f32.mrf.mxu0
      %v1260 = vadd.f32 0.0, %v1259
      %v1261 = vand.u32 %v1193, 4294901760
      %v1262 = vsub.f32 %v1193, %v1261
      %v1263 = vand.u32 %v1262, 4294901760
      %v1264 = vsub.f32 %v1262, %v1263
      %v1265 = vand.u32 %v1264, 4294901760
      %1266 = vmatmul.f32.gmra.mxu0 %v1265
      %v1267 = vpop.f32.mrf.mxu0
      %v1268 = vadd.f32 0.0, %v1267
      %v1269 = vand.u32 %v1196, 4294901760
      %v1270 = vsub.f32 %v1196, %v1269
      %v1271 = vand.u32 %v1270, 4294901760
      %v1272 = vsub.f32 %v1270, %v1271
      %v1273 = vand.u32 %v1272, 4294901760
      %1274 = vmatmul.f32.gmra.mxu0 %v1273
      %v1275 = vpop.f32.mrf.mxu0
      %v1276 = vadd.f32 0.0, %v1275
      %v1277 = vand.u32 %v1199, 4294901760
      %v1278 = vsub.f32 %v1199, %v1277
      %v1279 = vand.u32 %v1278, 4294901760
      %v1280 = vsub.f32 %v1278, %v1279
      %v1281 = vand.u32 %v1280, 4294901760
      %1282 = vmatmul.f32.gmra.mxu0 %v1281
      %v1283 = vpop.f32.mrf.mxu0
      %v1284 = vadd.f32 0.0, %v1283
      %1285 = vdwg.mxu0
      %1286 = vmatpush.msra.mxu0 0.0
      %1287 = vmatpush.msra.mxu0 0.0
      %1288 = vmatpush.msra.mxu0 0.0
      %1289 = vmatpush.msra.mxu0 0.0
      %1290 = vmatpush.msra.mxu0 0.0
      %1291 = vmatpush.msra.mxu0 0.0
      %1292 = vmatpush.msra.mxu0 0.0
      %1293 = vmatpush.msra.mxu0 0.0
      %1294 = vmatpush.msra.mxu0 0.0
      %1295 = vmatpush.msra.mxu0 0.0
      %1296 = vmatpush.msra.mxu0 0.0
      %1297 = vmatpush.msra.mxu0 0.0
      %1298 = vmatpush.msra.mxu0 0.0
      %1299 = vmatpush.msra.mxu0 0.0
      %1300 = vmatpush.msra.mxu0 0.0
      %v1301 = vand.u32 %v1202, 4294901760
      %v1302 = vsub.f32 %v1202, %v1301
      %v1303 = vand.u32 %v1302, 4294901760
      %v1304 = vsub.f32 %v1302, %v1303
      %v1305 = vand.u32 %v1304, 4294901760
      %1306 = vmatpush.msra.mxu0 %v1305
      %v1307 = vand.u32 %v1178, 4294901760
      %1308 = vmatmul.f32.gmra.mxu0 %v1307
      %v1309 = vpop.f32.mrf.mxu0
      %v1310 = vadd.f32 %v1228, %v1309
      %v1311 = vand.u32 %v1181, 4294901760
      %1312 = vmatmul.f32.gmra.mxu0 %v1311
      %v1313 = vpop.f32.mrf.mxu0
      %v1314 = vadd.f32 %v1236, %v1313
      %v1315 = vand.u32 %v1184, 4294901760
      %1316 = vmatmul.f32.gmra.mxu0 %v1315
      %v1317 = vpop.f32.mrf.mxu0
      %v1318 = vadd.f32 %v1244, %v1317
      %v1319 = vand.u32 %v1187, 4294901760
      %1320 = vmatmul.f32.gmra.mxu0 %v1319
      %v1321 = vpop.f32.mrf.mxu0
      %v1322 = vadd.f32 %v1252, %v1321
      %v1323 = vand.u32 %v1190, 4294901760
      %1324 = vmatmul.f32.gmra.mxu0 %v1323
      %v1325 = vpop.f32.mrf.mxu0
      %v1326 = vadd.f32 %v1260, %v1325
      %v1327 = vand.u32 %v1193, 4294901760
      %1328 = vmatmul.f32.gmra.mxu0 %v1327
      %v1329 = vpop.f32.mrf.mxu0
      %v1330 = vadd.f32 %v1268, %v1329
      %v1331 = vand.u32 %v1196, 4294901760
      %1332 = vmatmul.f32.gmra.mxu0 %v1331
      %v1333 = vpop.f32.mrf.mxu0
      %v1334 = vadd.f32 %v1276, %v1333
      %v1335 = vand.u32 %v1199, 4294901760
      %1336 = vmatmul.f32.gmra.mxu0 %v1335
      %v1337 = vpop.f32.mrf.mxu0
      %v1338 = vadd.f32 %v1284, %v1337
      %1339 = vdwg.mxu0
      %1340 = vmatpush.msra.mxu0 0.0
      %1341 = vmatpush.msra.mxu0 0.0
      %1342 = vmatpush.msra.mxu0 0.0
      %1343 = vmatpush.msra.mxu0 0.0
      %1344 = vmatpush.msra.mxu0 0.0
      %1345 = vmatpush.msra.mxu0 0.0
      %1346 = vmatpush.msra.mxu0 0.0
      %1347 = vmatpush.msra.mxu0 0.0
      %1348 = vmatpush.msra.mxu0 0.0
      %1349 = vmatpush.msra.mxu0 0.0
      %1350 = vmatpush.msra.mxu0 0.0
      %1351 = vmatpush.msra.mxu0 0.0
      %1352 = vmatpush.msra.mxu0 0.0
      %1353 = vmatpush.msra.mxu0 0.0
      %1354 = vmatpush.msra.mxu0 0.0
      %v1355 = vand.u32 %v1202, 4294901760
      %v1356 = vsub.f32 %v1202, %v1355
      %1357 = vmatpush.msra.mxu0 %v1356
      %v1358 = vand.u32 %v1178, 4294901760
      %v1359 = vsub.f32 %v1178, %v1358
      %1360 = vmatmul.f32.gmra.mxu0 %v1359
      %v1361 = vpop.f32.mrf.mxu0
      %v1362 = vadd.f32 %v1310, %v1361
      %v1363 = vand.u32 %v1181, 4294901760
      %v1364 = vsub.f32 %v1181, %v1363
      %1365 = vmatmul.f32.gmra.mxu0 %v1364
      %v1366 = vpop.f32.mrf.mxu0
      %v1367 = vadd.f32 %v1314, %v1366
      %v1368 = vand.u32 %v1184, 4294901760
      %v1369 = vsub.f32 %v1184, %v1368
      %1370 = vmatmul.f32.gmra.mxu0 %v1369
      %v1371 = vpop.f32.mrf.mxu0
      %v1372 = vadd.f32 %v1318, %v1371
      %v1373 = vand.u32 %v1187, 4294901760
      %v1374 = vsub.f32 %v1187, %v1373
      %1375 = vmatmul.f32.gmra.mxu0 %v1374
      %v1376 = vpop.f32.mrf.mxu0
      %v1377 = vadd.f32 %v1322, %v1376
      %v1378 = vand.u32 %v1190, 4294901760
      %v1379 = vsub.f32 %v1190, %v1378
      %1380 = vmatmul.f32.gmra.mxu0 %v1379
      %v1381 = vpop.f32.mrf.mxu0
      %v1382 = vadd.f32 %v1326, %v1381
      %v1383 = vand.u32 %v1193, 4294901760
      %v1384 = vsub.f32 %v1193, %v1383
      %1385 = vmatmul.f32.gmra.mxu0 %v1384
      %v1386 = vpop.f32.mrf.mxu0
      %v1387 = vadd.f32 %v1330, %v1386
      %v1388 = vand.u32 %v1196, 4294901760
      %v1389 = vsub.f32 %v1196, %v1388
      %1390 = vmatmul.f32.gmra.mxu0 %v1389
      %v1391 = vpop.f32.mrf.mxu0
      %v1392 = vadd.f32 %v1334, %v1391
      %v1393 = vand.u32 %v1199, 4294901760
      %v1394 = vsub.f32 %v1199, %v1393
      %1395 = vmatmul.f32.gmra.mxu0 %v1394
      %v1396 = vpop.f32.mrf.mxu0
      %v1397 = vadd.f32 %v1338, %v1396
      %1398 = vdwg.mxu0
      %1399 = vmatpush.msra.mxu0 0.0
      %1400 = vmatpush.msra.mxu0 0.0
      %1401 = vmatpush.msra.mxu0 0.0
      %1402 = vmatpush.msra.mxu0 0.0
      %1403 = vmatpush.msra.mxu0 0.0
      %1404 = vmatpush.msra.mxu0 0.0
      %1405 = vmatpush.msra.mxu0 0.0
      %1406 = vmatpush.msra.mxu0 0.0
      %1407 = vmatpush.msra.mxu0 0.0
      %1408 = vmatpush.msra.mxu0 0.0
      %1409 = vmatpush.msra.mxu0 0.0
      %1410 = vmatpush.msra.mxu0 0.0
      %1411 = vmatpush.msra.mxu0 0.0
      %1412 = vmatpush.msra.mxu0 0.0
      %1413 = vmatpush.msra.mxu0 0.0
      %v1414 = vand.u32 %v1202, 4294901760
      %1415 = vmatpush.msra.mxu0 %v1414
      %v1416 = vand.u32 %v1178, 4294901760
      %v1417 = vsub.f32 %v1178, %v1416
      %v1418 = vand.u32 %v1417, 4294901760
      %1419 = vmatmul.f32.gmra.mxu0 %v1418
      %v1420 = vpop.f32.mrf.mxu0
      %v1421 = vadd.f32 %v1362, %v1420
      %v1422 = vand.u32 %v1181, 4294901760
      %v1423 = vsub.f32 %v1181, %v1422
      %v1424 = vand.u32 %v1423, 4294901760
      %1425 = vmatmul.f32.gmra.mxu0 %v1424
      %v1426 = vpop.f32.mrf.mxu0
      %v1427 = vadd.f32 %v1367, %v1426
      %v1428 = vand.u32 %v1184, 4294901760
      %v1429 = vsub.f32 %v1184, %v1428
      %v1430 = vand.u32 %v1429, 4294901760
      %1431 = vmatmul.f32.gmra.mxu0 %v1430
      %v1432 = vpop.f32.mrf.mxu0
      %v1433 = vadd.f32 %v1372, %v1432
      %v1434 = vand.u32 %v1187, 4294901760
      %v1435 = vsub.f32 %v1187, %v1434
      %v1436 = vand.u32 %v1435, 4294901760
      %1437 = vmatmul.f32.gmra.mxu0 %v1436
      %v1438 = vpop.f32.mrf.mxu0
      %v1439 = vadd.f32 %v1377, %v1438
      %v1440 = vand.u32 %v1190, 4294901760
      %v1441 = vsub.f32 %v1190, %v1440
      %v1442 = vand.u32 %v1441, 4294901760
      %1443 = vmatmul.f32.gmra.mxu0 %v1442
      %v1444 = vpop.f32.mrf.mxu0
      %v1445 = vadd.f32 %v1382, %v1444
      %v1446 = vand.u32 %v1193, 4294901760
      %v1447 = vsub.f32 %v1193, %v1446
      %v1448 = vand.u32 %v1447, 4294901760
      %1449 = vmatmul.f32.gmra.mxu0 %v1448
      %v1450 = vpop.f32.mrf.mxu0
      %v1451 = vadd.f32 %v1387, %v1450
      %v1452 = vand.u32 %v1196, 4294901760
      %v1453 = vsub.f32 %v1196, %v1452
      %v1454 = vand.u32 %v1453, 4294901760
      %1455 = vmatmul.f32.gmra.mxu0 %v1454
      %v1456 = vpop.f32.mrf.mxu0
      %v1457 = vadd.f32 %v1392, %v1456
      %v1458 = vand.u32 %v1199, 4294901760
      %v1459 = vsub.f32 %v1199, %v1458
      %v1460 = vand.u32 %v1459, 4294901760
      %1461 = vmatmul.f32.gmra.mxu0 %v1460
      %v1462 = vpop.f32.mrf.mxu0
      %v1463 = vadd.f32 %v1397, %v1462
      %1464 = vdwg.mxu0
      %1465 = vmatpush.msra.mxu0 0.0
      %1466 = vmatpush.msra.mxu0 0.0
      %1467 = vmatpush.msra.mxu0 0.0
      %1468 = vmatpush.msra.mxu0 0.0
      %1469 = vmatpush.msra.mxu0 0.0
      %1470 = vmatpush.msra.mxu0 0.0
      %1471 = vmatpush.msra.mxu0 0.0
      %1472 = vmatpush.msra.mxu0 0.0
      %1473 = vmatpush.msra.mxu0 0.0
      %1474 = vmatpush.msra.mxu0 0.0
      %1475 = vmatpush.msra.mxu0 0.0
      %1476 = vmatpush.msra.mxu0 0.0
      %1477 = vmatpush.msra.mxu0 0.0
      %1478 = vmatpush.msra.mxu0 0.0
      %1479 = vmatpush.msra.mxu0 0.0
      %v1480 = vand.u32 %v1202, 4294901760
      %v1481 = vsub.f32 %v1202, %v1480
      %v1482 = vand.u32 %v1481, 4294901760
      %1483 = vmatpush.msra.mxu0 %v1482
      %v1484 = vand.u32 %v1178, 4294901760
      %1485 = vmatmul.f32.gmra.mxu0 %v1484
      %v1486 = vpop.f32.mrf.mxu0
      %v1487 = vadd.f32 %v1421, %v1486
      %v1488 = vand.u32 %v1181, 4294901760
      %1489 = vmatmul.f32.gmra.mxu0 %v1488
      %v1490 = vpop.f32.mrf.mxu0
      %v1491 = vadd.f32 %v1427, %v1490
      %v1492 = vand.u32 %v1184, 4294901760
      %1493 = vmatmul.f32.gmra.mxu0 %v1492
      %v1494 = vpop.f32.mrf.mxu0
      %v1495 = vadd.f32 %v1433, %v1494
      %v1496 = vand.u32 %v1187, 4294901760
      %1497 = vmatmul.f32.gmra.mxu0 %v1496
      %v1498 = vpop.f32.mrf.mxu0
      %v1499 = vadd.f32 %v1439, %v1498
      %v1500 = vand.u32 %v1190, 4294901760
      %1501 = vmatmul.f32.gmra.mxu0 %v1500
      %v1502 = vpop.f32.mrf.mxu0
      %v1503 = vadd.f32 %v1445, %v1502
      %v1504 = vand.u32 %v1193, 4294901760
      %1505 = vmatmul.f32.gmra.mxu0 %v1504
      %v1506 = vpop.f32.mrf.mxu0
      %v1507 = vadd.f32 %v1451, %v1506
      %v1508 = vand.u32 %v1196, 4294901760
      %1509 = vmatmul.f32.gmra.mxu0 %v1508
      %v1510 = vpop.f32.mrf.mxu0
      %v1511 = vadd.f32 %v1457, %v1510
      %v1512 = vand.u32 %v1199, 4294901760
      %1513 = vmatmul.f32.gmra.mxu0 %v1512
      %v1514 = vpop.f32.mrf.mxu0
      %v1515 = vadd.f32 %v1463, %v1514
      %1516 = vdwg.mxu0
      %1517 = vmatpush.msra.mxu0 0.0
      %1518 = vmatpush.msra.mxu0 0.0
      %1519 = vmatpush.msra.mxu0 0.0
      %1520 = vmatpush.msra.mxu0 0.0
      %1521 = vmatpush.msra.mxu0 0.0
      %1522 = vmatpush.msra.mxu0 0.0
      %1523 = vmatpush.msra.mxu0 0.0
      %1524 = vmatpush.msra.mxu0 0.0
      %1525 = vmatpush.msra.mxu0 0.0
      %1526 = vmatpush.msra.mxu0 0.0
      %1527 = vmatpush.msra.mxu0 0.0
      %1528 = vmatpush.msra.mxu0 0.0
      %1529 = vmatpush.msra.mxu0 0.0
      %1530 = vmatpush.msra.mxu0 0.0
      %1531 = vmatpush.msra.mxu0 0.0
      %v1532 = vand.u32 %v1202, 4294901760
      %1533 = vmatpush.msra.mxu0 %v1532
      %v1534 = vand.u32 %v1178, 4294901760
      %1535 = vmatmul.f32.gmra.mxu0 %v1534
      %v1536 = vpop.f32.mrf.mxu0
      %v1537 = vadd.f32 %v1487, %v1536
      %v1538 = vand.u32 %v1181, 4294901760
      %1539 = vmatmul.f32.gmra.mxu0 %v1538
      %v1540 = vpop.f32.mrf.mxu0
      %v1541 = vadd.f32 %v1491, %v1540
      %v1542 = vand.u32 %v1184, 4294901760
      %1543 = vmatmul.f32.gmra.mxu0 %v1542
      %v1544 = vpop.f32.mrf.mxu0
      %v1545 = vadd.f32 %v1495, %v1544
      %v1546 = vand.u32 %v1187, 4294901760
      %1547 = vmatmul.f32.gmra.mxu0 %v1546
      %v1548 = vpop.f32.mrf.mxu0
      %v1549 = vadd.f32 %v1499, %v1548
      %v1550 = vand.u32 %v1190, 4294901760
      %1551 = vmatmul.f32.gmra.mxu0 %v1550
      %v1552 = vpop.f32.mrf.mxu0
      %v1553 = vadd.f32 %v1503, %v1552
      %v1554 = vand.u32 %v1193, 4294901760
      %1555 = vmatmul.f32.gmra.mxu0 %v1554
      %v1556 = vpop.f32.mrf.mxu0
      %v1557 = vadd.f32 %v1507, %v1556
      %v1558 = vand.u32 %v1196, 4294901760
      %1559 = vmatmul.f32.gmra.mxu0 %v1558
      %v1560 = vpop.f32.mrf.mxu0
      %v1561 = vadd.f32 %v1511, %v1560
      %v1562 = vand.u32 %v1199, 4294901760
      %1563 = vmatmul.f32.gmra.mxu0 %v1562
      %v1564 = vpop.f32.mrf.mxu0
      %v1565 = vadd.f32 %v1515, %v1564
      %1566 = vdwg.mxu0
      %v1567 = vadd.f32 %v1137, %v1537
      %v1568 = vadd.f32 %v1141, %v1541
      %v1569 = vadd.f32 %v1145, %v1545
      %v1570 = vadd.f32 %v1149, %v1549
      %v1571 = vadd.f32 %v1153, %v1553
      %v1572 = vadd.f32 %v1157, %v1557
      %v1573 = vadd.f32 %v1161, %v1561
      %v1574 = vadd.f32 %v1165, %v1565
      %v1575 = vld [vmem:[%s355] sm:$0xff]
      %v1576 = vld [vmem:[%s355 + $0x10] sm:$0xff]
      %v1577 = vld [vmem:[%s355 + $0x20] sm:$0xff]
      %v1578 = vld [vmem:[%s355 + $0x30] sm:$0xff]
      %v1579 = vld [vmem:[%s355 + $0x40] sm:$0xff]
      %v1580 = vld [vmem:[%s355 + $0x50] sm:$0xff]
      %v1581 = vld [vmem:[%s355 + $0x60] sm:$0xff]
      %v1582 = vld [vmem:[%s355 + $0x70] sm:$0xff]
      %s1583 = scalar_lea.vmem %s4, 12
      %v1584 = vld [vmem:[%s1583] sm:$0xf]
      %v1586 = vsel %vm385, %v1575, 0
      %v1589 = vsel %vm385, %v1576, 0
      %v1592 = vsel %vm385, %v1577, 0
      %v1595 = vsel %vm385, %v1578, 0
      %v1598 = vsel %vm385, %v1579, 0
      %v1601 = vsel %vm385, %v1580, 0
      %v1604 = vsel %vm385, %v1581, 0
      %v1607 = vsel %vm385, %v1582, 0
      %v1610 = vsel %vm410, %v1584, 0
      %1612 = vmatpush.msra.mxu0 0.0
      %1613 = vmatpush.msra.mxu0 0.0
      %1614 = vmatpush.msra.mxu0 0.0
      %1615 = vmatpush.msra.mxu0 0.0
      %1616 = vmatpush.msra.mxu0 0.0
      %1617 = vmatpush.msra.mxu0 0.0
      %1618 = vmatpush.msra.mxu0 0.0
      %1619 = vmatpush.msra.mxu0 0.0
      %1620 = vmatpush.msra.mxu0 0.0
      %1621 = vmatpush.msra.mxu0 0.0
      %1622 = vmatpush.msra.mxu0 0.0
      %1623 = vmatpush.msra.mxu0 0.0
      %1624 = vmatpush.msra.mxu0 0.0
      %1625 = vmatpush.msra.mxu0 0.0
      %1626 = vmatpush.msra.mxu0 0.0
      %v1627 = vand.u32 %v1610, 4294901760
      %1628 = vmatpush.msra.mxu0 %v1627
      %v1629 = vand.u32 %v1586, 4294901760
      %v1630 = vsub.f32 %v1586, %v1629
      %v1631 = vand.u32 %v1630, 4294901760
      %v1632 = vsub.f32 %v1630, %v1631
      %v1633 = vand.u32 %v1632, 4294901760
      %1634 = vmatmul.f32.gmra.mxu0 %v1633
      %v1635 = vpop.f32.mrf.mxu0
      %v1636 = vadd.f32 0.0, %v1635
      %v1637 = vand.u32 %v1589, 4294901760
      %v1638 = vsub.f32 %v1589, %v1637
      %v1639 = vand.u32 %v1638, 4294901760
      %v1640 = vsub.f32 %v1638, %v1639
      %v1641 = vand.u32 %v1640, 4294901760
      %1642 = vmatmul.f32.gmra.mxu0 %v1641
      %v1643 = vpop.f32.mrf.mxu0
      %v1644 = vadd.f32 0.0, %v1643
      %v1645 = vand.u32 %v1592, 4294901760
      %v1646 = vsub.f32 %v1592, %v1645
      %v1647 = vand.u32 %v1646, 4294901760
      %v1648 = vsub.f32 %v1646, %v1647
      %v1649 = vand.u32 %v1648, 4294901760
      %1650 = vmatmul.f32.gmra.mxu0 %v1649
      %v1651 = vpop.f32.mrf.mxu0
      %v1652 = vadd.f32 0.0, %v1651
      %v1653 = vand.u32 %v1595, 4294901760
      %v1654 = vsub.f32 %v1595, %v1653
      %v1655 = vand.u32 %v1654, 4294901760
      %v1656 = vsub.f32 %v1654, %v1655
      %v1657 = vand.u32 %v1656, 4294901760
      %1658 = vmatmul.f32.gmra.mxu0 %v1657
      %v1659 = vpop.f32.mrf.mxu0
      %v1660 = vadd.f32 0.0, %v1659
      %v1661 = vand.u32 %v1598, 4294901760
      %v1662 = vsub.f32 %v1598, %v1661
      %v1663 = vand.u32 %v1662, 4294901760
      %v1664 = vsub.f32 %v1662, %v1663
      %v1665 = vand.u32 %v1664, 4294901760
      %1666 = vmatmul.f32.gmra.mxu0 %v1665
      %v1667 = vpop.f32.mrf.mxu0
      %v1668 = vadd.f32 0.0, %v1667
      %v1669 = vand.u32 %v1601, 4294901760
      %v1670 = vsub.f32 %v1601, %v1669
      %v1671 = vand.u32 %v1670, 4294901760
      %v1672 = vsub.f32 %v1670, %v1671
      %v1673 = vand.u32 %v1672, 4294901760
      %1674 = vmatmul.f32.gmra.mxu0 %v1673
      %v1675 = vpop.f32.mrf.mxu0
      %v1676 = vadd.f32 0.0, %v1675
      %v1677 = vand.u32 %v1604, 4294901760
      %v1678 = vsub.f32 %v1604, %v1677
      %v1679 = vand.u32 %v1678, 4294901760
      %v1680 = vsub.f32 %v1678, %v1679
      %v1681 = vand.u32 %v1680, 4294901760
      %1682 = vmatmul.f32.gmra.mxu0 %v1681
      %v1683 = vpop.f32.mrf.mxu0
      %v1684 = vadd.f32 0.0, %v1683
      %v1685 = vand.u32 %v1607, 4294901760
      %v1686 = vsub.f32 %v1607, %v1685
      %v1687 = vand.u32 %v1686, 4294901760
      %v1688 = vsub.f32 %v1686, %v1687
      %v1689 = vand.u32 %v1688, 4294901760
      %1690 = vmatmul.f32.gmra.mxu0 %v1689
      %v1691 = vpop.f32.mrf.mxu0
      %v1692 = vadd.f32 0.0, %v1691
      %1693 = vdwg.mxu0
      %1694 = vmatpush.msra.mxu0 0.0
      %1695 = vmatpush.msra.mxu0 0.0
      %1696 = vmatpush.msra.mxu0 0.0
      %1697 = vmatpush.msra.mxu0 0.0
      %1698 = vmatpush.msra.mxu0 0.0
      %1699 = vmatpush.msra.mxu0 0.0
      %1700 = vmatpush.msra.mxu0 0.0
      %1701 = vmatpush.msra.mxu0 0.0
      %1702 = vmatpush.msra.mxu0 0.0
      %1703 = vmatpush.msra.mxu0 0.0
      %1704 = vmatpush.msra.mxu0 0.0
      %1705 = vmatpush.msra.mxu0 0.0
      %1706 = vmatpush.msra.mxu0 0.0
      %1707 = vmatpush.msra.mxu0 0.0
      %1708 = vmatpush.msra.mxu0 0.0
      %v1709 = vand.u32 %v1610, 4294901760
      %v1710 = vsub.f32 %v1610, %v1709
      %v1711 = vand.u32 %v1710, 4294901760
      %v1712 = vsub.f32 %v1710, %v1711
      %v1713 = vand.u32 %v1712, 4294901760
      %1714 = vmatpush.msra.mxu0 %v1713
      %v1715 = vand.u32 %v1586, 4294901760
      %1716 = vmatmul.f32.gmra.mxu0 %v1715
      %v1717 = vpop.f32.mrf.mxu0
      %v1718 = vadd.f32 %v1636, %v1717
      %v1719 = vand.u32 %v1589, 4294901760
      %1720 = vmatmul.f32.gmra.mxu0 %v1719
      %v1721 = vpop.f32.mrf.mxu0
      %v1722 = vadd.f32 %v1644, %v1721
      %v1723 = vand.u32 %v1592, 4294901760
      %1724 = vmatmul.f32.gmra.mxu0 %v1723
      %v1725 = vpop.f32.mrf.mxu0
      %v1726 = vadd.f32 %v1652, %v1725
      %v1727 = vand.u32 %v1595, 4294901760
      %1728 = vmatmul.f32.gmra.mxu0 %v1727
      %v1729 = vpop.f32.mrf.mxu0
      %v1730 = vadd.f32 %v1660, %v1729
      %v1731 = vand.u32 %v1598, 4294901760
      %1732 = vmatmul.f32.gmra.mxu0 %v1731
      %v1733 = vpop.f32.mrf.mxu0
      %v1734 = vadd.f32 %v1668, %v1733
      %v1735 = vand.u32 %v1601, 4294901760
      %1736 = vmatmul.f32.gmra.mxu0 %v1735
      %v1737 = vpop.f32.mrf.mxu0
      %v1738 = vadd.f32 %v1676, %v1737
      %v1739 = vand.u32 %v1604, 4294901760
      %1740 = vmatmul.f32.gmra.mxu0 %v1739
      %v1741 = vpop.f32.mrf.mxu0
      %v1742 = vadd.f32 %v1684, %v1741
      %v1743 = vand.u32 %v1607, 4294901760
      %1744 = vmatmul.f32.gmra.mxu0 %v1743
      %v1745 = vpop.f32.mrf.mxu0
      %v1746 = vadd.f32 %v1692, %v1745
      %1747 = vdwg.mxu0
      %1748 = vmatpush.msra.mxu0 0.0
      %1749 = vmatpush.msra.mxu0 0.0
      %1750 = vmatpush.msra.mxu0 0.0
      %1751 = vmatpush.msra.mxu0 0.0
      %1752 = vmatpush.msra.mxu0 0.0
      %1753 = vmatpush.msra.mxu0 0.0
      %1754 = vmatpush.msra.mxu0 0.0
      %1755 = vmatpush.msra.mxu0 0.0
      %1756 = vmatpush.msra.mxu0 0.0
      %1757 = vmatpush.msra.mxu0 0.0
      %1758 = vmatpush.msra.mxu0 0.0
      %1759 = vmatpush.msra.mxu0 0.0
      %1760 = vmatpush.msra.mxu0 0.0
      %1761 = vmatpush.msra.mxu0 0.0
      %1762 = vmatpush.msra.mxu0 0.0
      %v1763 = vand.u32 %v1610, 4294901760
      %v1764 = vsub.f32 %v1610, %v1763
      %1765 = vmatpush.msra.mxu0 %v1764
      %v1766 = vand.u32 %v1586, 4294901760
      %v1767 = vsub.f32 %v1586, %v1766
      %1768 = vmatmul.f32.gmra.mxu0 %v1767
      %v1769 = vpop.f32.mrf.mxu0
      %v1770 = vadd.f32 %v1718, %v1769
      %v1771 = vand.u32 %v1589, 4294901760
      %v1772 = vsub.f32 %v1589, %v1771
      %1773 = vmatmul.f32.gmra.mxu0 %v1772
      %v1774 = vpop.f32.mrf.mxu0
      %v1775 = vadd.f32 %v1722, %v1774
      %v1776 = vand.u32 %v1592, 4294901760
      %v1777 = vsub.f32 %v1592, %v1776
      %1778 = vmatmul.f32.gmra.mxu0 %v1777
      %v1779 = vpop.f32.mrf.mxu0
      %v1780 = vadd.f32 %v1726, %v1779
      %v1781 = vand.u32 %v1595, 4294901760
      %v1782 = vsub.f32 %v1595, %v1781
      %1783 = vmatmul.f32.gmra.mxu0 %v1782
      %v1784 = vpop.f32.mrf.mxu0
      %v1785 = vadd.f32 %v1730, %v1784
      %v1786 = vand.u32 %v1598, 4294901760
      %v1787 = vsub.f32 %v1598, %v1786
      %1788 = vmatmul.f32.gmra.mxu0 %v1787
      %v1789 = vpop.f32.mrf.mxu0
      %v1790 = vadd.f32 %v1734, %v1789
      %v1791 = vand.u32 %v1601, 4294901760
      %v1792 = vsub.f32 %v1601, %v1791
      %1793 = vmatmul.f32.gmra.mxu0 %v1792
      %v1794 = vpop.f32.mrf.mxu0
      %v1795 = vadd.f32 %v1738, %v1794
      %v1796 = vand.u32 %v1604, 4294901760
      %v1797 = vsub.f32 %v1604, %v1796
      %1798 = vmatmul.f32.gmra.mxu0 %v1797
      %v1799 = vpop.f32.mrf.mxu0
      %v1800 = vadd.f32 %v1742, %v1799
      %v1801 = vand.u32 %v1607, 4294901760
      %v1802 = vsub.f32 %v1607, %v1801
      %1803 = vmatmul.f32.gmra.mxu0 %v1802
      %v1804 = vpop.f32.mrf.mxu0
      %v1805 = vadd.f32 %v1746, %v1804
      %1806 = vdwg.mxu0
      %1807 = vmatpush.msra.mxu0 0.0
      %1808 = vmatpush.msra.mxu0 0.0
      %1809 = vmatpush.msra.mxu0 0.0
      %1810 = vmatpush.msra.mxu0 0.0
      %1811 = vmatpush.msra.mxu0 0.0
      %1812 = vmatpush.msra.mxu0 0.0
      %1813 = vmatpush.msra.mxu0 0.0
      %1814 = vmatpush.msra.mxu0 0.0
      %1815 = vmatpush.msra.mxu0 0.0
      %1816 = vmatpush.msra.mxu0 0.0
      %1817 = vmatpush.msra.mxu0 0.0
      %1818 = vmatpush.msra.mxu0 0.0
      %1819 = vmatpush.msra.mxu0 0.0
      %1820 = vmatpush.msra.mxu0 0.0
      %1821 = vmatpush.msra.mxu0 0.0
      %v1822 = vand.u32 %v1610, 4294901760
      %1823 = vmatpush.msra.mxu0 %v1822
      %v1824 = vand.u32 %v1586, 4294901760
      %v1825 = vsub.f32 %v1586, %v1824
      %v1826 = vand.u32 %v1825, 4294901760
      %1827 = vmatmul.f32.gmra.mxu0 %v1826
      %v1828 = vpop.f32.mrf.mxu0
      %v1829 = vadd.f32 %v1770, %v1828
      %v1830 = vand.u32 %v1589, 4294901760
      %v1831 = vsub.f32 %v1589, %v1830
      %v1832 = vand.u32 %v1831, 4294901760
      %1833 = vmatmul.f32.gmra.mxu0 %v1832
      %v1834 = vpop.f32.mrf.mxu0
      %v1835 = vadd.f32 %v1775, %v1834
      %v1836 = vand.u32 %v1592, 4294901760
      %v1837 = vsub.f32 %v1592, %v1836
      %v1838 = vand.u32 %v1837, 4294901760
      %1839 = vmatmul.f32.gmra.mxu0 %v1838
      %v1840 = vpop.f32.mrf.mxu0
      %v1841 = vadd.f32 %v1780, %v1840
      %v1842 = vand.u32 %v1595, 4294901760
      %v1843 = vsub.f32 %v1595, %v1842
      %v1844 = vand.u32 %v1843, 4294901760
      %1845 = vmatmul.f32.gmra.mxu0 %v1844
      %v1846 = vpop.f32.mrf.mxu0
      %v1847 = vadd.f32 %v1785, %v1846
      %v1848 = vand.u32 %v1598, 4294901760
      %v1849 = vsub.f32 %v1598, %v1848
      %v1850 = vand.u32 %v1849, 4294901760
      %1851 = vmatmul.f32.gmra.mxu0 %v1850
      %v1852 = vpop.f32.mrf.mxu0
      %v1853 = vadd.f32 %v1790, %v1852
      %v1854 = vand.u32 %v1601, 4294901760
      %v1855 = vsub.f32 %v1601, %v1854
      %v1856 = vand.u32 %v1855, 4294901760
      %1857 = vmatmul.f32.gmra.mxu0 %v1856
      %v1858 = vpop.f32.mrf.mxu0
      %v1859 = vadd.f32 %v1795, %v1858
      %v1860 = vand.u32 %v1604, 4294901760
      %v1861 = vsub.f32 %v1604, %v1860
      %v1862 = vand.u32 %v1861, 4294901760
      %1863 = vmatmul.f32.gmra.mxu0 %v1862
      %v1864 = vpop.f32.mrf.mxu0
      %v1865 = vadd.f32 %v1800, %v1864
      %v1866 = vand.u32 %v1607, 4294901760
      %v1867 = vsub.f32 %v1607, %v1866
      %v1868 = vand.u32 %v1867, 4294901760
      %1869 = vmatmul.f32.gmra.mxu0 %v1868
      %v1870 = vpop.f32.mrf.mxu0
      %v1871 = vadd.f32 %v1805, %v1870
      %1872 = vdwg.mxu0
      %1873 = vmatpush.msra.mxu0 0.0
      %1874 = vmatpush.msra.mxu0 0.0
      %1875 = vmatpush.msra.mxu0 0.0
      %1876 = vmatpush.msra.mxu0 0.0
      %1877 = vmatpush.msra.mxu0 0.0
      %1878 = vmatpush.msra.mxu0 0.0
      %1879 = vmatpush.msra.mxu0 0.0
      %1880 = vmatpush.msra.mxu0 0.0
      %1881 = vmatpush.msra.mxu0 0.0
      %1882 = vmatpush.msra.mxu0 0.0
      %1883 = vmatpush.msra.mxu0 0.0
      %1884 = vmatpush.msra.mxu0 0.0
      %1885 = vmatpush.msra.mxu0 0.0
      %1886 = vmatpush.msra.mxu0 0.0
      %1887 = vmatpush.msra.mxu0 0.0
      %v1888 = vand.u32 %v1610, 4294901760
      %v1889 = vsub.f32 %v1610, %v1888
      %v1890 = vand.u32 %v1889, 4294901760
      %1891 = vmatpush.msra.mxu0 %v1890
      %v1892 = vand.u32 %v1586, 4294901760
      %1893 = vmatmul.f32.gmra.mxu0 %v1892
      %v1894 = vpop.f32.mrf.mxu0
      %v1895 = vadd.f32 %v1829, %v1894
      %v1896 = vand.u32 %v1589, 4294901760
      %1897 = vmatmul.f32.gmra.mxu0 %v1896
      %v1898 = vpop.f32.mrf.mxu0
      %v1899 = vadd.f32 %v1835, %v1898
      %v1900 = vand.u32 %v1592, 4294901760
      %1901 = vmatmul.f32.gmra.mxu0 %v1900
      %v1902 = vpop.f32.mrf.mxu0
      %v1903 = vadd.f32 %v1841, %v1902
      %v1904 = vand.u32 %v1595, 4294901760
      %1905 = vmatmul.f32.gmra.mxu0 %v1904
      %v1906 = vpop.f32.mrf.mxu0
      %v1907 = vadd.f32 %v1847, %v1906
      %v1908 = vand.u32 %v1598, 4294901760
      %1909 = vmatmul.f32.gmra.mxu0 %v1908
      %v1910 = vpop.f32.mrf.mxu0
      %v1911 = vadd.f32 %v1853, %v1910
      %v1912 = vand.u32 %v1601, 4294901760
      %1913 = vmatmul.f32.gmra.mxu0 %v1912
      %v1914 = vpop.f32.mrf.mxu0
      %v1915 = vadd.f32 %v1859, %v1914
      %v1916 = vand.u32 %v1604, 4294901760
      %1917 = vmatmul.f32.gmra.mxu0 %v1916
      %v1918 = vpop.f32.mrf.mxu0
      %v1919 = vadd.f32 %v1865, %v1918
      %v1920 = vand.u32 %v1607, 4294901760
      %1921 = vmatmul.f32.gmra.mxu0 %v1920
      %v1922 = vpop.f32.mrf.mxu0
      %v1923 = vadd.f32 %v1871, %v1922
      %1924 = vdwg.mxu0
      %1925 = vmatpush.msra.mxu0 0.0
      %1926 = vmatpush.msra.mxu0 0.0
      %1927 = vmatpush.msra.mxu0 0.0
      %1928 = vmatpush.msra.mxu0 0.0
      %1929 = vmatpush.msra.mxu0 0.0
      %1930 = vmatpush.msra.mxu0 0.0
      %1931 = vmatpush.msra.mxu0 0.0
      %1932 = vmatpush.msra.mxu0 0.0
      %1933 = vmatpush.msra.mxu0 0.0
      %1934 = vmatpush.msra.mxu0 0.0
      %1935 = vmatpush.msra.mxu0 0.0
      %1936 = vmatpush.msra.mxu0 0.0
      %1937 = vmatpush.msra.mxu0 0.0
      %1938 = vmatpush.msra.mxu0 0.0
      %1939 = vmatpush.msra.mxu0 0.0
      %v1940 = vand.u32 %v1610, 4294901760
      %1941 = vmatpush.msra.mxu0 %v1940
      %v1942 = vand.u32 %v1586, 4294901760
      %1943 = vmatmul.f32.gmra.mxu0 %v1942
      %v1944 = vpop.f32.mrf.mxu0
      %v1945 = vadd.f32 %v1895, %v1944
      %v1946 = vand.u32 %v1589, 4294901760
      %1947 = vmatmul.f32.gmra.mxu0 %v1946
      %v1948 = vpop.f32.mrf.mxu0
      %v1949 = vadd.f32 %v1899, %v1948
      %v1950 = vand.u32 %v1592, 4294901760
      %1951 = vmatmul.f32.gmra.mxu0 %v1950
      %v1952 = vpop.f32.mrf.mxu0
      %v1953 = vadd.f32 %v1903, %v1952
      %v1954 = vand.u32 %v1595, 4294901760
      %1955 = vmatmul.f32.gmra.mxu0 %v1954
      %v1956 = vpop.f32.mrf.mxu0
      %v1957 = vadd.f32 %v1907, %v1956
      %v1958 = vand.u32 %v1598, 4294901760
      %1959 = vmatmul.f32.gmra.mxu0 %v1958
      %v1960 = vpop.f32.mrf.mxu0
      %v1961 = vadd.f32 %v1911, %v1960
      %v1962 = vand.u32 %v1601, 4294901760
      %1963 = vmatmul.f32.gmra.mxu0 %v1962
      %v1964 = vpop.f32.mrf.mxu0
      %v1965 = vadd.f32 %v1915, %v1964
      %v1966 = vand.u32 %v1604, 4294901760
      %1967 = vmatmul.f32.gmra.mxu0 %v1966
      %v1968 = vpop.f32.mrf.mxu0
      %v1969 = vadd.f32 %v1919, %v1968
      %v1970 = vand.u32 %v1607, 4294901760
      %1971 = vmatmul.f32.gmra.mxu0 %v1970
      %v1972 = vpop.f32.mrf.mxu0
      %v1973 = vadd.f32 %v1923, %v1972
      %1974 = vdwg.mxu0
      %v1975 = vadd.f32 %v1567, %v1945
      %v1976 = vadd.f32 %v1568, %v1949
      %v1977 = vadd.f32 %v1569, %v1953
      %v1978 = vadd.f32 %v1570, %v1957
      %v1979 = vadd.f32 %v1571, %v1961
      %v1980 = vadd.f32 %v1572, %v1965
      %v1981 = vadd.f32 %v1573, %v1969
      %v1982 = vadd.f32 %v1574, %v1973
      %v1983 = vld [vmem:[%s360] sm:$0xff]
      %v1984 = vld [vmem:[%s360 + $0x10] sm:$0xff]
      %v1985 = vld [vmem:[%s360 + $0x20] sm:$0xff]
      %v1986 = vld [vmem:[%s360 + $0x30] sm:$0xff]
      %v1987 = vld [vmem:[%s360 + $0x40] sm:$0xff]
      %v1988 = vld [vmem:[%s360 + $0x50] sm:$0xff]
      %v1989 = vld [vmem:[%s360 + $0x60] sm:$0xff]
      %v1990 = vld [vmem:[%s360 + $0x70] sm:$0xff]
      %s1991 = scalar_lea.vmem %s4, 16
      %v1992 = vld [vmem:[%s1991] sm:$0xf]
      %v1994 = vsel %vm385, %v1983, 0
      %v1997 = vsel %vm385, %v1984, 0
      %v2000 = vsel %vm385, %v1985, 0
      %v2003 = vsel %vm385, %v1986, 0
      %v2006 = vsel %vm385, %v1987, 0
      %v2009 = vsel %vm385, %v1988, 0
      %v2012 = vsel %vm385, %v1989, 0
      %v2015 = vsel %vm385, %v1990, 0
      %v2018 = vsel %vm410, %v1992, 0
      %2020 = vmatpush.msra.mxu0 0.0
      %2021 = vmatpush.msra.mxu0 0.0
      %2022 = vmatpush.msra.mxu0 0.0
      %2023 = vmatpush.msra.mxu0 0.0
      %2024 = vmatpush.msra.mxu0 0.0
      %2025 = vmatpush.msra.mxu0 0.0
      %2026 = vmatpush.msra.mxu0 0.0
      %2027 = vmatpush.msra.mxu0 0.0
      %2028 = vmatpush.msra.mxu0 0.0
      %2029 = vmatpush.msra.mxu0 0.0
      %2030 = vmatpush.msra.mxu0 0.0
      %2031 = vmatpush.msra.mxu0 0.0
      %2032 = vmatpush.msra.mxu0 0.0
      %2033 = vmatpush.msra.mxu0 0.0
      %2034 = vmatpush.msra.mxu0 0.0
      %v2035 = vand.u32 %v2018, 4294901760
      %2036 = vmatpush.msra.mxu0 %v2035
      %v2037 = vand.u32 %v1994, 4294901760
      %v2038 = vsub.f32 %v1994, %v2037
      %v2039 = vand.u32 %v2038, 4294901760
      %v2040 = vsub.f32 %v2038, %v2039
      %v2041 = vand.u32 %v2040, 4294901760
      %2042 = vmatmul.f32.gmra.mxu0 %v2041
      %v2043 = vpop.f32.mrf.mxu0
      %v2044 = vadd.f32 0.0, %v2043
      %v2045 = vand.u32 %v1997, 4294901760
      %v2046 = vsub.f32 %v1997, %v2045
      %v2047 = vand.u32 %v2046, 4294901760
      %v2048 = vsub.f32 %v2046, %v2047
      %v2049 = vand.u32 %v2048, 4294901760
      %2050 = vmatmul.f32.gmra.mxu0 %v2049
      %v2051 = vpop.f32.mrf.mxu0
      %v2052 = vadd.f32 0.0, %v2051
      %v2053 = vand.u32 %v2000, 4294901760
      %v2054 = vsub.f32 %v2000, %v2053
      %v2055 = vand.u32 %v2054, 4294901760
      %v2056 = vsub.f32 %v2054, %v2055
      %v2057 = vand.u32 %v2056, 4294901760
      %2058 = vmatmul.f32.gmra.mxu0 %v2057
      %v2059 = vpop.f32.mrf.mxu0
      %v2060 = vadd.f32 0.0, %v2059
      %v2061 = vand.u32 %v2003, 4294901760
      %v2062 = vsub.f32 %v2003, %v2061
      %v2063 = vand.u32 %v2062, 4294901760
      %v2064 = vsub.f32 %v2062, %v2063
      %v2065 = vand.u32 %v2064, 4294901760
      %2066 = vmatmul.f32.gmra.mxu0 %v2065
      %v2067 = vpop.f32.mrf.mxu0
      %v2068 = vadd.f32 0.0, %v2067
      %v2069 = vand.u32 %v2006, 4294901760
      %v2070 = vsub.f32 %v2006, %v2069
      %v2071 = vand.u32 %v2070, 4294901760
      %v2072 = vsub.f32 %v2070, %v2071
      %v2073 = vand.u32 %v2072, 4294901760
      %2074 = vmatmul.f32.gmra.mxu0 %v2073
      %v2075 = vpop.f32.mrf.mxu0
      %v2076 = vadd.f32 0.0, %v2075
      %v2077 = vand.u32 %v2009, 4294901760
      %v2078 = vsub.f32 %v2009, %v2077
      %v2079 = vand.u32 %v2078, 4294901760
      %v2080 = vsub.f32 %v2078, %v2079
      %v2081 = vand.u32 %v2080, 4294901760
      %2082 = vmatmul.f32.gmra.mxu0 %v2081
      %v2083 = vpop.f32.mrf.mxu0
      %v2084 = vadd.f32 0.0, %v2083
      %v2085 = vand.u32 %v2012, 4294901760
      %v2086 = vsub.f32 %v2012, %v2085
      %v2087 = vand.u32 %v2086, 4294901760
      %v2088 = vsub.f32 %v2086, %v2087
      %v2089 = vand.u32 %v2088, 4294901760
      %2090 = vmatmul.f32.gmra.mxu0 %v2089
      %v2091 = vpop.f32.mrf.mxu0
      %v2092 = vadd.f32 0.0, %v2091
      %v2093 = vand.u32 %v2015, 4294901760
      %v2094 = vsub.f32 %v2015, %v2093
      %v2095 = vand.u32 %v2094, 4294901760
      %v2096 = vsub.f32 %v2094, %v2095
      %v2097 = vand.u32 %v2096, 4294901760
      %2098 = vmatmul.f32.gmra.mxu0 %v2097
      %v2099 = vpop.f32.mrf.mxu0
      %v2100 = vadd.f32 0.0, %v2099
      %2101 = vdwg.mxu0
      %2102 = vmatpush.msra.mxu0 0.0
      %2103 = vmatpush.msra.mxu0 0.0
      %2104 = vmatpush.msra.mxu0 0.0
      %2105 = vmatpush.msra.mxu0 0.0
      %2106 = vmatpush.msra.mxu0 0.0
      %2107 = vmatpush.msra.mxu0 0.0
      %2108 = vmatpush.msra.mxu0 0.0
      %2109 = vmatpush.msra.mxu0 0.0
      %2110 = vmatpush.msra.mxu0 0.0
      %2111 = vmatpush.msra.mxu0 0.0
      %2112 = vmatpush.msra.mxu0 0.0
      %2113 = vmatpush.msra.mxu0 0.0
      %2114 = vmatpush.msra.mxu0 0.0
      %2115 = vmatpush.msra.mxu0 0.0
      %2116 = vmatpush.msra.mxu0 0.0
      %v2117 = vand.u32 %v2018, 4294901760
      %v2118 = vsub.f32 %v2018, %v2117
      %v2119 = vand.u32 %v2118, 4294901760
      %v2120 = vsub.f32 %v2118, %v2119
      %v2121 = vand.u32 %v2120, 4294901760
      %2122 = vmatpush.msra.mxu0 %v2121
      %v2123 = vand.u32 %v1994, 4294901760
      %2124 = vmatmul.f32.gmra.mxu0 %v2123
      %v2125 = vpop.f32.mrf.mxu0
      %v2126 = vadd.f32 %v2044, %v2125
      %v2127 = vand.u32 %v1997, 4294901760
      %2128 = vmatmul.f32.gmra.mxu0 %v2127
      %v2129 = vpop.f32.mrf.mxu0
      %v2130 = vadd.f32 %v2052, %v2129
      %v2131 = vand.u32 %v2000, 4294901760
      %2132 = vmatmul.f32.gmra.mxu0 %v2131
      %v2133 = vpop.f32.mrf.mxu0
      %v2134 = vadd.f32 %v2060, %v2133
      %v2135 = vand.u32 %v2003, 4294901760
      %2136 = vmatmul.f32.gmra.mxu0 %v2135
      %v2137 = vpop.f32.mrf.mxu0
      %v2138 = vadd.f32 %v2068, %v2137
      %v2139 = vand.u32 %v2006, 4294901760
      %2140 = vmatmul.f32.gmra.mxu0 %v2139
      %v2141 = vpop.f32.mrf.mxu0
      %v2142 = vadd.f32 %v2076, %v2141
      %v2143 = vand.u32 %v2009, 4294901760
      %2144 = vmatmul.f32.gmra.mxu0 %v2143
      %v2145 = vpop.f32.mrf.mxu0
      %v2146 = vadd.f32 %v2084, %v2145
      %v2147 = vand.u32 %v2012, 4294901760
      %2148 = vmatmul.f32.gmra.mxu0 %v2147
      %v2149 = vpop.f32.mrf.mxu0
      %v2150 = vadd.f32 %v2092, %v2149
      %v2151 = vand.u32 %v2015, 4294901760
      %2152 = vmatmul.f32.gmra.mxu0 %v2151
      %v2153 = vpop.f32.mrf.mxu0
      %v2154 = vadd.f32 %v2100, %v2153
      %2155 = vdwg.mxu0
      %2156 = vmatpush.msra.mxu0 0.0
      %2157 = vmatpush.msra.mxu0 0.0
      %2158 = vmatpush.msra.mxu0 0.0
      %2159 = vmatpush.msra.mxu0 0.0
      %2160 = vmatpush.msra.mxu0 0.0
      %2161 = vmatpush.msra.mxu0 0.0
      %2162 = vmatpush.msra.mxu0 0.0
      %2163 = vmatpush.msra.mxu0 0.0
      %2164 = vmatpush.msra.mxu0 0.0
      %2165 = vmatpush.msra.mxu0 0.0
      %2166 = vmatpush.msra.mxu0 0.0
      %2167 = vmatpush.msra.mxu0 0.0
      %2168 = vmatpush.msra.mxu0 0.0
      %2169 = vmatpush.msra.mxu0 0.0
      %2170 = vmatpush.msra.mxu0 0.0
      %v2171 = vand.u32 %v2018, 4294901760
      %v2172 = vsub.f32 %v2018, %v2171
      %2173 = vmatpush.msra.mxu0 %v2172
      %v2174 = vand.u32 %v1994, 4294901760
      %v2175 = vsub.f32 %v1994, %v2174
      %2176 = vmatmul.f32.gmra.mxu0 %v2175
      %v2177 = vpop.f32.mrf.mxu0
      %v2178 = vadd.f32 %v2126, %v2177
      %v2179 = vand.u32 %v1997, 4294901760
      %v2180 = vsub.f32 %v1997, %v2179
      %2181 = vmatmul.f32.gmra.mxu0 %v2180
      %v2182 = vpop.f32.mrf.mxu0
      %v2183 = vadd.f32 %v2130, %v2182
      %v2184 = vand.u32 %v2000, 4294901760
      %v2185 = vsub.f32 %v2000, %v2184
      %2186 = vmatmul.f32.gmra.mxu0 %v2185
      %v2187 = vpop.f32.mrf.mxu0
      %v2188 = vadd.f32 %v2134, %v2187
      %v2189 = vand.u32 %v2003, 4294901760
      %v2190 = vsub.f32 %v2003, %v2189
      %2191 = vmatmul.f32.gmra.mxu0 %v2190
      %v2192 = vpop.f32.mrf.mxu0
      %v2193 = vadd.f32 %v2138, %v2192
      %v2194 = vand.u32 %v2006, 4294901760
      %v2195 = vsub.f32 %v2006, %v2194
      %2196 = vmatmul.f32.gmra.mxu0 %v2195
      %v2197 = vpop.f32.mrf.mxu0
      %v2198 = vadd.f32 %v2142, %v2197
      %v2199 = vand.u32 %v2009, 4294901760
      %v2200 = vsub.f32 %v2009, %v2199
      %2201 = vmatmul.f32.gmra.mxu0 %v2200
      %v2202 = vpop.f32.mrf.mxu0
      %v2203 = vadd.f32 %v2146, %v2202
      %v2204 = vand.u32 %v2012, 4294901760
      %v2205 = vsub.f32 %v2012, %v2204
      %2206 = vmatmul.f32.gmra.mxu0 %v2205
      %v2207 = vpop.f32.mrf.mxu0
      %v2208 = vadd.f32 %v2150, %v2207
      %v2209 = vand.u32 %v2015, 4294901760
      %v2210 = vsub.f32 %v2015, %v2209
      %2211 = vmatmul.f32.gmra.mxu0 %v2210
      %v2212 = vpop.f32.mrf.mxu0
      %v2213 = vadd.f32 %v2154, %v2212
      %2214 = vdwg.mxu0
      %2215 = vmatpush.msra.mxu0 0.0
      %2216 = vmatpush.msra.mxu0 0.0
      %2217 = vmatpush.msra.mxu0 0.0
      %2218 = vmatpush.msra.mxu0 0.0
      %2219 = vmatpush.msra.mxu0 0.0
      %2220 = vmatpush.msra.mxu0 0.0
      %2221 = vmatpush.msra.mxu0 0.0
      %2222 = vmatpush.msra.mxu0 0.0
      %2223 = vmatpush.msra.mxu0 0.0
      %2224 = vmatpush.msra.mxu0 0.0
      %2225 = vmatpush.msra.mxu0 0.0
      %2226 = vmatpush.msra.mxu0 0.0
      %2227 = vmatpush.msra.mxu0 0.0
      %2228 = vmatpush.msra.mxu0 0.0
      %2229 = vmatpush.msra.mxu0 0.0
      %v2230 = vand.u32 %v2018, 4294901760
      %2231 = vmatpush.msra.mxu0 %v2230
      %v2232 = vand.u32 %v1994, 4294901760
      %v2233 = vsub.f32 %v1994, %v2232
      %v2234 = vand.u32 %v2233, 4294901760
      %2235 = vmatmul.f32.gmra.mxu0 %v2234
      %v2236 = vpop.f32.mrf.mxu0
      %v2237 = vadd.f32 %v2178, %v2236
      %v2238 = vand.u32 %v1997, 4294901760
      %v2239 = vsub.f32 %v1997, %v2238
      %v2240 = vand.u32 %v2239, 4294901760
      %2241 = vmatmul.f32.gmra.mxu0 %v2240
      %v2242 = vpop.f32.mrf.mxu0
      %v2243 = vadd.f32 %v2183, %v2242
      %v2244 = vand.u32 %v2000, 4294901760
      %v2245 = vsub.f32 %v2000, %v2244
      %v2246 = vand.u32 %v2245, 4294901760
      %2247 = vmatmul.f32.gmra.mxu0 %v2246
      %v2248 = vpop.f32.mrf.mxu0
      %v2249 = vadd.f32 %v2188, %v2248
      %v2250 = vand.u32 %v2003, 4294901760
      %v2251 = vsub.f32 %v2003, %v2250
      %v2252 = vand.u32 %v2251, 4294901760
      %2253 = vmatmul.f32.gmra.mxu0 %v2252
      %v2254 = vpop.f32.mrf.mxu0
      %v2255 = vadd.f32 %v2193, %v2254
      %v2256 = vand.u32 %v2006, 4294901760
      %v2257 = vsub.f32 %v2006, %v2256
      %v2258 = vand.u32 %v2257, 4294901760
      %2259 = vmatmul.f32.gmra.mxu0 %v2258
      %v2260 = vpop.f32.mrf.mxu0
      %v2261 = vadd.f32 %v2198, %v2260
      %v2262 = vand.u32 %v2009, 4294901760
      %v2263 = vsub.f32 %v2009, %v2262
      %v2264 = vand.u32 %v2263, 4294901760
      %2265 = vmatmul.f32.gmra.mxu0 %v2264
      %v2266 = vpop.f32.mrf.mxu0
      %v2267 = vadd.f32 %v2203, %v2266
      %v2268 = vand.u32 %v2012, 4294901760
      %v2269 = vsub.f32 %v2012, %v2268
      %v2270 = vand.u32 %v2269, 4294901760
      %2271 = vmatmul.f32.gmra.mxu0 %v2270
      %v2272 = vpop.f32.mrf.mxu0
      %v2273 = vadd.f32 %v2208, %v2272
      %v2274 = vand.u32 %v2015, 4294901760
      %v2275 = vsub.f32 %v2015, %v2274
      %v2276 = vand.u32 %v2275, 4294901760
      %2277 = vmatmul.f32.gmra.mxu0 %v2276
      %v2278 = vpop.f32.mrf.mxu0
      %v2279 = vadd.f32 %v2213, %v2278
      %2280 = vdwg.mxu0
      %2281 = vmatpush.msra.mxu0 0.0
      %2282 = vmatpush.msra.mxu0 0.0
      %2283 = vmatpush.msra.mxu0 0.0
      %2284 = vmatpush.msra.mxu0 0.0
      %2285 = vmatpush.msra.mxu0 0.0
      %2286 = vmatpush.msra.mxu0 0.0
      %2287 = vmatpush.msra.mxu0 0.0
      %2288 = vmatpush.msra.mxu0 0.0
      %2289 = vmatpush.msra.mxu0 0.0
      %2290 = vmatpush.msra.mxu0 0.0
      %2291 = vmatpush.msra.mxu0 0.0
      %2292 = vmatpush.msra.mxu0 0.0
      %2293 = vmatpush.msra.mxu0 0.0
      %2294 = vmatpush.msra.mxu0 0.0
      %2295 = vmatpush.msra.mxu0 0.0
      %v2296 = vand.u32 %v2018, 4294901760
      %v2297 = vsub.f32 %v2018, %v2296
      %v2298 = vand.u32 %v2297, 4294901760
      %2299 = vmatpush.msra.mxu0 %v2298
      %v2300 = vand.u32 %v1994, 4294901760
      %2301 = vmatmul.f32.gmra.mxu0 %v2300
      %v2302 = vpop.f32.mrf.mxu0
      %v2303 = vadd.f32 %v2237, %v2302
      %v2304 = vand.u32 %v1997, 4294901760
      %2305 = vmatmul.f32.gmra.mxu0 %v2304
      %v2306 = vpop.f32.mrf.mxu0
      %v2307 = vadd.f32 %v2243, %v2306
      %v2308 = vand.u32 %v2000, 4294901760
      %2309 = vmatmul.f32.gmra.mxu0 %v2308
      %v2310 = vpop.f32.mrf.mxu0
      %v2311 = vadd.f32 %v2249, %v2310
      %v2312 = vand.u32 %v2003, 4294901760
      %2313 = vmatmul.f32.gmra.mxu0 %v2312
      %v2314 = vpop.f32.mrf.mxu0
      %v2315 = vadd.f32 %v2255, %v2314
      %v2316 = vand.u32 %v2006, 4294901760
      %2317 = vmatmul.f32.gmra.mxu0 %v2316
      %v2318 = vpop.f32.mrf.mxu0
      %v2319 = vadd.f32 %v2261, %v2318
      %v2320 = vand.u32 %v2009, 4294901760
      %2321 = vmatmul.f32.gmra.mxu0 %v2320
      %v2322 = vpop.f32.mrf.mxu0
      %v2323 = vadd.f32 %v2267, %v2322
      %v2324 = vand.u32 %v2012, 4294901760
      %2325 = vmatmul.f32.gmra.mxu0 %v2324
      %v2326 = vpop.f32.mrf.mxu0
      %v2327 = vadd.f32 %v2273, %v2326
      %v2328 = vand.u32 %v2015, 4294901760
      %2329 = vmatmul.f32.gmra.mxu0 %v2328
      %v2330 = vpop.f32.mrf.mxu0
      %v2331 = vadd.f32 %v2279, %v2330
      %2332 = vdwg.mxu0
      %2333 = vmatpush.msra.mxu0 0.0
      %2334 = vmatpush.msra.mxu0 0.0
      %2335 = vmatpush.msra.mxu0 0.0
      %2336 = vmatpush.msra.mxu0 0.0
      %2337 = vmatpush.msra.mxu0 0.0
      %2338 = vmatpush.msra.mxu0 0.0
      %2339 = vmatpush.msra.mxu0 0.0
      %2340 = vmatpush.msra.mxu0 0.0
      %2341 = vmatpush.msra.mxu0 0.0
      %2342 = vmatpush.msra.mxu0 0.0
      %2343 = vmatpush.msra.mxu0 0.0
      %2344 = vmatpush.msra.mxu0 0.0
      %2345 = vmatpush.msra.mxu0 0.0
      %2346 = vmatpush.msra.mxu0 0.0
      %2347 = vmatpush.msra.mxu0 0.0
      %v2348 = vand.u32 %v2018, 4294901760
      %2349 = vmatpush.msra.mxu0 %v2348
      %v2350 = vand.u32 %v1994, 4294901760
      %2351 = vmatmul.f32.gmra.mxu0 %v2350
      %v2352 = vpop.f32.mrf.mxu0
      %v2353 = vadd.f32 %v2303, %v2352
      %v2354 = vand.u32 %v1997, 4294901760
      %2355 = vmatmul.f32.gmra.mxu0 %v2354
      %v2356 = vpop.f32.mrf.mxu0
      %v2357 = vadd.f32 %v2307, %v2356
      %v2358 = vand.u32 %v2000, 4294901760
      %2359 = vmatmul.f32.gmra.mxu0 %v2358
      %v2360 = vpop.f32.mrf.mxu0
      %v2361 = vadd.f32 %v2311, %v2360
      %v2362 = vand.u32 %v2003, 4294901760
      %2363 = vmatmul.f32.gmra.mxu0 %v2362
      %v2364 = vpop.f32.mrf.mxu0
      %v2365 = vadd.f32 %v2315, %v2364
      %v2366 = vand.u32 %v2006, 4294901760
      %2367 = vmatmul.f32.gmra.mxu0 %v2366
      %v2368 = vpop.f32.mrf.mxu0
      %v2369 = vadd.f32 %v2319, %v2368
      %v2370 = vand.u32 %v2009, 4294901760
      %2371 = vmatmul.f32.gmra.mxu0 %v2370
      %v2372 = vpop.f32.mrf.mxu0
      %v2373 = vadd.f32 %v2323, %v2372
      %v2374 = vand.u32 %v2012, 4294901760
      %2375 = vmatmul.f32.gmra.mxu0 %v2374
      %v2376 = vpop.f32.mrf.mxu0
      %v2377 = vadd.f32 %v2327, %v2376
      %v2378 = vand.u32 %v2015, 4294901760
      %2379 = vmatmul.f32.gmra.mxu0 %v2378
      %v2380 = vpop.f32.mrf.mxu0
      %v2381 = vadd.f32 %v2331, %v2380
      %2382 = vdwg.mxu0
      %v2383 = vadd.f32 %v1975, %v2353
      %v2384 = vadd.f32 %v1976, %v2357
      %v2385 = vadd.f32 %v1977, %v2361
      %v2386 = vadd.f32 %v1978, %v2365
      %v2387 = vadd.f32 %v1979, %v2369
      %v2388 = vadd.f32 %v1980, %v2373
      %v2389 = vadd.f32 %v1981, %v2377
      %v2390 = vadd.f32 %v1982, %v2381
      %v2391 = vld [vmem:[%s355 + $0x1] sm:$0xff]
      %v2392 = vld [vmem:[%s355 + $0x11] sm:$0xff]
      %v2393 = vld [vmem:[%s355 + $0x21] sm:$0xff]
      %v2394 = vld [vmem:[%s355 + $0x31] sm:$0xff]
      %v2395 = vld [vmem:[%s355 + $0x41] sm:$0xff]
      %v2396 = vld [vmem:[%s355 + $0x51] sm:$0xff]
      %v2397 = vld [vmem:[%s355 + $0x61] sm:$0xff]
      %v2398 = vld [vmem:[%s355 + $0x71] sm:$0xff]
      %s2399 = scalar_lea.vmem %s4, 20
      %v2400 = vld [vmem:[%s2399] sm:$0xf]
      %v2402 = vsel %vm385, %v2391, 0
      %v2405 = vsel %vm385, %v2392, 0
      %v2408 = vsel %vm385, %v2393, 0
      %v2411 = vsel %vm385, %v2394, 0
      %v2414 = vsel %vm385, %v2395, 0
      %v2417 = vsel %vm385, %v2396, 0
      %v2420 = vsel %vm385, %v2397, 0
      %v2423 = vsel %vm385, %v2398, 0
      %v2426 = vsel %vm410, %v2400, 0
      %2428 = vmatpush.msra.mxu0 0.0
      %2429 = vmatpush.msra.mxu0 0.0
      %2430 = vmatpush.msra.mxu0 0.0
      %2431 = vmatpush.msra.mxu0 0.0
      %2432 = vmatpush.msra.mxu0 0.0
      %2433 = vmatpush.msra.mxu0 0.0
      %2434 = vmatpush.msra.mxu0 0.0
      %2435 = vmatpush.msra.mxu0 0.0
      %2436 = vmatpush.msra.mxu0 0.0
      %2437 = vmatpush.msra.mxu0 0.0
      %2438 = vmatpush.msra.mxu0 0.0
      %2439 = vmatpush.msra.mxu0 0.0
      %2440 = vmatpush.msra.mxu0 0.0
      %2441 = vmatpush.msra.mxu0 0.0
      %2442 = vmatpush.msra.mxu0 0.0
      %v2443 = vand.u32 %v2426, 4294901760
      %2444 = vmatpush.msra.mxu0 %v2443
      %v2445 = vand.u32 %v2402, 4294901760
      %v2446 = vsub.f32 %v2402, %v2445
      %v2447 = vand.u32 %v2446, 4294901760
      %v2448 = vsub.f32 %v2446, %v2447
      %v2449 = vand.u32 %v2448, 4294901760
      %2450 = vmatmul.f32.gmra.mxu0 %v2449
      %v2451 = vpop.f32.mrf.mxu0
      %v2452 = vadd.f32 0.0, %v2451
      %v2453 = vand.u32 %v2405, 4294901760
      %v2454 = vsub.f32 %v2405, %v2453
      %v2455 = vand.u32 %v2454, 4294901760
      %v2456 = vsub.f32 %v2454, %v2455
      %v2457 = vand.u32 %v2456, 4294901760
      %2458 = vmatmul.f32.gmra.mxu0 %v2457
      %v2459 = vpop.f32.mrf.mxu0
      %v2460 = vadd.f32 0.0, %v2459
      %v2461 = vand.u32 %v2408, 4294901760
      %v2462 = vsub.f32 %v2408, %v2461
      %v2463 = vand.u32 %v2462, 4294901760
      %v2464 = vsub.f32 %v2462, %v2463
      %v2465 = vand.u32 %v2464, 4294901760
      %2466 = vmatmul.f32.gmra.mxu0 %v2465
      %v2467 = vpop.f32.mrf.mxu0
      %v2468 = vadd.f32 0.0, %v2467
      %v2469 = vand.u32 %v2411, 4294901760
      %v2470 = vsub.f32 %v2411, %v2469
      %v2471 = vand.u32 %v2470, 4294901760
      %v2472 = vsub.f32 %v2470, %v2471
      %v2473 = vand.u32 %v2472, 4294901760
      %2474 = vmatmul.f32.gmra.mxu0 %v2473
      %v2475 = vpop.f32.mrf.mxu0
      %v2476 = vadd.f32 0.0, %v2475
      %v2477 = vand.u32 %v2414, 4294901760
      %v2478 = vsub.f32 %v2414, %v2477
      %v2479 = vand.u32 %v2478, 4294901760
      %v2480 = vsub.f32 %v2478, %v2479
      %v2481 = vand.u32 %v2480, 4294901760
      %2482 = vmatmul.f32.gmra.mxu0 %v2481
      %v2483 = vpop.f32.mrf.mxu0
      %v2484 = vadd.f32 0.0, %v2483
      %v2485 = vand.u32 %v2417, 4294901760
      %v2486 = vsub.f32 %v2417, %v2485
      %v2487 = vand.u32 %v2486, 4294901760
      %v2488 = vsub.f32 %v2486, %v2487
      %v2489 = vand.u32 %v2488, 4294901760
      %2490 = vmatmul.f32.gmra.mxu0 %v2489
      %v2491 = vpop.f32.mrf.mxu0
      %v2492 = vadd.f32 0.0, %v2491
      %v2493 = vand.u32 %v2420, 4294901760
      %v2494 = vsub.f32 %v2420, %v2493
      %v2495 = vand.u32 %v2494, 4294901760
      %v2496 = vsub.f32 %v2494, %v2495
      %v2497 = vand.u32 %v2496, 4294901760
      %2498 = vmatmul.f32.gmra.mxu0 %v2497
      %v2499 = vpop.f32.mrf.mxu0
      %v2500 = vadd.f32 0.0, %v2499
      %v2501 = vand.u32 %v2423, 4294901760
      %v2502 = vsub.f32 %v2423, %v2501
      %v2503 = vand.u32 %v2502, 4294901760
      %v2504 = vsub.f32 %v2502, %v2503
      %v2505 = vand.u32 %v2504, 4294901760
      %2506 = vmatmul.f32.gmra.mxu0 %v2505
      %v2507 = vpop.f32.mrf.mxu0
      %v2508 = vadd.f32 0.0, %v2507
      %2509 = vdwg.mxu0
      %2510 = vmatpush.msra.mxu0 0.0
      %2511 = vmatpush.msra.mxu0 0.0
      %2512 = vmatpush.msra.mxu0 0.0
      %2513 = vmatpush.msra.mxu0 0.0
      %2514 = vmatpush.msra.mxu0 0.0
      %2515 = vmatpush.msra.mxu0 0.0
      %2516 = vmatpush.msra.mxu0 0.0
      %2517 = vmatpush.msra.mxu0 0.0
      %2518 = vmatpush.msra.mxu0 0.0
      %2519 = vmatpush.msra.mxu0 0.0
      %2520 = vmatpush.msra.mxu0 0.0
      %2521 = vmatpush.msra.mxu0 0.0
      %2522 = vmatpush.msra.mxu0 0.0
      %2523 = vmatpush.msra.mxu0 0.0
      %2524 = vmatpush.msra.mxu0 0.0
      %v2525 = vand.u32 %v2426, 4294901760
      %v2526 = vsub.f32 %v2426, %v2525
      %v2527 = vand.u32 %v2526, 4294901760
      %v2528 = vsub.f32 %v2526, %v2527
      %v2529 = vand.u32 %v2528, 4294901760
      %2530 = vmatpush.msra.mxu0 %v2529
      %v2531 = vand.u32 %v2402, 4294901760
      %2532 = vmatmul.f32.gmra.mxu0 %v2531
      %v2533 = vpop.f32.mrf.mxu0
      %v2534 = vadd.f32 %v2452, %v2533
      %v2535 = vand.u32 %v2405, 4294901760
      %2536 = vmatmul.f32.gmra.mxu0 %v2535
      %v2537 = vpop.f32.mrf.mxu0
      %v2538 = vadd.f32 %v2460, %v2537
      %v2539 = vand.u32 %v2408, 4294901760
      %2540 = vmatmul.f32.gmra.mxu0 %v2539
      %v2541 = vpop.f32.mrf.mxu0
      %v2542 = vadd.f32 %v2468, %v2541
      %v2543 = vand.u32 %v2411, 4294901760
      %2544 = vmatmul.f32.gmra.mxu0 %v2543
      %v2545 = vpop.f32.mrf.mxu0
      %v2546 = vadd.f32 %v2476, %v2545
      %v2547 = vand.u32 %v2414, 4294901760
      %2548 = vmatmul.f32.gmra.mxu0 %v2547
      %v2549 = vpop.f32.mrf.mxu0
      %v2550 = vadd.f32 %v2484, %v2549
      %v2551 = vand.u32 %v2417, 4294901760
      %2552 = vmatmul.f32.gmra.mxu0 %v2551
      %v2553 = vpop.f32.mrf.mxu0
      %v2554 = vadd.f32 %v2492, %v2553
      %v2555 = vand.u32 %v2420, 4294901760
      %2556 = vmatmul.f32.gmra.mxu0 %v2555
      %v2557 = vpop.f32.mrf.mxu0
      %v2558 = vadd.f32 %v2500, %v2557
      %v2559 = vand.u32 %v2423, 4294901760
      %2560 = vmatmul.f32.gmra.mxu0 %v2559
      %v2561 = vpop.f32.mrf.mxu0
      %v2562 = vadd.f32 %v2508, %v2561
      %2563 = vdwg.mxu0
      %2564 = vmatpush.msra.mxu0 0.0
      %2565 = vmatpush.msra.mxu0 0.0
      %2566 = vmatpush.msra.mxu0 0.0
      %2567 = vmatpush.msra.mxu0 0.0
      %2568 = vmatpush.msra.mxu0 0.0
      %2569 = vmatpush.msra.mxu0 0.0
      %2570 = vmatpush.msra.mxu0 0.0
      %2571 = vmatpush.msra.mxu0 0.0
      %2572 = vmatpush.msra.mxu0 0.0
      %2573 = vmatpush.msra.mxu0 0.0
      %2574 = vmatpush.msra.mxu0 0.0
      %2575 = vmatpush.msra.mxu0 0.0
      %2576 = vmatpush.msra.mxu0 0.0
      %2577 = vmatpush.msra.mxu0 0.0
      %2578 = vmatpush.msra.mxu0 0.0
      %v2579 = vand.u32 %v2426, 4294901760
      %v2580 = vsub.f32 %v2426, %v2579
      %2581 = vmatpush.msra.mxu0 %v2580
      %v2582 = vand.u32 %v2402, 4294901760
      %v2583 = vsub.f32 %v2402, %v2582
      %2584 = vmatmul.f32.gmra.mxu0 %v2583
      %v2585 = vpop.f32.mrf.mxu0
      %v2586 = vadd.f32 %v2534, %v2585
      %v2587 = vand.u32 %v2405, 4294901760
      %v2588 = vsub.f32 %v2405, %v2587
      %2589 = vmatmul.f32.gmra.mxu0 %v2588
      %v2590 = vpop.f32.mrf.mxu0
      %v2591 = vadd.f32 %v2538, %v2590
      %v2592 = vand.u32 %v2408, 4294901760
      %v2593 = vsub.f32 %v2408, %v2592
      %2594 = vmatmul.f32.gmra.mxu0 %v2593
      %v2595 = vpop.f32.mrf.mxu0
      %v2596 = vadd.f32 %v2542, %v2595
      %v2597 = vand.u32 %v2411, 4294901760
      %v2598 = vsub.f32 %v2411, %v2597
      %2599 = vmatmul.f32.gmra.mxu0 %v2598
      %v2600 = vpop.f32.mrf.mxu0
      %v2601 = vadd.f32 %v2546, %v2600
      %v2602 = vand.u32 %v2414, 4294901760
      %v2603 = vsub.f32 %v2414, %v2602
      %2604 = vmatmul.f32.gmra.mxu0 %v2603
      %v2605 = vpop.f32.mrf.mxu0
      %v2606 = vadd.f32 %v2550, %v2605
      %v2607 = vand.u32 %v2417, 4294901760
      %v2608 = vsub.f32 %v2417, %v2607
      %2609 = vmatmul.f32.gmra.mxu0 %v2608
      %v2610 = vpop.f32.mrf.mxu0
      %v2611 = vadd.f32 %v2554, %v2610
      %v2612 = vand.u32 %v2420, 4294901760
      %v2613 = vsub.f32 %v2420, %v2612
      %2614 = vmatmul.f32.gmra.mxu0 %v2613
      %v2615 = vpop.f32.mrf.mxu0
      %v2616 = vadd.f32 %v2558, %v2615
      %v2617 = vand.u32 %v2423, 4294901760
      %v2618 = vsub.f32 %v2423, %v2617
      %2619 = vmatmul.f32.gmra.mxu0 %v2618
      %v2620 = vpop.f32.mrf.mxu0
      %v2621 = vadd.f32 %v2562, %v2620
      %2622 = vdwg.mxu0
      %2623 = vmatpush.msra.mxu0 0.0
      %2624 = vmatpush.msra.mxu0 0.0
      %2625 = vmatpush.msra.mxu0 0.0
      %2626 = vmatpush.msra.mxu0 0.0
      %2627 = vmatpush.msra.mxu0 0.0
      %2628 = vmatpush.msra.mxu0 0.0
      %2629 = vmatpush.msra.mxu0 0.0
      %2630 = vmatpush.msra.mxu0 0.0
      %2631 = vmatpush.msra.mxu0 0.0
      %2632 = vmatpush.msra.mxu0 0.0
      %2633 = vmatpush.msra.mxu0 0.0
      %2634 = vmatpush.msra.mxu0 0.0
      %2635 = vmatpush.msra.mxu0 0.0
      %2636 = vmatpush.msra.mxu0 0.0
      %2637 = vmatpush.msra.mxu0 0.0
      %v2638 = vand.u32 %v2426, 4294901760
      %2639 = vmatpush.msra.mxu0 %v2638
      %v2640 = vand.u32 %v2402, 4294901760
      %v2641 = vsub.f32 %v2402, %v2640
      %v2642 = vand.u32 %v2641, 4294901760
      %2643 = vmatmul.f32.gmra.mxu0 %v2642
      %v2644 = vpop.f32.mrf.mxu0
      %v2645 = vadd.f32 %v2586, %v2644
      %v2646 = vand.u32 %v2405, 4294901760
      %v2647 = vsub.f32 %v2405, %v2646
      %v2648 = vand.u32 %v2647, 4294901760
      %2649 = vmatmul.f32.gmra.mxu0 %v2648
      %v2650 = vpop.f32.mrf.mxu0
      %v2651 = vadd.f32 %v2591, %v2650
      %v2652 = vand.u32 %v2408, 4294901760
      %v2653 = vsub.f32 %v2408, %v2652
      %v2654 = vand.u32 %v2653, 4294901760
      %2655 = vmatmul.f32.gmra.mxu0 %v2654
      %v2656 = vpop.f32.mrf.mxu0
      %v2657 = vadd.f32 %v2596, %v2656
      %v2658 = vand.u32 %v2411, 4294901760
      %v2659 = vsub.f32 %v2411, %v2658
      %v2660 = vand.u32 %v2659, 4294901760
      %2661 = vmatmul.f32.gmra.mxu0 %v2660
      %v2662 = vpop.f32.mrf.mxu0
      %v2663 = vadd.f32 %v2601, %v2662
      %v2664 = vand.u32 %v2414, 4294901760
      %v2665 = vsub.f32 %v2414, %v2664
      %v2666 = vand.u32 %v2665, 4294901760
      %2667 = vmatmul.f32.gmra.mxu0 %v2666
      %v2668 = vpop.f32.mrf.mxu0
      %v2669 = vadd.f32 %v2606, %v2668
      %v2670 = vand.u32 %v2417, 4294901760
      %v2671 = vsub.f32 %v2417, %v2670
      %v2672 = vand.u32 %v2671, 4294901760
      %2673 = vmatmul.f32.gmra.mxu0 %v2672
      %v2674 = vpop.f32.mrf.mxu0
      %v2675 = vadd.f32 %v2611, %v2674
      %v2676 = vand.u32 %v2420, 4294901760
      %v2677 = vsub.f32 %v2420, %v2676
      %v2678 = vand.u32 %v2677, 4294901760
      %2679 = vmatmul.f32.gmra.mxu0 %v2678
      %v2680 = vpop.f32.mrf.mxu0
      %v2681 = vadd.f32 %v2616, %v2680
      %v2682 = vand.u32 %v2423, 4294901760
      %v2683 = vsub.f32 %v2423, %v2682
      %v2684 = vand.u32 %v2683, 4294901760
      %2685 = vmatmul.f32.gmra.mxu0 %v2684
      %v2686 = vpop.f32.mrf.mxu0
      %v2687 = vadd.f32 %v2621, %v2686
      %2688 = vdwg.mxu0
      %2689 = vmatpush.msra.mxu0 0.0
      %2690 = vmatpush.msra.mxu0 0.0
      %2691 = vmatpush.msra.mxu0 0.0
      %2692 = vmatpush.msra.mxu0 0.0
      %2693 = vmatpush.msra.mxu0 0.0
      %2694 = vmatpush.msra.mxu0 0.0
      %2695 = vmatpush.msra.mxu0 0.0
      %2696 = vmatpush.msra.mxu0 0.0
      %2697 = vmatpush.msra.mxu0 0.0
      %2698 = vmatpush.msra.mxu0 0.0
      %2699 = vmatpush.msra.mxu0 0.0
      %2700 = vmatpush.msra.mxu0 0.0
      %2701 = vmatpush.msra.mxu0 0.0
      %2702 = vmatpush.msra.mxu0 0.0
      %2703 = vmatpush.msra.mxu0 0.0
      %v2704 = vand.u32 %v2426, 4294901760
      %v2705 = vsub.f32 %v2426, %v2704
      %v2706 = vand.u32 %v2705, 4294901760
      %2707 = vmatpush.msra.mxu0 %v2706
      %v2708 = vand.u32 %v2402, 4294901760
      %2709 = vmatmul.f32.gmra.mxu0 %v2708
      %v2710 = vpop.f32.mrf.mxu0
      %v2711 = vadd.f32 %v2645, %v2710
      %v2712 = vand.u32 %v2405, 4294901760
      %2713 = vmatmul.f32.gmra.mxu0 %v2712
      %v2714 = vpop.f32.mrf.mxu0
      %v2715 = vadd.f32 %v2651, %v2714
      %v2716 = vand.u32 %v2408, 4294901760
      %2717 = vmatmul.f32.gmra.mxu0 %v2716
      %v2718 = vpop.f32.mrf.mxu0
      %v2719 = vadd.f32 %v2657, %v2718
      %v2720 = vand.u32 %v2411, 4294901760
      %2721 = vmatmul.f32.gmra.mxu0 %v2720
      %v2722 = vpop.f32.mrf.mxu0
      %v2723 = vadd.f32 %v2663, %v2722
      %v2724 = vand.u32 %v2414, 4294901760
      %2725 = vmatmul.f32.gmra.mxu0 %v2724
      %v2726 = vpop.f32.mrf.mxu0
      %v2727 = vadd.f32 %v2669, %v2726
      %v2728 = vand.u32 %v2417, 4294901760
      %2729 = vmatmul.f32.gmra.mxu0 %v2728
      %v2730 = vpop.f32.mrf.mxu0
      %v2731 = vadd.f32 %v2675, %v2730
      %v2732 = vand.u32 %v2420, 4294901760
      %2733 = vmatmul.f32.gmra.mxu0 %v2732
      %v2734 = vpop.f32.mrf.mxu0
      %v2735 = vadd.f32 %v2681, %v2734
      %v2736 = vand.u32 %v2423, 4294901760
      %2737 = vmatmul.f32.gmra.mxu0 %v2736
      %v2738 = vpop.f32.mrf.mxu0
      %v2739 = vadd.f32 %v2687, %v2738
      %2740 = vdwg.mxu0
      %2741 = vmatpush.msra.mxu0 0.0
      %2742 = vmatpush.msra.mxu0 0.0
      %2743 = vmatpush.msra.mxu0 0.0
      %2744 = vmatpush.msra.mxu0 0.0
      %2745 = vmatpush.msra.mxu0 0.0
      %2746 = vmatpush.msra.mxu0 0.0
      %2747 = vmatpush.msra.mxu0 0.0
      %2748 = vmatpush.msra.mxu0 0.0
      %2749 = vmatpush.msra.mxu0 0.0
      %2750 = vmatpush.msra.mxu0 0.0
      %2751 = vmatpush.msra.mxu0 0.0
      %2752 = vmatpush.msra.mxu0 0.0
      %2753 = vmatpush.msra.mxu0 0.0
      %2754 = vmatpush.msra.mxu0 0.0
      %2755 = vmatpush.msra.mxu0 0.0
      %v2756 = vand.u32 %v2426, 4294901760
      %2757 = vmatpush.msra.mxu0 %v2756
      %v2758 = vand.u32 %v2402, 4294901760
      %2759 = vmatmul.f32.gmra.mxu0 %v2758
      %v2760 = vpop.f32.mrf.mxu0
      %v2761 = vadd.f32 %v2711, %v2760
      %v2762 = vand.u32 %v2405, 4294901760
      %2763 = vmatmul.f32.gmra.mxu0 %v2762
      %v2764 = vpop.f32.mrf.mxu0
      %v2765 = vadd.f32 %v2715, %v2764
      %v2766 = vand.u32 %v2408, 4294901760
      %2767 = vmatmul.f32.gmra.mxu0 %v2766
      %v2768 = vpop.f32.mrf.mxu0
      %v2769 = vadd.f32 %v2719, %v2768
      %v2770 = vand.u32 %v2411, 4294901760
      %2771 = vmatmul.f32.gmra.mxu0 %v2770
      %v2772 = vpop.f32.mrf.mxu0
      %v2773 = vadd.f32 %v2723, %v2772
      %v2774 = vand.u32 %v2414, 4294901760
      %2775 = vmatmul.f32.gmra.mxu0 %v2774
      %v2776 = vpop.f32.mrf.mxu0
      %v2777 = vadd.f32 %v2727, %v2776
      %v2778 = vand.u32 %v2417, 4294901760
      %2779 = vmatmul.f32.gmra.mxu0 %v2778
      %v2780 = vpop.f32.mrf.mxu0
      %v2781 = vadd.f32 %v2731, %v2780
      %v2782 = vand.u32 %v2420, 4294901760
      %2783 = vmatmul.f32.gmra.mxu0 %v2782
      %v2784 = vpop.f32.mrf.mxu0
      %v2785 = vadd.f32 %v2735, %v2784
      %v2786 = vand.u32 %v2423, 4294901760
      %2787 = vmatmul.f32.gmra.mxu0 %v2786
      %v2788 = vpop.f32.mrf.mxu0
      %v2789 = vadd.f32 %v2739, %v2788
      %2790 = vdwg.mxu0
      %v2791 = vadd.f32 %v2383, %v2761
      %v2792 = vadd.f32 %v2384, %v2765
      %v2793 = vadd.f32 %v2385, %v2769
      %v2794 = vadd.f32 %v2386, %v2773
      %v2795 = vadd.f32 %v2387, %v2777
      %v2796 = vadd.f32 %v2388, %v2781
      %v2797 = vadd.f32 %v2389, %v2785
      %v2798 = vadd.f32 %v2390, %v2789
      %s2799 = scalar_lea.vmem %s345, 16
      %v2800 = vld [vmem:[%s2799] sm:$0xff]
      %v2801 = vld [vmem:[%s2799 + $0x10] sm:$0xff]
      %v2802 = vld [vmem:[%s2799 + $0x20] sm:$0xff]
      %v2803 = vld [vmem:[%s2799 + $0x30] sm:$0xff]
      %v2804 = vld [vmem:[%s2799 + $0x40] sm:$0xff]
      %v2805 = vld [vmem:[%s2799 + $0x50] sm:$0xff]
      %v2806 = vld [vmem:[%s2799 + $0x60] sm:$0xff]
      %v2807 = vld [vmem:[%s2799 + $0x70] sm:$0xff]
      %s2808 = scalar_lea.vmem %s4, 24
      %v2809 = vld [vmem:[%s2808] sm:$0xf]
      %v2811 = vsel %vm385, %v2800, 0
      %v2814 = vsel %vm385, %v2801, 0
      %v2817 = vsel %vm385, %v2802, 0
      %v2820 = vsel %vm385, %v2803, 0
      %v2823 = vsel %vm385, %v2804, 0
      %v2826 = vsel %vm385, %v2805, 0
      %v2829 = vsel %vm385, %v2806, 0
      %v2832 = vsel %vm385, %v2807, 0
      %v2835 = vsel %vm410, %v2809, 0
      %2837 = vmatpush.msra.mxu0 0.0
      %2838 = vmatpush.msra.mxu0 0.0
      %2839 = vmatpush.msra.mxu0 0.0
      %2840 = vmatpush.msra.mxu0 0.0
      %2841 = vmatpush.msra.mxu0 0.0
      %2842 = vmatpush.msra.mxu0 0.0
      %2843 = vmatpush.msra.mxu0 0.0
      %2844 = vmatpush.msra.mxu0 0.0
      %2845 = vmatpush.msra.mxu0 0.0
      %2846 = vmatpush.msra.mxu0 0.0
      %2847 = vmatpush.msra.mxu0 0.0
      %2848 = vmatpush.msra.mxu0 0.0
      %2849 = vmatpush.msra.mxu0 0.0
      %2850 = vmatpush.msra.mxu0 0.0
      %2851 = vmatpush.msra.mxu0 0.0
      %v2852 = vand.u32 %v2835, 4294901760
      %2853 = vmatpush.msra.mxu0 %v2852
      %v2854 = vand.u32 %v2811, 4294901760
      %v2855 = vsub.f32 %v2811, %v2854
      %v2856 = vand.u32 %v2855, 4294901760
      %v2857 = vsub.f32 %v2855, %v2856
      %v2858 = vand.u32 %v2857, 4294901760
      %2859 = vmatmul.f32.gmra.mxu0 %v2858
      %v2860 = vpop.f32.mrf.mxu0
      %v2861 = vadd.f32 0.0, %v2860
      %v2862 = vand.u32 %v2814, 4294901760
      %v2863 = vsub.f32 %v2814, %v2862
      %v2864 = vand.u32 %v2863, 4294901760
      %v2865 = vsub.f32 %v2863, %v2864
      %v2866 = vand.u32 %v2865, 4294901760
      %2867 = vmatmul.f32.gmra.mxu0 %v2866
      %v2868 = vpop.f32.mrf.mxu0
      %v2869 = vadd.f32 0.0, %v2868
      %v2870 = vand.u32 %v2817, 4294901760
      %v2871 = vsub.f32 %v2817, %v2870
      %v2872 = vand.u32 %v2871, 4294901760
      %v2873 = vsub.f32 %v2871, %v2872
      %v2874 = vand.u32 %v2873, 4294901760
      %2875 = vmatmul.f32.gmra.mxu0 %v2874
      %v2876 = vpop.f32.mrf.mxu0
      %v2877 = vadd.f32 0.0, %v2876
      %v2878 = vand.u32 %v2820, 4294901760
      %v2879 = vsub.f32 %v2820, %v2878
      %v2880 = vand.u32 %v2879, 4294901760
      %v2881 = vsub.f32 %v2879, %v2880
      %v2882 = vand.u32 %v2881, 4294901760
      %2883 = vmatmul.f32.gmra.mxu0 %v2882
      %v2884 = vpop.f32.mrf.mxu0
      %v2885 = vadd.f32 0.0, %v2884
      %v2886 = vand.u32 %v2823, 4294901760
      %v2887 = vsub.f32 %v2823, %v2886
      %v2888 = vand.u32 %v2887, 4294901760
      %v2889 = vsub.f32 %v2887, %v2888
      %v2890 = vand.u32 %v2889, 4294901760
      %2891 = vmatmul.f32.gmra.mxu0 %v2890
      %v2892 = vpop.f32.mrf.mxu0
      %v2893 = vadd.f32 0.0, %v2892
      %v2894 = vand.u32 %v2826, 4294901760
      %v2895 = vsub.f32 %v2826, %v2894
      %v2896 = vand.u32 %v2895, 4294901760
      %v2897 = vsub.f32 %v2895, %v2896
      %v2898 = vand.u32 %v2897, 4294901760
      %2899 = vmatmul.f32.gmra.mxu0 %v2898
      %v2900 = vpop.f32.mrf.mxu0
      %v2901 = vadd.f32 0.0, %v2900
      %v2902 = vand.u32 %v2829, 4294901760
      %v2903 = vsub.f32 %v2829, %v2902
      %v2904 = vand.u32 %v2903, 4294901760
      %v2905 = vsub.f32 %v2903, %v2904
      %v2906 = vand.u32 %v2905, 4294901760
      %2907 = vmatmul.f32.gmra.mxu0 %v2906
      %v2908 = vpop.f32.mrf.mxu0
      %v2909 = vadd.f32 0.0, %v2908
      %v2910 = vand.u32 %v2832, 4294901760
      %v2911 = vsub.f32 %v2832, %v2910
      %v2912 = vand.u32 %v2911, 4294901760
      %v2913 = vsub.f32 %v2911, %v2912
      %v2914 = vand.u32 %v2913, 4294901760
      %2915 = vmatmul.f32.gmra.mxu0 %v2914
      %v2916 = vpop.f32.mrf.mxu0
      %v2917 = vadd.f32 0.0, %v2916
      %2918 = vdwg.mxu0
      %2919 = vmatpush.msra.mxu0 0.0
      %2920 = vmatpush.msra.mxu0 0.0
      %2921 = vmatpush.msra.mxu0 0.0
      %2922 = vmatpush.msra.mxu0 0.0
      %2923 = vmatpush.msra.mxu0 0.0
      %2924 = vmatpush.msra.mxu0 0.0
      %2925 = vmatpush.msra.mxu0 0.0
      %2926 = vmatpush.msra.mxu0 0.0
      %2927 = vmatpush.msra.mxu0 0.0
      %2928 = vmatpush.msra.mxu0 0.0
      %2929 = vmatpush.msra.mxu0 0.0
      %2930 = vmatpush.msra.mxu0 0.0
      %2931 = vmatpush.msra.mxu0 0.0
      %2932 = vmatpush.msra.mxu0 0.0
      %2933 = vmatpush.msra.mxu0 0.0
      %v2934 = vand.u32 %v2835, 4294901760
      %v2935 = vsub.f32 %v2835, %v2934
      %v2936 = vand.u32 %v2935, 4294901760
      %v2937 = vsub.f32 %v2935, %v2936
      %v2938 = vand.u32 %v2937, 4294901760
      %2939 = vmatpush.msra.mxu0 %v2938
      %v2940 = vand.u32 %v2811, 4294901760
      %2941 = vmatmul.f32.gmra.mxu0 %v2940
      %v2942 = vpop.f32.mrf.mxu0
      %v2943 = vadd.f32 %v2861, %v2942
      %v2944 = vand.u32 %v2814, 4294901760
      %2945 = vmatmul.f32.gmra.mxu0 %v2944
      %v2946 = vpop.f32.mrf.mxu0
      %v2947 = vadd.f32 %v2869, %v2946
      %v2948 = vand.u32 %v2817, 4294901760
      %2949 = vmatmul.f32.gmra.mxu0 %v2948
      %v2950 = vpop.f32.mrf.mxu0
      %v2951 = vadd.f32 %v2877, %v2950
      %v2952 = vand.u32 %v2820, 4294901760
      %2953 = vmatmul.f32.gmra.mxu0 %v2952
      %v2954 = vpop.f32.mrf.mxu0
      %v2955 = vadd.f32 %v2885, %v2954
      %v2956 = vand.u32 %v2823, 4294901760
      %2957 = vmatmul.f32.gmra.mxu0 %v2956
      %v2958 = vpop.f32.mrf.mxu0
      %v2959 = vadd.f32 %v2893, %v2958
      %v2960 = vand.u32 %v2826, 4294901760
      %2961 = vmatmul.f32.gmra.mxu0 %v2960
      %v2962 = vpop.f32.mrf.mxu0
      %v2963 = vadd.f32 %v2901, %v2962
      %v2964 = vand.u32 %v2829, 4294901760
      %2965 = vmatmul.f32.gmra.mxu0 %v2964
      %v2966 = vpop.f32.mrf.mxu0
      %v2967 = vadd.f32 %v2909, %v2966
      %v2968 = vand.u32 %v2832, 4294901760
      %2969 = vmatmul.f32.gmra.mxu0 %v2968
      %v2970 = vpop.f32.mrf.mxu0
      %v2971 = vadd.f32 %v2917, %v2970
      %2972 = vdwg.mxu0
      %2973 = vmatpush.msra.mxu0 0.0
      %2974 = vmatpush.msra.mxu0 0.0
      %2975 = vmatpush.msra.mxu0 0.0
      %2976 = vmatpush.msra.mxu0 0.0
      %2977 = vmatpush.msra.mxu0 0.0
      %2978 = vmatpush.msra.mxu0 0.0
      %2979 = vmatpush.msra.mxu0 0.0
      %2980 = vmatpush.msra.mxu0 0.0
      %2981 = vmatpush.msra.mxu0 0.0
      %2982 = vmatpush.msra.mxu0 0.0
      %2983 = vmatpush.msra.mxu0 0.0
      %2984 = vmatpush.msra.mxu0 0.0
      %2985 = vmatpush.msra.mxu0 0.0
      %2986 = vmatpush.msra.mxu0 0.0
      %2987 = vmatpush.msra.mxu0 0.0
      %v2988 = vand.u32 %v2835, 4294901760
      %v2989 = vsub.f32 %v2835, %v2988
      %2990 = vmatpush.msra.mxu0 %v2989
      %v2991 = vand.u32 %v2811, 4294901760
      %v2992 = vsub.f32 %v2811, %v2991
      %2993 = vmatmul.f32.gmra.mxu0 %v2992
      %v2994 = vpop.f32.mrf.mxu0
      %v2995 = vadd.f32 %v2943, %v2994
      %v2996 = vand.u32 %v2814, 4294901760
      %v2997 = vsub.f32 %v2814, %v2996
      %2998 = vmatmul.f32.gmra.mxu0 %v2997
      %v2999 = vpop.f32.mrf.mxu0
      %v3000 = vadd.f32 %v2947, %v2999
      %v3001 = vand.u32 %v2817, 4294901760
      %v3002 = vsub.f32 %v2817, %v3001
      %3003 = vmatmul.f32.gmra.mxu0 %v3002
      %v3004 = vpop.f32.mrf.mxu0
      %v3005 = vadd.f32 %v2951, %v3004
      %v3006 = vand.u32 %v2820, 4294901760
      %v3007 = vsub.f32 %v2820, %v3006
      %3008 = vmatmul.f32.gmra.mxu0 %v3007
      %v3009 = vpop.f32.mrf.mxu0
      %v3010 = vadd.f32 %v2955, %v3009
      %v3011 = vand.u32 %v2823, 4294901760
      %v3012 = vsub.f32 %v2823, %v3011
      %3013 = vmatmul.f32.gmra.mxu0 %v3012
      %v3014 = vpop.f32.mrf.mxu0
      %v3015 = vadd.f32 %v2959, %v3014
      %v3016 = vand.u32 %v2826, 4294901760
      %v3017 = vsub.f32 %v2826, %v3016
      %3018 = vmatmul.f32.gmra.mxu0 %v3017
      %v3019 = vpop.f32.mrf.mxu0
      %v3020 = vadd.f32 %v2963, %v3019
      %v3021 = vand.u32 %v2829, 4294901760
      %v3022 = vsub.f32 %v2829, %v3021
      %3023 = vmatmul.f32.gmra.mxu0 %v3022
      %v3024 = vpop.f32.mrf.mxu0
      %v3025 = vadd.f32 %v2967, %v3024
      %v3026 = vand.u32 %v2832, 4294901760
      %v3027 = vsub.f32 %v2832, %v3026
      %3028 = vmatmul.f32.gmra.mxu0 %v3027
      %v3029 = vpop.f32.mrf.mxu0
      %v3030 = vadd.f32 %v2971, %v3029
      %3031 = vdwg.mxu0
      %3032 = vmatpush.msra.mxu0 0.0
      %3033 = vmatpush.msra.mxu0 0.0
      %3034 = vmatpush.msra.mxu0 0.0
      %3035 = vmatpush.msra.mxu0 0.0
      %3036 = vmatpush.msra.mxu0 0.0
      %3037 = vmatpush.msra.mxu0 0.0
      %3038 = vmatpush.msra.mxu0 0.0
      %3039 = vmatpush.msra.mxu0 0.0
      %3040 = vmatpush.msra.mxu0 0.0
      %3041 = vmatpush.msra.mxu0 0.0
      %3042 = vmatpush.msra.mxu0 0.0
      %3043 = vmatpush.msra.mxu0 0.0
      %3044 = vmatpush.msra.mxu0 0.0
      %3045 = vmatpush.msra.mxu0 0.0
      %3046 = vmatpush.msra.mxu0 0.0
      %v3047 = vand.u32 %v2835, 4294901760
      %3048 = vmatpush.msra.mxu0 %v3047
      %v3049 = vand.u32 %v2811, 4294901760
      %v3050 = vsub.f32 %v2811, %v3049
      %v3051 = vand.u32 %v3050, 4294901760
      %3052 = vmatmul.f32.gmra.mxu0 %v3051
      %v3053 = vpop.f32.mrf.mxu0
      %v3054 = vadd.f32 %v2995, %v3053
      %v3055 = vand.u32 %v2814, 4294901760
      %v3056 = vsub.f32 %v2814, %v3055
      %v3057 = vand.u32 %v3056, 4294901760
      %3058 = vmatmul.f32.gmra.mxu0 %v3057
      %v3059 = vpop.f32.mrf.mxu0
      %v3060 = vadd.f32 %v3000, %v3059
      %v3061 = vand.u32 %v2817, 4294901760
      %v3062 = vsub.f32 %v2817, %v3061
      %v3063 = vand.u32 %v3062, 4294901760
      %3064 = vmatmul.f32.gmra.mxu0 %v3063
      %v3065 = vpop.f32.mrf.mxu0
      %v3066 = vadd.f32 %v3005, %v3065
      %v3067 = vand.u32 %v2820, 4294901760
      %v3068 = vsub.f32 %v2820, %v3067
      %v3069 = vand.u32 %v3068, 4294901760
      %3070 = vmatmul.f32.gmra.mxu0 %v3069
      %v3071 = vpop.f32.mrf.mxu0
      %v3072 = vadd.f32 %v3010, %v3071
      %v3073 = vand.u32 %v2823, 4294901760
      %v3074 = vsub.f32 %v2823, %v3073
      %v3075 = vand.u32 %v3074, 4294901760
      %3076 = vmatmul.f32.gmra.mxu0 %v3075
      %v3077 = vpop.f32.mrf.mxu0
      %v3078 = vadd.f32 %v3015, %v3077
      %v3079 = vand.u32 %v2826, 4294901760
      %v3080 = vsub.f32 %v2826, %v3079
      %v3081 = vand.u32 %v3080, 4294901760
      %3082 = vmatmul.f32.gmra.mxu0 %v3081
      %v3083 = vpop.f32.mrf.mxu0
      %v3084 = vadd.f32 %v3020, %v3083
      %v3085 = vand.u32 %v2829, 4294901760
      %v3086 = vsub.f32 %v2829, %v3085
      %v3087 = vand.u32 %v3086, 4294901760
      %3088 = vmatmul.f32.gmra.mxu0 %v3087
      %v3089 = vpop.f32.mrf.mxu0
      %v3090 = vadd.f32 %v3025, %v3089
      %v3091 = vand.u32 %v2832, 4294901760
      %v3092 = vsub.f32 %v2832, %v3091
      %v3093 = vand.u32 %v3092, 4294901760
      %3094 = vmatmul.f32.gmra.mxu0 %v3093
      %v3095 = vpop.f32.mrf.mxu0
      %v3096 = vadd.f32 %v3030, %v3095
      %3097 = vdwg.mxu0
      %3098 = vmatpush.msra.mxu0 0.0
      %3099 = vmatpush.msra.mxu0 0.0
      %3100 = vmatpush.msra.mxu0 0.0
      %3101 = vmatpush.msra.mxu0 0.0
      %3102 = vmatpush.msra.mxu0 0.0
      %3103 = vmatpush.msra.mxu0 0.0
      %3104 = vmatpush.msra.mxu0 0.0
      %3105 = vmatpush.msra.mxu0 0.0
      %3106 = vmatpush.msra.mxu0 0.0
      %3107 = vmatpush.msra.mxu0 0.0
      %3108 = vmatpush.msra.mxu0 0.0
      %3109 = vmatpush.msra.mxu0 0.0
      %3110 = vmatpush.msra.mxu0 0.0
      %3111 = vmatpush.msra.mxu0 0.0
      %3112 = vmatpush.msra.mxu0 0.0
      %v3113 = vand.u32 %v2835, 4294901760
      %v3114 = vsub.f32 %v2835, %v3113
      %v3115 = vand.u32 %v3114, 4294901760
      %3116 = vmatpush.msra.mxu0 %v3115
      %v3117 = vand.u32 %v2811, 4294901760
      %3118 = vmatmul.f32.gmra.mxu0 %v3117
      %v3119 = vpop.f32.mrf.mxu0
      %v3120 = vadd.f32 %v3054, %v3119
      %v3121 = vand.u32 %v2814, 4294901760
      %3122 = vmatmul.f32.gmra.mxu0 %v3121
      %v3123 = vpop.f32.mrf.mxu0
      %v3124 = vadd.f32 %v3060, %v3123
      %v3125 = vand.u32 %v2817, 4294901760
      %3126 = vmatmul.f32.gmra.mxu0 %v3125
      %v3127 = vpop.f32.mrf.mxu0
      %v3128 = vadd.f32 %v3066, %v3127
      %v3129 = vand.u32 %v2820, 4294901760
      %3130 = vmatmul.f32.gmra.mxu0 %v3129
      %v3131 = vpop.f32.mrf.mxu0
      %v3132 = vadd.f32 %v3072, %v3131
      %v3133 = vand.u32 %v2823, 4294901760
      %3134 = vmatmul.f32.gmra.mxu0 %v3133
      %v3135 = vpop.f32.mrf.mxu0
      %v3136 = vadd.f32 %v3078, %v3135
      %v3137 = vand.u32 %v2826, 4294901760
      %3138 = vmatmul.f32.gmra.mxu0 %v3137
      %v3139 = vpop.f32.mrf.mxu0
      %v3140 = vadd.f32 %v3084, %v3139
      %v3141 = vand.u32 %v2829, 4294901760
      %3142 = vmatmul.f32.gmra.mxu0 %v3141
      %v3143 = vpop.f32.mrf.mxu0
      %v3144 = vadd.f32 %v3090, %v3143
      %v3145 = vand.u32 %v2832, 4294901760
      %3146 = vmatmul.f32.gmra.mxu0 %v3145
      %v3147 = vpop.f32.mrf.mxu0
      %v3148 = vadd.f32 %v3096, %v3147
      %3149 = vdwg.mxu0
      %3150 = vmatpush.msra.mxu0 0.0
      %3151 = vmatpush.msra.mxu0 0.0
      %3152 = vmatpush.msra.mxu0 0.0
      %3153 = vmatpush.msra.mxu0 0.0
      %3154 = vmatpush.msra.mxu0 0.0
      %3155 = vmatpush.msra.mxu0 0.0
      %3156 = vmatpush.msra.mxu0 0.0
      %3157 = vmatpush.msra.mxu0 0.0
      %3158 = vmatpush.msra.mxu0 0.0
      %3159 = vmatpush.msra.mxu0 0.0
      %3160 = vmatpush.msra.mxu0 0.0
      %3161 = vmatpush.msra.mxu0 0.0
      %3162 = vmatpush.msra.mxu0 0.0
      %3163 = vmatpush.msra.mxu0 0.0
      %3164 = vmatpush.msra.mxu0 0.0
      %v3165 = vand.u32 %v2835, 4294901760
      %3166 = vmatpush.msra.mxu0 %v3165
      %v3167 = vand.u32 %v2811, 4294901760
      %3168 = vmatmul.f32.gmra.mxu0 %v3167
      %v3169 = vpop.f32.mrf.mxu0
      %v3170 = vadd.f32 %v3120, %v3169
      %v3171 = vand.u32 %v2814, 4294901760
      %3172 = vmatmul.f32.gmra.mxu0 %v3171
      %v3173 = vpop.f32.mrf.mxu0
      %v3174 = vadd.f32 %v3124, %v3173
      %v3175 = vand.u32 %v2817, 4294901760
      %3176 = vmatmul.f32.gmra.mxu0 %v3175
      %v3177 = vpop.f32.mrf.mxu0
      %v3178 = vadd.f32 %v3128, %v3177
      %v3179 = vand.u32 %v2820, 4294901760
      %3180 = vmatmul.f32.gmra.mxu0 %v3179
      %v3181 = vpop.f32.mrf.mxu0
      %v3182 = vadd.f32 %v3132, %v3181
      %v3183 = vand.u32 %v2823, 4294901760
      %3184 = vmatmul.f32.gmra.mxu0 %v3183
      %v3185 = vpop.f32.mrf.mxu0
      %v3186 = vadd.f32 %v3136, %v3185
      %v3187 = vand.u32 %v2826, 4294901760
      %3188 = vmatmul.f32.gmra.mxu0 %v3187
      %v3189 = vpop.f32.mrf.mxu0
      %v3190 = vadd.f32 %v3140, %v3189
      %v3191 = vand.u32 %v2829, 4294901760
      %3192 = vmatmul.f32.gmra.mxu0 %v3191
      %v3193 = vpop.f32.mrf.mxu0
      %v3194 = vadd.f32 %v3144, %v3193
      %v3195 = vand.u32 %v2832, 4294901760
      %3196 = vmatmul.f32.gmra.mxu0 %v3195
      %v3197 = vpop.f32.mrf.mxu0
      %v3198 = vadd.f32 %v3148, %v3197
      %3199 = vdwg.mxu0
      %v3200 = vadd.f32 %v2791, %v3170
      %v3201 = vadd.f32 %v2792, %v3174
      %v3202 = vadd.f32 %v2793, %v3178
      %v3203 = vadd.f32 %v2794, %v3182
      %v3204 = vadd.f32 %v2795, %v3186
      %v3205 = vadd.f32 %v2796, %v3190
      %v3206 = vadd.f32 %v2797, %v3194
      %v3207 = vadd.f32 %v2798, %v3198
      %s3208 = scalar_lea.vmem %s350, 16
      %v3209 = vld [vmem:[%s3208] sm:$0xff]
      %v3210 = vld [vmem:[%s3208 + $0x10] sm:$0xff]
      %v3211 = vld [vmem:[%s3208 + $0x20] sm:$0xff]
      %v3212 = vld [vmem:[%s3208 + $0x30] sm:$0xff]
      %v3213 = vld [vmem:[%s3208 + $0x40] sm:$0xff]
      %v3214 = vld [vmem:[%s3208 + $0x50] sm:$0xff]
      %v3215 = vld [vmem:[%s3208 + $0x60] sm:$0xff]
      %v3216 = vld [vmem:[%s3208 + $0x70] sm:$0xff]
      %s3217 = scalar_lea.vmem %s4, 28
      %v3218 = vld [vmem:[%s3217] sm:$0xf]
      %v3220 = vsel %vm385, %v3209, 0
      %v3223 = vsel %vm385, %v3210, 0
      %v3226 = vsel %vm385, %v3211, 0
      %v3229 = vsel %vm385, %v3212, 0
      %v3232 = vsel %vm385, %v3213, 0
      %v3235 = vsel %vm385, %v3214, 0
      %v3238 = vsel %vm385, %v3215, 0
      %v3241 = vsel %vm385, %v3216, 0
      %v3244 = vsel %vm410, %v3218, 0
      %3246 = vmatpush.msra.mxu0 0.0
      %3247 = vmatpush.msra.mxu0 0.0
      %3248 = vmatpush.msra.mxu0 0.0
      %3249 = vmatpush.msra.mxu0 0.0
      %3250 = vmatpush.msra.mxu0 0.0
      %3251 = vmatpush.msra.mxu0 0.0
      %3252 = vmatpush.msra.mxu0 0.0
      %3253 = vmatpush.msra.mxu0 0.0
      %3254 = vmatpush.msra.mxu0 0.0
      %3255 = vmatpush.msra.mxu0 0.0
      %3256 = vmatpush.msra.mxu0 0.0
      %3257 = vmatpush.msra.mxu0 0.0
      %3258 = vmatpush.msra.mxu0 0.0
      %3259 = vmatpush.msra.mxu0 0.0
      %3260 = vmatpush.msra.mxu0 0.0
      %v3261 = vand.u32 %v3244, 4294901760
      %3262 = vmatpush.msra.mxu0 %v3261
      %v3263 = vand.u32 %v3220, 4294901760
      %v3264 = vsub.f32 %v3220, %v3263
      %v3265 = vand.u32 %v3264, 4294901760
      %v3266 = vsub.f32 %v3264, %v3265
      %v3267 = vand.u32 %v3266, 4294901760
      %3268 = vmatmul.f32.gmra.mxu0 %v3267
      %v3269 = vpop.f32.mrf.mxu0
      %v3270 = vadd.f32 0.0, %v3269
      %v3271 = vand.u32 %v3223, 4294901760
      %v3272 = vsub.f32 %v3223, %v3271
      %v3273 = vand.u32 %v3272, 4294901760
      %v3274 = vsub.f32 %v3272, %v3273
      %v3275 = vand.u32 %v3274, 4294901760
      %3276 = vmatmul.f32.gmra.mxu0 %v3275
      %v3277 = vpop.f32.mrf.mxu0
      %v3278 = vadd.f32 0.0, %v3277
      %v3279 = vand.u32 %v3226, 4294901760
      %v3280 = vsub.f32 %v3226, %v3279
      %v3281 = vand.u32 %v3280, 4294901760
      %v3282 = vsub.f32 %v3280, %v3281
      %v3283 = vand.u32 %v3282, 4294901760
      %3284 = vmatmul.f32.gmra.mxu0 %v3283
      %v3285 = vpop.f32.mrf.mxu0
      %v3286 = vadd.f32 0.0, %v3285
      %v3287 = vand.u32 %v3229, 4294901760
      %v3288 = vsub.f32 %v3229, %v3287
      %v3289 = vand.u32 %v3288, 4294901760
      %v3290 = vsub.f32 %v3288, %v3289
      %v3291 = vand.u32 %v3290, 4294901760
      %3292 = vmatmul.f32.gmra.mxu0 %v3291
      %v3293 = vpop.f32.mrf.mxu0
      %v3294 = vadd.f32 0.0, %v3293
      %v3295 = vand.u32 %v3232, 4294901760
      %v3296 = vsub.f32 %v3232, %v3295
      %v3297 = vand.u32 %v3296, 4294901760
      %v3298 = vsub.f32 %v3296, %v3297
      %v3299 = vand.u32 %v3298, 4294901760
      %3300 = vmatmul.f32.gmra.mxu0 %v3299
      %v3301 = vpop.f32.mrf.mxu0
      %v3302 = vadd.f32 0.0, %v3301
      %v3303 = vand.u32 %v3235, 4294901760
      %v3304 = vsub.f32 %v3235, %v3303
      %v3305 = vand.u32 %v3304, 4294901760
      %v3306 = vsub.f32 %v3304, %v3305
      %v3307 = vand.u32 %v3306, 4294901760
      %3308 = vmatmul.f32.gmra.mxu0 %v3307
      %v3309 = vpop.f32.mrf.mxu0
      %v3310 = vadd.f32 0.0, %v3309
      %v3311 = vand.u32 %v3238, 4294901760
      %v3312 = vsub.f32 %v3238, %v3311
      %v3313 = vand.u32 %v3312, 4294901760
      %v3314 = vsub.f32 %v3312, %v3313
      %v3315 = vand.u32 %v3314, 4294901760
      %3316 = vmatmul.f32.gmra.mxu0 %v3315
      %v3317 = vpop.f32.mrf.mxu0
      %v3318 = vadd.f32 0.0, %v3317
      %v3319 = vand.u32 %v3241, 4294901760
      %v3320 = vsub.f32 %v3241, %v3319
      %v3321 = vand.u32 %v3320, 4294901760
      %v3322 = vsub.f32 %v3320, %v3321
      %v3323 = vand.u32 %v3322, 4294901760
      %3324 = vmatmul.f32.gmra.mxu0 %v3323
      %v3325 = vpop.f32.mrf.mxu0
      %v3326 = vadd.f32 0.0, %v3325
      %3327 = vdwg.mxu0
      %3328 = vmatpush.msra.mxu0 0.0
      %3329 = vmatpush.msra.mxu0 0.0
      %3330 = vmatpush.msra.mxu0 0.0
      %3331 = vmatpush.msra.mxu0 0.0
      %3332 = vmatpush.msra.mxu0 0.0
      %3333 = vmatpush.msra.mxu0 0.0
      %3334 = vmatpush.msra.mxu0 0.0
      %3335 = vmatpush.msra.mxu0 0.0
      %3336 = vmatpush.msra.mxu0 0.0
      %3337 = vmatpush.msra.mxu0 0.0
      %3338 = vmatpush.msra.mxu0 0.0
      %3339 = vmatpush.msra.mxu0 0.0
      %3340 = vmatpush.msra.mxu0 0.0
      %3341 = vmatpush.msra.mxu0 0.0
      %3342 = vmatpush.msra.mxu0 0.0
      %v3343 = vand.u32 %v3244, 4294901760
      %v3344 = vsub.f32 %v3244, %v3343
      %v3345 = vand.u32 %v3344, 4294901760
      %v3346 = vsub.f32 %v3344, %v3345
      %v3347 = vand.u32 %v3346, 4294901760
      %3348 = vmatpush.msra.mxu0 %v3347
      %v3349 = vand.u32 %v3220, 4294901760
      %3350 = vmatmul.f32.gmra.mxu0 %v3349
      %v3351 = vpop.f32.mrf.mxu0
      %v3352 = vadd.f32 %v3270, %v3351
      %v3353 = vand.u32 %v3223, 4294901760
      %3354 = vmatmul.f32.gmra.mxu0 %v3353
      %v3355 = vpop.f32.mrf.mxu0
      %v3356 = vadd.f32 %v3278, %v3355
      %v3357 = vand.u32 %v3226, 4294901760
      %3358 = vmatmul.f32.gmra.mxu0 %v3357
      %v3359 = vpop.f32.mrf.mxu0
      %v3360 = vadd.f32 %v3286, %v3359
      %v3361 = vand.u32 %v3229, 4294901760
      %3362 = vmatmul.f32.gmra.mxu0 %v3361
      %v3363 = vpop.f32.mrf.mxu0
      %v3364 = vadd.f32 %v3294, %v3363
      %v3365 = vand.u32 %v3232, 4294901760
      %3366 = vmatmul.f32.gmra.mxu0 %v3365
      %v3367 = vpop.f32.mrf.mxu0
      %v3368 = vadd.f32 %v3302, %v3367
      %v3369 = vand.u32 %v3235, 4294901760
      %3370 = vmatmul.f32.gmra.mxu0 %v3369
      %v3371 = vpop.f32.mrf.mxu0
      %v3372 = vadd.f32 %v3310, %v3371
      %v3373 = vand.u32 %v3238, 4294901760
      %3374 = vmatmul.f32.gmra.mxu0 %v3373
      %v3375 = vpop.f32.mrf.mxu0
      %v3376 = vadd.f32 %v3318, %v3375
      %v3377 = vand.u32 %v3241, 4294901760
      %3378 = vmatmul.f32.gmra.mxu0 %v3377
      %v3379 = vpop.f32.mrf.mxu0
      %v3380 = vadd.f32 %v3326, %v3379
      %3381 = vdwg.mxu0
      %3382 = vmatpush.msra.mxu0 0.0
      %3383 = vmatpush.msra.mxu0 0.0
      %3384 = vmatpush.msra.mxu0 0.0
      %3385 = vmatpush.msra.mxu0 0.0
      %3386 = vmatpush.msra.mxu0 0.0
      %3387 = vmatpush.msra.mxu0 0.0
      %3388 = vmatpush.msra.mxu0 0.0
      %3389 = vmatpush.msra.mxu0 0.0
      %3390 = vmatpush.msra.mxu0 0.0
      %3391 = vmatpush.msra.mxu0 0.0
      %3392 = vmatpush.msra.mxu0 0.0
      %3393 = vmatpush.msra.mxu0 0.0
      %3394 = vmatpush.msra.mxu0 0.0
      %3395 = vmatpush.msra.mxu0 0.0
      %3396 = vmatpush.msra.mxu0 0.0
      %v3397 = vand.u32 %v3244, 4294901760
      %v3398 = vsub.f32 %v3244, %v3397
      %3399 = vmatpush.msra.mxu0 %v3398
      %v3400 = vand.u32 %v3220, 4294901760
      %v3401 = vsub.f32 %v3220, %v3400
      %3402 = vmatmul.f32.gmra.mxu0 %v3401
      %v3403 = vpop.f32.mrf.mxu0
      %v3404 = vadd.f32 %v3352, %v3403
      %v3405 = vand.u32 %v3223, 4294901760
      %v3406 = vsub.f32 %v3223, %v3405
      %3407 = vmatmul.f32.gmra.mxu0 %v3406
      %v3408 = vpop.f32.mrf.mxu0
      %v3409 = vadd.f32 %v3356, %v3408
      %v3410 = vand.u32 %v3226, 4294901760
      %v3411 = vsub.f32 %v3226, %v3410
      %3412 = vmatmul.f32.gmra.mxu0 %v3411
      %v3413 = vpop.f32.mrf.mxu0
      %v3414 = vadd.f32 %v3360, %v3413
      %v3415 = vand.u32 %v3229, 4294901760
      %v3416 = vsub.f32 %v3229, %v3415
      %3417 = vmatmul.f32.gmra.mxu0 %v3416
      %v3418 = vpop.f32.mrf.mxu0
      %v3419 = vadd.f32 %v3364, %v3418
      %v3420 = vand.u32 %v3232, 4294901760
      %v3421 = vsub.f32 %v3232, %v3420
      %3422 = vmatmul.f32.gmra.mxu0 %v3421
      %v3423 = vpop.f32.mrf.mxu0
      %v3424 = vadd.f32 %v3368, %v3423
      %v3425 = vand.u32 %v3235, 4294901760
      %v3426 = vsub.f32 %v3235, %v3425
      %3427 = vmatmul.f32.gmra.mxu0 %v3426
      %v3428 = vpop.f32.mrf.mxu0
      %v3429 = vadd.f32 %v3372, %v3428
      %v3430 = vand.u32 %v3238, 4294901760
      %v3431 = vsub.f32 %v3238, %v3430
      %3432 = vmatmul.f32.gmra.mxu0 %v3431
      %v3433 = vpop.f32.mrf.mxu0
      %v3434 = vadd.f32 %v3376, %v3433
      %v3435 = vand.u32 %v3241, 4294901760
      %v3436 = vsub.f32 %v3241, %v3435
      %3437 = vmatmul.f32.gmra.mxu0 %v3436
      %v3438 = vpop.f32.mrf.mxu0
      %v3439 = vadd.f32 %v3380, %v3438
      %3440 = vdwg.mxu0
      %3441 = vmatpush.msra.mxu0 0.0
      %3442 = vmatpush.msra.mxu0 0.0
      %3443 = vmatpush.msra.mxu0 0.0
      %3444 = vmatpush.msra.mxu0 0.0
      %3445 = vmatpush.msra.mxu0 0.0
      %3446 = vmatpush.msra.mxu0 0.0
      %3447 = vmatpush.msra.mxu0 0.0
      %3448 = vmatpush.msra.mxu0 0.0
      %3449 = vmatpush.msra.mxu0 0.0
      %3450 = vmatpush.msra.mxu0 0.0
      %3451 = vmatpush.msra.mxu0 0.0
      %3452 = vmatpush.msra.mxu0 0.0
      %3453 = vmatpush.msra.mxu0 0.0
      %3454 = vmatpush.msra.mxu0 0.0
      %3455 = vmatpush.msra.mxu0 0.0
      %v3456 = vand.u32 %v3244, 4294901760
      %3457 = vmatpush.msra.mxu0 %v3456
      %v3458 = vand.u32 %v3220, 4294901760
      %v3459 = vsub.f32 %v3220, %v3458
      %v3460 = vand.u32 %v3459, 4294901760
      %3461 = vmatmul.f32.gmra.mxu0 %v3460
      %v3462 = vpop.f32.mrf.mxu0
      %v3463 = vadd.f32 %v3404, %v3462
      %v3464 = vand.u32 %v3223, 4294901760
      %v3465 = vsub.f32 %v3223, %v3464
      %v3466 = vand.u32 %v3465, 4294901760
      %3467 = vmatmul.f32.gmra.mxu0 %v3466
      %v3468 = vpop.f32.mrf.mxu0
      %v3469 = vadd.f32 %v3409, %v3468
      %v3470 = vand.u32 %v3226, 4294901760
      %v3471 = vsub.f32 %v3226, %v3470
      %v3472 = vand.u32 %v3471, 4294901760
      %3473 = vmatmul.f32.gmra.mxu0 %v3472
      %v3474 = vpop.f32.mrf.mxu0
      %v3475 = vadd.f32 %v3414, %v3474
      %v3476 = vand.u32 %v3229, 4294901760
      %v3477 = vsub.f32 %v3229, %v3476
      %v3478 = vand.u32 %v3477, 4294901760
      %3479 = vmatmul.f32.gmra.mxu0 %v3478
      %v3480 = vpop.f32.mrf.mxu0
      %v3481 = vadd.f32 %v3419, %v3480
      %v3482 = vand.u32 %v3232, 4294901760
      %v3483 = vsub.f32 %v3232, %v3482
      %v3484 = vand.u32 %v3483, 4294901760
      %3485 = vmatmul.f32.gmra.mxu0 %v3484
      %v3486 = vpop.f32.mrf.mxu0
      %v3487 = vadd.f32 %v3424, %v3486
      %v3488 = vand.u32 %v3235, 4294901760
      %v3489 = vsub.f32 %v3235, %v3488
      %v3490 = vand.u32 %v3489, 4294901760
      %3491 = vmatmul.f32.gmra.mxu0 %v3490
      %v3492 = vpop.f32.mrf.mxu0
      %v3493 = vadd.f32 %v3429, %v3492
      %v3494 = vand.u32 %v3238, 4294901760
      %v3495 = vsub.f32 %v3238, %v3494
      %v3496 = vand.u32 %v3495, 4294901760
      %3497 = vmatmul.f32.gmra.mxu0 %v3496
      %v3498 = vpop.f32.mrf.mxu0
      %v3499 = vadd.f32 %v3434, %v3498
      %v3500 = vand.u32 %v3241, 4294901760
      %v3501 = vsub.f32 %v3241, %v3500
      %v3502 = vand.u32 %v3501, 4294901760
      %3503 = vmatmul.f32.gmra.mxu0 %v3502
      %v3504 = vpop.f32.mrf.mxu0
      %v3505 = vadd.f32 %v3439, %v3504
      %3506 = vdwg.mxu0
      %3507 = vmatpush.msra.mxu0 0.0
      %3508 = vmatpush.msra.mxu0 0.0
      %3509 = vmatpush.msra.mxu0 0.0
      %3510 = vmatpush.msra.mxu0 0.0
      %3511 = vmatpush.msra.mxu0 0.0
      %3512 = vmatpush.msra.mxu0 0.0
      %3513 = vmatpush.msra.mxu0 0.0
      %3514 = vmatpush.msra.mxu0 0.0
      %3515 = vmatpush.msra.mxu0 0.0
      %3516 = vmatpush.msra.mxu0 0.0
      %3517 = vmatpush.msra.mxu0 0.0
      %3518 = vmatpush.msra.mxu0 0.0
      %3519 = vmatpush.msra.mxu0 0.0
      %3520 = vmatpush.msra.mxu0 0.0
      %3521 = vmatpush.msra.mxu0 0.0
      %v3522 = vand.u32 %v3244, 4294901760
      %v3523 = vsub.f32 %v3244, %v3522
      %v3524 = vand.u32 %v3523, 4294901760
      %3525 = vmatpush.msra.mxu0 %v3524
      %v3526 = vand.u32 %v3220, 4294901760
      %3527 = vmatmul.f32.gmra.mxu0 %v3526
      %v3528 = vpop.f32.mrf.mxu0
      %v3529 = vadd.f32 %v3463, %v3528
      %v3530 = vand.u32 %v3223, 4294901760
      %3531 = vmatmul.f32.gmra.mxu0 %v3530
      %v3532 = vpop.f32.mrf.mxu0
      %v3533 = vadd.f32 %v3469, %v3532
      %v3534 = vand.u32 %v3226, 4294901760
      %3535 = vmatmul.f32.gmra.mxu0 %v3534
      %v3536 = vpop.f32.mrf.mxu0
      %v3537 = vadd.f32 %v3475, %v3536
      %v3538 = vand.u32 %v3229, 4294901760
      %3539 = vmatmul.f32.gmra.mxu0 %v3538
      %v3540 = vpop.f32.mrf.mxu0
      %v3541 = vadd.f32 %v3481, %v3540
      %v3542 = vand.u32 %v3232, 4294901760
      %3543 = vmatmul.f32.gmra.mxu0 %v3542
      %v3544 = vpop.f32.mrf.mxu0
      %v3545 = vadd.f32 %v3487, %v3544
      %v3546 = vand.u32 %v3235, 4294901760
      %3547 = vmatmul.f32.gmra.mxu0 %v3546
      %v3548 = vpop.f32.mrf.mxu0
      %v3549 = vadd.f32 %v3493, %v3548
      %v3550 = vand.u32 %v3238, 4294901760
      %3551 = vmatmul.f32.gmra.mxu0 %v3550
      %v3552 = vpop.f32.mrf.mxu0
      %v3553 = vadd.f32 %v3499, %v3552
      %v3554 = vand.u32 %v3241, 4294901760
      %3555 = vmatmul.f32.gmra.mxu0 %v3554
      %v3556 = vpop.f32.mrf.mxu0
      %v3557 = vadd.f32 %v3505, %v3556
      %3558 = vdwg.mxu0
      %3559 = vmatpush.msra.mxu0 0.0
      %3560 = vmatpush.msra.mxu0 0.0
      %3561 = vmatpush.msra.mxu0 0.0
      %3562 = vmatpush.msra.mxu0 0.0
      %3563 = vmatpush.msra.mxu0 0.0
      %3564 = vmatpush.msra.mxu0 0.0
      %3565 = vmatpush.msra.mxu0 0.0
      %3566 = vmatpush.msra.mxu0 0.0
      %3567 = vmatpush.msra.mxu0 0.0
      %3568 = vmatpush.msra.mxu0 0.0
      %3569 = vmatpush.msra.mxu0 0.0
      %3570 = vmatpush.msra.mxu0 0.0
      %3571 = vmatpush.msra.mxu0 0.0
      %3572 = vmatpush.msra.mxu0 0.0
      %3573 = vmatpush.msra.mxu0 0.0
      %v3574 = vand.u32 %v3244, 4294901760
      %3575 = vmatpush.msra.mxu0 %v3574
      %v3576 = vand.u32 %v3220, 4294901760
      %3577 = vmatmul.f32.gmra.mxu0 %v3576
      %v3578 = vpop.f32.mrf.mxu0
      %v3579 = vadd.f32 %v3529, %v3578
      %v3580 = vand.u32 %v3223, 4294901760
      %3581 = vmatmul.f32.gmra.mxu0 %v3580
      %v3582 = vpop.f32.mrf.mxu0
      %v3583 = vadd.f32 %v3533, %v3582
      %v3584 = vand.u32 %v3226, 4294901760
      %3585 = vmatmul.f32.gmra.mxu0 %v3584
      %v3586 = vpop.f32.mrf.mxu0
      %v3587 = vadd.f32 %v3537, %v3586
      %v3588 = vand.u32 %v3229, 4294901760
      %3589 = vmatmul.f32.gmra.mxu0 %v3588
      %v3590 = vpop.f32.mrf.mxu0
      %v3591 = vadd.f32 %v3541, %v3590
      %v3592 = vand.u32 %v3232, 4294901760
      %3593 = vmatmul.f32.gmra.mxu0 %v3592
      %v3594 = vpop.f32.mrf.mxu0
      %v3595 = vadd.f32 %v3545, %v3594
      %v3596 = vand.u32 %v3235, 4294901760
      %3597 = vmatmul.f32.gmra.mxu0 %v3596
      %v3598 = vpop.f32.mrf.mxu0
      %v3599 = vadd.f32 %v3549, %v3598
      %v3600 = vand.u32 %v3238, 4294901760
      %3601 = vmatmul.f32.gmra.mxu0 %v3600
      %v3602 = vpop.f32.mrf.mxu0
      %v3603 = vadd.f32 %v3553, %v3602
      %v3604 = vand.u32 %v3241, 4294901760
      %3605 = vmatmul.f32.gmra.mxu0 %v3604
      %v3606 = vpop.f32.mrf.mxu0
      %v3607 = vadd.f32 %v3557, %v3606
      %3608 = vdwg.mxu0
      %v3609 = vadd.f32 %v3200, %v3579
      %v3610 = vadd.f32 %v3201, %v3583
      %v3611 = vadd.f32 %v3202, %v3587
      %v3612 = vadd.f32 %v3203, %v3591
      %v3613 = vadd.f32 %v3204, %v3595
      %v3614 = vadd.f32 %v3205, %v3599
      %v3615 = vadd.f32 %v3206, %v3603
      %v3616 = vadd.f32 %v3207, %v3607
      %v3617 = vld [vmem:[%s2799 + $0x1] sm:$0xff]
      %v3618 = vld [vmem:[%s2799 + $0x11] sm:$0xff]
      %v3619 = vld [vmem:[%s2799 + $0x21] sm:$0xff]
      %v3620 = vld [vmem:[%s2799 + $0x31] sm:$0xff]
      %v3621 = vld [vmem:[%s2799 + $0x41] sm:$0xff]
      %v3622 = vld [vmem:[%s2799 + $0x51] sm:$0xff]
      %v3623 = vld [vmem:[%s2799 + $0x61] sm:$0xff]
      %v3624 = vld [vmem:[%s2799 + $0x71] sm:$0xff]
      %s3625 = scalar_lea.vmem %s4, 32
      %v3626 = vld [vmem:[%s3625] sm:$0xf]
      %v3628 = vsel %vm385, %v3617, 0
      %v3631 = vsel %vm385, %v3618, 0
      %v3634 = vsel %vm385, %v3619, 0
      %v3637 = vsel %vm385, %v3620, 0
      %v3640 = vsel %vm385, %v3621, 0
      %v3643 = vsel %vm385, %v3622, 0
      %v3646 = vsel %vm385, %v3623, 0
      %v3649 = vsel %vm385, %v3624, 0
      %v3652 = vsel %vm410, %v3626, 0
      %3654 = vmatpush.msra.mxu0 0.0
      %3655 = vmatpush.msra.mxu0 0.0
      %3656 = vmatpush.msra.mxu0 0.0
      %3657 = vmatpush.msra.mxu0 0.0
      %3658 = vmatpush.msra.mxu0 0.0
      %3659 = vmatpush.msra.mxu0 0.0
      %3660 = vmatpush.msra.mxu0 0.0
      %3661 = vmatpush.msra.mxu0 0.0
      %3662 = vmatpush.msra.mxu0 0.0
      %3663 = vmatpush.msra.mxu0 0.0
      %3664 = vmatpush.msra.mxu0 0.0
      %3665 = vmatpush.msra.mxu0 0.0
      %3666 = vmatpush.msra.mxu0 0.0
      %3667 = vmatpush.msra.mxu0 0.0
      %3668 = vmatpush.msra.mxu0 0.0
      %v3669 = vand.u32 %v3652, 4294901760
      %3670 = vmatpush.msra.mxu0 %v3669
      %v3671 = vand.u32 %v3628, 4294901760
      %v3672 = vsub.f32 %v3628, %v3671
      %v3673 = vand.u32 %v3672, 4294901760
      %v3674 = vsub.f32 %v3672, %v3673
      %v3675 = vand.u32 %v3674, 4294901760
      %3676 = vmatmul.f32.gmra.mxu0 %v3675
      %v3677 = vpop.f32.mrf.mxu0
      %v3678 = vadd.f32 0.0, %v3677
      %v3679 = vand.u32 %v3631, 4294901760
      %v3680 = vsub.f32 %v3631, %v3679
      %v3681 = vand.u32 %v3680, 4294901760
      %v3682 = vsub.f32 %v3680, %v3681
      %v3683 = vand.u32 %v3682, 4294901760
      %3684 = vmatmul.f32.gmra.mxu0 %v3683
      %v3685 = vpop.f32.mrf.mxu0
      %v3686 = vadd.f32 0.0, %v3685
      %v3687 = vand.u32 %v3634, 4294901760
      %v3688 = vsub.f32 %v3634, %v3687
      %v3689 = vand.u32 %v3688, 4294901760
      %v3690 = vsub.f32 %v3688, %v3689
      %v3691 = vand.u32 %v3690, 4294901760
      %3692 = vmatmul.f32.gmra.mxu0 %v3691
      %v3693 = vpop.f32.mrf.mxu0
      %v3694 = vadd.f32 0.0, %v3693
      %v3695 = vand.u32 %v3637, 4294901760
      %v3696 = vsub.f32 %v3637, %v3695
      %v3697 = vand.u32 %v3696, 4294901760
      %v3698 = vsub.f32 %v3696, %v3697
      %v3699 = vand.u32 %v3698, 4294901760
      %3700 = vmatmul.f32.gmra.mxu0 %v3699
      %v3701 = vpop.f32.mrf.mxu0
      %v3702 = vadd.f32 0.0, %v3701
      %v3703 = vand.u32 %v3640, 4294901760
      %v3704 = vsub.f32 %v3640, %v3703
      %v3705 = vand.u32 %v3704, 4294901760
      %v3706 = vsub.f32 %v3704, %v3705
      %v3707 = vand.u32 %v3706, 4294901760
      %3708 = vmatmul.f32.gmra.mxu0 %v3707
      %v3709 = vpop.f32.mrf.mxu0
      %v3710 = vadd.f32 0.0, %v3709
      %v3711 = vand.u32 %v3643, 4294901760
      %v3712 = vsub.f32 %v3643, %v3711
      %v3713 = vand.u32 %v3712, 4294901760
      %v3714 = vsub.f32 %v3712, %v3713
      %v3715 = vand.u32 %v3714, 4294901760
      %3716 = vmatmul.f32.gmra.mxu0 %v3715
      %v3717 = vpop.f32.mrf.mxu0
      %v3718 = vadd.f32 0.0, %v3717
      %v3719 = vand.u32 %v3646, 4294901760
      %v3720 = vsub.f32 %v3646, %v3719
      %v3721 = vand.u32 %v3720, 4294901760
      %v3722 = vsub.f32 %v3720, %v3721
      %v3723 = vand.u32 %v3722, 4294901760
      %3724 = vmatmul.f32.gmra.mxu0 %v3723
      %v3725 = vpop.f32.mrf.mxu0
      %v3726 = vadd.f32 0.0, %v3725
      %v3727 = vand.u32 %v3649, 4294901760
      %v3728 = vsub.f32 %v3649, %v3727
      %v3729 = vand.u32 %v3728, 4294901760
      %v3730 = vsub.f32 %v3728, %v3729
      %v3731 = vand.u32 %v3730, 4294901760
      %3732 = vmatmul.f32.gmra.mxu0 %v3731
      %v3733 = vpop.f32.mrf.mxu0
      %v3734 = vadd.f32 0.0, %v3733
      %3735 = vdwg.mxu0
      %3736 = vmatpush.msra.mxu0 0.0
      %3737 = vmatpush.msra.mxu0 0.0
      %3738 = vmatpush.msra.mxu0 0.0
      %3739 = vmatpush.msra.mxu0 0.0
      %3740 = vmatpush.msra.mxu0 0.0
      %3741 = vmatpush.msra.mxu0 0.0
      %3742 = vmatpush.msra.mxu0 0.0
      %3743 = vmatpush.msra.mxu0 0.0
      %3744 = vmatpush.msra.mxu0 0.0
      %3745 = vmatpush.msra.mxu0 0.0
      %3746 = vmatpush.msra.mxu0 0.0
      %3747 = vmatpush.msra.mxu0 0.0
      %3748 = vmatpush.msra.mxu0 0.0
      %3749 = vmatpush.msra.mxu0 0.0
      %3750 = vmatpush.msra.mxu0 0.0
      %v3751 = vand.u32 %v3652, 4294901760
      %v3752 = vsub.f32 %v3652, %v3751
      %v3753 = vand.u32 %v3752, 4294901760
      %v3754 = vsub.f32 %v3752, %v3753
      %v3755 = vand.u32 %v3754, 4294901760
      %3756 = vmatpush.msra.mxu0 %v3755
      %v3757 = vand.u32 %v3628, 4294901760
      %3758 = vmatmul.f32.gmra.mxu0 %v3757
      %v3759 = vpop.f32.mrf.mxu0
      %v3760 = vadd.f32 %v3678, %v3759
      %v3761 = vand.u32 %v3631, 4294901760
      %3762 = vmatmul.f32.gmra.mxu0 %v3761
      %v3763 = vpop.f32.mrf.mxu0
      %v3764 = vadd.f32 %v3686, %v3763
      %v3765 = vand.u32 %v3634, 4294901760
      %3766 = vmatmul.f32.gmra.mxu0 %v3765
      %v3767 = vpop.f32.mrf.mxu0
      %v3768 = vadd.f32 %v3694, %v3767
      %v3769 = vand.u32 %v3637, 4294901760
      %3770 = vmatmul.f32.gmra.mxu0 %v3769
      %v3771 = vpop.f32.mrf.mxu0
      %v3772 = vadd.f32 %v3702, %v3771
      %v3773 = vand.u32 %v3640, 4294901760
      %3774 = vmatmul.f32.gmra.mxu0 %v3773
      %v3775 = vpop.f32.mrf.mxu0
      %v3776 = vadd.f32 %v3710, %v3775
      %v3777 = vand.u32 %v3643, 4294901760
      %3778 = vmatmul.f32.gmra.mxu0 %v3777
      %v3779 = vpop.f32.mrf.mxu0
      %v3780 = vadd.f32 %v3718, %v3779
      %v3781 = vand.u32 %v3646, 4294901760
      %3782 = vmatmul.f32.gmra.mxu0 %v3781
      %v3783 = vpop.f32.mrf.mxu0
      %v3784 = vadd.f32 %v3726, %v3783
      %v3785 = vand.u32 %v3649, 4294901760
      %3786 = vmatmul.f32.gmra.mxu0 %v3785
      %v3787 = vpop.f32.mrf.mxu0
      %v3788 = vadd.f32 %v3734, %v3787
      %3789 = vdwg.mxu0
      %3790 = vmatpush.msra.mxu0 0.0
      %3791 = vmatpush.msra.mxu0 0.0
      %3792 = vmatpush.msra.mxu0 0.0
      %3793 = vmatpush.msra.mxu0 0.0
      %3794 = vmatpush.msra.mxu0 0.0
      %3795 = vmatpush.msra.mxu0 0.0
      %3796 = vmatpush.msra.mxu0 0.0
      %3797 = vmatpush.msra.mxu0 0.0
      %3798 = vmatpush.msra.mxu0 0.0
      %3799 = vmatpush.msra.mxu0 0.0
      %3800 = vmatpush.msra.mxu0 0.0
      %3801 = vmatpush.msra.mxu0 0.0
      %3802 = vmatpush.msra.mxu0 0.0
      %3803 = vmatpush.msra.mxu0 0.0
      %3804 = vmatpush.msra.mxu0 0.0
      %v3805 = vand.u32 %v3652, 4294901760
      %v3806 = vsub.f32 %v3652, %v3805
      %3807 = vmatpush.msra.mxu0 %v3806
      %v3808 = vand.u32 %v3628, 4294901760
      %v3809 = vsub.f32 %v3628, %v3808
      %3810 = vmatmul.f32.gmra.mxu0 %v3809
      %v3811 = vpop.f32.mrf.mxu0
      %v3812 = vadd.f32 %v3760, %v3811
      %v3813 = vand.u32 %v3631, 4294901760
      %v3814 = vsub.f32 %v3631, %v3813
      %3815 = vmatmul.f32.gmra.mxu0 %v3814
      %v3816 = vpop.f32.mrf.mxu0
      %v3817 = vadd.f32 %v3764, %v3816
      %v3818 = vand.u32 %v3634, 4294901760
      %v3819 = vsub.f32 %v3634, %v3818
      %3820 = vmatmul.f32.gmra.mxu0 %v3819
      %v3821 = vpop.f32.mrf.mxu0
      %v3822 = vadd.f32 %v3768, %v3821
      %v3823 = vand.u32 %v3637, 4294901760
      %v3824 = vsub.f32 %v3637, %v3823
      %3825 = vmatmul.f32.gmra.mxu0 %v3824
      %v3826 = vpop.f32.mrf.mxu0
      %v3827 = vadd.f32 %v3772, %v3826
      %v3828 = vand.u32 %v3640, 4294901760
      %v3829 = vsub.f32 %v3640, %v3828
      %3830 = vmatmul.f32.gmra.mxu0 %v3829
      %v3831 = vpop.f32.mrf.mxu0
      %v3832 = vadd.f32 %v3776, %v3831
      %v3833 = vand.u32 %v3643, 4294901760
      %v3834 = vsub.f32 %v3643, %v3833
      %3835 = vmatmul.f32.gmra.mxu0 %v3834
      %v3836 = vpop.f32.mrf.mxu0
      %v3837 = vadd.f32 %v3780, %v3836
      %v3838 = vand.u32 %v3646, 4294901760
      %v3839 = vsub.f32 %v3646, %v3838
      %3840 = vmatmul.f32.gmra.mxu0 %v3839
      %v3841 = vpop.f32.mrf.mxu0
      %v3842 = vadd.f32 %v3784, %v3841
      %v3843 = vand.u32 %v3649, 4294901760
      %v3844 = vsub.f32 %v3649, %v3843
      %3845 = vmatmul.f32.gmra.mxu0 %v3844
      %v3846 = vpop.f32.mrf.mxu0
      %v3847 = vadd.f32 %v3788, %v3846
      %3848 = vdwg.mxu0
      %3849 = vmatpush.msra.mxu0 0.0
      %3850 = vmatpush.msra.mxu0 0.0
      %3851 = vmatpush.msra.mxu0 0.0
      %3852 = vmatpush.msra.mxu0 0.0
      %3853 = vmatpush.msra.mxu0 0.0
      %3854 = vmatpush.msra.mxu0 0.0
      %3855 = vmatpush.msra.mxu0 0.0
      %3856 = vmatpush.msra.mxu0 0.0
      %3857 = vmatpush.msra.mxu0 0.0
      %3858 = vmatpush.msra.mxu0 0.0
      %3859 = vmatpush.msra.mxu0 0.0
      %3860 = vmatpush.msra.mxu0 0.0
      %3861 = vmatpush.msra.mxu0 0.0
      %3862 = vmatpush.msra.mxu0 0.0
      %3863 = vmatpush.msra.mxu0 0.0
      %v3864 = vand.u32 %v3652, 4294901760
      %3865 = vmatpush.msra.mxu0 %v3864
      %v3866 = vand.u32 %v3628, 4294901760
      %v3867 = vsub.f32 %v3628, %v3866
      %v3868 = vand.u32 %v3867, 4294901760
      %3869 = vmatmul.f32.gmra.mxu0 %v3868
      %v3870 = vpop.f32.mrf.mxu0
      %v3871 = vadd.f32 %v3812, %v3870
      %v3872 = vand.u32 %v3631, 4294901760
      %v3873 = vsub.f32 %v3631, %v3872
      %v3874 = vand.u32 %v3873, 4294901760
      %3875 = vmatmul.f32.gmra.mxu0 %v3874
      %v3876 = vpop.f32.mrf.mxu0
      %v3877 = vadd.f32 %v3817, %v3876
      %v3878 = vand.u32 %v3634, 4294901760
      %v3879 = vsub.f32 %v3634, %v3878
      %v3880 = vand.u32 %v3879, 4294901760
      %3881 = vmatmul.f32.gmra.mxu0 %v3880
      %v3882 = vpop.f32.mrf.mxu0
      %v3883 = vadd.f32 %v3822, %v3882
      %v3884 = vand.u32 %v3637, 4294901760
      %v3885 = vsub.f32 %v3637, %v3884
      %v3886 = vand.u32 %v3885, 4294901760
      %3887 = vmatmul.f32.gmra.mxu0 %v3886
      %v3888 = vpop.f32.mrf.mxu0
      %v3889 = vadd.f32 %v3827, %v3888
      %v3890 = vand.u32 %v3640, 4294901760
      %v3891 = vsub.f32 %v3640, %v3890
      %v3892 = vand.u32 %v3891, 4294901760
      %3893 = vmatmul.f32.gmra.mxu0 %v3892
      %v3894 = vpop.f32.mrf.mxu0
      %v3895 = vadd.f32 %v3832, %v3894
      %v3896 = vand.u32 %v3643, 4294901760
      %v3897 = vsub.f32 %v3643, %v3896
      %v3898 = vand.u32 %v3897, 4294901760
      %3899 = vmatmul.f32.gmra.mxu0 %v3898
      %v3900 = vpop.f32.mrf.mxu0
      %v3901 = vadd.f32 %v3837, %v3900
      %v3902 = vand.u32 %v3646, 4294901760
      %v3903 = vsub.f32 %v3646, %v3902
      %v3904 = vand.u32 %v3903, 4294901760
      %3905 = vmatmul.f32.gmra.mxu0 %v3904
      %v3906 = vpop.f32.mrf.mxu0
      %v3907 = vadd.f32 %v3842, %v3906
      %v3908 = vand.u32 %v3649, 4294901760
      %v3909 = vsub.f32 %v3649, %v3908
      %v3910 = vand.u32 %v3909, 4294901760
      %3911 = vmatmul.f32.gmra.mxu0 %v3910
      %v3912 = vpop.f32.mrf.mxu0
      %v3913 = vadd.f32 %v3847, %v3912
      %3914 = vdwg.mxu0
      %3915 = vmatpush.msra.mxu0 0.0
      %3916 = vmatpush.msra.mxu0 0.0
      %3917 = vmatpush.msra.mxu0 0.0
      %3918 = vmatpush.msra.mxu0 0.0
      %3919 = vmatpush.msra.mxu0 0.0
      %3920 = vmatpush.msra.mxu0 0.0
      %3921 = vmatpush.msra.mxu0 0.0
      %3922 = vmatpush.msra.mxu0 0.0
      %3923 = vmatpush.msra.mxu0 0.0
      %3924 = vmatpush.msra.mxu0 0.0
      %3925 = vmatpush.msra.mxu0 0.0
      %3926 = vmatpush.msra.mxu0 0.0
      %3927 = vmatpush.msra.mxu0 0.0
      %3928 = vmatpush.msra.mxu0 0.0
      %3929 = vmatpush.msra.mxu0 0.0
      %v3930 = vand.u32 %v3652, 4294901760
      %v3931 = vsub.f32 %v3652, %v3930
      %v3932 = vand.u32 %v3931, 4294901760
      %3933 = vmatpush.msra.mxu0 %v3932
      %v3934 = vand.u32 %v3628, 4294901760
      %3935 = vmatmul.f32.gmra.mxu0 %v3934
      %v3936 = vpop.f32.mrf.mxu0
      %v3937 = vadd.f32 %v3871, %v3936
      %v3938 = vand.u32 %v3631, 4294901760
      %3939 = vmatmul.f32.gmra.mxu0 %v3938
      %v3940 = vpop.f32.mrf.mxu0
      %v3941 = vadd.f32 %v3877, %v3940
      %v3942 = vand.u32 %v3634, 4294901760
      %3943 = vmatmul.f32.gmra.mxu0 %v3942
      %v3944 = vpop.f32.mrf.mxu0
      %v3945 = vadd.f32 %v3883, %v3944
      %v3946 = vand.u32 %v3637, 4294901760
      %3947 = vmatmul.f32.gmra.mxu0 %v3946
      %v3948 = vpop.f32.mrf.mxu0
      %v3949 = vadd.f32 %v3889, %v3948
      %v3950 = vand.u32 %v3640, 4294901760
      %3951 = vmatmul.f32.gmra.mxu0 %v3950
      %v3952 = vpop.f32.mrf.mxu0
      %v3953 = vadd.f32 %v3895, %v3952
      %v3954 = vand.u32 %v3643, 4294901760
      %3955 = vmatmul.f32.gmra.mxu0 %v3954
      %v3956 = vpop.f32.mrf.mxu0
      %v3957 = vadd.f32 %v3901, %v3956
      %v3958 = vand.u32 %v3646, 4294901760
      %3959 = vmatmul.f32.gmra.mxu0 %v3958
      %v3960 = vpop.f32.mrf.mxu0
      %v3961 = vadd.f32 %v3907, %v3960
      %v3962 = vand.u32 %v3649, 4294901760
      %3963 = vmatmul.f32.gmra.mxu0 %v3962
      %v3964 = vpop.f32.mrf.mxu0
      %v3965 = vadd.f32 %v3913, %v3964
      %3966 = vdwg.mxu0
      %3967 = vmatpush.msra.mxu0 0.0
      %3968 = vmatpush.msra.mxu0 0.0
      %3969 = vmatpush.msra.mxu0 0.0
      %3970 = vmatpush.msra.mxu0 0.0
      %3971 = vmatpush.msra.mxu0 0.0
      %3972 = vmatpush.msra.mxu0 0.0
      %3973 = vmatpush.msra.mxu0 0.0
      %3974 = vmatpush.msra.mxu0 0.0
      %3975 = vmatpush.msra.mxu0 0.0
      %3976 = vmatpush.msra.mxu0 0.0
      %3977 = vmatpush.msra.mxu0 0.0
      %3978 = vmatpush.msra.mxu0 0.0
      %3979 = vmatpush.msra.mxu0 0.0
      %3980 = vmatpush.msra.mxu0 0.0
      %3981 = vmatpush.msra.mxu0 0.0
      %v3982 = vand.u32 %v3652, 4294901760
      %3983 = vmatpush.msra.mxu0 %v3982
      %v3984 = vand.u32 %v3628, 4294901760
      %3985 = vmatmul.f32.gmra.mxu0 %v3984
      %v3986 = vpop.f32.mrf.mxu0
      %v3987 = vadd.f32 %v3937, %v3986
      %v3988 = vand.u32 %v3631, 4294901760
      %3989 = vmatmul.f32.gmra.mxu0 %v3988
      %v3990 = vpop.f32.mrf.mxu0
      %v3991 = vadd.f32 %v3941, %v3990
      %v3992 = vand.u32 %v3634, 4294901760
      %3993 = vmatmul.f32.gmra.mxu0 %v3992
      %v3994 = vpop.f32.mrf.mxu0
      %v3995 = vadd.f32 %v3945, %v3994
      %v3996 = vand.u32 %v3637, 4294901760
      %3997 = vmatmul.f32.gmra.mxu0 %v3996
      %v3998 = vpop.f32.mrf.mxu0
      %v3999 = vadd.f32 %v3949, %v3998
      %v4000 = vand.u32 %v3640, 4294901760
      %4001 = vmatmul.f32.gmra.mxu0 %v4000
      %v4002 = vpop.f32.mrf.mxu0
      %v4003 = vadd.f32 %v3953, %v4002
      %v4004 = vand.u32 %v3643, 4294901760
      %4005 = vmatmul.f32.gmra.mxu0 %v4004
      %v4006 = vpop.f32.mrf.mxu0
      %v4007 = vadd.f32 %v3957, %v4006
      %v4008 = vand.u32 %v3646, 4294901760
      %4009 = vmatmul.f32.gmra.mxu0 %v4008
      %v4010 = vpop.f32.mrf.mxu0
      %v4011 = vadd.f32 %v3961, %v4010
      %v4012 = vand.u32 %v3649, 4294901760
      %4013 = vmatmul.f32.gmra.mxu0 %v4012
      %v4014 = vpop.f32.mrf.mxu0
      %v4015 = vadd.f32 %v3965, %v4014
      %4016 = vdwg.mxu0
      %v4017 = vadd.f32 %v3609, %v3987
      %v4018 = vadd.f32 %v3610, %v3991
      %v4019 = vadd.f32 %v3611, %v3995
      %v4020 = vadd.f32 %v3612, %v3999
      %v4021 = vadd.f32 %v3613, %v4003
      %v4022 = vadd.f32 %v3614, %v4007
      %v4023 = vadd.f32 %v3615, %v4011
      %v4024 = vadd.f32 %v3616, %v4015
      %v4025 = vld [vmem:[%s5] sm:$0x1]
      %v4027 = vperm.slane %v4025, 0
      %v4029 = vadd.f32 %v4017, %v4027
      %v4030 = vadd.f32 %v4018, %v4027
      %v4031 = vadd.f32 %v4019, %v4027
      %v4032 = vadd.f32 %v4020, %v4027
      %v4033 = vadd.f32 %v4021, %v4027
      %v4034 = vadd.f32 %v4022, %v4027
      %v4035 = vadd.f32 %v4023, %v4027
      %v4036 = vadd.f32 %v4024, %v4027
      %v4037 = vmax.f32 %v4029, 0.0
      %v4038 = vmax.f32 %v4030, 0.0
      %v4039 = vmax.f32 %v4031, 0.0
      %v4040 = vmax.f32 %v4032, 0.0
      %v4041 = vmax.f32 %v4033, 0.0
      %v4042 = vmax.f32 %v4034, 0.0
      %v4043 = vmax.f32 %v4035, 0.0
      %v4044 = vmax.f32 %v4036, 0.0
      %vm4045 = vcmask 64512
      %4046 = vst.msk [vmem:[#allocation2] sm:$0xff] %vm4045, 0.0
      %vm4047 = vcmask 58368
      %4048 = vst.msk [vmem:[#allocation2 + $0x8] sm:$0x3] %vm4047, 0.0
      %4049 = vst.msk [vmem:[#allocation2 + $0x10] sm:$0xff] %vm4045, 0.0
      %4050 = vst.msk [vmem:[#allocation2 + $0x18] sm:$0x3] %vm4047, 0.0
      %4051 = vst.msk [vmem:[#allocation2 + $0x20] sm:$0xff] %vm4045, 0.0
      %4052 = vst.msk [vmem:[#allocation2 + $0x28] sm:$0x3] %vm4047, 0.0
      %4053 = vst.msk [vmem:[#allocation2 + $0x30] sm:$0xff] %vm4045, 0.0
      %4054 = vst.msk [vmem:[#allocation2 + $0x38] sm:$0x3] %vm4047, 0.0
      %4055 = vst.msk [vmem:[#allocation2 + $0x40] sm:$0xff] %vm4045, 0.0
      %4056 = vst.msk [vmem:[#allocation2 + $0x48] sm:$0x3] %vm4047, 0.0
      %4057 = vst.msk [vmem:[#allocation2 + $0x50] sm:$0xff] %vm4045, 0.0
      %4058 = vst.msk [vmem:[#allocation2 + $0x58] sm:$0x3] %vm4047, 0.0
      %4059 = vst.msk [vmem:[#allocation2 + $0x60] sm:$0xff] %vm4045, 0.0
      %4060 = vst.msk [vmem:[#allocation2 + $0x68] sm:$0x3] %vm4047, 0.0
      %4061 = vst.msk [vmem:[#allocation2 + $0x70] sm:$0xff] %vm4045, 0.0
      %4062 = vst.msk [vmem:[#allocation2 + $0x78] sm:$0x3] %vm4047, 0.0
      %4063 = vst.msk [vmem:[#allocation2 + $0x80] sm:$0xff] %vm4045, 0.0
      %4064 = vst.msk [vmem:[#allocation2 + $0x88] sm:$0x3] %vm4047, 0.0
      %4065 = vst.msk [vmem:[#allocation2 + $0x90] sm:$0xff] %vm4045, 0.0
      %4066 = vst.msk [vmem:[#allocation2 + $0x98] sm:$0x3] %vm4047, 0.0
      %s4067 = scalar_lea.vmem [#allocation2], 16
      %4068 = vst.msk [vmem:[%s4067 + $0x1] sm:$0xff] %vm4045, %v4037
      %4069 = vst.msk [vmem:[%s4067 + $0x11] sm:$0xff] %vm4045, %v4038
      %4070 = vst.msk [vmem:[%s4067 + $0x21] sm:$0xff] %vm4045, %v4039
      %4071 = vst.msk [vmem:[%s4067 + $0x31] sm:$0xff] %vm4045, %v4040
      %4072 = vst.msk [vmem:[%s4067 + $0x41] sm:$0xff] %vm4045, %v4041
      %4073 = vst.msk [vmem:[%s4067 + $0x51] sm:$0xff] %vm4045, %v4042
      %4074 = vst.msk [vmem:[%s4067 + $0x61] sm:$0xff] %vm4045, %v4043
      %4075 = vst.msk [vmem:[%s4067 + $0x71] sm:$0xff] %vm4045, %v4044
      %v4076 = vld [vmem:[#allocation2] sm:$0xff]
      %v4077 = vld [vmem:[#allocation2 + $0x10] sm:$0xff]
      %v4078 = vld [vmem:[#allocation2 + $0x20] sm:$0xff]
      %v4079 = vld [vmem:[#allocation2 + $0x30] sm:$0xff]
      %v4080 = vld [vmem:[#allocation2 + $0x40] sm:$0xff]
      %v4081 = vld [vmem:[#allocation2 + $0x50] sm:$0xff]
      %v4082 = vld [vmem:[#allocation2 + $0x60] sm:$0xff]
      %v4083 = vld [vmem:[#allocation2 + $0x70] sm:$0xff]
      %v4084 = vld [vmem:[%s6] sm:$0xff]
      %v4085 = vld [vmem:[#allocation2 + $0x1] sm:$0xff]
      %v4086 = vld [vmem:[#allocation2 + $0x11] sm:$0xff]
      %v4087 = vld [vmem:[#allocation2 + $0x21] sm:$0xff]
      %v4088 = vld [vmem:[#allocation2 + $0x31] sm:$0xff]
      %v4089 = vld [vmem:[#allocation2 + $0x41] sm:$0xff]
      %v4090 = vld [vmem:[#allocation2 + $0x51] sm:$0xff]
      %v4091 = vld [vmem:[#allocation2 + $0x61] sm:$0xff]
      %v4092 = vld [vmem:[#allocation2 + $0x71] sm:$0xff]
      %s4093 = scalar_lea.vmem %s6, 8
      %v4094 = vld [vmem:[%s4093] sm:$0xff]
      %v4096 = vsel %vm4045, %v4085, 0
      %v4099 = vsel %vm4045, %v4086, 0
      %v4102 = vsel %vm4045, %v4087, 0
      %v4105 = vsel %vm4045, %v4088, 0
      %v4108 = vsel %vm4045, %v4089, 0
      %v4111 = vsel %vm4045, %v4090, 0
      %v4114 = vsel %vm4045, %v4091, 0
      %v4117 = vsel %vm4045, %v4092, 0
      %4119 = vmatpush.msra.mxu0 0.0
      %4120 = vmatpush.msra.mxu0 0.0
      %4121 = vmatpush.msra.mxu0 0.0
      %4122 = vmatpush.msra.mxu0 0.0
      %4123 = vmatpush.msra.mxu0 0.0
      %4124 = vmatpush.msra.mxu0 0.0
      %4125 = vmatpush.msra.mxu0 0.0
      %4126 = vmatpush.msra.mxu0 0.0
      %4127 = vmatpush.msra.mxu0 0.0
      %4128 = vmatpush.msra.mxu0 0.0
      %4129 = vmatpush.msra.mxu0 0.0
      %4130 = vmatpush.msra.mxu0 0.0
      %4131 = vmatpush.msra.mxu0 0.0
      %4132 = vmatpush.msra.mxu0 0.0
      %4133 = vmatpush.msra.mxu0 0.0
      %v4134 = vand.u32 %v4094, 4294901760
      %4135 = vmatpush.msra.mxu0 %v4134
      %v4136 = vand.u32 %v4096, 4294901760
      %v4137 = vsub.f32 %v4096, %v4136
      %v4138 = vand.u32 %v4137, 4294901760
      %v4139 = vsub.f32 %v4137, %v4138
      %v4140 = vand.u32 %v4139, 4294901760
      %4141 = vmatmul.f32.gmra.mxu0 %v4140
      %v4142 = vpop.f32.mrf.mxu0
      %v4143 = vadd.f32 0.0, %v4142
      %v4144 = vand.u32 %v4099, 4294901760
      %v4145 = vsub.f32 %v4099, %v4144
      %v4146 = vand.u32 %v4145, 4294901760
      %v4147 = vsub.f32 %v4145, %v4146
      %v4148 = vand.u32 %v4147, 4294901760
      %4149 = vmatmul.f32.gmra.mxu0 %v4148
      %v4150 = vpop.f32.mrf.mxu0
      %v4151 = vadd.f32 0.0, %v4150
      %v4152 = vand.u32 %v4102, 4294901760
      %v4153 = vsub.f32 %v4102, %v4152
      %v4154 = vand.u32 %v4153, 4294901760
      %v4155 = vsub.f32 %v4153, %v4154
      %v4156 = vand.u32 %v4155, 4294901760
      %4157 = vmatmul.f32.gmra.mxu0 %v4156
      %v4158 = vpop.f32.mrf.mxu0
      %v4159 = vadd.f32 0.0, %v4158
      %v4160 = vand.u32 %v4105, 4294901760
      %v4161 = vsub.f32 %v4105, %v4160
      %v4162 = vand.u32 %v4161, 4294901760
      %v4163 = vsub.f32 %v4161, %v4162
      %v4164 = vand.u32 %v4163, 4294901760
      %4165 = vmatmul.f32.gmra.mxu0 %v4164
      %v4166 = vpop.f32.mrf.mxu0
      %v4167 = vadd.f32 0.0, %v4166
      %v4168 = vand.u32 %v4108, 4294901760
      %v4169 = vsub.f32 %v4108, %v4168
      %v4170 = vand.u32 %v4169, 4294901760
      %v4171 = vsub.f32 %v4169, %v4170
      %v4172 = vand.u32 %v4171, 4294901760
      %4173 = vmatmul.f32.gmra.mxu0 %v4172
      %v4174 = vpop.f32.mrf.mxu0
      %v4175 = vadd.f32 0.0, %v4174
      %v4176 = vand.u32 %v4111, 4294901760
      %v4177 = vsub.f32 %v4111, %v4176
      %v4178 = vand.u32 %v4177, 4294901760
      %v4179 = vsub.f32 %v4177, %v4178
      %v4180 = vand.u32 %v4179, 4294901760
      %4181 = vmatmul.f32.gmra.mxu0 %v4180
      %v4182 = vpop.f32.mrf.mxu0
      %v4183 = vadd.f32 0.0, %v4182
      %v4184 = vand.u32 %v4114, 4294901760
      %v4185 = vsub.f32 %v4114, %v4184
      %v4186 = vand.u32 %v4185, 4294901760
      %v4187 = vsub.f32 %v4185, %v4186
      %v4188 = vand.u32 %v4187, 4294901760
      %4189 = vmatmul.f32.gmra.mxu0 %v4188
      %v4190 = vpop.f32.mrf.mxu0
      %v4191 = vadd.f32 0.0, %v4190
      %v4192 = vand.u32 %v4117, 4294901760
      %v4193 = vsub.f32 %v4117, %v4192
      %v4194 = vand.u32 %v4193, 4294901760
      %v4195 = vsub.f32 %v4193, %v4194
      %v4196 = vand.u32 %v4195, 4294901760
      %4197 = vmatmul.f32.gmra.mxu0 %v4196
      %v4198 = vpop.f32.mrf.mxu0
      %v4199 = vadd.f32 0.0, %v4198
      %4200 = vdwg.mxu0
      %4201 = vmatpush.msra.mxu0 0.0
      %4202 = vmatpush.msra.mxu0 0.0
      %4203 = vmatpush.msra.mxu0 0.0
      %4204 = vmatpush.msra.mxu0 0.0
      %4205 = vmatpush.msra.mxu0 0.0
      %4206 = vmatpush.msra.mxu0 0.0
      %4207 = vmatpush.msra.mxu0 0.0
      %4208 = vmatpush.msra.mxu0 0.0
      %4209 = vmatpush.msra.mxu0 0.0
      %4210 = vmatpush.msra.mxu0 0.0
      %4211 = vmatpush.msra.mxu0 0.0
      %4212 = vmatpush.msra.mxu0 0.0
      %4213 = vmatpush.msra.mxu0 0.0
      %4214 = vmatpush.msra.mxu0 0.0
      %4215 = vmatpush.msra.mxu0 0.0
      %v4216 = vand.u32 %v4094, 4294901760
      %v4217 = vsub.f32 %v4094, %v4216
      %v4218 = vand.u32 %v4217, 4294901760
      %v4219 = vsub.f32 %v4217, %v4218
      %v4220 = vand.u32 %v4219, 4294901760
      %4221 = vmatpush.msra.mxu0 %v4220
      %v4222 = vand.u32 %v4096, 4294901760
      %4223 = vmatmul.f32.gmra.mxu0 %v4222
      %v4224 = vpop.f32.mrf.mxu0
      %v4225 = vadd.f32 %v4143, %v4224
      %v4226 = vand.u32 %v4099, 4294901760
      %4227 = vmatmul.f32.gmra.mxu0 %v4226
      %v4228 = vpop.f32.mrf.mxu0
      %v4229 = vadd.f32 %v4151, %v4228
      %v4230 = vand.u32 %v4102, 4294901760
      %4231 = vmatmul.f32.gmra.mxu0 %v4230
      %v4232 = vpop.f32.mrf.mxu0
      %v4233 = vadd.f32 %v4159, %v4232
      %v4234 = vand.u32 %v4105, 4294901760
      %4235 = vmatmul.f32.gmra.mxu0 %v4234
      %v4236 = vpop.f32.mrf.mxu0
      %v4237 = vadd.f32 %v4167, %v4236
      %v4238 = vand.u32 %v4108, 4294901760
      %4239 = vmatmul.f32.gmra.mxu0 %v4238
      %v4240 = vpop.f32.mrf.mxu0
      %v4241 = vadd.f32 %v4175, %v4240
      %v4242 = vand.u32 %v4111, 4294901760
      %4243 = vmatmul.f32.gmra.mxu0 %v4242
      %v4244 = vpop.f32.mrf.mxu0
      %v4245 = vadd.f32 %v4183, %v4244
      %v4246 = vand.u32 %v4114, 4294901760
      %4247 = vmatmul.f32.gmra.mxu0 %v4246
      %v4248 = vpop.f32.mrf.mxu0
      %v4249 = vadd.f32 %v4191, %v4248
      %v4250 = vand.u32 %v4117, 4294901760
      %4251 = vmatmul.f32.gmra.mxu0 %v4250
      %v4252 = vpop.f32.mrf.mxu0
      %v4253 = vadd.f32 %v4199, %v4252
      %4254 = vdwg.mxu0
      %4255 = vmatpush.msra.mxu0 0.0
      %4256 = vmatpush.msra.mxu0 0.0
      %4257 = vmatpush.msra.mxu0 0.0
      %4258 = vmatpush.msra.mxu0 0.0
      %4259 = vmatpush.msra.mxu0 0.0
      %4260 = vmatpush.msra.mxu0 0.0
      %4261 = vmatpush.msra.mxu0 0.0
      %4262 = vmatpush.msra.mxu0 0.0
      %4263 = vmatpush.msra.mxu0 0.0
      %4264 = vmatpush.msra.mxu0 0.0
      %4265 = vmatpush.msra.mxu0 0.0
      %4266 = vmatpush.msra.mxu0 0.0
      %4267 = vmatpush.msra.mxu0 0.0
      %4268 = vmatpush.msra.mxu0 0.0
      %4269 = vmatpush.msra.mxu0 0.0
      %v4270 = vand.u32 %v4094, 4294901760
      %v4271 = vsub.f32 %v4094, %v4270
      %4272 = vmatpush.msra.mxu0 %v4271
      %v4273 = vand.u32 %v4096, 4294901760
      %v4274 = vsub.f32 %v4096, %v4273
      %4275 = vmatmul.f32.gmra.mxu0 %v4274
      %v4276 = vpop.f32.mrf.mxu0
      %v4277 = vadd.f32 %v4225, %v4276
      %v4278 = vand.u32 %v4099, 4294901760
      %v4279 = vsub.f32 %v4099, %v4278
      %4280 = vmatmul.f32.gmra.mxu0 %v4279
      %v4281 = vpop.f32.mrf.mxu0
      %v4282 = vadd.f32 %v4229, %v4281
      %v4283 = vand.u32 %v4102, 4294901760
      %v4284 = vsub.f32 %v4102, %v4283
      %4285 = vmatmul.f32.gmra.mxu0 %v4284
      %v4286 = vpop.f32.mrf.mxu0
      %v4287 = vadd.f32 %v4233, %v4286
      %v4288 = vand.u32 %v4105, 4294901760
      %v4289 = vsub.f32 %v4105, %v4288
      %4290 = vmatmul.f32.gmra.mxu0 %v4289
      %v4291 = vpop.f32.mrf.mxu0
      %v4292 = vadd.f32 %v4237, %v4291
      %v4293 = vand.u32 %v4108, 4294901760
      %v4294 = vsub.f32 %v4108, %v4293
      %4295 = vmatmul.f32.gmra.mxu0 %v4294
      %v4296 = vpop.f32.mrf.mxu0
      %v4297 = vadd.f32 %v4241, %v4296
      %v4298 = vand.u32 %v4111, 4294901760
      %v4299 = vsub.f32 %v4111, %v4298
      %4300 = vmatmul.f32.gmra.mxu0 %v4299
      %v4301 = vpop.f32.mrf.mxu0
      %v4302 = vadd.f32 %v4245, %v4301
      %v4303 = vand.u32 %v4114, 4294901760
      %v4304 = vsub.f32 %v4114, %v4303
      %4305 = vmatmul.f32.gmra.mxu0 %v4304
      %v4306 = vpop.f32.mrf.mxu0
      %v4307 = vadd.f32 %v4249, %v4306
      %v4308 = vand.u32 %v4117, 4294901760
      %v4309 = vsub.f32 %v4117, %v4308
      %4310 = vmatmul.f32.gmra.mxu0 %v4309
      %v4311 = vpop.f32.mrf.mxu0
      %v4312 = vadd.f32 %v4253, %v4311
      %4313 = vdwg.mxu0
      %4314 = vmatpush.msra.mxu0 0.0
      %4315 = vmatpush.msra.mxu0 0.0
      %4316 = vmatpush.msra.mxu0 0.0
      %4317 = vmatpush.msra.mxu0 0.0
      %4318 = vmatpush.msra.mxu0 0.0
      %4319 = vmatpush.msra.mxu0 0.0
      %4320 = vmatpush.msra.mxu0 0.0
      %4321 = vmatpush.msra.mxu0 0.0
      %4322 = vmatpush.msra.mxu0 0.0
      %4323 = vmatpush.msra.mxu0 0.0
      %4324 = vmatpush.msra.mxu0 0.0
      %4325 = vmatpush.msra.mxu0 0.0
      %4326 = vmatpush.msra.mxu0 0.0
      %4327 = vmatpush.msra.mxu0 0.0
      %4328 = vmatpush.msra.mxu0 0.0
      %v4329 = vand.u32 %v4094, 4294901760
      %4330 = vmatpush.msra.mxu0 %v4329
      %v4331 = vand.u32 %v4096, 4294901760
      %v4332 = vsub.f32 %v4096, %v4331
      %v4333 = vand.u32 %v4332, 4294901760
      %4334 = vmatmul.f32.gmra.mxu0 %v4333
      %v4335 = vpop.f32.mrf.mxu0
      %v4336 = vadd.f32 %v4277, %v4335
      %v4337 = vand.u32 %v4099, 4294901760
      %v4338 = vsub.f32 %v4099, %v4337
      %v4339 = vand.u32 %v4338, 4294901760
      %4340 = vmatmul.f32.gmra.mxu0 %v4339
      %v4341 = vpop.f32.mrf.mxu0
      %v4342 = vadd.f32 %v4282, %v4341
      %v4343 = vand.u32 %v4102, 4294901760
      %v4344 = vsub.f32 %v4102, %v4343
      %v4345 = vand.u32 %v4344, 4294901760
      %4346 = vmatmul.f32.gmra.mxu0 %v4345
      %v4347 = vpop.f32.mrf.mxu0
      %v4348 = vadd.f32 %v4287, %v4347
      %v4349 = vand.u32 %v4105, 4294901760
      %v4350 = vsub.f32 %v4105, %v4349
      %v4351 = vand.u32 %v4350, 4294901760
      %4352 = vmatmul.f32.gmra.mxu0 %v4351
      %v4353 = vpop.f32.mrf.mxu0
      %v4354 = vadd.f32 %v4292, %v4353
      %v4355 = vand.u32 %v4108, 4294901760
      %v4356 = vsub.f32 %v4108, %v4355
      %v4357 = vand.u32 %v4356, 4294901760
      %4358 = vmatmul.f32.gmra.mxu0 %v4357
      %v4359 = vpop.f32.mrf.mxu0
      %v4360 = vadd.f32 %v4297, %v4359
      %v4361 = vand.u32 %v4111, 4294901760
      %v4362 = vsub.f32 %v4111, %v4361
      %v4363 = vand.u32 %v4362, 4294901760
      %4364 = vmatmul.f32.gmra.mxu0 %v4363
      %v4365 = vpop.f32.mrf.mxu0
      %v4366 = vadd.f32 %v4302, %v4365
      %v4367 = vand.u32 %v4114, 4294901760
      %v4368 = vsub.f32 %v4114, %v4367
      %v4369 = vand.u32 %v4368, 4294901760
      %4370 = vmatmul.f32.gmra.mxu0 %v4369
      %v4371 = vpop.f32.mrf.mxu0
      %v4372 = vadd.f32 %v4307, %v4371
      %v4373 = vand.u32 %v4117, 4294901760
      %v4374 = vsub.f32 %v4117, %v4373
      %v4375 = vand.u32 %v4374, 4294901760
      %4376 = vmatmul.f32.gmra.mxu0 %v4375
      %v4377 = vpop.f32.mrf.mxu0
      %v4378 = vadd.f32 %v4312, %v4377
      %4379 = vdwg.mxu0
      %4380 = vmatpush.msra.mxu0 0.0
      %4381 = vmatpush.msra.mxu0 0.0
      %4382 = vmatpush.msra.mxu0 0.0
      %4383 = vmatpush.msra.mxu0 0.0
      %4384 = vmatpush.msra.mxu0 0.0
      %4385 = vmatpush.msra.mxu0 0.0
      %4386 = vmatpush.msra.mxu0 0.0
      %4387 = vmatpush.msra.mxu0 0.0
      %4388 = vmatpush.msra.mxu0 0.0
      %4389 = vmatpush.msra.mxu0 0.0
      %4390 = vmatpush.msra.mxu0 0.0
      %4391 = vmatpush.msra.mxu0 0.0
      %4392 = vmatpush.msra.mxu0 0.0
      %4393 = vmatpush.msra.mxu0 0.0
      %4394 = vmatpush.msra.mxu0 0.0
      %v4395 = vand.u32 %v4094, 4294901760
      %v4396 = vsub.f32 %v4094, %v4395
      %v4397 = vand.u32 %v4396, 4294901760
      %4398 = vmatpush.msra.mxu0 %v4397
      %v4399 = vand.u32 %v4096, 4294901760
      %4400 = vmatmul.f32.gmra.mxu0 %v4399
      %v4401 = vpop.f32.mrf.mxu0
      %v4402 = vadd.f32 %v4336, %v4401
      %v4403 = vand.u32 %v4099, 4294901760
      %4404 = vmatmul.f32.gmra.mxu0 %v4403
      %v4405 = vpop.f32.mrf.mxu0
      %v4406 = vadd.f32 %v4342, %v4405
      %v4407 = vand.u32 %v4102, 4294901760
      %4408 = vmatmul.f32.gmra.mxu0 %v4407
      %v4409 = vpop.f32.mrf.mxu0
      %v4410 = vadd.f32 %v4348, %v4409
      %v4411 = vand.u32 %v4105, 4294901760
      %4412 = vmatmul.f32.gmra.mxu0 %v4411
      %v4413 = vpop.f32.mrf.mxu0
      %v4414 = vadd.f32 %v4354, %v4413
      %v4415 = vand.u32 %v4108, 4294901760
      %4416 = vmatmul.f32.gmra.mxu0 %v4415
      %v4417 = vpop.f32.mrf.mxu0
      %v4418 = vadd.f32 %v4360, %v4417
      %v4419 = vand.u32 %v4111, 4294901760
      %4420 = vmatmul.f32.gmra.mxu0 %v4419
      %v4421 = vpop.f32.mrf.mxu0
      %v4422 = vadd.f32 %v4366, %v4421
      %v4423 = vand.u32 %v4114, 4294901760
      %4424 = vmatmul.f32.gmra.mxu0 %v4423
      %v4425 = vpop.f32.mrf.mxu0
      %v4426 = vadd.f32 %v4372, %v4425
      %v4427 = vand.u32 %v4117, 4294901760
      %4428 = vmatmul.f32.gmra.mxu0 %v4427
      %v4429 = vpop.f32.mrf.mxu0
      %v4430 = vadd.f32 %v4378, %v4429
      %4431 = vdwg.mxu0
      %4432 = vmatpush.msra.mxu0 0.0
      %4433 = vmatpush.msra.mxu0 0.0
      %4434 = vmatpush.msra.mxu0 0.0
      %4435 = vmatpush.msra.mxu0 0.0
      %4436 = vmatpush.msra.mxu0 0.0
      %4437 = vmatpush.msra.mxu0 0.0
      %4438 = vmatpush.msra.mxu0 0.0
      %4439 = vmatpush.msra.mxu0 0.0
      %4440 = vmatpush.msra.mxu0 0.0
      %4441 = vmatpush.msra.mxu0 0.0
      %4442 = vmatpush.msra.mxu0 0.0
      %4443 = vmatpush.msra.mxu0 0.0
      %4444 = vmatpush.msra.mxu0 0.0
      %4445 = vmatpush.msra.mxu0 0.0
      %4446 = vmatpush.msra.mxu0 0.0
      %v4447 = vand.u32 %v4094, 4294901760
      %4448 = vmatpush.msra.mxu0 %v4447
      %v4449 = vand.u32 %v4096, 4294901760
      %4450 = vmatmul.f32.gmra.mxu0 %v4449
      %v4451 = vpop.f32.mrf.mxu0
      %v4452 = vadd.f32 %v4402, %v4451
      %v4453 = vand.u32 %v4099, 4294901760
      %4454 = vmatmul.f32.gmra.mxu0 %v4453
      %v4455 = vpop.f32.mrf.mxu0
      %v4456 = vadd.f32 %v4406, %v4455
      %v4457 = vand.u32 %v4102, 4294901760
      %4458 = vmatmul.f32.gmra.mxu0 %v4457
      %v4459 = vpop.f32.mrf.mxu0
      %v4460 = vadd.f32 %v4410, %v4459
      %v4461 = vand.u32 %v4105, 4294901760
      %4462 = vmatmul.f32.gmra.mxu0 %v4461
      %v4463 = vpop.f32.mrf.mxu0
      %v4464 = vadd.f32 %v4414, %v4463
      %v4465 = vand.u32 %v4108, 4294901760
      %4466 = vmatmul.f32.gmra.mxu0 %v4465
      %v4467 = vpop.f32.mrf.mxu0
      %v4468 = vadd.f32 %v4418, %v4467
      %v4469 = vand.u32 %v4111, 4294901760
      %4470 = vmatmul.f32.gmra.mxu0 %v4469
      %v4471 = vpop.f32.mrf.mxu0
      %v4472 = vadd.f32 %v4422, %v4471
      %v4473 = vand.u32 %v4114, 4294901760
      %4474 = vmatmul.f32.gmra.mxu0 %v4473
      %v4475 = vpop.f32.mrf.mxu0
      %v4476 = vadd.f32 %v4426, %v4475
      %v4477 = vand.u32 %v4117, 4294901760
      %4478 = vmatmul.f32.gmra.mxu0 %v4477
      %v4479 = vpop.f32.mrf.mxu0
      %v4480 = vadd.f32 %v4430, %v4479
      %4481 = vdwg.mxu0
      %v4483 = vsel %vm4045, %v4076, 0
      %v4486 = vsel %vm4045, %v4077, 0
      %v4489 = vsel %vm4045, %v4078, 0
      %v4492 = vsel %vm4045, %v4079, 0
      %v4495 = vsel %vm4045, %v4080, 0
      %v4498 = vsel %vm4045, %v4081, 0
      %v4501 = vsel %vm4045, %v4082, 0
      %v4504 = vsel %vm4045, %v4083, 0
      %4506 = vmatpush.msra.mxu0 0.0
      %4507 = vmatpush.msra.mxu0 0.0
      %4508 = vmatpush.msra.mxu0 0.0
      %4509 = vmatpush.msra.mxu0 0.0
      %4510 = vmatpush.msra.mxu0 0.0
      %4511 = vmatpush.msra.mxu0 0.0
      %4512 = vmatpush.msra.mxu0 0.0
      %4513 = vmatpush.msra.mxu0 0.0
      %4514 = vmatpush.msra.mxu0 0.0
      %4515 = vmatpush.msra.mxu0 0.0
      %4516 = vmatpush.msra.mxu0 0.0
      %4517 = vmatpush.msra.mxu0 0.0
      %4518 = vmatpush.msra.mxu0 0.0
      %4519 = vmatpush.msra.mxu0 0.0
      %4520 = vmatpush.msra.mxu0 0.0
      %v4521 = vand.u32 %v4084, 4294901760
      %4522 = vmatpush.msra.mxu0 %v4521
      %v4523 = vand.u32 %v4483, 4294901760
      %v4524 = vsub.f32 %v4483, %v4523
      %v4525 = vand.u32 %v4524, 4294901760
      %v4526 = vsub.f32 %v4524, %v4525
      %v4527 = vand.u32 %v4526, 4294901760
      %4528 = vmatmul.f32.gmra.mxu0 %v4527
      %v4529 = vpop.f32.mrf.mxu0
      %v4530 = vadd.f32 %v4452, %v4529
      %v4531 = vand.u32 %v4486, 4294901760
      %v4532 = vsub.f32 %v4486, %v4531
      %v4533 = vand.u32 %v4532, 4294901760
      %v4534 = vsub.f32 %v4532, %v4533
      %v4535 = vand.u32 %v4534, 4294901760
      %4536 = vmatmul.f32.gmra.mxu0 %v4535
      %v4537 = vpop.f32.mrf.mxu0
      %v4538 = vadd.f32 %v4456, %v4537
      %v4539 = vand.u32 %v4489, 4294901760
      %v4540 = vsub.f32 %v4489, %v4539
      %v4541 = vand.u32 %v4540, 4294901760
      %v4542 = vsub.f32 %v4540, %v4541
      %v4543 = vand.u32 %v4542, 4294901760
      %4544 = vmatmul.f32.gmra.mxu0 %v4543
      %v4545 = vpop.f32.mrf.mxu0
      %v4546 = vadd.f32 %v4460, %v4545
      %v4547 = vand.u32 %v4492, 4294901760
      %v4548 = vsub.f32 %v4492, %v4547
      %v4549 = vand.u32 %v4548, 4294901760
      %v4550 = vsub.f32 %v4548, %v4549
      %v4551 = vand.u32 %v4550, 4294901760
      %4552 = vmatmul.f32.gmra.mxu0 %v4551
      %v4553 = vpop.f32.mrf.mxu0
      %v4554 = vadd.f32 %v4464, %v4553
      %v4555 = vand.u32 %v4495, 4294901760
      %v4556 = vsub.f32 %v4495, %v4555
      %v4557 = vand.u32 %v4556, 4294901760
      %v4558 = vsub.f32 %v4556, %v4557
      %v4559 = vand.u32 %v4558, 4294901760
      %4560 = vmatmul.f32.gmra.mxu0 %v4559
      %v4561 = vpop.f32.mrf.mxu0
      %v4562 = vadd.f32 %v4468, %v4561
      %v4563 = vand.u32 %v4498, 4294901760
      %v4564 = vsub.f32 %v4498, %v4563
      %v4565 = vand.u32 %v4564, 4294901760
      %v4566 = vsub.f32 %v4564, %v4565
      %v4567 = vand.u32 %v4566, 4294901760
      %4568 = vmatmul.f32.gmra.mxu0 %v4567
      %v4569 = vpop.f32.mrf.mxu0
      %v4570 = vadd.f32 %v4472, %v4569
      %v4571 = vand.u32 %v4501, 4294901760
      %v4572 = vsub.f32 %v4501, %v4571
      %v4573 = vand.u32 %v4572, 4294901760
      %v4574 = vsub.f32 %v4572, %v4573
      %v4575 = vand.u32 %v4574, 4294901760
      %4576 = vmatmul.f32.gmra.mxu0 %v4575
      %v4577 = vpop.f32.mrf.mxu0
      %v4578 = vadd.f32 %v4476, %v4577
      %v4579 = vand.u32 %v4504, 4294901760
      %v4580 = vsub.f32 %v4504, %v4579
      %v4581 = vand.u32 %v4580, 4294901760
      %v4582 = vsub.f32 %v4580, %v4581
      %v4583 = vand.u32 %v4582, 4294901760
      %4584 = vmatmul.f32.gmra.mxu0 %v4583
      %v4585 = vpop.f32.mrf.mxu0
      %v4586 = vadd.f32 %v4480, %v4585
      %4587 = vdwg.mxu0
      %4588 = vmatpush.msra.mxu0 0.0
      %4589 = vmatpush.msra.mxu0 0.0
      %4590 = vmatpush.msra.mxu0 0.0
      %4591 = vmatpush.msra.mxu0 0.0
      %4592 = vmatpush.msra.mxu0 0.0
      %4593 = vmatpush.msra.mxu0 0.0
      %4594 = vmatpush.msra.mxu0 0.0
      %4595 = vmatpush.msra.mxu0 0.0
      %4596 = vmatpush.msra.mxu0 0.0
      %4597 = vmatpush.msra.mxu0 0.0
      %4598 = vmatpush.msra.mxu0 0.0
      %4599 = vmatpush.msra.mxu0 0.0
      %4600 = vmatpush.msra.mxu0 0.0
      %4601 = vmatpush.msra.mxu0 0.0
      %4602 = vmatpush.msra.mxu0 0.0
      %v4603 = vand.u32 %v4084, 4294901760
      %v4604 = vsub.f32 %v4084, %v4603
      %v4605 = vand.u32 %v4604, 4294901760
      %v4606 = vsub.f32 %v4604, %v4605
      %v4607 = vand.u32 %v4606, 4294901760
      %4608 = vmatpush.msra.mxu0 %v4607
      %v4609 = vand.u32 %v4483, 4294901760
      %4610 = vmatmul.f32.gmra.mxu0 %v4609
      %v4611 = vpop.f32.mrf.mxu0
      %v4612 = vadd.f32 %v4530, %v4611
      %v4613 = vand.u32 %v4486, 4294901760
      %4614 = vmatmul.f32.gmra.mxu0 %v4613
      %v4615 = vpop.f32.mrf.mxu0
      %v4616 = vadd.f32 %v4538, %v4615
      %v4617 = vand.u32 %v4489, 4294901760
      %4618 = vmatmul.f32.gmra.mxu0 %v4617
      %v4619 = vpop.f32.mrf.mxu0
      %v4620 = vadd.f32 %v4546, %v4619
      %v4621 = vand.u32 %v4492, 4294901760
      %4622 = vmatmul.f32.gmra.mxu0 %v4621
      %v4623 = vpop.f32.mrf.mxu0
      %v4624 = vadd.f32 %v4554, %v4623
      %v4625 = vand.u32 %v4495, 4294901760
      %4626 = vmatmul.f32.gmra.mxu0 %v4625
      %v4627 = vpop.f32.mrf.mxu0
      %v4628 = vadd.f32 %v4562, %v4627
      %v4629 = vand.u32 %v4498, 4294901760
      %4630 = vmatmul.f32.gmra.mxu0 %v4629
      %v4631 = vpop.f32.mrf.mxu0
      %v4632 = vadd.f32 %v4570, %v4631
      %v4633 = vand.u32 %v4501, 4294901760
      %4634 = vmatmul.f32.gmra.mxu0 %v4633
      %v4635 = vpop.f32.mrf.mxu0
      %v4636 = vadd.f32 %v4578, %v4635
      %v4637 = vand.u32 %v4504, 4294901760
      %4638 = vmatmul.f32.gmra.mxu0 %v4637
      %v4639 = vpop.f32.mrf.mxu0
      %v4640 = vadd.f32 %v4586, %v4639
      %4641 = vdwg.mxu0
      %4642 = vmatpush.msra.mxu0 0.0
      %4643 = vmatpush.msra.mxu0 0.0
      %4644 = vmatpush.msra.mxu0 0.0
      %4645 = vmatpush.msra.mxu0 0.0
      %4646 = vmatpush.msra.mxu0 0.0
      %4647 = vmatpush.msra.mxu0 0.0
      %4648 = vmatpush.msra.mxu0 0.0
      %4649 = vmatpush.msra.mxu0 0.0
      %4650 = vmatpush.msra.mxu0 0.0
      %4651 = vmatpush.msra.mxu0 0.0
      %4652 = vmatpush.msra.mxu0 0.0
      %4653 = vmatpush.msra.mxu0 0.0
      %4654 = vmatpush.msra.mxu0 0.0
      %4655 = vmatpush.msra.mxu0 0.0
      %4656 = vmatpush.msra.mxu0 0.0
      %v4657 = vand.u32 %v4084, 4294901760
      %v4658 = vsub.f32 %v4084, %v4657
      %4659 = vmatpush.msra.mxu0 %v4658
      %v4660 = vand.u32 %v4483, 4294901760
      %v4661 = vsub.f32 %v4483, %v4660
      %4662 = vmatmul.f32.gmra.mxu0 %v4661
      %v4663 = vpop.f32.mrf.mxu0
      %v4664 = vadd.f32 %v4612, %v4663
      %v4665 = vand.u32 %v4486, 4294901760
      %v4666 = vsub.f32 %v4486, %v4665
      %4667 = vmatmul.f32.gmra.mxu0 %v4666
      %v4668 = vpop.f32.mrf.mxu0
      %v4669 = vadd.f32 %v4616, %v4668
      %v4670 = vand.u32 %v4489, 4294901760
      %v4671 = vsub.f32 %v4489, %v4670
      %4672 = vmatmul.f32.gmra.mxu0 %v4671
      %v4673 = vpop.f32.mrf.mxu0
      %v4674 = vadd.f32 %v4620, %v4673
      %v4675 = vand.u32 %v4492, 4294901760
      %v4676 = vsub.f32 %v4492, %v4675
      %4677 = vmatmul.f32.gmra.mxu0 %v4676
      %v4678 = vpop.f32.mrf.mxu0
      %v4679 = vadd.f32 %v4624, %v4678
      %v4680 = vand.u32 %v4495, 4294901760
      %v4681 = vsub.f32 %v4495, %v4680
      %4682 = vmatmul.f32.gmra.mxu0 %v4681
      %v4683 = vpop.f32.mrf.mxu0
      %v4684 = vadd.f32 %v4628, %v4683
      %v4685 = vand.u32 %v4498, 4294901760
      %v4686 = vsub.f32 %v4498, %v4685
      %4687 = vmatmul.f32.gmra.mxu0 %v4686
      %v4688 = vpop.f32.mrf.mxu0
      %v4689 = vadd.f32 %v4632, %v4688
      %v4690 = vand.u32 %v4501, 4294901760
      %v4691 = vsub.f32 %v4501, %v4690
      %4692 = vmatmul.f32.gmra.mxu0 %v4691
      %v4693 = vpop.f32.mrf.mxu0
      %v4694 = vadd.f32 %v4636, %v4693
      %v4695 = vand.u32 %v4504, 4294901760
      %v4696 = vsub.f32 %v4504, %v4695
      %4697 = vmatmul.f32.gmra.mxu0 %v4696
      %v4698 = vpop.f32.mrf.mxu0
      %v4699 = vadd.f32 %v4640, %v4698
      %4700 = vdwg.mxu0
      %4701 = vmatpush.msra.mxu0 0.0
      %4702 = vmatpush.msra.mxu0 0.0
      %4703 = vmatpush.msra.mxu0 0.0
      %4704 = vmatpush.msra.mxu0 0.0
      %4705 = vmatpush.msra.mxu0 0.0
      %4706 = vmatpush.msra.mxu0 0.0
      %4707 = vmatpush.msra.mxu0 0.0
      %4708 = vmatpush.msra.mxu0 0.0
      %4709 = vmatpush.msra.mxu0 0.0
      %4710 = vmatpush.msra.mxu0 0.0
      %4711 = vmatpush.msra.mxu0 0.0
      %4712 = vmatpush.msra.mxu0 0.0
      %4713 = vmatpush.msra.mxu0 0.0
      %4714 = vmatpush.msra.mxu0 0.0
      %4715 = vmatpush.msra.mxu0 0.0
      %v4716 = vand.u32 %v4084, 4294901760
      %4717 = vmatpush.msra.mxu0 %v4716
      %v4718 = vand.u32 %v4483, 4294901760
      %v4719 = vsub.f32 %v4483, %v4718
      %v4720 = vand.u32 %v4719, 4294901760
      %4721 = vmatmul.f32.gmra.mxu0 %v4720
      %v4722 = vpop.f32.mrf.mxu0
      %v4723 = vadd.f32 %v4664, %v4722
      %v4724 = vand.u32 %v4486, 4294901760
      %v4725 = vsub.f32 %v4486, %v4724
      %v4726 = vand.u32 %v4725, 4294901760
      %4727 = vmatmul.f32.gmra.mxu0 %v4726
      %v4728 = vpop.f32.mrf.mxu0
      %v4729 = vadd.f32 %v4669, %v4728
      %v4730 = vand.u32 %v4489, 4294901760
      %v4731 = vsub.f32 %v4489, %v4730
      %v4732 = vand.u32 %v4731, 4294901760
      %4733 = vmatmul.f32.gmra.mxu0 %v4732
      %v4734 = vpop.f32.mrf.mxu0
      %v4735 = vadd.f32 %v4674, %v4734
      %v4736 = vand.u32 %v4492, 4294901760
      %v4737 = vsub.f32 %v4492, %v4736
      %v4738 = vand.u32 %v4737, 4294901760
      %4739 = vmatmul.f32.gmra.mxu0 %v4738
      %v4740 = vpop.f32.mrf.mxu0
      %v4741 = vadd.f32 %v4679, %v4740
      %v4742 = vand.u32 %v4495, 4294901760
      %v4743 = vsub.f32 %v4495, %v4742
      %v4744 = vand.u32 %v4743, 4294901760
      %4745 = vmatmul.f32.gmra.mxu0 %v4744
      %v4746 = vpop.f32.mrf.mxu0
      %v4747 = vadd.f32 %v4684, %v4746
      %v4748 = vand.u32 %v4498, 4294901760
      %v4749 = vsub.f32 %v4498, %v4748
      %v4750 = vand.u32 %v4749, 4294901760
      %4751 = vmatmul.f32.gmra.mxu0 %v4750
      %v4752 = vpop.f32.mrf.mxu0
      %v4753 = vadd.f32 %v4689, %v4752
      %v4754 = vand.u32 %v4501, 4294901760
      %v4755 = vsub.f32 %v4501, %v4754
      %v4756 = vand.u32 %v4755, 4294901760
      %4757 = vmatmul.f32.gmra.mxu0 %v4756
      %v4758 = vpop.f32.mrf.mxu0
      %v4759 = vadd.f32 %v4694, %v4758
      %v4760 = vand.u32 %v4504, 4294901760
      %v4761 = vsub.f32 %v4504, %v4760
      %v4762 = vand.u32 %v4761, 4294901760
      %4763 = vmatmul.f32.gmra.mxu0 %v4762
      %v4764 = vpop.f32.mrf.mxu0
      %v4765 = vadd.f32 %v4699, %v4764
      %4766 = vdwg.mxu0
      %4767 = vmatpush.msra.mxu0 0.0
      %4768 = vmatpush.msra.mxu0 0.0
      %4769 = vmatpush.msra.mxu0 0.0
      %4770 = vmatpush.msra.mxu0 0.0
      %4771 = vmatpush.msra.mxu0 0.0
      %4772 = vmatpush.msra.mxu0 0.0
      %4773 = vmatpush.msra.mxu0 0.0
      %4774 = vmatpush.msra.mxu0 0.0
      %4775 = vmatpush.msra.mxu0 0.0
      %4776 = vmatpush.msra.mxu0 0.0
      %4777 = vmatpush.msra.mxu0 0.0
      %4778 = vmatpush.msra.mxu0 0.0
      %4779 = vmatpush.msra.mxu0 0.0
      %4780 = vmatpush.msra.mxu0 0.0
      %4781 = vmatpush.msra.mxu0 0.0
      %v4782 = vand.u32 %v4084, 4294901760
      %v4783 = vsub.f32 %v4084, %v4782
      %v4784 = vand.u32 %v4783, 4294901760
      %4785 = vmatpush.msra.mxu0 %v4784
      %v4786 = vand.u32 %v4483, 4294901760
      %4787 = vmatmul.f32.gmra.mxu0 %v4786
      %v4788 = vpop.f32.mrf.mxu0
      %v4789 = vadd.f32 %v4723, %v4788
      %v4790 = vand.u32 %v4486, 4294901760
      %4791 = vmatmul.f32.gmra.mxu0 %v4790
      %v4792 = vpop.f32.mrf.mxu0
      %v4793 = vadd.f32 %v4729, %v4792
      %v4794 = vand.u32 %v4489, 4294901760
      %4795 = vmatmul.f32.gmra.mxu0 %v4794
      %v4796 = vpop.f32.mrf.mxu0
      %v4797 = vadd.f32 %v4735, %v4796
      %v4798 = vand.u32 %v4492, 4294901760
      %4799 = vmatmul.f32.gmra.mxu0 %v4798
      %v4800 = vpop.f32.mrf.mxu0
      %v4801 = vadd.f32 %v4741, %v4800
      %v4802 = vand.u32 %v4495, 4294901760
      %4803 = vmatmul.f32.gmra.mxu0 %v4802
      %v4804 = vpop.f32.mrf.mxu0
      %v4805 = vadd.f32 %v4747, %v4804
      %v4806 = vand.u32 %v4498, 4294901760
      %4807 = vmatmul.f32.gmra.mxu0 %v4806
      %v4808 = vpop.f32.mrf.mxu0
      %v4809 = vadd.f32 %v4753, %v4808
      %v4810 = vand.u32 %v4501, 4294901760
      %4811 = vmatmul.f32.gmra.mxu0 %v4810
      %v4812 = vpop.f32.mrf.mxu0
      %v4813 = vadd.f32 %v4759, %v4812
      %v4814 = vand.u32 %v4504, 4294901760
      %4815 = vmatmul.f32.gmra.mxu0 %v4814
      %v4816 = vpop.f32.mrf.mxu0
      %v4817 = vadd.f32 %v4765, %v4816
      %4818 = vdwg.mxu0
      %4819 = vmatpush.msra.mxu0 0.0
      %4820 = vmatpush.msra.mxu0 0.0
      %4821 = vmatpush.msra.mxu0 0.0
      %4822 = vmatpush.msra.mxu0 0.0
      %4823 = vmatpush.msra.mxu0 0.0
      %4824 = vmatpush.msra.mxu0 0.0
      %4825 = vmatpush.msra.mxu0 0.0
      %4826 = vmatpush.msra.mxu0 0.0
      %4827 = vmatpush.msra.mxu0 0.0
      %4828 = vmatpush.msra.mxu0 0.0
      %4829 = vmatpush.msra.mxu0 0.0
      %4830 = vmatpush.msra.mxu0 0.0
      %4831 = vmatpush.msra.mxu0 0.0
      %4832 = vmatpush.msra.mxu0 0.0
      %4833 = vmatpush.msra.mxu0 0.0
      %v4834 = vand.u32 %v4084, 4294901760
      %4835 = vmatpush.msra.mxu0 %v4834
      %v4836 = vand.u32 %v4483, 4294901760
      %4837 = vmatmul.f32.gmra.mxu0 %v4836
      %v4838 = vpop.f32.mrf.mxu0
      %v4839 = vadd.f32 %v4789, %v4838
      %v4840 = vand.u32 %v4486, 4294901760
      %4841 = vmatmul.f32.gmra.mxu0 %v4840
      %v4842 = vpop.f32.mrf.mxu0
      %v4843 = vadd.f32 %v4793, %v4842
      %v4844 = vand.u32 %v4489, 4294901760
      %4845 = vmatmul.f32.gmra.mxu0 %v4844
      %v4846 = vpop.f32.mrf.mxu0
      %v4847 = vadd.f32 %v4797, %v4846
      %v4848 = vand.u32 %v4492, 4294901760
      %4849 = vmatmul.f32.gmra.mxu0 %v4848
      %v4850 = vpop.f32.mrf.mxu0
      %v4851 = vadd.f32 %v4801, %v4850
      %v4852 = vand.u32 %v4495, 4294901760
      %4853 = vmatmul.f32.gmra.mxu0 %v4852
      %v4854 = vpop.f32.mrf.mxu0
      %v4855 = vadd.f32 %v4805, %v4854
      %v4856 = vand.u32 %v4498, 4294901760
      %4857 = vmatmul.f32.gmra.mxu0 %v4856
      %v4858 = vpop.f32.mrf.mxu0
      %v4859 = vadd.f32 %v4809, %v4858
      %v4860 = vand.u32 %v4501, 4294901760
      %4861 = vmatmul.f32.gmra.mxu0 %v4860
      %v4862 = vpop.f32.mrf.mxu0
      %v4863 = vadd.f32 %v4813, %v4862
      %v4864 = vand.u32 %v4504, 4294901760
      %4865 = vmatmul.f32.gmra.mxu0 %v4864
      %v4866 = vpop.f32.mrf.mxu0
      %v4867 = vadd.f32 %v4817, %v4866
      %4868 = vdwg.mxu0
      %v4869 = vld [vmem:[#allocation2 + $0x2] sm:$0xff]
      %v4870 = vld [vmem:[#allocation2 + $0x12] sm:$0xff]
      %v4871 = vld [vmem:[#allocation2 + $0x22] sm:$0xff]
      %v4872 = vld [vmem:[#allocation2 + $0x32] sm:$0xff]
      %v4873 = vld [vmem:[#allocation2 + $0x42] sm:$0xff]
      %v4874 = vld [vmem:[#allocation2 + $0x52] sm:$0xff]
      %v4875 = vld [vmem:[#allocation2 + $0x62] sm:$0xff]
      %v4876 = vld [vmem:[#allocation2 + $0x72] sm:$0xff]
      %s4877 = scalar_lea.vmem %s6, 16
      %v4878 = vld [vmem:[%s4877] sm:$0xff]
      %v4880 = vsel %vm4045, %v4869, 0
      %v4883 = vsel %vm4045, %v4870, 0
      %v4886 = vsel %vm4045, %v4871, 0
      %v4889 = vsel %vm4045, %v4872, 0
      %v4892 = vsel %vm4045, %v4873, 0
      %v4895 = vsel %vm4045, %v4874, 0
      %v4898 = vsel %vm4045, %v4875, 0
      %v4901 = vsel %vm4045, %v4876, 0
      %4903 = vmatpush.msra.mxu0 0.0
      %4904 = vmatpush.msra.mxu0 0.0
      %4905 = vmatpush.msra.mxu0 0.0
      %4906 = vmatpush.msra.mxu0 0.0
      %4907 = vmatpush.msra.mxu0 0.0
      %4908 = vmatpush.msra.mxu0 0.0
      %4909 = vmatpush.msra.mxu0 0.0
      %4910 = vmatpush.msra.mxu0 0.0
      %4911 = vmatpush.msra.mxu0 0.0
      %4912 = vmatpush.msra.mxu0 0.0
      %4913 = vmatpush.msra.mxu0 0.0
      %4914 = vmatpush.msra.mxu0 0.0
      %4915 = vmatpush.msra.mxu0 0.0
      %4916 = vmatpush.msra.mxu0 0.0
      %4917 = vmatpush.msra.mxu0 0.0
      %v4918 = vand.u32 %v4878, 4294901760
      %4919 = vmatpush.msra.mxu0 %v4918
      %v4920 = vand.u32 %v4880, 4294901760
      %v4921 = vsub.f32 %v4880, %v4920
      %v4922 = vand.u32 %v4921, 4294901760
      %v4923 = vsub.f32 %v4921, %v4922
      %v4924 = vand.u32 %v4923, 4294901760
      %4925 = vmatmul.f32.gmra.mxu0 %v4924
      %v4926 = vpop.f32.mrf.mxu0
      %v4927 = vadd.f32 0.0, %v4926
      %v4928 = vand.u32 %v4883, 4294901760
      %v4929 = vsub.f32 %v4883, %v4928
      %v4930 = vand.u32 %v4929, 4294901760
      %v4931 = vsub.f32 %v4929, %v4930
      %v4932 = vand.u32 %v4931, 4294901760
      %4933 = vmatmul.f32.gmra.mxu0 %v4932
      %v4934 = vpop.f32.mrf.mxu0
      %v4935 = vadd.f32 0.0, %v4934
      %v4936 = vand.u32 %v4886, 4294901760
      %v4937 = vsub.f32 %v4886, %v4936
      %v4938 = vand.u32 %v4937, 4294901760
      %v4939 = vsub.f32 %v4937, %v4938
      %v4940 = vand.u32 %v4939, 4294901760
      %4941 = vmatmul.f32.gmra.mxu0 %v4940
      %v4942 = vpop.f32.mrf.mxu0
      %v4943 = vadd.f32 0.0, %v4942
      %v4944 = vand.u32 %v4889, 4294901760
      %v4945 = vsub.f32 %v4889, %v4944
      %v4946 = vand.u32 %v4945, 4294901760
      %v4947 = vsub.f32 %v4945, %v4946
      %v4948 = vand.u32 %v4947, 4294901760
      %4949 = vmatmul.f32.gmra.mxu0 %v4948
      %v4950 = vpop.f32.mrf.mxu0
      %v4951 = vadd.f32 0.0, %v4950
      %v4952 = vand.u32 %v4892, 4294901760
      %v4953 = vsub.f32 %v4892, %v4952
      %v4954 = vand.u32 %v4953, 4294901760
      %v4955 = vsub.f32 %v4953, %v4954
      %v4956 = vand.u32 %v4955, 4294901760
      %4957 = vmatmul.f32.gmra.mxu0 %v4956
      %v4958 = vpop.f32.mrf.mxu0
      %v4959 = vadd.f32 0.0, %v4958
      %v4960 = vand.u32 %v4895, 4294901760
      %v4961 = vsub.f32 %v4895, %v4960
      %v4962 = vand.u32 %v4961, 4294901760
      %v4963 = vsub.f32 %v4961, %v4962
      %v4964 = vand.u32 %v4963, 4294901760
      %4965 = vmatmul.f32.gmra.mxu0 %v4964
      %v4966 = vpop.f32.mrf.mxu0
      %v4967 = vadd.f32 0.0, %v4966
      %v4968 = vand.u32 %v4898, 4294901760
      %v4969 = vsub.f32 %v4898, %v4968
      %v4970 = vand.u32 %v4969, 4294901760
      %v4971 = vsub.f32 %v4969, %v4970
      %v4972 = vand.u32 %v4971, 4294901760
      %4973 = vmatmul.f32.gmra.mxu0 %v4972
      %v4974 = vpop.f32.mrf.mxu0
      %v4975 = vadd.f32 0.0, %v4974
      %v4976 = vand.u32 %v4901, 4294901760
      %v4977 = vsub.f32 %v4901, %v4976
      %v4978 = vand.u32 %v4977, 4294901760
      %v4979 = vsub.f32 %v4977, %v4978
      %v4980 = vand.u32 %v4979, 4294901760
      %4981 = vmatmul.f32.gmra.mxu0 %v4980
      %v4982 = vpop.f32.mrf.mxu0
      %v4983 = vadd.f32 0.0, %v4982
      %4984 = vdwg.mxu0
      %4985 = vmatpush.msra.mxu0 0.0
      %4986 = vmatpush.msra.mxu0 0.0
      %4987 = vmatpush.msra.mxu0 0.0
      %4988 = vmatpush.msra.mxu0 0.0
      %4989 = vmatpush.msra.mxu0 0.0
      %4990 = vmatpush.msra.mxu0 0.0
      %4991 = vmatpush.msra.mxu0 0.0
      %4992 = vmatpush.msra.mxu0 0.0
      %4993 = vmatpush.msra.mxu0 0.0
      %4994 = vmatpush.msra.mxu0 0.0
      %4995 = vmatpush.msra.mxu0 0.0
      %4996 = vmatpush.msra.mxu0 0.0
      %4997 = vmatpush.msra.mxu0 0.0
      %4998 = vmatpush.msra.mxu0 0.0
      %4999 = vmatpush.msra.mxu0 0.0
      %v5000 = vand.u32 %v4878, 4294901760
      %v5001 = vsub.f32 %v4878, %v5000
      %v5002 = vand.u32 %v5001, 4294901760
      %v5003 = vsub.f32 %v5001, %v5002
      %v5004 = vand.u32 %v5003, 4294901760
      %5005 = vmatpush.msra.mxu0 %v5004
      %v5006 = vand.u32 %v4880, 4294901760
      %5007 = vmatmul.f32.gmra.mxu0 %v5006
      %v5008 = vpop.f32.mrf.mxu0
      %v5009 = vadd.f32 %v4927, %v5008
      %v5010 = vand.u32 %v4883, 4294901760
      %5011 = vmatmul.f32.gmra.mxu0 %v5010
      %v5012 = vpop.f32.mrf.mxu0
      %v5013 = vadd.f32 %v4935, %v5012
      %v5014 = vand.u32 %v4886, 4294901760
      %5015 = vmatmul.f32.gmra.mxu0 %v5014
      %v5016 = vpop.f32.mrf.mxu0
      %v5017 = vadd.f32 %v4943, %v5016
      %v5018 = vand.u32 %v4889, 4294901760
      %5019 = vmatmul.f32.gmra.mxu0 %v5018
      %v5020 = vpop.f32.mrf.mxu0
      %v5021 = vadd.f32 %v4951, %v5020
      %v5022 = vand.u32 %v4892, 4294901760
      %5023 = vmatmul.f32.gmra.mxu0 %v5022
      %v5024 = vpop.f32.mrf.mxu0
      %v5025 = vadd.f32 %v4959, %v5024
      %v5026 = vand.u32 %v4895, 4294901760
      %5027 = vmatmul.f32.gmra.mxu0 %v5026
      %v5028 = vpop.f32.mrf.mxu0
      %v5029 = vadd.f32 %v4967, %v5028
      %v5030 = vand.u32 %v4898, 4294901760
      %5031 = vmatmul.f32.gmra.mxu0 %v5030
      %v5032 = vpop.f32.mrf.mxu0
      %v5033 = vadd.f32 %v4975, %v5032
      %v5034 = vand.u32 %v4901, 4294901760
      %5035 = vmatmul.f32.gmra.mxu0 %v5034
      %v5036 = vpop.f32.mrf.mxu0
      %v5037 = vadd.f32 %v4983, %v5036
      %5038 = vdwg.mxu0
      %5039 = vmatpush.msra.mxu0 0.0
      %5040 = vmatpush.msra.mxu0 0.0
      %5041 = vmatpush.msra.mxu0 0.0
      %5042 = vmatpush.msra.mxu0 0.0
      %5043 = vmatpush.msra.mxu0 0.0
      %5044 = vmatpush.msra.mxu0 0.0
      %5045 = vmatpush.msra.mxu0 0.0
      %5046 = vmatpush.msra.mxu0 0.0
      %5047 = vmatpush.msra.mxu0 0.0
      %5048 = vmatpush.msra.mxu0 0.0
      %5049 = vmatpush.msra.mxu0 0.0
      %5050 = vmatpush.msra.mxu0 0.0
      %5051 = vmatpush.msra.mxu0 0.0
      %5052 = vmatpush.msra.mxu0 0.0
      %5053 = vmatpush.msra.mxu0 0.0
      %v5054 = vand.u32 %v4878, 4294901760
      %v5055 = vsub.f32 %v4878, %v5054
      %5056 = vmatpush.msra.mxu0 %v5055
      %v5057 = vand.u32 %v4880, 4294901760
      %v5058 = vsub.f32 %v4880, %v5057
      %5059 = vmatmul.f32.gmra.mxu0 %v5058
      %v5060 = vpop.f32.mrf.mxu0
      %v5061 = vadd.f32 %v5009, %v5060
      %v5062 = vand.u32 %v4883, 4294901760
      %v5063 = vsub.f32 %v4883, %v5062
      %5064 = vmatmul.f32.gmra.mxu0 %v5063
      %v5065 = vpop.f32.mrf.mxu0
      %v5066 = vadd.f32 %v5013, %v5065
      %v5067 = vand.u32 %v4886, 4294901760
      %v5068 = vsub.f32 %v4886, %v5067
      %5069 = vmatmul.f32.gmra.mxu0 %v5068
      %v5070 = vpop.f32.mrf.mxu0
      %v5071 = vadd.f32 %v5017, %v5070
      %v5072 = vand.u32 %v4889, 4294901760
      %v5073 = vsub.f32 %v4889, %v5072
      %5074 = vmatmul.f32.gmra.mxu0 %v5073
      %v5075 = vpop.f32.mrf.mxu0
      %v5076 = vadd.f32 %v5021, %v5075
      %v5077 = vand.u32 %v4892, 4294901760
      %v5078 = vsub.f32 %v4892, %v5077
      %5079 = vmatmul.f32.gmra.mxu0 %v5078
      %v5080 = vpop.f32.mrf.mxu0
      %v5081 = vadd.f32 %v5025, %v5080
      %v5082 = vand.u32 %v4895, 4294901760
      %v5083 = vsub.f32 %v4895, %v5082
      %5084 = vmatmul.f32.gmra.mxu0 %v5083
      %v5085 = vpop.f32.mrf.mxu0
      %v5086 = vadd.f32 %v5029, %v5085
      %v5087 = vand.u32 %v4898, 4294901760
      %v5088 = vsub.f32 %v4898, %v5087
      %5089 = vmatmul.f32.gmra.mxu0 %v5088
      %v5090 = vpop.f32.mrf.mxu0
      %v5091 = vadd.f32 %v5033, %v5090
      %v5092 = vand.u32 %v4901, 4294901760
      %v5093 = vsub.f32 %v4901, %v5092
      %5094 = vmatmul.f32.gmra.mxu0 %v5093
      %v5095 = vpop.f32.mrf.mxu0
      %v5096 = vadd.f32 %v5037, %v5095
      %5097 = vdwg.mxu0
      %5098 = vmatpush.msra.mxu0 0.0
      %5099 = vmatpush.msra.mxu0 0.0
      %5100 = vmatpush.msra.mxu0 0.0
      %5101 = vmatpush.msra.mxu0 0.0
      %5102 = vmatpush.msra.mxu0 0.0
      %5103 = vmatpush.msra.mxu0 0.0
      %5104 = vmatpush.msra.mxu0 0.0
      %5105 = vmatpush.msra.mxu0 0.0
      %5106 = vmatpush.msra.mxu0 0.0
      %5107 = vmatpush.msra.mxu0 0.0
      %5108 = vmatpush.msra.mxu0 0.0
      %5109 = vmatpush.msra.mxu0 0.0
      %5110 = vmatpush.msra.mxu0 0.0
      %5111 = vmatpush.msra.mxu0 0.0
      %5112 = vmatpush.msra.mxu0 0.0
      %v5113 = vand.u32 %v4878, 4294901760
      %5114 = vmatpush.msra.mxu0 %v5113
      %v5115 = vand.u32 %v4880, 4294901760
      %v5116 = vsub.f32 %v4880, %v5115
      %v5117 = vand.u32 %v5116, 4294901760
      %5118 = vmatmul.f32.gmra.mxu0 %v5117
      %v5119 = vpop.f32.mrf.mxu0
      %v5120 = vadd.f32 %v5061, %v5119
      %v5121 = vand.u32 %v4883, 4294901760
      %v5122 = vsub.f32 %v4883, %v5121
      %v5123 = vand.u32 %v5122, 4294901760
      %5124 = vmatmul.f32.gmra.mxu0 %v5123
      %v5125 = vpop.f32.mrf.mxu0
      %v5126 = vadd.f32 %v5066, %v5125
      %v5127 = vand.u32 %v4886, 4294901760
      %v5128 = vsub.f32 %v4886, %v5127
      %v5129 = vand.u32 %v5128, 4294901760
      %5130 = vmatmul.f32.gmra.mxu0 %v5129
      %v5131 = vpop.f32.mrf.mxu0
      %v5132 = vadd.f32 %v5071, %v5131
      %v5133 = vand.u32 %v4889, 4294901760
      %v5134 = vsub.f32 %v4889, %v5133
      %v5135 = vand.u32 %v5134, 4294901760
      %5136 = vmatmul.f32.gmra.mxu0 %v5135
      %v5137 = vpop.f32.mrf.mxu0
      %v5138 = vadd.f32 %v5076, %v5137
      %v5139 = vand.u32 %v4892, 4294901760
      %v5140 = vsub.f32 %v4892, %v5139
      %v5141 = vand.u32 %v5140, 4294901760
      %5142 = vmatmul.f32.gmra.mxu0 %v5141
      %v5143 = vpop.f32.mrf.mxu0
      %v5144 = vadd.f32 %v5081, %v5143
      %v5145 = vand.u32 %v4895, 4294901760
      %v5146 = vsub.f32 %v4895, %v5145
      %v5147 = vand.u32 %v5146, 4294901760
      %5148 = vmatmul.f32.gmra.mxu0 %v5147
      %v5149 = vpop.f32.mrf.mxu0
      %v5150 = vadd.f32 %v5086, %v5149
      %v5151 = vand.u32 %v4898, 4294901760
      %v5152 = vsub.f32 %v4898, %v5151
      %v5153 = vand.u32 %v5152, 4294901760
      %5154 = vmatmul.f32.gmra.mxu0 %v5153
      %v5155 = vpop.f32.mrf.mxu0
      %v5156 = vadd.f32 %v5091, %v5155
      %v5157 = vand.u32 %v4901, 4294901760
      %v5158 = vsub.f32 %v4901, %v5157
      %v5159 = vand.u32 %v5158, 4294901760
      %5160 = vmatmul.f32.gmra.mxu0 %v5159
      %v5161 = vpop.f32.mrf.mxu0
      %v5162 = vadd.f32 %v5096, %v5161
      %5163 = vdwg.mxu0
      %5164 = vmatpush.msra.mxu0 0.0
      %5165 = vmatpush.msra.mxu0 0.0
      %5166 = vmatpush.msra.mxu0 0.0
      %5167 = vmatpush.msra.mxu0 0.0
      %5168 = vmatpush.msra.mxu0 0.0
      %5169 = vmatpush.msra.mxu0 0.0
      %5170 = vmatpush.msra.mxu0 0.0
      %5171 = vmatpush.msra.mxu0 0.0
      %5172 = vmatpush.msra.mxu0 0.0
      %5173 = vmatpush.msra.mxu0 0.0
      %5174 = vmatpush.msra.mxu0 0.0
      %5175 = vmatpush.msra.mxu0 0.0
      %5176 = vmatpush.msra.mxu0 0.0
      %5177 = vmatpush.msra.mxu0 0.0
      %5178 = vmatpush.msra.mxu0 0.0
      %v5179 = vand.u32 %v4878, 4294901760
      %v5180 = vsub.f32 %v4878, %v5179
      %v5181 = vand.u32 %v5180, 4294901760
      %5182 = vmatpush.msra.mxu0 %v5181
      %v5183 = vand.u32 %v4880, 4294901760
      %5184 = vmatmul.f32.gmra.mxu0 %v5183
      %v5185 = vpop.f32.mrf.mxu0
      %v5186 = vadd.f32 %v5120, %v5185
      %v5187 = vand.u32 %v4883, 4294901760
      %5188 = vmatmul.f32.gmra.mxu0 %v5187
      %v5189 = vpop.f32.mrf.mxu0
      %v5190 = vadd.f32 %v5126, %v5189
      %v5191 = vand.u32 %v4886, 4294901760
      %5192 = vmatmul.f32.gmra.mxu0 %v5191
      %v5193 = vpop.f32.mrf.mxu0
      %v5194 = vadd.f32 %v5132, %v5193
      %v5195 = vand.u32 %v4889, 4294901760
      %5196 = vmatmul.f32.gmra.mxu0 %v5195
      %v5197 = vpop.f32.mrf.mxu0
      %v5198 = vadd.f32 %v5138, %v5197
      %v5199 = vand.u32 %v4892, 4294901760
      %5200 = vmatmul.f32.gmra.mxu0 %v5199
      %v5201 = vpop.f32.mrf.mxu0
      %v5202 = vadd.f32 %v5144, %v5201
      %v5203 = vand.u32 %v4895, 4294901760
      %5204 = vmatmul.f32.gmra.mxu0 %v5203
      %v5205 = vpop.f32.mrf.mxu0
      %v5206 = vadd.f32 %v5150, %v5205
      %v5207 = vand.u32 %v4898, 4294901760
      %5208 = vmatmul.f32.gmra.mxu0 %v5207
      %v5209 = vpop.f32.mrf.mxu0
      %v5210 = vadd.f32 %v5156, %v5209
      %v5211 = vand.u32 %v4901, 4294901760
      %5212 = vmatmul.f32.gmra.mxu0 %v5211
      %v5213 = vpop.f32.mrf.mxu0
      %v5214 = vadd.f32 %v5162, %v5213
      %5215 = vdwg.mxu0
      %5216 = vmatpush.msra.mxu0 0.0
      %5217 = vmatpush.msra.mxu0 0.0
      %5218 = vmatpush.msra.mxu0 0.0
      %5219 = vmatpush.msra.mxu0 0.0
      %5220 = vmatpush.msra.mxu0 0.0
      %5221 = vmatpush.msra.mxu0 0.0
      %5222 = vmatpush.msra.mxu0 0.0
      %5223 = vmatpush.msra.mxu0 0.0
      %5224 = vmatpush.msra.mxu0 0.0
      %5225 = vmatpush.msra.mxu0 0.0
      %5226 = vmatpush.msra.mxu0 0.0
      %5227 = vmatpush.msra.mxu0 0.0
      %5228 = vmatpush.msra.mxu0 0.0
      %5229 = vmatpush.msra.mxu0 0.0
      %5230 = vmatpush.msra.mxu0 0.0
      %v5231 = vand.u32 %v4878, 4294901760
      %5232 = vmatpush.msra.mxu0 %v5231
      %v5233 = vand.u32 %v4880, 4294901760
      %5234 = vmatmul.f32.gmra.mxu0 %v5233
      %v5235 = vpop.f32.mrf.mxu0
      %v5236 = vadd.f32 %v5186, %v5235
      %v5237 = vand.u32 %v4883, 4294901760
      %5238 = vmatmul.f32.gmra.mxu0 %v5237
      %v5239 = vpop.f32.mrf.mxu0
      %v5240 = vadd.f32 %v5190, %v5239
      %v5241 = vand.u32 %v4886, 4294901760
      %5242 = vmatmul.f32.gmra.mxu0 %v5241
      %v5243 = vpop.f32.mrf.mxu0
      %v5244 = vadd.f32 %v5194, %v5243
      %v5245 = vand.u32 %v4889, 4294901760
      %5246 = vmatmul.f32.gmra.mxu0 %v5245
      %v5247 = vpop.f32.mrf.mxu0
      %v5248 = vadd.f32 %v5198, %v5247
      %v5249 = vand.u32 %v4892, 4294901760
      %5250 = vmatmul.f32.gmra.mxu0 %v5249
      %v5251 = vpop.f32.mrf.mxu0
      %v5252 = vadd.f32 %v5202, %v5251
      %v5253 = vand.u32 %v4895, 4294901760
      %5254 = vmatmul.f32.gmra.mxu0 %v5253
      %v5255 = vpop.f32.mrf.mxu0
      %v5256 = vadd.f32 %v5206, %v5255
      %v5257 = vand.u32 %v4898, 4294901760
      %5258 = vmatmul.f32.gmra.mxu0 %v5257
      %v5259 = vpop.f32.mrf.mxu0
      %v5260 = vadd.f32 %v5210, %v5259
      %v5261 = vand.u32 %v4901, 4294901760
      %5262 = vmatmul.f32.gmra.mxu0 %v5261
      %v5263 = vpop.f32.mrf.mxu0
      %v5264 = vadd.f32 %v5214, %v5263
      %5265 = vdwg.mxu0
      %v5266 = vadd.f32 %v4839, %v5236
      %v5267 = vadd.f32 %v4843, %v5240
      %v5268 = vadd.f32 %v4847, %v5244
      %v5269 = vadd.f32 %v4851, %v5248
      %v5270 = vadd.f32 %v4855, %v5252
      %v5271 = vadd.f32 %v4859, %v5256
      %v5272 = vadd.f32 %v4863, %v5260
      %v5273 = vadd.f32 %v4867, %v5264
      %v5274 = vld [vmem:[%s4067] sm:$0xff]
      %v5275 = vld [vmem:[%s4067 + $0x10] sm:$0xff]
      %v5276 = vld [vmem:[%s4067 + $0x20] sm:$0xff]
      %v5277 = vld [vmem:[%s4067 + $0x30] sm:$0xff]
      %v5278 = vld [vmem:[%s4067 + $0x40] sm:$0xff]
      %v5279 = vld [vmem:[%s4067 + $0x50] sm:$0xff]
      %v5280 = vld [vmem:[%s4067 + $0x60] sm:$0xff]
      %v5281 = vld [vmem:[%s4067 + $0x70] sm:$0xff]
      %s5282 = scalar_lea.vmem %s6, 24
      %v5283 = vld [vmem:[%s5282] sm:$0xff]
      %v5285 = vsel %vm4045, %v5274, 0
      %v5288 = vsel %vm4045, %v5275, 0
      %v5291 = vsel %vm4045, %v5276, 0
      %v5294 = vsel %vm4045, %v5277, 0
      %v5297 = vsel %vm4045, %v5278, 0
      %v5300 = vsel %vm4045, %v5279, 0
      %v5303 = vsel %vm4045, %v5280, 0
      %v5306 = vsel %vm4045, %v5281, 0
      %5308 = vmatpush.msra.mxu0 0.0
      %5309 = vmatpush.msra.mxu0 0.0
      %5310 = vmatpush.msra.mxu0 0.0
      %5311 = vmatpush.msra.mxu0 0.0
      %5312 = vmatpush.msra.mxu0 0.0
      %5313 = vmatpush.msra.mxu0 0.0
      %5314 = vmatpush.msra.mxu0 0.0
      %5315 = vmatpush.msra.mxu0 0.0
      %5316 = vmatpush.msra.mxu0 0.0
      %5317 = vmatpush.msra.mxu0 0.0
      %5318 = vmatpush.msra.mxu0 0.0
      %5319 = vmatpush.msra.mxu0 0.0
      %5320 = vmatpush.msra.mxu0 0.0
      %5321 = vmatpush.msra.mxu0 0.0
      %5322 = vmatpush.msra.mxu0 0.0
      %v5323 = vand.u32 %v5283, 4294901760
      %5324 = vmatpush.msra.mxu0 %v5323
      %v5325 = vand.u32 %v5285, 4294901760
      %v5326 = vsub.f32 %v5285, %v5325
      %v5327 = vand.u32 %v5326, 4294901760
      %v5328 = vsub.f32 %v5326, %v5327
      %v5329 = vand.u32 %v5328, 4294901760
      %5330 = vmatmul.f32.gmra.mxu0 %v5329
      %v5331 = vpop.f32.mrf.mxu0
      %v5332 = vadd.f32 0.0, %v5331
      %v5333 = vand.u32 %v5288, 4294901760
      %v5334 = vsub.f32 %v5288, %v5333
      %v5335 = vand.u32 %v5334, 4294901760
      %v5336 = vsub.f32 %v5334, %v5335
      %v5337 = vand.u32 %v5336, 4294901760
      %5338 = vmatmul.f32.gmra.mxu0 %v5337
      %v5339 = vpop.f32.mrf.mxu0
      %v5340 = vadd.f32 0.0, %v5339
      %v5341 = vand.u32 %v5291, 4294901760
      %v5342 = vsub.f32 %v5291, %v5341
      %v5343 = vand.u32 %v5342, 4294901760
      %v5344 = vsub.f32 %v5342, %v5343
      %v5345 = vand.u32 %v5344, 4294901760
      %5346 = vmatmul.f32.gmra.mxu0 %v5345
      %v5347 = vpop.f32.mrf.mxu0
      %v5348 = vadd.f32 0.0, %v5347
      %v5349 = vand.u32 %v5294, 4294901760
      %v5350 = vsub.f32 %v5294, %v5349
      %v5351 = vand.u32 %v5350, 4294901760
      %v5352 = vsub.f32 %v5350, %v5351
      %v5353 = vand.u32 %v5352, 4294901760
      %5354 = vmatmul.f32.gmra.mxu0 %v5353
      %v5355 = vpop.f32.mrf.mxu0
      %v5356 = vadd.f32 0.0, %v5355
      %v5357 = vand.u32 %v5297, 4294901760
      %v5358 = vsub.f32 %v5297, %v5357
      %v5359 = vand.u32 %v5358, 4294901760
      %v5360 = vsub.f32 %v5358, %v5359
      %v5361 = vand.u32 %v5360, 4294901760
      %5362 = vmatmul.f32.gmra.mxu0 %v5361
      %v5363 = vpop.f32.mrf.mxu0
      %v5364 = vadd.f32 0.0, %v5363
      %v5365 = vand.u32 %v5300, 4294901760
      %v5366 = vsub.f32 %v5300, %v5365
      %v5367 = vand.u32 %v5366, 4294901760
      %v5368 = vsub.f32 %v5366, %v5367
      %v5369 = vand.u32 %v5368, 4294901760
      %5370 = vmatmul.f32.gmra.mxu0 %v5369
      %v5371 = vpop.f32.mrf.mxu0
      %v5372 = vadd.f32 0.0, %v5371
      %v5373 = vand.u32 %v5303, 4294901760
      %v5374 = vsub.f32 %v5303, %v5373
      %v5375 = vand.u32 %v5374, 4294901760
      %v5376 = vsub.f32 %v5374, %v5375
      %v5377 = vand.u32 %v5376, 4294901760
      %5378 = vmatmul.f32.gmra.mxu0 %v5377
      %v5379 = vpop.f32.mrf.mxu0
      %v5380 = vadd.f32 0.0, %v5379
      %v5381 = vand.u32 %v5306, 4294901760
      %v5382 = vsub.f32 %v5306, %v5381
      %v5383 = vand.u32 %v5382, 4294901760
      %v5384 = vsub.f32 %v5382, %v5383
      %v5385 = vand.u32 %v5384, 4294901760
      %5386 = vmatmul.f32.gmra.mxu0 %v5385
      %v5387 = vpop.f32.mrf.mxu0
      %v5388 = vadd.f32 0.0, %v5387
      %5389 = vdwg.mxu0
      %5390 = vmatpush.msra.mxu0 0.0
      %5391 = vmatpush.msra.mxu0 0.0
      %5392 = vmatpush.msra.mxu0 0.0
      %5393 = vmatpush.msra.mxu0 0.0
      %5394 = vmatpush.msra.mxu0 0.0
      %5395 = vmatpush.msra.mxu0 0.0
      %5396 = vmatpush.msra.mxu0 0.0
      %5397 = vmatpush.msra.mxu0 0.0
      %5398 = vmatpush.msra.mxu0 0.0
      %5399 = vmatpush.msra.mxu0 0.0
      %5400 = vmatpush.msra.mxu0 0.0
      %5401 = vmatpush.msra.mxu0 0.0
      %5402 = vmatpush.msra.mxu0 0.0
      %5403 = vmatpush.msra.mxu0 0.0
      %5404 = vmatpush.msra.mxu0 0.0
      %v5405 = vand.u32 %v5283, 4294901760
      %v5406 = vsub.f32 %v5283, %v5405
      %v5407 = vand.u32 %v5406, 4294901760
      %v5408 = vsub.f32 %v5406, %v5407
      %v5409 = vand.u32 %v5408, 4294901760
      %5410 = vmatpush.msra.mxu0 %v5409
      %v5411 = vand.u32 %v5285, 4294901760
      %5412 = vmatmul.f32.gmra.mxu0 %v5411
      %v5413 = vpop.f32.mrf.mxu0
      %v5414 = vadd.f32 %v5332, %v5413
      %v5415 = vand.u32 %v5288, 4294901760
      %5416 = vmatmul.f32.gmra.mxu0 %v5415
      %v5417 = vpop.f32.mrf.mxu0
      %v5418 = vadd.f32 %v5340, %v5417
      %v5419 = vand.u32 %v5291, 4294901760
      %5420 = vmatmul.f32.gmra.mxu0 %v5419
      %v5421 = vpop.f32.mrf.mxu0
      %v5422 = vadd.f32 %v5348, %v5421
      %v5423 = vand.u32 %v5294, 4294901760
      %5424 = vmatmul.f32.gmra.mxu0 %v5423
      %v5425 = vpop.f32.mrf.mxu0
      %v5426 = vadd.f32 %v5356, %v5425
      %v5427 = vand.u32 %v5297, 4294901760
      %5428 = vmatmul.f32.gmra.mxu0 %v5427
      %v5429 = vpop.f32.mrf.mxu0
      %v5430 = vadd.f32 %v5364, %v5429
      %v5431 = vand.u32 %v5300, 4294901760
      %5432 = vmatmul.f32.gmra.mxu0 %v5431
      %v5433 = vpop.f32.mrf.mxu0
      %v5434 = vadd.f32 %v5372, %v5433
      %v5435 = vand.u32 %v5303, 4294901760
      %5436 = vmatmul.f32.gmra.mxu0 %v5435
      %v5437 = vpop.f32.mrf.mxu0
      %v5438 = vadd.f32 %v5380, %v5437
      %v5439 = vand.u32 %v5306, 4294901760
      %5440 = vmatmul.f32.gmra.mxu0 %v5439
      %v5441 = vpop.f32.mrf.mxu0
      %v5442 = vadd.f32 %v5388, %v5441
      %5443 = vdwg.mxu0
      %5444 = vmatpush.msra.mxu0 0.0
      %5445 = vmatpush.msra.mxu0 0.0
      %5446 = vmatpush.msra.mxu0 0.0
      %5447 = vmatpush.msra.mxu0 0.0
      %5448 = vmatpush.msra.mxu0 0.0
      %5449 = vmatpush.msra.mxu0 0.0
      %5450 = vmatpush.msra.mxu0 0.0
      %5451 = vmatpush.msra.mxu0 0.0
      %5452 = vmatpush.msra.mxu0 0.0
      %5453 = vmatpush.msra.mxu0 0.0
      %5454 = vmatpush.msra.mxu0 0.0
      %5455 = vmatpush.msra.mxu0 0.0
      %5456 = vmatpush.msra.mxu0 0.0
      %5457 = vmatpush.msra.mxu0 0.0
      %5458 = vmatpush.msra.mxu0 0.0
      %v5459 = vand.u32 %v5283, 4294901760
      %v5460 = vsub.f32 %v5283, %v5459
      %5461 = vmatpush.msra.mxu0 %v5460
      %v5462 = vand.u32 %v5285, 4294901760
      %v5463 = vsub.f32 %v5285, %v5462
      %5464 = vmatmul.f32.gmra.mxu0 %v5463
      %v5465 = vpop.f32.mrf.mxu0
      %v5466 = vadd.f32 %v5414, %v5465
      %v5467 = vand.u32 %v5288, 4294901760
      %v5468 = vsub.f32 %v5288, %v5467
      %5469 = vmatmul.f32.gmra.mxu0 %v5468
      %v5470 = vpop.f32.mrf.mxu0
      %v5471 = vadd.f32 %v5418, %v5470
      %v5472 = vand.u32 %v5291, 4294901760
      %v5473 = vsub.f32 %v5291, %v5472
      %5474 = vmatmul.f32.gmra.mxu0 %v5473
      %v5475 = vpop.f32.mrf.mxu0
      %v5476 = vadd.f32 %v5422, %v5475
      %v5477 = vand.u32 %v5294, 4294901760
      %v5478 = vsub.f32 %v5294, %v5477
      %5479 = vmatmul.f32.gmra.mxu0 %v5478
      %v5480 = vpop.f32.mrf.mxu0
      %v5481 = vadd.f32 %v5426, %v5480
      %v5482 = vand.u32 %v5297, 4294901760
      %v5483 = vsub.f32 %v5297, %v5482
      %5484 = vmatmul.f32.gmra.mxu0 %v5483
      %v5485 = vpop.f32.mrf.mxu0
      %v5486 = vadd.f32 %v5430, %v5485
      %v5487 = vand.u32 %v5300, 4294901760
      %v5488 = vsub.f32 %v5300, %v5487
      %5489 = vmatmul.f32.gmra.mxu0 %v5488
      %v5490 = vpop.f32.mrf.mxu0
      %v5491 = vadd.f32 %v5434, %v5490
      %v5492 = vand.u32 %v5303, 4294901760
      %v5493 = vsub.f32 %v5303, %v5492
      %5494 = vmatmul.f32.gmra.mxu0 %v5493
      %v5495 = vpop.f32.mrf.mxu0
      %v5496 = vadd.f32 %v5438, %v5495
      %v5497 = vand.u32 %v5306, 4294901760
      %v5498 = vsub.f32 %v5306, %v5497
      %5499 = vmatmul.f32.gmra.mxu0 %v5498
      %v5500 = vpop.f32.mrf.mxu0
      %v5501 = vadd.f32 %v5442, %v5500
      %5502 = vdwg.mxu0
      %5503 = vmatpush.msra.mxu0 0.0
      %5504 = vmatpush.msra.mxu0 0.0
      %5505 = vmatpush.msra.mxu0 0.0
      %5506 = vmatpush.msra.mxu0 0.0
      %5507 = vmatpush.msra.mxu0 0.0
      %5508 = vmatpush.msra.mxu0 0.0
      %5509 = vmatpush.msra.mxu0 0.0
      %5510 = vmatpush.msra.mxu0 0.0
      %5511 = vmatpush.msra.mxu0 0.0
      %5512 = vmatpush.msra.mxu0 0.0
      %5513 = vmatpush.msra.mxu0 0.0
      %5514 = vmatpush.msra.mxu0 0.0
      %5515 = vmatpush.msra.mxu0 0.0
      %5516 = vmatpush.msra.mxu0 0.0
      %5517 = vmatpush.msra.mxu0 0.0
      %v5518 = vand.u32 %v5283, 4294901760
      %5519 = vmatpush.msra.mxu0 %v5518
      %v5520 = vand.u32 %v5285, 4294901760
      %v5521 = vsub.f32 %v5285, %v5520
      %v5522 = vand.u32 %v5521, 4294901760
      %5523 = vmatmul.f32.gmra.mxu0 %v5522
      %v5524 = vpop.f32.mrf.mxu0
      %v5525 = vadd.f32 %v5466, %v5524
      %v5526 = vand.u32 %v5288, 4294901760
      %v5527 = vsub.f32 %v5288, %v5526
      %v5528 = vand.u32 %v5527, 4294901760
      %5529 = vmatmul.f32.gmra.mxu0 %v5528
      %v5530 = vpop.f32.mrf.mxu0
      %v5531 = vadd.f32 %v5471, %v5530
      %v5532 = vand.u32 %v5291, 4294901760
      %v5533 = vsub.f32 %v5291, %v5532
      %v5534 = vand.u32 %v5533, 4294901760
      %5535 = vmatmul.f32.gmra.mxu0 %v5534
      %v5536 = vpop.f32.mrf.mxu0
      %v5537 = vadd.f32 %v5476, %v5536
      %v5538 = vand.u32 %v5294, 4294901760
      %v5539 = vsub.f32 %v5294, %v5538
      %v5540 = vand.u32 %v5539, 4294901760
      %5541 = vmatmul.f32.gmra.mxu0 %v5540
      %v5542 = vpop.f32.mrf.mxu0
      %v5543 = vadd.f32 %v5481, %v5542
      %v5544 = vand.u32 %v5297, 4294901760
      %v5545 = vsub.f32 %v5297, %v5544
      %v5546 = vand.u32 %v5545, 4294901760
      %5547 = vmatmul.f32.gmra.mxu0 %v5546
      %v5548 = vpop.f32.mrf.mxu0
      %v5549 = vadd.f32 %v5486, %v5548
      %v5550 = vand.u32 %v5300, 4294901760
      %v5551 = vsub.f32 %v5300, %v5550
      %v5552 = vand.u32 %v5551, 4294901760
      %5553 = vmatmul.f32.gmra.mxu0 %v5552
      %v5554 = vpop.f32.mrf.mxu0
      %v5555 = vadd.f32 %v5491, %v5554
      %v5556 = vand.u32 %v5303, 4294901760
      %v5557 = vsub.f32 %v5303, %v5556
      %v5558 = vand.u32 %v5557, 4294901760
      %5559 = vmatmul.f32.gmra.mxu0 %v5558
      %v5560 = vpop.f32.mrf.mxu0
      %v5561 = vadd.f32 %v5496, %v5560
      %v5562 = vand.u32 %v5306, 4294901760
      %v5563 = vsub.f32 %v5306, %v5562
      %v5564 = vand.u32 %v5563, 4294901760
      %5565 = vmatmul.f32.gmra.mxu0 %v5564
      %v5566 = vpop.f32.mrf.mxu0
      %v5567 = vadd.f32 %v5501, %v5566
      %5568 = vdwg.mxu0
      %5569 = vmatpush.msra.mxu0 0.0
      %5570 = vmatpush.msra.mxu0 0.0
      %5571 = vmatpush.msra.mxu0 0.0
      %5572 = vmatpush.msra.mxu0 0.0
      %5573 = vmatpush.msra.mxu0 0.0
      %5574 = vmatpush.msra.mxu0 0.0
      %5575 = vmatpush.msra.mxu0 0.0
      %5576 = vmatpush.msra.mxu0 0.0
      %5577 = vmatpush.msra.mxu0 0.0
      %5578 = vmatpush.msra.mxu0 0.0
      %5579 = vmatpush.msra.mxu0 0.0
      %5580 = vmatpush.msra.mxu0 0.0
      %5581 = vmatpush.msra.mxu0 0.0
      %5582 = vmatpush.msra.mxu0 0.0
      %5583 = vmatpush.msra.mxu0 0.0
      %v5584 = vand.u32 %v5283, 4294901760
      %v5585 = vsub.f32 %v5283, %v5584
      %v5586 = vand.u32 %v5585, 4294901760
      %5587 = vmatpush.msra.mxu0 %v5586
      %v5588 = vand.u32 %v5285, 4294901760
      %5589 = vmatmul.f32.gmra.mxu0 %v5588
      %v5590 = vpop.f32.mrf.mxu0
      %v5591 = vadd.f32 %v5525, %v5590
      %v5592 = vand.u32 %v5288, 4294901760
      %5593 = vmatmul.f32.gmra.mxu0 %v5592
      %v5594 = vpop.f32.mrf.mxu0
      %v5595 = vadd.f32 %v5531, %v5594
      %v5596 = vand.u32 %v5291, 4294901760
      %5597 = vmatmul.f32.gmra.mxu0 %v5596
      %v5598 = vpop.f32.mrf.mxu0
      %v5599 = vadd.f32 %v5537, %v5598
      %v5600 = vand.u32 %v5294, 4294901760
      %5601 = vmatmul.f32.gmra.mxu0 %v5600
      %v5602 = vpop.f32.mrf.mxu0
      %v5603 = vadd.f32 %v5543, %v5602
      %v5604 = vand.u32 %v5297, 4294901760
      %5605 = vmatmul.f32.gmra.mxu0 %v5604
      %v5606 = vpop.f32.mrf.mxu0
      %v5607 = vadd.f32 %v5549, %v5606
      %v5608 = vand.u32 %v5300, 4294901760
      %5609 = vmatmul.f32.gmra.mxu0 %v5608
      %v5610 = vpop.f32.mrf.mxu0
      %v5611 = vadd.f32 %v5555, %v5610
      %v5612 = vand.u32 %v5303, 4294901760
      %5613 = vmatmul.f32.gmra.mxu0 %v5612
      %v5614 = vpop.f32.mrf.mxu0
      %v5615 = vadd.f32 %v5561, %v5614
      %v5616 = vand.u32 %v5306, 4294901760
      %5617 = vmatmul.f32.gmra.mxu0 %v5616
      %v5618 = vpop.f32.mrf.mxu0
      %v5619 = vadd.f32 %v5567, %v5618
      %5620 = vdwg.mxu0
      %5621 = vmatpush.msra.mxu0 0.0
      %5622 = vmatpush.msra.mxu0 0.0
      %5623 = vmatpush.msra.mxu0 0.0
      %5624 = vmatpush.msra.mxu0 0.0
      %5625 = vmatpush.msra.mxu0 0.0
      %5626 = vmatpush.msra.mxu0 0.0
      %5627 = vmatpush.msra.mxu0 0.0
      %5628 = vmatpush.msra.mxu0 0.0
      %5629 = vmatpush.msra.mxu0 0.0
      %5630 = vmatpush.msra.mxu0 0.0
      %5631 = vmatpush.msra.mxu0 0.0
      %5632 = vmatpush.msra.mxu0 0.0
      %5633 = vmatpush.msra.mxu0 0.0
      %5634 = vmatpush.msra.mxu0 0.0
      %5635 = vmatpush.msra.mxu0 0.0
      %v5636 = vand.u32 %v5283, 4294901760
      %5637 = vmatpush.msra.mxu0 %v5636
      %v5638 = vand.u32 %v5285, 4294901760
      %5639 = vmatmul.f32.gmra.mxu0 %v5638
      %v5640 = vpop.f32.mrf.mxu0
      %v5641 = vadd.f32 %v5591, %v5640
      %v5642 = vand.u32 %v5288, 4294901760
      %5643 = vmatmul.f32.gmra.mxu0 %v5642
      %v5644 = vpop.f32.mrf.mxu0
      %v5645 = vadd.f32 %v5595, %v5644
      %v5646 = vand.u32 %v5291, 4294901760
      %5647 = vmatmul.f32.gmra.mxu0 %v5646
      %v5648 = vpop.f32.mrf.mxu0
      %v5649 = vadd.f32 %v5599, %v5648
      %v5650 = vand.u32 %v5294, 4294901760
      %5651 = vmatmul.f32.gmra.mxu0 %v5650
      %v5652 = vpop.f32.mrf.mxu0
      %v5653 = vadd.f32 %v5603, %v5652
      %v5654 = vand.u32 %v5297, 4294901760
      %5655 = vmatmul.f32.gmra.mxu0 %v5654
      %v5656 = vpop.f32.mrf.mxu0
      %v5657 = vadd.f32 %v5607, %v5656
      %v5658 = vand.u32 %v5300, 4294901760
      %5659 = vmatmul.f32.gmra.mxu0 %v5658
      %v5660 = vpop.f32.mrf.mxu0
      %v5661 = vadd.f32 %v5611, %v5660
      %v5662 = vand.u32 %v5303, 4294901760
      %5663 = vmatmul.f32.gmra.mxu0 %v5662
      %v5664 = vpop.f32.mrf.mxu0
      %v5665 = vadd.f32 %v5615, %v5664
      %v5666 = vand.u32 %v5306, 4294901760
      %5667 = vmatmul.f32.gmra.mxu0 %v5666
      %v5668 = vpop.f32.mrf.mxu0
      %v5669 = vadd.f32 %v5619, %v5668
      %5670 = vdwg.mxu0
      %v5671 = vadd.f32 %v5266, %v5641
      %v5672 = vadd.f32 %v5267, %v5645
      %v5673 = vadd.f32 %v5268, %v5649
      %v5674 = vadd.f32 %v5269, %v5653
      %v5675 = vadd.f32 %v5270, %v5657
      %v5676 = vadd.f32 %v5271, %v5661
      %v5677 = vadd.f32 %v5272, %v5665
      %v5678 = vadd.f32 %v5273, %v5669
      %v5679 = vld [vmem:[%s4067 + $0x1] sm:$0xff]
      %v5680 = vld [vmem:[%s4067 + $0x11] sm:$0xff]
      %v5681 = vld [vmem:[%s4067 + $0x21] sm:$0xff]
      %v5682 = vld [vmem:[%s4067 + $0x31] sm:$0xff]
      %v5683 = vld [vmem:[%s4067 + $0x41] sm:$0xff]
      %v5684 = vld [vmem:[%s4067 + $0x51] sm:$0xff]
      %v5685 = vld [vmem:[%s4067 + $0x61] sm:$0xff]
      %v5686 = vld [vmem:[%s4067 + $0x71] sm:$0xff]
      %s5687 = scalar_lea.vmem %s6, 32
      %v5688 = vld [vmem:[%s5687] sm:$0xff]
      %v5690 = vsel %vm4045, %v5679, 0
      %v5693 = vsel %vm4045, %v5680, 0
      %v5696 = vsel %vm4045, %v5681, 0
      %v5699 = vsel %vm4045, %v5682, 0
      %v5702 = vsel %vm4045, %v5683, 0
      %v5705 = vsel %vm4045, %v5684, 0
      %v5708 = vsel %vm4045, %v5685, 0
      %v5711 = vsel %vm4045, %v5686, 0
      %5713 = vmatpush.msra.mxu0 0.0
      %5714 = vmatpush.msra.mxu0 0.0
      %5715 = vmatpush.msra.mxu0 0.0
      %5716 = vmatpush.msra.mxu0 0.0
      %5717 = vmatpush.msra.mxu0 0.0
      %5718 = vmatpush.msra.mxu0 0.0
      %5719 = vmatpush.msra.mxu0 0.0
      %5720 = vmatpush.msra.mxu0 0.0
      %5721 = vmatpush.msra.mxu0 0.0
      %5722 = vmatpush.msra.mxu0 0.0
      %5723 = vmatpush.msra.mxu0 0.0
      %5724 = vmatpush.msra.mxu0 0.0
      %5725 = vmatpush.msra.mxu0 0.0
      %5726 = vmatpush.msra.mxu0 0.0
      %5727 = vmatpush.msra.mxu0 0.0
      %v5728 = vand.u32 %v5688, 4294901760
      %5729 = vmatpush.msra.mxu0 %v5728
      %v5730 = vand.u32 %v5690, 4294901760
      %v5731 = vsub.f32 %v5690, %v5730
      %v5732 = vand.u32 %v5731, 4294901760
      %v5733 = vsub.f32 %v5731, %v5732
      %v5734 = vand.u32 %v5733, 4294901760
      %5735 = vmatmul.f32.gmra.mxu0 %v5734
      %v5736 = vpop.f32.mrf.mxu0
      %v5737 = vadd.f32 0.0, %v5736
      %v5738 = vand.u32 %v5693, 4294901760
      %v5739 = vsub.f32 %v5693, %v5738
      %v5740 = vand.u32 %v5739, 4294901760
      %v5741 = vsub.f32 %v5739, %v5740
      %v5742 = vand.u32 %v5741, 4294901760
      %5743 = vmatmul.f32.gmra.mxu0 %v5742
      %v5744 = vpop.f32.mrf.mxu0
      %v5745 = vadd.f32 0.0, %v5744
      %v5746 = vand.u32 %v5696, 4294901760
      %v5747 = vsub.f32 %v5696, %v5746
      %v5748 = vand.u32 %v5747, 4294901760
      %v5749 = vsub.f32 %v5747, %v5748
      %v5750 = vand.u32 %v5749, 4294901760
      %5751 = vmatmul.f32.gmra.mxu0 %v5750
      %v5752 = vpop.f32.mrf.mxu0
      %v5753 = vadd.f32 0.0, %v5752
      %v5754 = vand.u32 %v5699, 4294901760
      %v5755 = vsub.f32 %v5699, %v5754
      %v5756 = vand.u32 %v5755, 4294901760
      %v5757 = vsub.f32 %v5755, %v5756
      %v5758 = vand.u32 %v5757, 4294901760
      %5759 = vmatmul.f32.gmra.mxu0 %v5758
      %v5760 = vpop.f32.mrf.mxu0
      %v5761 = vadd.f32 0.0, %v5760
      %v5762 = vand.u32 %v5702, 4294901760
      %v5763 = vsub.f32 %v5702, %v5762
      %v5764 = vand.u32 %v5763, 4294901760
      %v5765 = vsub.f32 %v5763, %v5764
      %v5766 = vand.u32 %v5765, 4294901760
      %5767 = vmatmul.f32.gmra.mxu0 %v5766
      %v5768 = vpop.f32.mrf.mxu0
      %v5769 = vadd.f32 0.0, %v5768
      %v5770 = vand.u32 %v5705, 4294901760
      %v5771 = vsub.f32 %v5705, %v5770
      %v5772 = vand.u32 %v5771, 4294901760
      %v5773 = vsub.f32 %v5771, %v5772
      %v5774 = vand.u32 %v5773, 4294901760
      %5775 = vmatmul.f32.gmra.mxu0 %v5774
      %v5776 = vpop.f32.mrf.mxu0
      %v5777 = vadd.f32 0.0, %v5776
      %v5778 = vand.u32 %v5708, 4294901760
      %v5779 = vsub.f32 %v5708, %v5778
      %v5780 = vand.u32 %v5779, 4294901760
      %v5781 = vsub.f32 %v5779, %v5780
      %v5782 = vand.u32 %v5781, 4294901760
      %5783 = vmatmul.f32.gmra.mxu0 %v5782
      %v5784 = vpop.f32.mrf.mxu0
      %v5785 = vadd.f32 0.0, %v5784
      %v5786 = vand.u32 %v5711, 4294901760
      %v5787 = vsub.f32 %v5711, %v5786
      %v5788 = vand.u32 %v5787, 4294901760
      %v5789 = vsub.f32 %v5787, %v5788
      %v5790 = vand.u32 %v5789, 4294901760
      %5791 = vmatmul.f32.gmra.mxu0 %v5790
      %v5792 = vpop.f32.mrf.mxu0
      %v5793 = vadd.f32 0.0, %v5792
      %5794 = vdwg.mxu0
      %5795 = vmatpush.msra.mxu0 0.0
      %5796 = vmatpush.msra.mxu0 0.0
      %5797 = vmatpush.msra.mxu0 0.0
      %5798 = vmatpush.msra.mxu0 0.0
      %5799 = vmatpush.msra.mxu0 0.0
      %5800 = vmatpush.msra.mxu0 0.0
      %5801 = vmatpush.msra.mxu0 0.0
      %5802 = vmatpush.msra.mxu0 0.0
      %5803 = vmatpush.msra.mxu0 0.0
      %5804 = vmatpush.msra.mxu0 0.0
      %5805 = vmatpush.msra.mxu0 0.0
      %5806 = vmatpush.msra.mxu0 0.0
      %5807 = vmatpush.msra.mxu0 0.0
      %5808 = vmatpush.msra.mxu0 0.0
      %5809 = vmatpush.msra.mxu0 0.0
      %v5810 = vand.u32 %v5688, 4294901760
      %v5811 = vsub.f32 %v5688, %v5810
      %v5812 = vand.u32 %v5811, 4294901760
      %v5813 = vsub.f32 %v5811, %v5812
      %v5814 = vand.u32 %v5813, 4294901760
      %5815 = vmatpush.msra.mxu0 %v5814
      %v5816 = vand.u32 %v5690, 4294901760
      %5817 = vmatmul.f32.gmra.mxu0 %v5816
      %v5818 = vpop.f32.mrf.mxu0
      %v5819 = vadd.f32 %v5737, %v5818
      %v5820 = vand.u32 %v5693, 4294901760
      %5821 = vmatmul.f32.gmra.mxu0 %v5820
      %v5822 = vpop.f32.mrf.mxu0
      %v5823 = vadd.f32 %v5745, %v5822
      %v5824 = vand.u32 %v5696, 4294901760
      %5825 = vmatmul.f32.gmra.mxu0 %v5824
      %v5826 = vpop.f32.mrf.mxu0
      %v5827 = vadd.f32 %v5753, %v5826
      %v5828 = vand.u32 %v5699, 4294901760
      %5829 = vmatmul.f32.gmra.mxu0 %v5828
      %v5830 = vpop.f32.mrf.mxu0
      %v5831 = vadd.f32 %v5761, %v5830
      %v5832 = vand.u32 %v5702, 4294901760
      %5833 = vmatmul.f32.gmra.mxu0 %v5832
      %v5834 = vpop.f32.mrf.mxu0
      %v5835 = vadd.f32 %v5769, %v5834
      %v5836 = vand.u32 %v5705, 4294901760
      %5837 = vmatmul.f32.gmra.mxu0 %v5836
      %v5838 = vpop.f32.mrf.mxu0
      %v5839 = vadd.f32 %v5777, %v5838
      %v5840 = vand.u32 %v5708, 4294901760
      %5841 = vmatmul.f32.gmra.mxu0 %v5840
      %v5842 = vpop.f32.mrf.mxu0
      %v5843 = vadd.f32 %v5785, %v5842
      %v5844 = vand.u32 %v5711, 4294901760
      %5845 = vmatmul.f32.gmra.mxu0 %v5844
      %v5846 = vpop.f32.mrf.mxu0
      %v5847 = vadd.f32 %v5793, %v5846
      %5848 = vdwg.mxu0
      %5849 = vmatpush.msra.mxu0 0.0
      %5850 = vmatpush.msra.mxu0 0.0
      %5851 = vmatpush.msra.mxu0 0.0
      %5852 = vmatpush.msra.mxu0 0.0
      %5853 = vmatpush.msra.mxu0 0.0
      %5854 = vmatpush.msra.mxu0 0.0
      %5855 = vmatpush.msra.mxu0 0.0
      %5856 = vmatpush.msra.mxu0 0.0
      %5857 = vmatpush.msra.mxu0 0.0
      %5858 = vmatpush.msra.mxu0 0.0
      %5859 = vmatpush.msra.mxu0 0.0
      %5860 = vmatpush.msra.mxu0 0.0
      %5861 = vmatpush.msra.mxu0 0.0
      %5862 = vmatpush.msra.mxu0 0.0
      %5863 = vmatpush.msra.mxu0 0.0
      %v5864 = vand.u32 %v5688, 4294901760
      %v5865 = vsub.f32 %v5688, %v5864
      %5866 = vmatpush.msra.mxu0 %v5865
      %v5867 = vand.u32 %v5690, 4294901760
      %v5868 = vsub.f32 %v5690, %v5867
      %5869 = vmatmul.f32.gmra.mxu0 %v5868
      %v5870 = vpop.f32.mrf.mxu0
      %v5871 = vadd.f32 %v5819, %v5870
      %v5872 = vand.u32 %v5693, 4294901760
      %v5873 = vsub.f32 %v5693, %v5872
      %5874 = vmatmul.f32.gmra.mxu0 %v5873
      %v5875 = vpop.f32.mrf.mxu0
      %v5876 = vadd.f32 %v5823, %v5875
      %v5877 = vand.u32 %v5696, 4294901760
      %v5878 = vsub.f32 %v5696, %v5877
      %5879 = vmatmul.f32.gmra.mxu0 %v5878
      %v5880 = vpop.f32.mrf.mxu0
      %v5881 = vadd.f32 %v5827, %v5880
      %v5882 = vand.u32 %v5699, 4294901760
      %v5883 = vsub.f32 %v5699, %v5882
      %5884 = vmatmul.f32.gmra.mxu0 %v5883
      %v5885 = vpop.f32.mrf.mxu0
      %v5886 = vadd.f32 %v5831, %v5885
      %v5887 = vand.u32 %v5702, 4294901760
      %v5888 = vsub.f32 %v5702, %v5887
      %5889 = vmatmul.f32.gmra.mxu0 %v5888
      %v5890 = vpop.f32.mrf.mxu0
      %v5891 = vadd.f32 %v5835, %v5890
      %v5892 = vand.u32 %v5705, 4294901760
      %v5893 = vsub.f32 %v5705, %v5892
      %5894 = vmatmul.f32.gmra.mxu0 %v5893
      %v5895 = vpop.f32.mrf.mxu0
      %v5896 = vadd.f32 %v5839, %v5895
      %v5897 = vand.u32 %v5708, 4294901760
      %v5898 = vsub.f32 %v5708, %v5897
      %5899 = vmatmul.f32.gmra.mxu0 %v5898
      %v5900 = vpop.f32.mrf.mxu0
      %v5901 = vadd.f32 %v5843, %v5900
      %v5902 = vand.u32 %v5711, 4294901760
      %v5903 = vsub.f32 %v5711, %v5902
      %5904 = vmatmul.f32.gmra.mxu0 %v5903
      %v5905 = vpop.f32.mrf.mxu0
      %v5906 = vadd.f32 %v5847, %v5905
      %5907 = vdwg.mxu0
      %5908 = vmatpush.msra.mxu0 0.0
      %5909 = vmatpush.msra.mxu0 0.0
      %5910 = vmatpush.msra.mxu0 0.0
      %5911 = vmatpush.msra.mxu0 0.0
      %5912 = vmatpush.msra.mxu0 0.0
      %5913 = vmatpush.msra.mxu0 0.0
      %5914 = vmatpush.msra.mxu0 0.0
      %5915 = vmatpush.msra.mxu0 0.0
      %5916 = vmatpush.msra.mxu0 0.0
      %5917 = vmatpush.msra.mxu0 0.0
      %5918 = vmatpush.msra.mxu0 0.0
      %5919 = vmatpush.msra.mxu0 0.0
      %5920 = vmatpush.msra.mxu0 0.0
      %5921 = vmatpush.msra.mxu0 0.0
      %5922 = vmatpush.msra.mxu0 0.0
      %v5923 = vand.u32 %v5688, 4294901760
      %5924 = vmatpush.msra.mxu0 %v5923
      %v5925 = vand.u32 %v5690, 4294901760
      %v5926 = vsub.f32 %v5690, %v5925
      %v5927 = vand.u32 %v5926, 4294901760
      %5928 = vmatmul.f32.gmra.mxu0 %v5927
      %v5929 = vpop.f32.mrf.mxu0
      %v5930 = vadd.f32 %v5871, %v5929
      %v5931 = vand.u32 %v5693, 4294901760
      %v5932 = vsub.f32 %v5693, %v5931
      %v5933 = vand.u32 %v5932, 4294901760
      %5934 = vmatmul.f32.gmra.mxu0 %v5933
      %v5935 = vpop.f32.mrf.mxu0
      %v5936 = vadd.f32 %v5876, %v5935
      %v5937 = vand.u32 %v5696, 4294901760
      %v5938 = vsub.f32 %v5696, %v5937
      %v5939 = vand.u32 %v5938, 4294901760
      %5940 = vmatmul.f32.gmra.mxu0 %v5939
      %v5941 = vpop.f32.mrf.mxu0
      %v5942 = vadd.f32 %v5881, %v5941
      %v5943 = vand.u32 %v5699, 4294901760
      %v5944 = vsub.f32 %v5699, %v5943
      %v5945 = vand.u32 %v5944, 4294901760
      %5946 = vmatmul.f32.gmra.mxu0 %v5945
      %v5947 = vpop.f32.mrf.mxu0
      %v5948 = vadd.f32 %v5886, %v5947
      %v5949 = vand.u32 %v5702, 4294901760
      %v5950 = vsub.f32 %v5702, %v5949
      %v5951 = vand.u32 %v5950, 4294901760
      %5952 = vmatmul.f32.gmra.mxu0 %v5951
      %v5953 = vpop.f32.mrf.mxu0
      %v5954 = vadd.f32 %v5891, %v5953
      %v5955 = vand.u32 %v5705, 4294901760
      %v5956 = vsub.f32 %v5705, %v5955
      %v5957 = vand.u32 %v5956, 4294901760
      %5958 = vmatmul.f32.gmra.mxu0 %v5957
      %v5959 = vpop.f32.mrf.mxu0
      %v5960 = vadd.f32 %v5896, %v5959
      %v5961 = vand.u32 %v5708, 4294901760
      %v5962 = vsub.f32 %v5708, %v5961
      %v5963 = vand.u32 %v5962, 4294901760
      %5964 = vmatmul.f32.gmra.mxu0 %v5963
      %v5965 = vpop.f32.mrf.mxu0
      %v5966 = vadd.f32 %v5901, %v5965
      %v5967 = vand.u32 %v5711, 4294901760
      %v5968 = vsub.f32 %v5711, %v5967
      %v5969 = vand.u32 %v5968, 4294901760
      %5970 = vmatmul.f32.gmra.mxu0 %v5969
      %v5971 = vpop.f32.mrf.mxu0
      %v5972 = vadd.f32 %v5906, %v5971
      %5973 = vdwg.mxu0
      %5974 = vmatpush.msra.mxu0 0.0
      %5975 = vmatpush.msra.mxu0 0.0
      %5976 = vmatpush.msra.mxu0 0.0
      %5977 = vmatpush.msra.mxu0 0.0
      %5978 = vmatpush.msra.mxu0 0.0
      %5979 = vmatpush.msra.mxu0 0.0
      %5980 = vmatpush.msra.mxu0 0.0
      %5981 = vmatpush.msra.mxu0 0.0
      %5982 = vmatpush.msra.mxu0 0.0
      %5983 = vmatpush.msra.mxu0 0.0
      %5984 = vmatpush.msra.mxu0 0.0
      %5985 = vmatpush.msra.mxu0 0.0
      %5986 = vmatpush.msra.mxu0 0.0
      %5987 = vmatpush.msra.mxu0 0.0
      %5988 = vmatpush.msra.mxu0 0.0
      %v5989 = vand.u32 %v5688, 4294901760
      %v5990 = vsub.f32 %v5688, %v5989
      %v5991 = vand.u32 %v5990, 4294901760
      %5992 = vmatpush.msra.mxu0 %v5991
      %v5993 = vand.u32 %v5690, 4294901760
      %5994 = vmatmul.f32.gmra.mxu0 %v5993
      %v5995 = vpop.f32.mrf.mxu0
      %v5996 = vadd.f32 %v5930, %v5995
      %v5997 = vand.u32 %v5693, 4294901760
      %5998 = vmatmul.f32.gmra.mxu0 %v5997
      %v5999 = vpop.f32.mrf.mxu0
      %v6000 = vadd.f32 %v5936, %v5999
      %v6001 = vand.u32 %v5696, 4294901760
      %6002 = vmatmul.f32.gmra.mxu0 %v6001
      %v6003 = vpop.f32.mrf.mxu0
      %v6004 = vadd.f32 %v5942, %v6003
      %v6005 = vand.u32 %v5699, 4294901760
      %6006 = vmatmul.f32.gmra.mxu0 %v6005
      %v6007 = vpop.f32.mrf.mxu0
      %v6008 = vadd.f32 %v5948, %v6007
      %v6009 = vand.u32 %v5702, 4294901760
      %6010 = vmatmul.f32.gmra.mxu0 %v6009
      %v6011 = vpop.f32.mrf.mxu0
      %v6012 = vadd.f32 %v5954, %v6011
      %v6013 = vand.u32 %v5705, 4294901760
      %6014 = vmatmul.f32.gmra.mxu0 %v6013
      %v6015 = vpop.f32.mrf.mxu0
      %v6016 = vadd.f32 %v5960, %v6015
      %v6017 = vand.u32 %v5708, 4294901760
      %6018 = vmatmul.f32.gmra.mxu0 %v6017
      %v6019 = vpop.f32.mrf.mxu0
      %v6020 = vadd.f32 %v5966, %v6019
      %v6021 = vand.u32 %v5711, 4294901760
      %6022 = vmatmul.f32.gmra.mxu0 %v6021
      %v6023 = vpop.f32.mrf.mxu0
      %v6024 = vadd.f32 %v5972, %v6023
      %6025 = vdwg.mxu0
      %6026 = vmatpush.msra.mxu0 0.0
      %6027 = vmatpush.msra.mxu0 0.0
      %6028 = vmatpush.msra.mxu0 0.0
      %6029 = vmatpush.msra.mxu0 0.0
      %6030 = vmatpush.msra.mxu0 0.0
      %6031 = vmatpush.msra.mxu0 0.0
      %6032 = vmatpush.msra.mxu0 0.0
      %6033 = vmatpush.msra.mxu0 0.0
      %6034 = vmatpush.msra.mxu0 0.0
      %6035 = vmatpush.msra.mxu0 0.0
      %6036 = vmatpush.msra.mxu0 0.0
      %6037 = vmatpush.msra.mxu0 0.0
      %6038 = vmatpush.msra.mxu0 0.0
      %6039 = vmatpush.msra.mxu0 0.0
      %6040 = vmatpush.msra.mxu0 0.0
      %v6041 = vand.u32 %v5688, 4294901760
      %6042 = vmatpush.msra.mxu0 %v6041
      %v6043 = vand.u32 %v5690, 4294901760
      %6044 = vmatmul.f32.gmra.mxu0 %v6043
      %v6045 = vpop.f32.mrf.mxu0
      %v6046 = vadd.f32 %v5996, %v6045
      %v6047 = vand.u32 %v5693, 4294901760
      %6048 = vmatmul.f32.gmra.mxu0 %v6047
      %v6049 = vpop.f32.mrf.mxu0
      %v6050 = vadd.f32 %v6000, %v6049
      %v6051 = vand.u32 %v5696, 4294901760
      %6052 = vmatmul.f32.gmra.mxu0 %v6051
      %v6053 = vpop.f32.mrf.mxu0
      %v6054 = vadd.f32 %v6004, %v6053
      %v6055 = vand.u32 %v5699, 4294901760
      %6056 = vmatmul.f32.gmra.mxu0 %v6055
      %v6057 = vpop.f32.mrf.mxu0
      %v6058 = vadd.f32 %v6008, %v6057
      %v6059 = vand.u32 %v5702, 4294901760
      %6060 = vmatmul.f32.gmra.mxu0 %v6059
      %v6061 = vpop.f32.mrf.mxu0
      %v6062 = vadd.f32 %v6012, %v6061
      %v6063 = vand.u32 %v5705, 4294901760
      %6064 = vmatmul.f32.gmra.mxu0 %v6063
      %v6065 = vpop.f32.mrf.mxu0
      %v6066 = vadd.f32 %v6016, %v6065
      %v6067 = vand.u32 %v5708, 4294901760
      %6068 = vmatmul.f32.gmra.mxu0 %v6067
      %v6069 = vpop.f32.mrf.mxu0
      %v6070 = vadd.f32 %v6020, %v6069
      %v6071 = vand.u32 %v5711, 4294901760
      %6072 = vmatmul.f32.gmra.mxu0 %v6071
      %v6073 = vpop.f32.mrf.mxu0
      %v6074 = vadd.f32 %v6024, %v6073
      %6075 = vdwg.mxu0
      %v6076 = vadd.f32 %v5671, %v6046
      %v6077 = vadd.f32 %v5672, %v6050
      %v6078 = vadd.f32 %v5673, %v6054
      %v6079 = vadd.f32 %v5674, %v6058
      %v6080 = vadd.f32 %v5675, %v6062
      %v6081 = vadd.f32 %v5676, %v6066
      %v6082 = vadd.f32 %v5677, %v6070
      %v6083 = vadd.f32 %v5678, %v6074
      %v6084 = vld [vmem:[%s4067 + $0x2] sm:$0xff]
      %v6085 = vld [vmem:[%s4067 + $0x12] sm:$0xff]
      %v6086 = vld [vmem:[%s4067 + $0x22] sm:$0xff]
      %v6087 = vld [vmem:[%s4067 + $0x32] sm:$0xff]
      %v6088 = vld [vmem:[%s4067 + $0x42] sm:$0xff]
      %v6089 = vld [vmem:[%s4067 + $0x52] sm:$0xff]
      %v6090 = vld [vmem:[%s4067 + $0x62] sm:$0xff]
      %v6091 = vld [vmem:[%s4067 + $0x72] sm:$0xff]
      %s6092 = scalar_lea.vmem %s6, 40
      %v6093 = vld [vmem:[%s6092] sm:$0xff]
      %v6095 = vsel %vm4045, %v6084, 0
      %v6098 = vsel %vm4045, %v6085, 0
      %v6101 = vsel %vm4045, %v6086, 0
      %v6104 = vsel %vm4045, %v6087, 0
      %v6107 = vsel %vm4045, %v6088, 0
      %v6110 = vsel %vm4045, %v6089, 0
      %v6113 = vsel %vm4045, %v6090, 0
      %v6116 = vsel %vm4045, %v6091, 0
      %6118 = vmatpush.msra.mxu0 0.0
      %6119 = vmatpush.msra.mxu0 0.0
      %6120 = vmatpush.msra.mxu0 0.0
      %6121 = vmatpush.msra.mxu0 0.0
      %6122 = vmatpush.msra.mxu0 0.0
      %6123 = vmatpush.msra.mxu0 0.0
      %6124 = vmatpush.msra.mxu0 0.0
      %6125 = vmatpush.msra.mxu0 0.0
      %6126 = vmatpush.msra.mxu0 0.0
      %6127 = vmatpush.msra.mxu0 0.0
      %6128 = vmatpush.msra.mxu0 0.0
      %6129 = vmatpush.msra.mxu0 0.0
      %6130 = vmatpush.msra.mxu0 0.0
      %6131 = vmatpush.msra.mxu0 0.0
      %6132 = vmatpush.msra.mxu0 0.0
      %v6133 = vand.u32 %v6093, 4294901760
      %6134 = vmatpush.msra.mxu0 %v6133
      %v6135 = vand.u32 %v6095, 4294901760
      %v6136 = vsub.f32 %v6095, %v6135
      %v6137 = vand.u32 %v6136, 4294901760
      %v6138 = vsub.f32 %v6136, %v6137
      %v6139 = vand.u32 %v6138, 4294901760
      %6140 = vmatmul.f32.gmra.mxu0 %v6139
      %v6141 = vpop.f32.mrf.mxu0
      %v6142 = vadd.f32 0.0, %v6141
      %v6143 = vand.u32 %v6098, 4294901760
      %v6144 = vsub.f32 %v6098, %v6143
      %v6145 = vand.u32 %v6144, 4294901760
      %v6146 = vsub.f32 %v6144, %v6145
      %v6147 = vand.u32 %v6146, 4294901760
      %6148 = vmatmul.f32.gmra.mxu0 %v6147
      %v6149 = vpop.f32.mrf.mxu0
      %v6150 = vadd.f32 0.0, %v6149
      %v6151 = vand.u32 %v6101, 4294901760
      %v6152 = vsub.f32 %v6101, %v6151
      %v6153 = vand.u32 %v6152, 4294901760
      %v6154 = vsub.f32 %v6152, %v6153
      %v6155 = vand.u32 %v6154, 4294901760
      %6156 = vmatmul.f32.gmra.mxu0 %v6155
      %v6157 = vpop.f32.mrf.mxu0
      %v6158 = vadd.f32 0.0, %v6157
      %v6159 = vand.u32 %v6104, 4294901760
      %v6160 = vsub.f32 %v6104, %v6159
      %v6161 = vand.u32 %v6160, 4294901760
      %v6162 = vsub.f32 %v6160, %v6161
      %v6163 = vand.u32 %v6162, 4294901760
      %6164 = vmatmul.f32.gmra.mxu0 %v6163
      %v6165 = vpop.f32.mrf.mxu0
      %v6166 = vadd.f32 0.0, %v6165
      %v6167 = vand.u32 %v6107, 4294901760
      %v6168 = vsub.f32 %v6107, %v6167
      %v6169 = vand.u32 %v6168, 4294901760
      %v6170 = vsub.f32 %v6168, %v6169
      %v6171 = vand.u32 %v6170, 4294901760
      %6172 = vmatmul.f32.gmra.mxu0 %v6171
      %v6173 = vpop.f32.mrf.mxu0
      %v6174 = vadd.f32 0.0, %v6173
      %v6175 = vand.u32 %v6110, 4294901760
      %v6176 = vsub.f32 %v6110, %v6175
      %v6177 = vand.u32 %v6176, 4294901760
      %v6178 = vsub.f32 %v6176, %v6177
      %v6179 = vand.u32 %v6178, 4294901760
      %6180 = vmatmul.f32.gmra.mxu0 %v6179
      %v6181 = vpop.f32.mrf.mxu0
      %v6182 = vadd.f32 0.0, %v6181
      %v6183 = vand.u32 %v6113, 4294901760
      %v6184 = vsub.f32 %v6113, %v6183
      %v6185 = vand.u32 %v6184, 4294901760
      %v6186 = vsub.f32 %v6184, %v6185
      %v6187 = vand.u32 %v6186, 4294901760
      %6188 = vmatmul.f32.gmra.mxu0 %v6187
      %v6189 = vpop.f32.mrf.mxu0
      %v6190 = vadd.f32 0.0, %v6189
      %v6191 = vand.u32 %v6116, 4294901760
      %v6192 = vsub.f32 %v6116, %v6191
      %v6193 = vand.u32 %v6192, 4294901760
      %v6194 = vsub.f32 %v6192, %v6193
      %v6195 = vand.u32 %v6194, 4294901760
      %6196 = vmatmul.f32.gmra.mxu0 %v6195
      %v6197 = vpop.f32.mrf.mxu0
      %v6198 = vadd.f32 0.0, %v6197
      %6199 = vdwg.mxu0
      %6200 = vmatpush.msra.mxu0 0.0
      %6201 = vmatpush.msra.mxu0 0.0
      %6202 = vmatpush.msra.mxu0 0.0
      %6203 = vmatpush.msra.mxu0 0.0
      %6204 = vmatpush.msra.mxu0 0.0
      %6205 = vmatpush.msra.mxu0 0.0
      %6206 = vmatpush.msra.mxu0 0.0
      %6207 = vmatpush.msra.mxu0 0.0
      %6208 = vmatpush.msra.mxu0 0.0
      %6209 = vmatpush.msra.mxu0 0.0
      %6210 = vmatpush.msra.mxu0 0.0
      %6211 = vmatpush.msra.mxu0 0.0
      %6212 = vmatpush.msra.mxu0 0.0
      %6213 = vmatpush.msra.mxu0 0.0
      %6214 = vmatpush.msra.mxu0 0.0
      %v6215 = vand.u32 %v6093, 4294901760
      %v6216 = vsub.f32 %v6093, %v6215
      %v6217 = vand.u32 %v6216, 4294901760
      %v6218 = vsub.f32 %v6216, %v6217
      %v6219 = vand.u32 %v6218, 4294901760
      %6220 = vmatpush.msra.mxu0 %v6219
      %v6221 = vand.u32 %v6095, 4294901760
      %6222 = vmatmul.f32.gmra.mxu0 %v6221
      %v6223 = vpop.f32.mrf.mxu0
      %v6224 = vadd.f32 %v6142, %v6223
      %v6225 = vand.u32 %v6098, 4294901760
      %6226 = vmatmul.f32.gmra.mxu0 %v6225
      %v6227 = vpop.f32.mrf.mxu0
      %v6228 = vadd.f32 %v6150, %v6227
      %v6229 = vand.u32 %v6101, 4294901760
      %6230 = vmatmul.f32.gmra.mxu0 %v6229
      %v6231 = vpop.f32.mrf.mxu0
      %v6232 = vadd.f32 %v6158, %v6231
      %v6233 = vand.u32 %v6104, 4294901760
      %6234 = vmatmul.f32.gmra.mxu0 %v6233
      %v6235 = vpop.f32.mrf.mxu0
      %v6236 = vadd.f32 %v6166, %v6235
      %v6237 = vand.u32 %v6107, 4294901760
      %6238 = vmatmul.f32.gmra.mxu0 %v6237
      %v6239 = vpop.f32.mrf.mxu0
      %v6240 = vadd.f32 %v6174, %v6239
      %v6241 = vand.u32 %v6110, 4294901760
      %6242 = vmatmul.f32.gmra.mxu0 %v6241
      %v6243 = vpop.f32.mrf.mxu0
      %v6244 = vadd.f32 %v6182, %v6243
      %v6245 = vand.u32 %v6113, 4294901760
      %6246 = vmatmul.f32.gmra.mxu0 %v6245
      %v6247 = vpop.f32.mrf.mxu0
      %v6248 = vadd.f32 %v6190, %v6247
      %v6249 = vand.u32 %v6116, 4294901760
      %6250 = vmatmul.f32.gmra.mxu0 %v6249
      %v6251 = vpop.f32.mrf.mxu0
      %v6252 = vadd.f32 %v6198, %v6251
      %6253 = vdwg.mxu0
      %6254 = vmatpush.msra.mxu0 0.0
      %6255 = vmatpush.msra.mxu0 0.0
      %6256 = vmatpush.msra.mxu0 0.0
      %6257 = vmatpush.msra.mxu0 0.0
      %6258 = vmatpush.msra.mxu0 0.0
      %6259 = vmatpush.msra.mxu0 0.0
      %6260 = vmatpush.msra.mxu0 0.0
      %6261 = vmatpush.msra.mxu0 0.0
      %6262 = vmatpush.msra.mxu0 0.0
      %6263 = vmatpush.msra.mxu0 0.0
      %6264 = vmatpush.msra.mxu0 0.0
      %6265 = vmatpush.msra.mxu0 0.0
      %6266 = vmatpush.msra.mxu0 0.0
      %6267 = vmatpush.msra.mxu0 0.0
      %6268 = vmatpush.msra.mxu0 0.0
      %v6269 = vand.u32 %v6093, 4294901760
      %v6270 = vsub.f32 %v6093, %v6269
      %6271 = vmatpush.msra.mxu0 %v6270
      %v6272 = vand.u32 %v6095, 4294901760
      %v6273 = vsub.f32 %v6095, %v6272
      %6274 = vmatmul.f32.gmra.mxu0 %v6273
      %v6275 = vpop.f32.mrf.mxu0
      %v6276 = vadd.f32 %v6224, %v6275
      %v6277 = vand.u32 %v6098, 4294901760
      %v6278 = vsub.f32 %v6098, %v6277
      %6279 = vmatmul.f32.gmra.mxu0 %v6278
      %v6280 = vpop.f32.mrf.mxu0
      %v6281 = vadd.f32 %v6228, %v6280
      %v6282 = vand.u32 %v6101, 4294901760
      %v6283 = vsub.f32 %v6101, %v6282
      %6284 = vmatmul.f32.gmra.mxu0 %v6283
      %v6285 = vpop.f32.mrf.mxu0
      %v6286 = vadd.f32 %v6232, %v6285
      %v6287 = vand.u32 %v6104, 4294901760
      %v6288 = vsub.f32 %v6104, %v6287
      %6289 = vmatmul.f32.gmra.mxu0 %v6288
      %v6290 = vpop.f32.mrf.mxu0
      %v6291 = vadd.f32 %v6236, %v6290
      %v6292 = vand.u32 %v6107, 4294901760
      %v6293 = vsub.f32 %v6107, %v6292
      %6294 = vmatmul.f32.gmra.mxu0 %v6293
      %v6295 = vpop.f32.mrf.mxu0
      %v6296 = vadd.f32 %v6240, %v6295
      %v6297 = vand.u32 %v6110, 4294901760
      %v6298 = vsub.f32 %v6110, %v6297
      %6299 = vmatmul.f32.gmra.mxu0 %v6298
      %v6300 = vpop.f32.mrf.mxu0
      %v6301 = vadd.f32 %v6244, %v6300
      %v6302 = vand.u32 %v6113, 4294901760
      %v6303 = vsub.f32 %v6113, %v6302
      %6304 = vmatmul.f32.gmra.mxu0 %v6303
      %v6305 = vpop.f32.mrf.mxu0
      %v6306 = vadd.f32 %v6248, %v6305
      %v6307 = vand.u32 %v6116, 4294901760
      %v6308 = vsub.f32 %v6116, %v6307
      %6309 = vmatmul.f32.gmra.mxu0 %v6308
      %v6310 = vpop.f32.mrf.mxu0
      %v6311 = vadd.f32 %v6252, %v6310
      %6312 = vdwg.mxu0
      %6313 = vmatpush.msra.mxu0 0.0
      %6314 = vmatpush.msra.mxu0 0.0
      %6315 = vmatpush.msra.mxu0 0.0
      %6316 = vmatpush.msra.mxu0 0.0
      %6317 = vmatpush.msra.mxu0 0.0
      %6318 = vmatpush.msra.mxu0 0.0
      %6319 = vmatpush.msra.mxu0 0.0
      %6320 = vmatpush.msra.mxu0 0.0
      %6321 = vmatpush.msra.mxu0 0.0
      %6322 = vmatpush.msra.mxu0 0.0
      %6323 = vmatpush.msra.mxu0 0.0
      %6324 = vmatpush.msra.mxu0 0.0
      %6325 = vmatpush.msra.mxu0 0.0
      %6326 = vmatpush.msra.mxu0 0.0
      %6327 = vmatpush.msra.mxu0 0.0
      %v6328 = vand.u32 %v6093, 4294901760
      %6329 = vmatpush.msra.mxu0 %v6328
      %v6330 = vand.u32 %v6095, 4294901760
      %v6331 = vsub.f32 %v6095, %v6330
      %v6332 = vand.u32 %v6331, 4294901760
      %6333 = vmatmul.f32.gmra.mxu0 %v6332
      %v6334 = vpop.f32.mrf.mxu0
      %v6335 = vadd.f32 %v6276, %v6334
      %v6336 = vand.u32 %v6098, 4294901760
      %v6337 = vsub.f32 %v6098, %v6336
      %v6338 = vand.u32 %v6337, 4294901760
      %6339 = vmatmul.f32.gmra.mxu0 %v6338
      %v6340 = vpop.f32.mrf.mxu0
      %v6341 = vadd.f32 %v6281, %v6340
      %v6342 = vand.u32 %v6101, 4294901760
      %v6343 = vsub.f32 %v6101, %v6342
      %v6344 = vand.u32 %v6343, 4294901760
      %6345 = vmatmul.f32.gmra.mxu0 %v6344
      %v6346 = vpop.f32.mrf.mxu0
      %v6347 = vadd.f32 %v6286, %v6346
      %v6348 = vand.u32 %v6104, 4294901760
      %v6349 = vsub.f32 %v6104, %v6348
      %v6350 = vand.u32 %v6349, 4294901760
      %6351 = vmatmul.f32.gmra.mxu0 %v6350
      %v6352 = vpop.f32.mrf.mxu0
      %v6353 = vadd.f32 %v6291, %v6352
      %v6354 = vand.u32 %v6107, 4294901760
      %v6355 = vsub.f32 %v6107, %v6354
      %v6356 = vand.u32 %v6355, 4294901760
      %6357 = vmatmul.f32.gmra.mxu0 %v6356
      %v6358 = vpop.f32.mrf.mxu0
      %v6359 = vadd.f32 %v6296, %v6358
      %v6360 = vand.u32 %v6110, 4294901760
      %v6361 = vsub.f32 %v6110, %v6360
      %v6362 = vand.u32 %v6361, 4294901760
      %6363 = vmatmul.f32.gmra.mxu0 %v6362
      %v6364 = vpop.f32.mrf.mxu0
      %v6365 = vadd.f32 %v6301, %v6364
      %v6366 = vand.u32 %v6113, 4294901760
      %v6367 = vsub.f32 %v6113, %v6366
      %v6368 = vand.u32 %v6367, 4294901760
      %6369 = vmatmul.f32.gmra.mxu0 %v6368
      %v6370 = vpop.f32.mrf.mxu0
      %v6371 = vadd.f32 %v6306, %v6370
      %v6372 = vand.u32 %v6116, 4294901760
      %v6373 = vsub.f32 %v6116, %v6372
      %v6374 = vand.u32 %v6373, 4294901760
      %6375 = vmatmul.f32.gmra.mxu0 %v6374
      %v6376 = vpop.f32.mrf.mxu0
      %v6377 = vadd.f32 %v6311, %v6376
      %6378 = vdwg.mxu0
      %6379 = vmatpush.msra.mxu0 0.0
      %6380 = vmatpush.msra.mxu0 0.0
      %6381 = vmatpush.msra.mxu0 0.0
      %6382 = vmatpush.msra.mxu0 0.0
      %6383 = vmatpush.msra.mxu0 0.0
      %6384 = vmatpush.msra.mxu0 0.0
      %6385 = vmatpush.msra.mxu0 0.0
      %6386 = vmatpush.msra.mxu0 0.0
      %6387 = vmatpush.msra.mxu0 0.0
      %6388 = vmatpush.msra.mxu0 0.0
      %6389 = vmatpush.msra.mxu0 0.0
      %6390 = vmatpush.msra.mxu0 0.0
      %6391 = vmatpush.msra.mxu0 0.0
      %6392 = vmatpush.msra.mxu0 0.0
      %6393 = vmatpush.msra.mxu0 0.0
      %v6394 = vand.u32 %v6093, 4294901760
      %v6395 = vsub.f32 %v6093, %v6394
      %v6396 = vand.u32 %v6395, 4294901760
      %6397 = vmatpush.msra.mxu0 %v6396
      %v6398 = vand.u32 %v6095, 4294901760
      %6399 = vmatmul.f32.gmra.mxu0 %v6398
      %v6400 = vpop.f32.mrf.mxu0
      %v6401 = vadd.f32 %v6335, %v6400
      %v6402 = vand.u32 %v6098, 4294901760
      %6403 = vmatmul.f32.gmra.mxu0 %v6402
      %v6404 = vpop.f32.mrf.mxu0
      %v6405 = vadd.f32 %v6341, %v6404
      %v6406 = vand.u32 %v6101, 4294901760
      %6407 = vmatmul.f32.gmra.mxu0 %v6406
      %v6408 = vpop.f32.mrf.mxu0
      %v6409 = vadd.f32 %v6347, %v6408
      %v6410 = vand.u32 %v6104, 4294901760
      %6411 = vmatmul.f32.gmra.mxu0 %v6410
      %v6412 = vpop.f32.mrf.mxu0
      %v6413 = vadd.f32 %v6353, %v6412
      %v6414 = vand.u32 %v6107, 4294901760
      %6415 = vmatmul.f32.gmra.mxu0 %v6414
      %v6416 = vpop.f32.mrf.mxu0
      %v6417 = vadd.f32 %v6359, %v6416
      %v6418 = vand.u32 %v6110, 4294901760
      %6419 = vmatmul.f32.gmra.mxu0 %v6418
      %v6420 = vpop.f32.mrf.mxu0
      %v6421 = vadd.f32 %v6365, %v6420
      %v6422 = vand.u32 %v6113, 4294901760
      %6423 = vmatmul.f32.gmra.mxu0 %v6422
      %v6424 = vpop.f32.mrf.mxu0
      %v6425 = vadd.f32 %v6371, %v6424
      %v6426 = vand.u32 %v6116, 4294901760
      %6427 = vmatmul.f32.gmra.mxu0 %v6426
      %v6428 = vpop.f32.mrf.mxu0
      %v6429 = vadd.f32 %v6377, %v6428
      %6430 = vdwg.mxu0
      %6431 = vmatpush.msra.mxu0 0.0
      %6432 = vmatpush.msra.mxu0 0.0
      %6433 = vmatpush.msra.mxu0 0.0
      %6434 = vmatpush.msra.mxu0 0.0
      %6435 = vmatpush.msra.mxu0 0.0
      %6436 = vmatpush.msra.mxu0 0.0
      %6437 = vmatpush.msra.mxu0 0.0
      %6438 = vmatpush.msra.mxu0 0.0
      %6439 = vmatpush.msra.mxu0 0.0
      %6440 = vmatpush.msra.mxu0 0.0
      %6441 = vmatpush.msra.mxu0 0.0
      %6442 = vmatpush.msra.mxu0 0.0
      %6443 = vmatpush.msra.mxu0 0.0
      %6444 = vmatpush.msra.mxu0 0.0
      %6445 = vmatpush.msra.mxu0 0.0
      %v6446 = vand.u32 %v6093, 4294901760
      %6447 = vmatpush.msra.mxu0 %v6446
      %v6448 = vand.u32 %v6095, 4294901760
      %6449 = vmatmul.f32.gmra.mxu0 %v6448
      %v6450 = vpop.f32.mrf.mxu0
      %v6451 = vadd.f32 %v6401, %v6450
      %v6452 = vand.u32 %v6098, 4294901760
      %6453 = vmatmul.f32.gmra.mxu0 %v6452
      %v6454 = vpop.f32.mrf.mxu0
      %v6455 = vadd.f32 %v6405, %v6454
      %v6456 = vand.u32 %v6101, 4294901760
      %6457 = vmatmul.f32.gmra.mxu0 %v6456
      %v6458 = vpop.f32.mrf.mxu0
      %v6459 = vadd.f32 %v6409, %v6458
      %v6460 = vand.u32 %v6104, 4294901760
      %6461 = vmatmul.f32.gmra.mxu0 %v6460
      %v6462 = vpop.f32.mrf.mxu0
      %v6463 = vadd.f32 %v6413, %v6462
      %v6464 = vand.u32 %v6107, 4294901760
      %6465 = vmatmul.f32.gmra.mxu0 %v6464
      %v6466 = vpop.f32.mrf.mxu0
      %v6467 = vadd.f32 %v6417, %v6466
      %v6468 = vand.u32 %v6110, 4294901760
      %6469 = vmatmul.f32.gmra.mxu0 %v6468
      %v6470 = vpop.f32.mrf.mxu0
      %v6471 = vadd.f32 %v6421, %v6470
      %v6472 = vand.u32 %v6113, 4294901760
      %6473 = vmatmul.f32.gmra.mxu0 %v6472
      %v6474 = vpop.f32.mrf.mxu0
      %v6475 = vadd.f32 %v6425, %v6474
      %v6476 = vand.u32 %v6116, 4294901760
      %6477 = vmatmul.f32.gmra.mxu0 %v6476
      %v6478 = vpop.f32.mrf.mxu0
      %v6479 = vadd.f32 %v6429, %v6478
      %6480 = vdwg.mxu0
      %v6481 = vadd.f32 %v6076, %v6451
      %v6482 = vadd.f32 %v6077, %v6455
      %v6483 = vadd.f32 %v6078, %v6459
      %v6484 = vadd.f32 %v6079, %v6463
      %v6485 = vadd.f32 %v6080, %v6467
      %v6486 = vadd.f32 %v6081, %v6471
      %v6487 = vadd.f32 %v6082, %v6475
      %v6488 = vadd.f32 %v6083, %v6479
      %s6489 = scalar_lea.vmem [#allocation2], 32
      %v6490 = vld [vmem:[%s6489] sm:$0xff]
      %v6491 = vld [vmem:[%s6489 + $0x10] sm:$0xff]
      %v6492 = vld [vmem:[%s6489 + $0x20] sm:$0xff]
      %v6493 = vld [vmem:[%s6489 + $0x30] sm:$0xff]
      %v6494 = vld [vmem:[%s6489 + $0x40] sm:$0xff]
      %v6495 = vld [vmem:[%s6489 + $0x50] sm:$0xff]
      %v6496 = vld [vmem:[%s6489 + $0x60] sm:$0xff]
      %v6497 = vld [vmem:[%s6489 + $0x70] sm:$0xff]
      %s6498 = scalar_lea.vmem %s6, 48
      %v6499 = vld [vmem:[%s6498] sm:$0xff]
      %v6501 = vsel %vm4045, %v6490, 0
      %v6504 = vsel %vm4045, %v6491, 0
      %v6507 = vsel %vm4045, %v6492, 0
      %v6510 = vsel %vm4045, %v6493, 0
      %v6513 = vsel %vm4045, %v6494, 0
      %v6516 = vsel %vm4045, %v6495, 0
      %v6519 = vsel %vm4045, %v6496, 0
      %v6522 = vsel %vm4045, %v6497, 0
      %6524 = vmatpush.msra.mxu0 0.0
      %6525 = vmatpush.msra.mxu0 0.0
      %6526 = vmatpush.msra.mxu0 0.0
      %6527 = vmatpush.msra.mxu0 0.0
      %6528 = vmatpush.msra.mxu0 0.0
      %6529 = vmatpush.msra.mxu0 0.0
      %6530 = vmatpush.msra.mxu0 0.0
      %6531 = vmatpush.msra.mxu0 0.0
      %6532 = vmatpush.msra.mxu0 0.0
      %6533 = vmatpush.msra.mxu0 0.0
      %6534 = vmatpush.msra.mxu0 0.0
      %6535 = vmatpush.msra.mxu0 0.0
      %6536 = vmatpush.msra.mxu0 0.0
      %6537 = vmatpush.msra.mxu0 0.0
      %6538 = vmatpush.msra.mxu0 0.0
      %v6539 = vand.u32 %v6499, 4294901760
      %6540 = vmatpush.msra.mxu0 %v6539
      %v6541 = vand.u32 %v6501, 4294901760
      %v6542 = vsub.f32 %v6501, %v6541
      %v6543 = vand.u32 %v6542, 4294901760
      %v6544 = vsub.f32 %v6542, %v6543
      %v6545 = vand.u32 %v6544, 4294901760
      %6546 = vmatmul.f32.gmra.mxu0 %v6545
      %v6547 = vpop.f32.mrf.mxu0
      %v6548 = vadd.f32 0.0, %v6547
      %v6549 = vand.u32 %v6504, 4294901760
      %v6550 = vsub.f32 %v6504, %v6549
      %v6551 = vand.u32 %v6550, 4294901760
      %v6552 = vsub.f32 %v6550, %v6551
      %v6553 = vand.u32 %v6552, 4294901760
      %6554 = vmatmul.f32.gmra.mxu0 %v6553
      %v6555 = vpop.f32.mrf.mxu0
      %v6556 = vadd.f32 0.0, %v6555
      %v6557 = vand.u32 %v6507, 4294901760
      %v6558 = vsub.f32 %v6507, %v6557
      %v6559 = vand.u32 %v6558, 4294901760
      %v6560 = vsub.f32 %v6558, %v6559
      %v6561 = vand.u32 %v6560, 4294901760
      %6562 = vmatmul.f32.gmra.mxu0 %v6561
      %v6563 = vpop.f32.mrf.mxu0
      %v6564 = vadd.f32 0.0, %v6563
      %v6565 = vand.u32 %v6510, 4294901760
      %v6566 = vsub.f32 %v6510, %v6565
      %v6567 = vand.u32 %v6566, 4294901760
      %v6568 = vsub.f32 %v6566, %v6567
      %v6569 = vand.u32 %v6568, 4294901760
      %6570 = vmatmul.f32.gmra.mxu0 %v6569
      %v6571 = vpop.f32.mrf.mxu0
      %v6572 = vadd.f32 0.0, %v6571
      %v6573 = vand.u32 %v6513, 4294901760
      %v6574 = vsub.f32 %v6513, %v6573
      %v6575 = vand.u32 %v6574, 4294901760
      %v6576 = vsub.f32 %v6574, %v6575
      %v6577 = vand.u32 %v6576, 4294901760
      %6578 = vmatmul.f32.gmra.mxu0 %v6577
      %v6579 = vpop.f32.mrf.mxu0
      %v6580 = vadd.f32 0.0, %v6579
      %v6581 = vand.u32 %v6516, 4294901760
      %v6582 = vsub.f32 %v6516, %v6581
      %v6583 = vand.u32 %v6582, 4294901760
      %v6584 = vsub.f32 %v6582, %v6583
      %v6585 = vand.u32 %v6584, 4294901760
      %6586 = vmatmul.f32.gmra.mxu0 %v6585
      %v6587 = vpop.f32.mrf.mxu0
      %v6588 = vadd.f32 0.0, %v6587
      %v6589 = vand.u32 %v6519, 4294901760
      %v6590 = vsub.f32 %v6519, %v6589
      %v6591 = vand.u32 %v6590, 4294901760
      %v6592 = vsub.f32 %v6590, %v6591
      %v6593 = vand.u32 %v6592, 4294901760
      %6594 = vmatmul.f32.gmra.mxu0 %v6593
      %v6595 = vpop.f32.mrf.mxu0
      %v6596 = vadd.f32 0.0, %v6595
      %v6597 = vand.u32 %v6522, 4294901760
      %v6598 = vsub.f32 %v6522, %v6597
      %v6599 = vand.u32 %v6598, 4294901760
      %v6600 = vsub.f32 %v6598, %v6599
      %v6601 = vand.u32 %v6600, 4294901760
      %6602 = vmatmul.f32.gmra.mxu0 %v6601
      %v6603 = vpop.f32.mrf.mxu0
      %v6604 = vadd.f32 0.0, %v6603
      %6605 = vdwg.mxu0
      %6606 = vmatpush.msra.mxu0 0.0
      %6607 = vmatpush.msra.mxu0 0.0
      %6608 = vmatpush.msra.mxu0 0.0
      %6609 = vmatpush.msra.mxu0 0.0
      %6610 = vmatpush.msra.mxu0 0.0
      %6611 = vmatpush.msra.mxu0 0.0
      %6612 = vmatpush.msra.mxu0 0.0
      %6613 = vmatpush.msra.mxu0 0.0
      %6614 = vmatpush.msra.mxu0 0.0
      %6615 = vmatpush.msra.mxu0 0.0
      %6616 = vmatpush.msra.mxu0 0.0
      %6617 = vmatpush.msra.mxu0 0.0
      %6618 = vmatpush.msra.mxu0 0.0
      %6619 = vmatpush.msra.mxu0 0.0
      %6620 = vmatpush.msra.mxu0 0.0
      %v6621 = vand.u32 %v6499, 4294901760
      %v6622 = vsub.f32 %v6499, %v6621
      %v6623 = vand.u32 %v6622, 4294901760
      %v6624 = vsub.f32 %v6622, %v6623
      %v6625 = vand.u32 %v6624, 4294901760
      %6626 = vmatpush.msra.mxu0 %v6625
      %v6627 = vand.u32 %v6501, 4294901760
      %6628 = vmatmul.f32.gmra.mxu0 %v6627
      %v6629 = vpop.f32.mrf.mxu0
      %v6630 = vadd.f32 %v6548, %v6629
      %v6631 = vand.u32 %v6504, 4294901760
      %6632 = vmatmul.f32.gmra.mxu0 %v6631
      %v6633 = vpop.f32.mrf.mxu0
      %v6634 = vadd.f32 %v6556, %v6633
      %v6635 = vand.u32 %v6507, 4294901760
      %6636 = vmatmul.f32.gmra.mxu0 %v6635
      %v6637 = vpop.f32.mrf.mxu0
      %v6638 = vadd.f32 %v6564, %v6637
      %v6639 = vand.u32 %v6510, 4294901760
      %6640 = vmatmul.f32.gmra.mxu0 %v6639
      %v6641 = vpop.f32.mrf.mxu0
      %v6642 = vadd.f32 %v6572, %v6641
      %v6643 = vand.u32 %v6513, 4294901760
      %6644 = vmatmul.f32.gmra.mxu0 %v6643
      %v6645 = vpop.f32.mrf.mxu0
      %v6646 = vadd.f32 %v6580, %v6645
      %v6647 = vand.u32 %v6516, 4294901760
      %6648 = vmatmul.f32.gmra.mxu0 %v6647
      %v6649 = vpop.f32.mrf.mxu0
      %v6650 = vadd.f32 %v6588, %v6649
      %v6651 = vand.u32 %v6519, 4294901760
      %6652 = vmatmul.f32.gmra.mxu0 %v6651
      %v6653 = vpop.f32.mrf.mxu0
      %v6654 = vadd.f32 %v6596, %v6653
      %v6655 = vand.u32 %v6522, 4294901760
      %6656 = vmatmul.f32.gmra.mxu0 %v6655
      %v6657 = vpop.f32.mrf.mxu0
      %v6658 = vadd.f32 %v6604, %v6657
      %6659 = vdwg.mxu0
      %6660 = vmatpush.msra.mxu0 0.0
      %6661 = vmatpush.msra.mxu0 0.0
      %6662 = vmatpush.msra.mxu0 0.0
      %6663 = vmatpush.msra.mxu0 0.0
      %6664 = vmatpush.msra.mxu0 0.0
      %6665 = vmatpush.msra.mxu0 0.0
      %6666 = vmatpush.msra.mxu0 0.0
      %6667 = vmatpush.msra.mxu0 0.0
      %6668 = vmatpush.msra.mxu0 0.0
      %6669 = vmatpush.msra.mxu0 0.0
      %6670 = vmatpush.msra.mxu0 0.0
      %6671 = vmatpush.msra.mxu0 0.0
      %6672 = vmatpush.msra.mxu0 0.0
      %6673 = vmatpush.msra.mxu0 0.0
      %6674 = vmatpush.msra.mxu0 0.0
      %v6675 = vand.u32 %v6499, 4294901760
      %v6676 = vsub.f32 %v6499, %v6675
      %6677 = vmatpush.msra.mxu0 %v6676
      %v6678 = vand.u32 %v6501, 4294901760
      %v6679 = vsub.f32 %v6501, %v6678
      %6680 = vmatmul.f32.gmra.mxu0 %v6679
      %v6681 = vpop.f32.mrf.mxu0
      %v6682 = vadd.f32 %v6630, %v6681
      %v6683 = vand.u32 %v6504, 4294901760
      %v6684 = vsub.f32 %v6504, %v6683
      %6685 = vmatmul.f32.gmra.mxu0 %v6684
      %v6686 = vpop.f32.mrf.mxu0
      %v6687 = vadd.f32 %v6634, %v6686
      %v6688 = vand.u32 %v6507, 4294901760
      %v6689 = vsub.f32 %v6507, %v6688
      %6690 = vmatmul.f32.gmra.mxu0 %v6689
      %v6691 = vpop.f32.mrf.mxu0
      %v6692 = vadd.f32 %v6638, %v6691
      %v6693 = vand.u32 %v6510, 4294901760
      %v6694 = vsub.f32 %v6510, %v6693
      %6695 = vmatmul.f32.gmra.mxu0 %v6694
      %v6696 = vpop.f32.mrf.mxu0
      %v6697 = vadd.f32 %v6642, %v6696
      %v6698 = vand.u32 %v6513, 4294901760
      %v6699 = vsub.f32 %v6513, %v6698
      %6700 = vmatmul.f32.gmra.mxu0 %v6699
      %v6701 = vpop.f32.mrf.mxu0
      %v6702 = vadd.f32 %v6646, %v6701
      %v6703 = vand.u32 %v6516, 4294901760
      %v6704 = vsub.f32 %v6516, %v6703
      %6705 = vmatmul.f32.gmra.mxu0 %v6704
      %v6706 = vpop.f32.mrf.mxu0
      %v6707 = vadd.f32 %v6650, %v6706
      %v6708 = vand.u32 %v6519, 4294901760
      %v6709 = vsub.f32 %v6519, %v6708
      %6710 = vmatmul.f32.gmra.mxu0 %v6709
      %v6711 = vpop.f32.mrf.mxu0
      %v6712 = vadd.f32 %v6654, %v6711
      %v6713 = vand.u32 %v6522, 4294901760
      %v6714 = vsub.f32 %v6522, %v6713
      %6715 = vmatmul.f32.gmra.mxu0 %v6714
      %v6716 = vpop.f32.mrf.mxu0
      %v6717 = vadd.f32 %v6658, %v6716
      %6718 = vdwg.mxu0
      %6719 = vmatpush.msra.mxu0 0.0
      %6720 = vmatpush.msra.mxu0 0.0
      %6721 = vmatpush.msra.mxu0 0.0
      %6722 = vmatpush.msra.mxu0 0.0
      %6723 = vmatpush.msra.mxu0 0.0
      %6724 = vmatpush.msra.mxu0 0.0
      %6725 = vmatpush.msra.mxu0 0.0
      %6726 = vmatpush.msra.mxu0 0.0
      %6727 = vmatpush.msra.mxu0 0.0
      %6728 = vmatpush.msra.mxu0 0.0
      %6729 = vmatpush.msra.mxu0 0.0
      %6730 = vmatpush.msra.mxu0 0.0
      %6731 = vmatpush.msra.mxu0 0.0
      %6732 = vmatpush.msra.mxu0 0.0
      %6733 = vmatpush.msra.mxu0 0.0
      %v6734 = vand.u32 %v6499, 4294901760
      %6735 = vmatpush.msra.mxu0 %v6734
      %v6736 = vand.u32 %v6501, 4294901760
      %v6737 = vsub.f32 %v6501, %v6736
      %v6738 = vand.u32 %v6737, 4294901760
      %6739 = vmatmul.f32.gmra.mxu0 %v6738
      %v6740 = vpop.f32.mrf.mxu0
      %v6741 = vadd.f32 %v6682, %v6740
      %v6742 = vand.u32 %v6504, 4294901760
      %v6743 = vsub.f32 %v6504, %v6742
      %v6744 = vand.u32 %v6743, 4294901760
      %6745 = vmatmul.f32.gmra.mxu0 %v6744
      %v6746 = vpop.f32.mrf.mxu0
      %v6747 = vadd.f32 %v6687, %v6746
      %v6748 = vand.u32 %v6507, 4294901760
      %v6749 = vsub.f32 %v6507, %v6748
      %v6750 = vand.u32 %v6749, 4294901760
      %6751 = vmatmul.f32.gmra.mxu0 %v6750
      %v6752 = vpop.f32.mrf.mxu0
      %v6753 = vadd.f32 %v6692, %v6752
      %v6754 = vand.u32 %v6510, 4294901760
      %v6755 = vsub.f32 %v6510, %v6754
      %v6756 = vand.u32 %v6755, 4294901760
      %6757 = vmatmul.f32.gmra.mxu0 %v6756
      %v6758 = vpop.f32.mrf.mxu0
      %v6759 = vadd.f32 %v6697, %v6758
      %v6760 = vand.u32 %v6513, 4294901760
      %v6761 = vsub.f32 %v6513, %v6760
      %v6762 = vand.u32 %v6761, 4294901760
      %6763 = vmatmul.f32.gmra.mxu0 %v6762
      %v6764 = vpop.f32.mrf.mxu0
      %v6765 = vadd.f32 %v6702, %v6764
      %v6766 = vand.u32 %v6516, 4294901760
      %v6767 = vsub.f32 %v6516, %v6766
      %v6768 = vand.u32 %v6767, 4294901760
      %6769 = vmatmul.f32.gmra.mxu0 %v6768
      %v6770 = vpop.f32.mrf.mxu0
      %v6771 = vadd.f32 %v6707, %v6770
      %v6772 = vand.u32 %v6519, 4294901760
      %v6773 = vsub.f32 %v6519, %v6772
      %v6774 = vand.u32 %v6773, 4294901760
      %6775 = vmatmul.f32.gmra.mxu0 %v6774
      %v6776 = vpop.f32.mrf.mxu0
      %v6777 = vadd.f32 %v6712, %v6776
      %v6778 = vand.u32 %v6522, 4294901760
      %v6779 = vsub.f32 %v6522, %v6778
      %v6780 = vand.u32 %v6779, 4294901760
      %6781 = vmatmul.f32.gmra.mxu0 %v6780
      %v6782 = vpop.f32.mrf.mxu0
      %v6783 = vadd.f32 %v6717, %v6782
      %6784 = vdwg.mxu0
      %6785 = vmatpush.msra.mxu0 0.0
      %6786 = vmatpush.msra.mxu0 0.0
      %6787 = vmatpush.msra.mxu0 0.0
      %6788 = vmatpush.msra.mxu0 0.0
      %6789 = vmatpush.msra.mxu0 0.0
      %6790 = vmatpush.msra.mxu0 0.0
      %6791 = vmatpush.msra.mxu0 0.0
      %6792 = vmatpush.msra.mxu0 0.0
      %6793 = vmatpush.msra.mxu0 0.0
      %6794 = vmatpush.msra.mxu0 0.0
      %6795 = vmatpush.msra.mxu0 0.0
      %6796 = vmatpush.msra.mxu0 0.0
      %6797 = vmatpush.msra.mxu0 0.0
      %6798 = vmatpush.msra.mxu0 0.0
      %6799 = vmatpush.msra.mxu0 0.0
      %v6800 = vand.u32 %v6499, 4294901760
      %v6801 = vsub.f32 %v6499, %v6800
      %v6802 = vand.u32 %v6801, 4294901760
      %6803 = vmatpush.msra.mxu0 %v6802
      %v6804 = vand.u32 %v6501, 4294901760
      %6805 = vmatmul.f32.gmra.mxu0 %v6804
      %v6806 = vpop.f32.mrf.mxu0
      %v6807 = vadd.f32 %v6741, %v6806
      %v6808 = vand.u32 %v6504, 4294901760
      %6809 = vmatmul.f32.gmra.mxu0 %v6808
      %v6810 = vpop.f32.mrf.mxu0
      %v6811 = vadd.f32 %v6747, %v6810
      %v6812 = vand.u32 %v6507, 4294901760
      %6813 = vmatmul.f32.gmra.mxu0 %v6812
      %v6814 = vpop.f32.mrf.mxu0
      %v6815 = vadd.f32 %v6753, %v6814
      %v6816 = vand.u32 %v6510, 4294901760
      %6817 = vmatmul.f32.gmra.mxu0 %v6816
      %v6818 = vpop.f32.mrf.mxu0
      %v6819 = vadd.f32 %v6759, %v6818
      %v6820 = vand.u32 %v6513, 4294901760
      %6821 = vmatmul.f32.gmra.mxu0 %v6820
      %v6822 = vpop.f32.mrf.mxu0
      %v6823 = vadd.f32 %v6765, %v6822
      %v6824 = vand.u32 %v6516, 4294901760
      %6825 = vmatmul.f32.gmra.mxu0 %v6824
      %v6826 = vpop.f32.mrf.mxu0
      %v6827 = vadd.f32 %v6771, %v6826
      %v6828 = vand.u32 %v6519, 4294901760
      %6829 = vmatmul.f32.gmra.mxu0 %v6828
      %v6830 = vpop.f32.mrf.mxu0
      %v6831 = vadd.f32 %v6777, %v6830
      %v6832 = vand.u32 %v6522, 4294901760
      %6833 = vmatmul.f32.gmra.mxu0 %v6832
      %v6834 = vpop.f32.mrf.mxu0
      %v6835 = vadd.f32 %v6783, %v6834
      %6836 = vdwg.mxu0
      %6837 = vmatpush.msra.mxu0 0.0
      %6838 = vmatpush.msra.mxu0 0.0
      %6839 = vmatpush.msra.mxu0 0.0
      %6840 = vmatpush.msra.mxu0 0.0
      %6841 = vmatpush.msra.mxu0 0.0
      %6842 = vmatpush.msra.mxu0 0.0
      %6843 = vmatpush.msra.mxu0 0.0
      %6844 = vmatpush.msra.mxu0 0.0
      %6845 = vmatpush.msra.mxu0 0.0
      %6846 = vmatpush.msra.mxu0 0.0
      %6847 = vmatpush.msra.mxu0 0.0
      %6848 = vmatpush.msra.mxu0 0.0
      %6849 = vmatpush.msra.mxu0 0.0
      %6850 = vmatpush.msra.mxu0 0.0
      %6851 = vmatpush.msra.mxu0 0.0
      %v6852 = vand.u32 %v6499, 4294901760
      %6853 = vmatpush.msra.mxu0 %v6852
      %v6854 = vand.u32 %v6501, 4294901760
      %6855 = vmatmul.f32.gmra.mxu0 %v6854
      %v6856 = vpop.f32.mrf.mxu0
      %v6857 = vadd.f32 %v6807, %v6856
      %v6858 = vand.u32 %v6504, 4294901760
      %6859 = vmatmul.f32.gmra.mxu0 %v6858
      %v6860 = vpop.f32.mrf.mxu0
      %v6861 = vadd.f32 %v6811, %v6860
      %v6862 = vand.u32 %v6507, 4294901760
      %6863 = vmatmul.f32.gmra.mxu0 %v6862
      %v6864 = vpop.f32.mrf.mxu0
      %v6865 = vadd.f32 %v6815, %v6864
      %v6866 = vand.u32 %v6510, 4294901760
      %6867 = vmatmul.f32.gmra.mxu0 %v6866
      %v6868 = vpop.f32.mrf.mxu0
      %v6869 = vadd.f32 %v6819, %v6868
      %v6870 = vand.u32 %v6513, 4294901760
      %6871 = vmatmul.f32.gmra.mxu0 %v6870
      %v6872 = vpop.f32.mrf.mxu0
      %v6873 = vadd.f32 %v6823, %v6872
      %v6874 = vand.u32 %v6516, 4294901760
      %6875 = vmatmul.f32.gmra.mxu0 %v6874
      %v6876 = vpop.f32.mrf.mxu0
      %v6877 = vadd.f32 %v6827, %v6876
      %v6878 = vand.u32 %v6519, 4294901760
      %6879 = vmatmul.f32.gmra.mxu0 %v6878
      %v6880 = vpop.f32.mrf.mxu0
      %v6881 = vadd.f32 %v6831, %v6880
      %v6882 = vand.u32 %v6522, 4294901760
      %6883 = vmatmul.f32.gmra.mxu0 %v6882
      %v6884 = vpop.f32.mrf.mxu0
      %v6885 = vadd.f32 %v6835, %v6884
      %6886 = vdwg.mxu0
      %v6887 = vadd.f32 %v6481, %v6857
      %v6888 = vadd.f32 %v6482, %v6861
      %v6889 = vadd.f32 %v6483, %v6865
      %v6890 = vadd.f32 %v6484, %v6869
      %v6891 = vadd.f32 %v6485, %v6873
      %v6892 = vadd.f32 %v6486, %v6877
      %v6893 = vadd.f32 %v6487, %v6881
      %v6894 = vadd.f32 %v6488, %v6885
      %v6895 = vld [vmem:[%s6489 + $0x1] sm:$0xff]
      %v6896 = vld [vmem:[%s6489 + $0x11] sm:$0xff]
      %v6897 = vld [vmem:[%s6489 + $0x21] sm:$0xff]
      %v6898 = vld [vmem:[%s6489 + $0x31] sm:$0xff]
      %v6899 = vld [vmem:[%s6489 + $0x41] sm:$0xff]
      %v6900 = vld [vmem:[%s6489 + $0x51] sm:$0xff]
      %v6901 = vld [vmem:[%s6489 + $0x61] sm:$0xff]
      %v6902 = vld [vmem:[%s6489 + $0x71] sm:$0xff]
      %s6903 = scalar_lea.vmem %s6, 56
      %v6904 = vld [vmem:[%s6903] sm:$0xff]
      %v6906 = vsel %vm4045, %v6895, 0
      %v6909 = vsel %vm4045, %v6896, 0
      %v6912 = vsel %vm4045, %v6897, 0
      %v6915 = vsel %vm4045, %v6898, 0
      %v6918 = vsel %vm4045, %v6899, 0
      %v6921 = vsel %vm4045, %v6900, 0
      %v6924 = vsel %vm4045, %v6901, 0
      %v6927 = vsel %vm4045, %v6902, 0
      %6929 = vmatpush.msra.mxu0 0.0
      %6930 = vmatpush.msra.mxu0 0.0
      %6931 = vmatpush.msra.mxu0 0.0
      %6932 = vmatpush.msra.mxu0 0.0
      %6933 = vmatpush.msra.mxu0 0.0
      %6934 = vmatpush.msra.mxu0 0.0
      %6935 = vmatpush.msra.mxu0 0.0
      %6936 = vmatpush.msra.mxu0 0.0
      %6937 = vmatpush.msra.mxu0 0.0
      %6938 = vmatpush.msra.mxu0 0.0
      %6939 = vmatpush.msra.mxu0 0.0
      %6940 = vmatpush.msra.mxu0 0.0
      %6941 = vmatpush.msra.mxu0 0.0
      %6942 = vmatpush.msra.mxu0 0.0
      %6943 = vmatpush.msra.mxu0 0.0
      %v6944 = vand.u32 %v6904, 4294901760
      %6945 = vmatpush.msra.mxu0 %v6944
      %v6946 = vand.u32 %v6906, 4294901760
      %v6947 = vsub.f32 %v6906, %v6946
      %v6948 = vand.u32 %v6947, 4294901760
      %v6949 = vsub.f32 %v6947, %v6948
      %v6950 = vand.u32 %v6949, 4294901760
      %6951 = vmatmul.f32.gmra.mxu0 %v6950
      %v6952 = vpop.f32.mrf.mxu0
      %v6953 = vadd.f32 0.0, %v6952
      %v6954 = vand.u32 %v6909, 4294901760
      %v6955 = vsub.f32 %v6909, %v6954
      %v6956 = vand.u32 %v6955, 4294901760
      %v6957 = vsub.f32 %v6955, %v6956
      %v6958 = vand.u32 %v6957, 4294901760
      %6959 = vmatmul.f32.gmra.mxu0 %v6958
      %v6960 = vpop.f32.mrf.mxu0
      %v6961 = vadd.f32 0.0, %v6960
      %v6962 = vand.u32 %v6912, 4294901760
      %v6963 = vsub.f32 %v6912, %v6962
      %v6964 = vand.u32 %v6963, 4294901760
      %v6965 = vsub.f32 %v6963, %v6964
      %v6966 = vand.u32 %v6965, 4294901760
      %6967 = vmatmul.f32.gmra.mxu0 %v6966
      %v6968 = vpop.f32.mrf.mxu0
      %v6969 = vadd.f32 0.0, %v6968
      %v6970 = vand.u32 %v6915, 4294901760
      %v6971 = vsub.f32 %v6915, %v6970
      %v6972 = vand.u32 %v6971, 4294901760
      %v6973 = vsub.f32 %v6971, %v6972
      %v6974 = vand.u32 %v6973, 4294901760
      %6975 = vmatmul.f32.gmra.mxu0 %v6974
      %v6976 = vpop.f32.mrf.mxu0
      %v6977 = vadd.f32 0.0, %v6976
      %v6978 = vand.u32 %v6918, 4294901760
      %v6979 = vsub.f32 %v6918, %v6978
      %v6980 = vand.u32 %v6979, 4294901760
      %v6981 = vsub.f32 %v6979, %v6980
      %v6982 = vand.u32 %v6981, 4294901760
      %6983 = vmatmul.f32.gmra.mxu0 %v6982
      %v6984 = vpop.f32.mrf.mxu0
      %v6985 = vadd.f32 0.0, %v6984
      %v6986 = vand.u32 %v6921, 4294901760
      %v6987 = vsub.f32 %v6921, %v6986
      %v6988 = vand.u32 %v6987, 4294901760
      %v6989 = vsub.f32 %v6987, %v6988
      %v6990 = vand.u32 %v6989, 4294901760
      %6991 = vmatmul.f32.gmra.mxu0 %v6990
      %v6992 = vpop.f32.mrf.mxu0
      %v6993 = vadd.f32 0.0, %v6992
      %v6994 = vand.u32 %v6924, 4294901760
      %v6995 = vsub.f32 %v6924, %v6994
      %v6996 = vand.u32 %v6995, 4294901760
      %v6997 = vsub.f32 %v6995, %v6996
      %v6998 = vand.u32 %v6997, 4294901760
      %6999 = vmatmul.f32.gmra.mxu0 %v6998
      %v7000 = vpop.f32.mrf.mxu0
      %v7001 = vadd.f32 0.0, %v7000
      %v7002 = vand.u32 %v6927, 4294901760
      %v7003 = vsub.f32 %v6927, %v7002
      %v7004 = vand.u32 %v7003, 4294901760
      %v7005 = vsub.f32 %v7003, %v7004
      %v7006 = vand.u32 %v7005, 4294901760
      %7007 = vmatmul.f32.gmra.mxu0 %v7006
      %v7008 = vpop.f32.mrf.mxu0
      %v7009 = vadd.f32 0.0, %v7008
      %7010 = vdwg.mxu0
      %7011 = vmatpush.msra.mxu0 0.0
      %7012 = vmatpush.msra.mxu0 0.0
      %7013 = vmatpush.msra.mxu0 0.0
      %7014 = vmatpush.msra.mxu0 0.0
      %7015 = vmatpush.msra.mxu0 0.0
      %7016 = vmatpush.msra.mxu0 0.0
      %7017 = vmatpush.msra.mxu0 0.0
      %7018 = vmatpush.msra.mxu0 0.0
      %7019 = vmatpush.msra.mxu0 0.0
      %7020 = vmatpush.msra.mxu0 0.0
      %7021 = vmatpush.msra.mxu0 0.0
      %7022 = vmatpush.msra.mxu0 0.0
      %7023 = vmatpush.msra.mxu0 0.0
      %7024 = vmatpush.msra.mxu0 0.0
      %7025 = vmatpush.msra.mxu0 0.0
      %v7026 = vand.u32 %v6904, 4294901760
      %v7027 = vsub.f32 %v6904, %v7026
      %v7028 = vand.u32 %v7027, 4294901760
      %v7029 = vsub.f32 %v7027, %v7028
      %v7030 = vand.u32 %v7029, 4294901760
      %7031 = vmatpush.msra.mxu0 %v7030
      %v7032 = vand.u32 %v6906, 4294901760
      %7033 = vmatmul.f32.gmra.mxu0 %v7032
      %v7034 = vpop.f32.mrf.mxu0
      %v7035 = vadd.f32 %v6953, %v7034
      %v7036 = vand.u32 %v6909, 4294901760
      %7037 = vmatmul.f32.gmra.mxu0 %v7036
      %v7038 = vpop.f32.mrf.mxu0
      %v7039 = vadd.f32 %v6961, %v7038
      %v7040 = vand.u32 %v6912, 4294901760
      %7041 = vmatmul.f32.gmra.mxu0 %v7040
      %v7042 = vpop.f32.mrf.mxu0
      %v7043 = vadd.f32 %v6969, %v7042
      %v7044 = vand.u32 %v6915, 4294901760
      %7045 = vmatmul.f32.gmra.mxu0 %v7044
      %v7046 = vpop.f32.mrf.mxu0
      %v7047 = vadd.f32 %v6977, %v7046
      %v7048 = vand.u32 %v6918, 4294901760
      %7049 = vmatmul.f32.gmra.mxu0 %v7048
      %v7050 = vpop.f32.mrf.mxu0
      %v7051 = vadd.f32 %v6985, %v7050
      %v7052 = vand.u32 %v6921, 4294901760
      %7053 = vmatmul.f32.gmra.mxu0 %v7052
      %v7054 = vpop.f32.mrf.mxu0
      %v7055 = vadd.f32 %v6993, %v7054
      %v7056 = vand.u32 %v6924, 4294901760
      %7057 = vmatmul.f32.gmra.mxu0 %v7056
      %v7058 = vpop.f32.mrf.mxu0
      %v7059 = vadd.f32 %v7001, %v7058
      %v7060 = vand.u32 %v6927, 4294901760
      %7061 = vmatmul.f32.gmra.mxu0 %v7060
      %v7062 = vpop.f32.mrf.mxu0
      %v7063 = vadd.f32 %v7009, %v7062
      %7064 = vdwg.mxu0
      %7065 = vmatpush.msra.mxu0 0.0
      %7066 = vmatpush.msra.mxu0 0.0
      %7067 = vmatpush.msra.mxu0 0.0
      %7068 = vmatpush.msra.mxu0 0.0
      %7069 = vmatpush.msra.mxu0 0.0
      %7070 = vmatpush.msra.mxu0 0.0
      %7071 = vmatpush.msra.mxu0 0.0
      %7072 = vmatpush.msra.mxu0 0.0
      %7073 = vmatpush.msra.mxu0 0.0
      %7074 = vmatpush.msra.mxu0 0.0
      %7075 = vmatpush.msra.mxu0 0.0
      %7076 = vmatpush.msra.mxu0 0.0
      %7077 = vmatpush.msra.mxu0 0.0
      %7078 = vmatpush.msra.mxu0 0.0
      %7079 = vmatpush.msra.mxu0 0.0
      %v7080 = vand.u32 %v6904, 4294901760
      %v7081 = vsub.f32 %v6904, %v7080
      %7082 = vmatpush.msra.mxu0 %v7081
      %v7083 = vand.u32 %v6906, 4294901760
      %v7084 = vsub.f32 %v6906, %v7083
      %7085 = vmatmul.f32.gmra.mxu0 %v7084
      %v7086 = vpop.f32.mrf.mxu0
      %v7087 = vadd.f32 %v7035, %v7086
      %v7088 = vand.u32 %v6909, 4294901760
      %v7089 = vsub.f32 %v6909, %v7088
      %7090 = vmatmul.f32.gmra.mxu0 %v7089
      %v7091 = vpop.f32.mrf.mxu0
      %v7092 = vadd.f32 %v7039, %v7091
      %v7093 = vand.u32 %v6912, 4294901760
      %v7094 = vsub.f32 %v6912, %v7093
      %7095 = vmatmul.f32.gmra.mxu0 %v7094
      %v7096 = vpop.f32.mrf.mxu0
      %v7097 = vadd.f32 %v7043, %v7096
      %v7098 = vand.u32 %v6915, 4294901760
      %v7099 = vsub.f32 %v6915, %v7098
      %7100 = vmatmul.f32.gmra.mxu0 %v7099
      %v7101 = vpop.f32.mrf.mxu0
      %v7102 = vadd.f32 %v7047, %v7101
      %v7103 = vand.u32 %v6918, 4294901760
      %v7104 = vsub.f32 %v6918, %v7103
      %7105 = vmatmul.f32.gmra.mxu0 %v7104
      %v7106 = vpop.f32.mrf.mxu0
      %v7107 = vadd.f32 %v7051, %v7106
      %v7108 = vand.u32 %v6921, 4294901760
      %v7109 = vsub.f32 %v6921, %v7108
      %7110 = vmatmul.f32.gmra.mxu0 %v7109
      %v7111 = vpop.f32.mrf.mxu0
      %v7112 = vadd.f32 %v7055, %v7111
      %v7113 = vand.u32 %v6924, 4294901760
      %v7114 = vsub.f32 %v6924, %v7113
      %7115 = vmatmul.f32.gmra.mxu0 %v7114
      %v7116 = vpop.f32.mrf.mxu0
      %v7117 = vadd.f32 %v7059, %v7116
      %v7118 = vand.u32 %v6927, 4294901760
      %v7119 = vsub.f32 %v6927, %v7118
      %7120 = vmatmul.f32.gmra.mxu0 %v7119
      %v7121 = vpop.f32.mrf.mxu0
      %v7122 = vadd.f32 %v7063, %v7121
      %7123 = vdwg.mxu0
      %7124 = vmatpush.msra.mxu0 0.0
      %7125 = vmatpush.msra.mxu0 0.0
      %7126 = vmatpush.msra.mxu0 0.0
      %7127 = vmatpush.msra.mxu0 0.0
      %7128 = vmatpush.msra.mxu0 0.0
      %7129 = vmatpush.msra.mxu0 0.0
      %7130 = vmatpush.msra.mxu0 0.0
      %7131 = vmatpush.msra.mxu0 0.0
      %7132 = vmatpush.msra.mxu0 0.0
      %7133 = vmatpush.msra.mxu0 0.0
      %7134 = vmatpush.msra.mxu0 0.0
      %7135 = vmatpush.msra.mxu0 0.0
      %7136 = vmatpush.msra.mxu0 0.0
      %7137 = vmatpush.msra.mxu0 0.0
      %7138 = vmatpush.msra.mxu0 0.0
      %v7139 = vand.u32 %v6904, 4294901760
      %7140 = vmatpush.msra.mxu0 %v7139
      %v7141 = vand.u32 %v6906, 4294901760
      %v7142 = vsub.f32 %v6906, %v7141
      %v7143 = vand.u32 %v7142, 4294901760
      %7144 = vmatmul.f32.gmra.mxu0 %v7143
      %v7145 = vpop.f32.mrf.mxu0
      %v7146 = vadd.f32 %v7087, %v7145
      %v7147 = vand.u32 %v6909, 4294901760
      %v7148 = vsub.f32 %v6909, %v7147
      %v7149 = vand.u32 %v7148, 4294901760
      %7150 = vmatmul.f32.gmra.mxu0 %v7149
      %v7151 = vpop.f32.mrf.mxu0
      %v7152 = vadd.f32 %v7092, %v7151
      %v7153 = vand.u32 %v6912, 4294901760
      %v7154 = vsub.f32 %v6912, %v7153
      %v7155 = vand.u32 %v7154, 4294901760
      %7156 = vmatmul.f32.gmra.mxu0 %v7155
      %v7157 = vpop.f32.mrf.mxu0
      %v7158 = vadd.f32 %v7097, %v7157
      %v7159 = vand.u32 %v6915, 4294901760
      %v7160 = vsub.f32 %v6915, %v7159
      %v7161 = vand.u32 %v7160, 4294901760
      %7162 = vmatmul.f32.gmra.mxu0 %v7161
      %v7163 = vpop.f32.mrf.mxu0
      %v7164 = vadd.f32 %v7102, %v7163
      %v7165 = vand.u32 %v6918, 4294901760
      %v7166 = vsub.f32 %v6918, %v7165
      %v7167 = vand.u32 %v7166, 4294901760
      %7168 = vmatmul.f32.gmra.mxu0 %v7167
      %v7169 = vpop.f32.mrf.mxu0
      %v7170 = vadd.f32 %v7107, %v7169
      %v7171 = vand.u32 %v6921, 4294901760
      %v7172 = vsub.f32 %v6921, %v7171
      %v7173 = vand.u32 %v7172, 4294901760
      %7174 = vmatmul.f32.gmra.mxu0 %v7173
      %v7175 = vpop.f32.mrf.mxu0
      %v7176 = vadd.f32 %v7112, %v7175
      %v7177 = vand.u32 %v6924, 4294901760
      %v7178 = vsub.f32 %v6924, %v7177
      %v7179 = vand.u32 %v7178, 4294901760
      %7180 = vmatmul.f32.gmra.mxu0 %v7179
      %v7181 = vpop.f32.mrf.mxu0
      %v7182 = vadd.f32 %v7117, %v7181
      %v7183 = vand.u32 %v6927, 4294901760
      %v7184 = vsub.f32 %v6927, %v7183
      %v7185 = vand.u32 %v7184, 4294901760
      %7186 = vmatmul.f32.gmra.mxu0 %v7185
      %v7187 = vpop.f32.mrf.mxu0
      %v7188 = vadd.f32 %v7122, %v7187
      %7189 = vdwg.mxu0
      %7190 = vmatpush.msra.mxu0 0.0
      %7191 = vmatpush.msra.mxu0 0.0
      %7192 = vmatpush.msra.mxu0 0.0
      %7193 = vmatpush.msra.mxu0 0.0
      %7194 = vmatpush.msra.mxu0 0.0
      %7195 = vmatpush.msra.mxu0 0.0
      %7196 = vmatpush.msra.mxu0 0.0
      %7197 = vmatpush.msra.mxu0 0.0
      %7198 = vmatpush.msra.mxu0 0.0
      %7199 = vmatpush.msra.mxu0 0.0
      %7200 = vmatpush.msra.mxu0 0.0
      %7201 = vmatpush.msra.mxu0 0.0
      %7202 = vmatpush.msra.mxu0 0.0
      %7203 = vmatpush.msra.mxu0 0.0
      %7204 = vmatpush.msra.mxu0 0.0
      %v7205 = vand.u32 %v6904, 4294901760
      %v7206 = vsub.f32 %v6904, %v7205
      %v7207 = vand.u32 %v7206, 4294901760
      %7208 = vmatpush.msra.mxu0 %v7207
      %v7209 = vand.u32 %v6906, 4294901760
      %7210 = vmatmul.f32.gmra.mxu0 %v7209
      %v7211 = vpop.f32.mrf.mxu0
      %v7212 = vadd.f32 %v7146, %v7211
      %v7213 = vand.u32 %v6909, 4294901760
      %7214 = vmatmul.f32.gmra.mxu0 %v7213
      %v7215 = vpop.f32.mrf.mxu0
      %v7216 = vadd.f32 %v7152, %v7215
      %v7217 = vand.u32 %v6912, 4294901760
      %7218 = vmatmul.f32.gmra.mxu0 %v7217
      %v7219 = vpop.f32.mrf.mxu0
      %v7220 = vadd.f32 %v7158, %v7219
      %v7221 = vand.u32 %v6915, 4294901760
      %7222 = vmatmul.f32.gmra.mxu0 %v7221
      %v7223 = vpop.f32.mrf.mxu0
      %v7224 = vadd.f32 %v7164, %v7223
      %v7225 = vand.u32 %v6918, 4294901760
      %7226 = vmatmul.f32.gmra.mxu0 %v7225
      %v7227 = vpop.f32.mrf.mxu0
      %v7228 = vadd.f32 %v7170, %v7227
      %v7229 = vand.u32 %v6921, 4294901760
      %7230 = vmatmul.f32.gmra.mxu0 %v7229
      %v7231 = vpop.f32.mrf.mxu0
      %v7232 = vadd.f32 %v7176, %v7231
      %v7233 = vand.u32 %v6924, 4294901760
      %7234 = vmatmul.f32.gmra.mxu0 %v7233
      %v7235 = vpop.f32.mrf.mxu0
      %v7236 = vadd.f32 %v7182, %v7235
      %v7237 = vand.u32 %v6927, 4294901760
      %7238 = vmatmul.f32.gmra.mxu0 %v7237
      %v7239 = vpop.f32.mrf.mxu0
      %v7240 = vadd.f32 %v7188, %v7239
      %7241 = vdwg.mxu0
      %7242 = vmatpush.msra.mxu0 0.0
      %7243 = vmatpush.msra.mxu0 0.0
      %7244 = vmatpush.msra.mxu0 0.0
      %7245 = vmatpush.msra.mxu0 0.0
      %7246 = vmatpush.msra.mxu0 0.0
      %7247 = vmatpush.msra.mxu0 0.0
      %7248 = vmatpush.msra.mxu0 0.0
      %7249 = vmatpush.msra.mxu0 0.0
      %7250 = vmatpush.msra.mxu0 0.0
      %7251 = vmatpush.msra.mxu0 0.0
      %7252 = vmatpush.msra.mxu0 0.0
      %7253 = vmatpush.msra.mxu0 0.0
      %7254 = vmatpush.msra.mxu0 0.0
      %7255 = vmatpush.msra.mxu0 0.0
      %7256 = vmatpush.msra.mxu0 0.0
      %v7257 = vand.u32 %v6904, 4294901760
      %7258 = vmatpush.msra.mxu0 %v7257
      %v7259 = vand.u32 %v6906, 4294901760
      %7260 = vmatmul.f32.gmra.mxu0 %v7259
      %v7261 = vpop.f32.mrf.mxu0
      %v7262 = vadd.f32 %v7212, %v7261
      %v7263 = vand.u32 %v6909, 4294901760
      %7264 = vmatmul.f32.gmra.mxu0 %v7263
      %v7265 = vpop.f32.mrf.mxu0
      %v7266 = vadd.f32 %v7216, %v7265
      %v7267 = vand.u32 %v6912, 4294901760
      %7268 = vmatmul.f32.gmra.mxu0 %v7267
      %v7269 = vpop.f32.mrf.mxu0
      %v7270 = vadd.f32 %v7220, %v7269
      %v7271 = vand.u32 %v6915, 4294901760
      %7272 = vmatmul.f32.gmra.mxu0 %v7271
      %v7273 = vpop.f32.mrf.mxu0
      %v7274 = vadd.f32 %v7224, %v7273
      %v7275 = vand.u32 %v6918, 4294901760
      %7276 = vmatmul.f32.gmra.mxu0 %v7275
      %v7277 = vpop.f32.mrf.mxu0
      %v7278 = vadd.f32 %v7228, %v7277
      %v7279 = vand.u32 %v6921, 4294901760
      %7280 = vmatmul.f32.gmra.mxu0 %v7279
      %v7281 = vpop.f32.mrf.mxu0
      %v7282 = vadd.f32 %v7232, %v7281
      %v7283 = vand.u32 %v6924, 4294901760
      %7284 = vmatmul.f32.gmra.mxu0 %v7283
      %v7285 = vpop.f32.mrf.mxu0
      %v7286 = vadd.f32 %v7236, %v7285
      %v7287 = vand.u32 %v6927, 4294901760
      %7288 = vmatmul.f32.gmra.mxu0 %v7287
      %v7289 = vpop.f32.mrf.mxu0
      %v7290 = vadd.f32 %v7240, %v7289
      %7291 = vdwg.mxu0
      %v7292 = vadd.f32 %v6887, %v7262
      %v7293 = vadd.f32 %v6888, %v7266
      %v7294 = vadd.f32 %v6889, %v7270
      %v7295 = vadd.f32 %v6890, %v7274
      %v7296 = vadd.f32 %v6891, %v7278
      %v7297 = vadd.f32 %v6892, %v7282
      %v7298 = vadd.f32 %v6893, %v7286
      %v7299 = vadd.f32 %v6894, %v7290
      %v7300 = vld [vmem:[%s6489 + $0x2] sm:$0xff]
      %v7301 = vld [vmem:[%s6489 + $0x12] sm:$0xff]
      %v7302 = vld [vmem:[%s6489 + $0x22] sm:$0xff]
      %v7303 = vld [vmem:[%s6489 + $0x32] sm:$0xff]
      %v7304 = vld [vmem:[%s6489 + $0x42] sm:$0xff]
      %v7305 = vld [vmem:[%s6489 + $0x52] sm:$0xff]
      %v7306 = vld [vmem:[%s6489 + $0x62] sm:$0xff]
      %v7307 = vld [vmem:[%s6489 + $0x72] sm:$0xff]
      %s7308 = scalar_lea.vmem %s6, 64
      %v7309 = vld [vmem:[%s7308] sm:$0xff]
      %v7311 = vsel %vm4045, %v7300, 0
      %v7314 = vsel %vm4045, %v7301, 0
      %v7317 = vsel %vm4045, %v7302, 0
      %v7320 = vsel %vm4045, %v7303, 0
      %v7323 = vsel %vm4045, %v7304, 0
      %v7326 = vsel %vm4045, %v7305, 0
      %v7329 = vsel %vm4045, %v7306, 0
      %v7332 = vsel %vm4045, %v7307, 0
      %7334 = vmatpush.msra.mxu0 0.0
      %7335 = vmatpush.msra.mxu0 0.0
      %7336 = vmatpush.msra.mxu0 0.0
      %7337 = vmatpush.msra.mxu0 0.0
      %7338 = vmatpush.msra.mxu0 0.0
      %7339 = vmatpush.msra.mxu0 0.0
      %7340 = vmatpush.msra.mxu0 0.0
      %7341 = vmatpush.msra.mxu0 0.0
      %7342 = vmatpush.msra.mxu0 0.0
      %7343 = vmatpush.msra.mxu0 0.0
      %7344 = vmatpush.msra.mxu0 0.0
      %7345 = vmatpush.msra.mxu0 0.0
      %7346 = vmatpush.msra.mxu0 0.0
      %7347 = vmatpush.msra.mxu0 0.0
      %7348 = vmatpush.msra.mxu0 0.0
      %v7349 = vand.u32 %v7309, 4294901760
      %7350 = vmatpush.msra.mxu0 %v7349
      %v7351 = vand.u32 %v7311, 4294901760
      %v7352 = vsub.f32 %v7311, %v7351
      %v7353 = vand.u32 %v7352, 4294901760
      %v7354 = vsub.f32 %v7352, %v7353
      %v7355 = vand.u32 %v7354, 4294901760
      %7356 = vmatmul.f32.gmra.mxu0 %v7355
      %v7357 = vpop.f32.mrf.mxu0
      %v7358 = vadd.f32 0.0, %v7357
      %v7359 = vand.u32 %v7314, 4294901760
      %v7360 = vsub.f32 %v7314, %v7359
      %v7361 = vand.u32 %v7360, 4294901760
      %v7362 = vsub.f32 %v7360, %v7361
      %v7363 = vand.u32 %v7362, 4294901760
      %7364 = vmatmul.f32.gmra.mxu0 %v7363
      %v7365 = vpop.f32.mrf.mxu0
      %v7366 = vadd.f32 0.0, %v7365
      %v7367 = vand.u32 %v7317, 4294901760
      %v7368 = vsub.f32 %v7317, %v7367
      %v7369 = vand.u32 %v7368, 4294901760
      %v7370 = vsub.f32 %v7368, %v7369
      %v7371 = vand.u32 %v7370, 4294901760
      %7372 = vmatmul.f32.gmra.mxu0 %v7371
      %v7373 = vpop.f32.mrf.mxu0
      %v7374 = vadd.f32 0.0, %v7373
      %v7375 = vand.u32 %v7320, 4294901760
      %v7376 = vsub.f32 %v7320, %v7375
      %v7377 = vand.u32 %v7376, 4294901760
      %v7378 = vsub.f32 %v7376, %v7377
      %v7379 = vand.u32 %v7378, 4294901760
      %7380 = vmatmul.f32.gmra.mxu0 %v7379
      %v7381 = vpop.f32.mrf.mxu0
      %v7382 = vadd.f32 0.0, %v7381
      %v7383 = vand.u32 %v7323, 4294901760
      %v7384 = vsub.f32 %v7323, %v7383
      %v7385 = vand.u32 %v7384, 4294901760
      %v7386 = vsub.f32 %v7384, %v7385
      %v7387 = vand.u32 %v7386, 4294901760
      %7388 = vmatmul.f32.gmra.mxu0 %v7387
      %v7389 = vpop.f32.mrf.mxu0
      %v7390 = vadd.f32 0.0, %v7389
      %v7391 = vand.u32 %v7326, 4294901760
      %v7392 = vsub.f32 %v7326, %v7391
      %v7393 = vand.u32 %v7392, 4294901760
      %v7394 = vsub.f32 %v7392, %v7393
      %v7395 = vand.u32 %v7394, 4294901760
      %7396 = vmatmul.f32.gmra.mxu0 %v7395
      %v7397 = vpop.f32.mrf.mxu0
      %v7398 = vadd.f32 0.0, %v7397
      %v7399 = vand.u32 %v7329, 4294901760
      %v7400 = vsub.f32 %v7329, %v7399
      %v7401 = vand.u32 %v7400, 4294901760
      %v7402 = vsub.f32 %v7400, %v7401
      %v7403 = vand.u32 %v7402, 4294901760
      %7404 = vmatmul.f32.gmra.mxu0 %v7403
      %v7405 = vpop.f32.mrf.mxu0
      %v7406 = vadd.f32 0.0, %v7405
      %v7407 = vand.u32 %v7332, 4294901760
      %v7408 = vsub.f32 %v7332, %v7407
      %v7409 = vand.u32 %v7408, 4294901760
      %v7410 = vsub.f32 %v7408, %v7409
      %v7411 = vand.u32 %v7410, 4294901760
      %7412 = vmatmul.f32.gmra.mxu0 %v7411
      %v7413 = vpop.f32.mrf.mxu0
      %v7414 = vadd.f32 0.0, %v7413
      %7415 = vdwg.mxu0
      %7416 = vmatpush.msra.mxu0 0.0
      %7417 = vmatpush.msra.mxu0 0.0
      %7418 = vmatpush.msra.mxu0 0.0
      %7419 = vmatpush.msra.mxu0 0.0
      %7420 = vmatpush.msra.mxu0 0.0
      %7421 = vmatpush.msra.mxu0 0.0
      %7422 = vmatpush.msra.mxu0 0.0
      %7423 = vmatpush.msra.mxu0 0.0
      %7424 = vmatpush.msra.mxu0 0.0
      %7425 = vmatpush.msra.mxu0 0.0
      %7426 = vmatpush.msra.mxu0 0.0
      %7427 = vmatpush.msra.mxu0 0.0
      %7428 = vmatpush.msra.mxu0 0.0
      %7429 = vmatpush.msra.mxu0 0.0
      %7430 = vmatpush.msra.mxu0 0.0
      %v7431 = vand.u32 %v7309, 4294901760
      %v7432 = vsub.f32 %v7309, %v7431
      %v7433 = vand.u32 %v7432, 4294901760
      %v7434 = vsub.f32 %v7432, %v7433
      %v7435 = vand.u32 %v7434, 4294901760
      %7436 = vmatpush.msra.mxu0 %v7435
      %v7437 = vand.u32 %v7311, 4294901760
      %7438 = vmatmul.f32.gmra.mxu0 %v7437
      %v7439 = vpop.f32.mrf.mxu0
      %v7440 = vadd.f32 %v7358, %v7439
      %v7441 = vand.u32 %v7314, 4294901760
      %7442 = vmatmul.f32.gmra.mxu0 %v7441
      %v7443 = vpop.f32.mrf.mxu0
      %v7444 = vadd.f32 %v7366, %v7443
      %v7445 = vand.u32 %v7317, 4294901760
      %7446 = vmatmul.f32.gmra.mxu0 %v7445
      %v7447 = vpop.f32.mrf.mxu0
      %v7448 = vadd.f32 %v7374, %v7447
      %v7449 = vand.u32 %v7320, 4294901760
      %7450 = vmatmul.f32.gmra.mxu0 %v7449
      %v7451 = vpop.f32.mrf.mxu0
      %v7452 = vadd.f32 %v7382, %v7451
      %v7453 = vand.u32 %v7323, 4294901760
      %7454 = vmatmul.f32.gmra.mxu0 %v7453
      %v7455 = vpop.f32.mrf.mxu0
      %v7456 = vadd.f32 %v7390, %v7455
      %v7457 = vand.u32 %v7326, 4294901760
      %7458 = vmatmul.f32.gmra.mxu0 %v7457
      %v7459 = vpop.f32.mrf.mxu0
      %v7460 = vadd.f32 %v7398, %v7459
      %v7461 = vand.u32 %v7329, 4294901760
      %7462 = vmatmul.f32.gmra.mxu0 %v7461
      %v7463 = vpop.f32.mrf.mxu0
      %v7464 = vadd.f32 %v7406, %v7463
      %v7465 = vand.u32 %v7332, 4294901760
      %7466 = vmatmul.f32.gmra.mxu0 %v7465
      %v7467 = vpop.f32.mrf.mxu0
      %v7468 = vadd.f32 %v7414, %v7467
      %7469 = vdwg.mxu0
      %7470 = vmatpush.msra.mxu0 0.0
      %7471 = vmatpush.msra.mxu0 0.0
      %7472 = vmatpush.msra.mxu0 0.0
      %7473 = vmatpush.msra.mxu0 0.0
      %7474 = vmatpush.msra.mxu0 0.0
      %7475 = vmatpush.msra.mxu0 0.0
      %7476 = vmatpush.msra.mxu0 0.0
      %7477 = vmatpush.msra.mxu0 0.0
      %7478 = vmatpush.msra.mxu0 0.0
      %7479 = vmatpush.msra.mxu0 0.0
      %7480 = vmatpush.msra.mxu0 0.0
      %7481 = vmatpush.msra.mxu0 0.0
      %7482 = vmatpush.msra.mxu0 0.0
      %7483 = vmatpush.msra.mxu0 0.0
      %7484 = vmatpush.msra.mxu0 0.0
      %v7485 = vand.u32 %v7309, 4294901760
      %v7486 = vsub.f32 %v7309, %v7485
      %7487 = vmatpush.msra.mxu0 %v7486
      %v7488 = vand.u32 %v7311, 4294901760
      %v7489 = vsub.f32 %v7311, %v7488
      %7490 = vmatmul.f32.gmra.mxu0 %v7489
      %v7491 = vpop.f32.mrf.mxu0
      %v7492 = vadd.f32 %v7440, %v7491
      %v7493 = vand.u32 %v7314, 4294901760
      %v7494 = vsub.f32 %v7314, %v7493
      %7495 = vmatmul.f32.gmra.mxu0 %v7494
      %v7496 = vpop.f32.mrf.mxu0
      %v7497 = vadd.f32 %v7444, %v7496
      %v7498 = vand.u32 %v7317, 4294901760
      %v7499 = vsub.f32 %v7317, %v7498
      %7500 = vmatmul.f32.gmra.mxu0 %v7499
      %v7501 = vpop.f32.mrf.mxu0
      %v7502 = vadd.f32 %v7448, %v7501
      %v7503 = vand.u32 %v7320, 4294901760
      %v7504 = vsub.f32 %v7320, %v7503
      %7505 = vmatmul.f32.gmra.mxu0 %v7504
      %v7506 = vpop.f32.mrf.mxu0
      %v7507 = vadd.f32 %v7452, %v7506
      %v7508 = vand.u32 %v7323, 4294901760
      %v7509 = vsub.f32 %v7323, %v7508
      %7510 = vmatmul.f32.gmra.mxu0 %v7509
      %v7511 = vpop.f32.mrf.mxu0
      %v7512 = vadd.f32 %v7456, %v7511
      %v7513 = vand.u32 %v7326, 4294901760
      %v7514 = vsub.f32 %v7326, %v7513
      %7515 = vmatmul.f32.gmra.mxu0 %v7514
      %v7516 = vpop.f32.mrf.mxu0
      %v7517 = vadd.f32 %v7460, %v7516
      %v7518 = vand.u32 %v7329, 4294901760
      %v7519 = vsub.f32 %v7329, %v7518
      %7520 = vmatmul.f32.gmra.mxu0 %v7519
      %v7521 = vpop.f32.mrf.mxu0
      %v7522 = vadd.f32 %v7464, %v7521
      %v7523 = vand.u32 %v7332, 4294901760
      %v7524 = vsub.f32 %v7332, %v7523
      %7525 = vmatmul.f32.gmra.mxu0 %v7524
      %v7526 = vpop.f32.mrf.mxu0
      %v7527 = vadd.f32 %v7468, %v7526
      %7528 = vdwg.mxu0
      %7529 = vmatpush.msra.mxu0 0.0
      %7530 = vmatpush.msra.mxu0 0.0
      %7531 = vmatpush.msra.mxu0 0.0
      %7532 = vmatpush.msra.mxu0 0.0
      %7533 = vmatpush.msra.mxu0 0.0
      %7534 = vmatpush.msra.mxu0 0.0
      %7535 = vmatpush.msra.mxu0 0.0
      %7536 = vmatpush.msra.mxu0 0.0
      %7537 = vmatpush.msra.mxu0 0.0
      %7538 = vmatpush.msra.mxu0 0.0
      %7539 = vmatpush.msra.mxu0 0.0
      %7540 = vmatpush.msra.mxu0 0.0
      %7541 = vmatpush.msra.mxu0 0.0
      %7542 = vmatpush.msra.mxu0 0.0
      %7543 = vmatpush.msra.mxu0 0.0
      %v7544 = vand.u32 %v7309, 4294901760
      %7545 = vmatpush.msra.mxu0 %v7544
      %v7546 = vand.u32 %v7311, 4294901760
      %v7547 = vsub.f32 %v7311, %v7546
      %v7548 = vand.u32 %v7547, 4294901760
      %7549 = vmatmul.f32.gmra.mxu0 %v7548
      %v7550 = vpop.f32.mrf.mxu0
      %v7551 = vadd.f32 %v7492, %v7550
      %v7552 = vand.u32 %v7314, 4294901760
      %v7553 = vsub.f32 %v7314, %v7552
      %v7554 = vand.u32 %v7553, 4294901760
      %7555 = vmatmul.f32.gmra.mxu0 %v7554
      %v7556 = vpop.f32.mrf.mxu0
      %v7557 = vadd.f32 %v7497, %v7556
      %v7558 = vand.u32 %v7317, 4294901760
      %v7559 = vsub.f32 %v7317, %v7558
      %v7560 = vand.u32 %v7559, 4294901760
      %7561 = vmatmul.f32.gmra.mxu0 %v7560
      %v7562 = vpop.f32.mrf.mxu0
      %v7563 = vadd.f32 %v7502, %v7562
      %v7564 = vand.u32 %v7320, 4294901760
      %v7565 = vsub.f32 %v7320, %v7564
      %v7566 = vand.u32 %v7565, 4294901760
      %7567 = vmatmul.f32.gmra.mxu0 %v7566
      %v7568 = vpop.f32.mrf.mxu0
      %v7569 = vadd.f32 %v7507, %v7568
      %v7570 = vand.u32 %v7323, 4294901760
      %v7571 = vsub.f32 %v7323, %v7570
      %v7572 = vand.u32 %v7571, 4294901760
      %7573 = vmatmul.f32.gmra.mxu0 %v7572
      %v7574 = vpop.f32.mrf.mxu0
      %v7575 = vadd.f32 %v7512, %v7574
      %v7576 = vand.u32 %v7326, 4294901760
      %v7577 = vsub.f32 %v7326, %v7576
      %v7578 = vand.u32 %v7577, 4294901760
      %7579 = vmatmul.f32.gmra.mxu0 %v7578
      %v7580 = vpop.f32.mrf.mxu0
      %v7581 = vadd.f32 %v7517, %v7580
      %v7582 = vand.u32 %v7329, 4294901760
      %v7583 = vsub.f32 %v7329, %v7582
      %v7584 = vand.u32 %v7583, 4294901760
      %7585 = vmatmul.f32.gmra.mxu0 %v7584
      %v7586 = vpop.f32.mrf.mxu0
      %v7587 = vadd.f32 %v7522, %v7586
      %v7588 = vand.u32 %v7332, 4294901760
      %v7589 = vsub.f32 %v7332, %v7588
      %v7590 = vand.u32 %v7589, 4294901760
      %7591 = vmatmul.f32.gmra.mxu0 %v7590
      %v7592 = vpop.f32.mrf.mxu0
      %v7593 = vadd.f32 %v7527, %v7592
      %7594 = vdwg.mxu0
      %7595 = vmatpush.msra.mxu0 0.0
      %7596 = vmatpush.msra.mxu0 0.0
      %7597 = vmatpush.msra.mxu0 0.0
      %7598 = vmatpush.msra.mxu0 0.0
      %7599 = vmatpush.msra.mxu0 0.0
      %7600 = vmatpush.msra.mxu0 0.0
      %7601 = vmatpush.msra.mxu0 0.0
      %7602 = vmatpush.msra.mxu0 0.0
      %7603 = vmatpush.msra.mxu0 0.0
      %7604 = vmatpush.msra.mxu0 0.0
      %7605 = vmatpush.msra.mxu0 0.0
      %7606 = vmatpush.msra.mxu0 0.0
      %7607 = vmatpush.msra.mxu0 0.0
      %7608 = vmatpush.msra.mxu0 0.0
      %7609 = vmatpush.msra.mxu0 0.0
      %v7610 = vand.u32 %v7309, 4294901760
      %v7611 = vsub.f32 %v7309, %v7610
      %v7612 = vand.u32 %v7611, 4294901760
      %7613 = vmatpush.msra.mxu0 %v7612
      %v7614 = vand.u32 %v7311, 4294901760
      %7615 = vmatmul.f32.gmra.mxu0 %v7614
      %v7616 = vpop.f32.mrf.mxu0
      %v7617 = vadd.f32 %v7551, %v7616
      %v7618 = vand.u32 %v7314, 4294901760
      %7619 = vmatmul.f32.gmra.mxu0 %v7618
      %v7620 = vpop.f32.mrf.mxu0
      %v7621 = vadd.f32 %v7557, %v7620
      %v7622 = vand.u32 %v7317, 4294901760
      %7623 = vmatmul.f32.gmra.mxu0 %v7622
      %v7624 = vpop.f32.mrf.mxu0
      %v7625 = vadd.f32 %v7563, %v7624
      %v7626 = vand.u32 %v7320, 4294901760
      %7627 = vmatmul.f32.gmra.mxu0 %v7626
      %v7628 = vpop.f32.mrf.mxu0
      %v7629 = vadd.f32 %v7569, %v7628
      %v7630 = vand.u32 %v7323, 4294901760
      %7631 = vmatmul.f32.gmra.mxu0 %v7630
      %v7632 = vpop.f32.mrf.mxu0
      %v7633 = vadd.f32 %v7575, %v7632
      %v7634 = vand.u32 %v7326, 4294901760
      %7635 = vmatmul.f32.gmra.mxu0 %v7634
      %v7636 = vpop.f32.mrf.mxu0
      %v7637 = vadd.f32 %v7581, %v7636
      %v7638 = vand.u32 %v7329, 4294901760
      %7639 = vmatmul.f32.gmra.mxu0 %v7638
      %v7640 = vpop.f32.mrf.mxu0
      %v7641 = vadd.f32 %v7587, %v7640
      %v7642 = vand.u32 %v7332, 4294901760
      %7643 = vmatmul.f32.gmra.mxu0 %v7642
      %v7644 = vpop.f32.mrf.mxu0
      %v7645 = vadd.f32 %v7593, %v7644
      %7646 = vdwg.mxu0
      %7647 = vmatpush.msra.mxu0 0.0
      %7648 = vmatpush.msra.mxu0 0.0
      %7649 = vmatpush.msra.mxu0 0.0
      %7650 = vmatpush.msra.mxu0 0.0
      %7651 = vmatpush.msra.mxu0 0.0
      %7652 = vmatpush.msra.mxu0 0.0
      %7653 = vmatpush.msra.mxu0 0.0
      %7654 = vmatpush.msra.mxu0 0.0
      %7655 = vmatpush.msra.mxu0 0.0
      %7656 = vmatpush.msra.mxu0 0.0
      %7657 = vmatpush.msra.mxu0 0.0
      %7658 = vmatpush.msra.mxu0 0.0
      %7659 = vmatpush.msra.mxu0 0.0
      %7660 = vmatpush.msra.mxu0 0.0
      %7661 = vmatpush.msra.mxu0 0.0
      %v7662 = vand.u32 %v7309, 4294901760
      %7663 = vmatpush.msra.mxu0 %v7662
      %v7664 = vand.u32 %v7311, 4294901760
      %7665 = vmatmul.f32.gmra.mxu0 %v7664
      %v7666 = vpop.f32.mrf.mxu0
      %v7667 = vadd.f32 %v7617, %v7666
      %v7668 = vand.u32 %v7314, 4294901760
      %7669 = vmatmul.f32.gmra.mxu0 %v7668
      %v7670 = vpop.f32.mrf.mxu0
      %v7671 = vadd.f32 %v7621, %v7670
      %v7672 = vand.u32 %v7317, 4294901760
      %7673 = vmatmul.f32.gmra.mxu0 %v7672
      %v7674 = vpop.f32.mrf.mxu0
      %v7675 = vadd.f32 %v7625, %v7674
      %v7676 = vand.u32 %v7320, 4294901760
      %7677 = vmatmul.f32.gmra.mxu0 %v7676
      %v7678 = vpop.f32.mrf.mxu0
      %v7679 = vadd.f32 %v7629, %v7678
      %v7680 = vand.u32 %v7323, 4294901760
      %7681 = vmatmul.f32.gmra.mxu0 %v7680
      %v7682 = vpop.f32.mrf.mxu0
      %v7683 = vadd.f32 %v7633, %v7682
      %v7684 = vand.u32 %v7326, 4294901760
      %7685 = vmatmul.f32.gmra.mxu0 %v7684
      %v7686 = vpop.f32.mrf.mxu0
      %v7687 = vadd.f32 %v7637, %v7686
      %v7688 = vand.u32 %v7329, 4294901760
      %7689 = vmatmul.f32.gmra.mxu0 %v7688
      %v7690 = vpop.f32.mrf.mxu0
      %v7691 = vadd.f32 %v7641, %v7690
      %v7692 = vand.u32 %v7332, 4294901760
      %7693 = vmatmul.f32.gmra.mxu0 %v7692
      %v7694 = vpop.f32.mrf.mxu0
      %v7695 = vadd.f32 %v7645, %v7694
      %7696 = vdwg.mxu0
      %v7697 = vadd.f32 %v7292, %v7667
      %v7698 = vadd.f32 %v7293, %v7671
      %v7699 = vadd.f32 %v7294, %v7675
      %v7700 = vadd.f32 %v7295, %v7679
      %v7701 = vadd.f32 %v7296, %v7683
      %v7702 = vadd.f32 %v7297, %v7687
      %v7703 = vadd.f32 %v7298, %v7691
      %v7704 = vadd.f32 %v7299, %v7695
      %v7705 = vld [vmem:[%s7] sm:$0x1]
      %v7707 = vperm.slane %v7705, 0
      %v7709 = vadd.f32 %v7697, %v7707
      %v7710 = vadd.f32 %v7698, %v7707
      %v7711 = vadd.f32 %v7699, %v7707
      %v7712 = vadd.f32 %v7700, %v7707
      %v7713 = vadd.f32 %v7701, %v7707
      %v7714 = vadd.f32 %v7702, %v7707
      %v7715 = vadd.f32 %v7703, %v7707
      %v7716 = vadd.f32 %v7704, %v7707
      %v7717 = vmax.f32 %v7709, 0.0
      %v7718 = vmax.f32 %v7710, 0.0
      %v7719 = vmax.f32 %v7711, 0.0
      %v7720 = vmax.f32 %v7712, 0.0
      %v7721 = vmax.f32 %v7713, 0.0
      %v7722 = vmax.f32 %v7714, 0.0
      %v7723 = vmax.f32 %v7715, 0.0
      %v7724 = vmax.f32 %v7716, 0.0
      %7725 = vst.msk [vmem:[%s365] sm:$0xff] %vm4045, %v7717
      %7726 = vst.msk [vmem:[%s365 + $0x8] sm:$0xff] %vm4045, %v7718
      %7727 = vst.msk [vmem:[%s365 + $0x10] sm:$0xff] %vm4045, %v7719
      %7728 = vst.msk [vmem:[%s365 + $0x18] sm:$0xff] %vm4045, %v7720
      %7729 = vst.msk [vmem:[%s365 + $0x20] sm:$0xff] %vm4045, %v7721
      %7730 = vst.msk [vmem:[%s365 + $0x28] sm:$0xff] %vm4045, %v7722
      %7731 = vst.msk [vmem:[%s365 + $0x30] sm:$0xff] %vm4045, %v7723
      %7732 = vst.msk [vmem:[%s365 + $0x38] sm:$0xff] %vm4045, %v7724
      %p7733 = scmp.lt.s32.totalorder %s19, 1
      %s7734 = scalar_select %p7733, %s19, 1
      %s7735 = smul.addr %s7734, 8
      %s7736 = smul.addr %s7735, 8
      %s7737 = scalar_lea.vmem %s8, %s7736
      // Predicated region
      $region53: #{transition_block_down.1} parent=51 // pred_check
        %p7738 = pneg %p225
      $region54: #{transition_block_down.1} parent=51 // pred_check_branch
        %7740 = sbr.rel (%p7738) target = $region56
      $region55: #{transition_block_down.1} parent=51 // pred_region
        _
      $region56: #{transition_block_down.1} parent=51 // pred_fallthru
        _
    $region52: #{transition_block_down.1} parent=5 // pred_fallthru
      _
    %p7741 = scmp.le.s32.totalorder 2, %s14
    // Predicated region
    $region57: #{transition_block_down.1} parent=5 // pred_check
      %p7742 = pneg %p7741
    $region58: #{transition_block_down.1} parent=5 // pred_check_branch
      %7744 = sbr.rel (%p7742) target = $region60
    $region59: #{transition_block_down.1} parent=5 // pred_region
      %s7745 = ssub.s32 %s14, 2
      // Predicated region
      $region61: #{transition_block_down.1} parent=59 // pred_check
        %p7746 = pneg %p231
      $region62: #{transition_block_down.1} parent=59 // pred_check_branch
        %7748 = sbr.rel (%p7746) target = $region64
      $region63: #{transition_block_down.1} parent=59 // pred_region
        %p7749 = scmp.lt.s32.totalorder %s20, 1
        %s7750 = scalar_select %p7749, %s20, 1
        %s7751 = smul.addr %s7750, 8
        %s7752 = smul.addr %s7751, 8
        %s7753 = scalar_lea.vmem %s8, %s7752
      $region64: #{transition_block_down.1} parent=59 // pred_fallthru
        _
    $region60: #{transition_block_down.1} parent=5 // pred_fallthru
      _
  $region6: #{transition_block_down.1} parent=0 // loop_footer
    %s18 = sadd.s32 1, %s14
  $region7: #{transition_block_down.1} parent=0 // loop_footer_branch
    %13 = sbr.rel target = $region3
  $region8: #{transition_block_down.1} parent=0 // loop_exit
    _

</llo_original>
